<compile_context>
chip_gen: v7x
topology: tpu7x:2x2x1
jax: 0.10.0
libtpu: 0.0.40
codegen_flags: <defaults>
</compile_context>

<pallas_src>
import jax
import jax.numpy as jnp
from jax.experimental import pallas as pl
from jax.experimental.pallas import tpu as pltpu

# ---------------- static model geometry ----------------
H_IN = W_IN = 28                      # fc hardcodes 16*26*26 => input is 28x28
H_OUT = W_OUT = 26
C_OUT = 16
N_CLASSES = 10
K_FC = C_OUT * H_OUT * W_OUT          # 10816 (PyTorch flatten size)

BLK_H, BLK_W = 32, 28                 # per-channel padded spatial block
BLK = BLK_H * BLK_W                   # 896 = 7 * 128 lanes per channel
K_BLK = C_OUT * BLK                   # 14336 lanes in the activation layout
X_W = 1024                            # padded flat-image width (>= 896 + 58)


def _round_up(n, m):
    return ((n + m - 1) // m) * m


# ---------------- fused Pallas kernel ----------------

def cnn_fused_kernel(x_ref, wconv_ref, bconv_ref, wfc_ref, bfc_ref, out_ref):
    # x_ref    : (TB, 1024)  f32 VMEM  zero-padded flat 28x28 image
    # wconv_ref: (16, 9)     f32 SMEM  conv taps, k = dh*3 + dw
    # bconv_ref: (16,)       f32 SMEM
    # wfc_ref  : (10, 14336) f32 VMEM  FC weight, K on lanes, pad lanes = 0
    # bfc_ref  : (1, 10)     f32 VMEM
    # out_ref  : (TB, 10)    f32 VMEM
    x = x_ref[...]

    # 9 statically shifted lane views of the flat image, one per conv tap.
    taps = []
    for dh in range(3):
        for dw in range(3):
            o = dh * W_IN + dw
            taps.append(x[:, o:o + BLK])                      # (TB, 896)

    tb = x.shape[0]
    logits = jnp.zeros((tb, N_CLASSES), jnp.float32)

    # Per output channel: conv (VPU) + bias + ReLU, then an immediate partial
    # FC contraction (MXU) against that channel's 128-aligned weight slice.
    # No (TB, K_BLK) activation slab is ever materialized.
    for c in range(C_OUT):
        acc = taps[0] * wconv_ref[c, 0]
        for k in range(1, 9):
            acc = acc + taps[k] * wconv_ref[c, k]
        act = jnp.maximum(acc + bconv_ref[c], 0.0)            # (TB, 896)
        w_c = wfc_ref[:, c * BLK:(c + 1) * BLK]               # (10, 896)
        logits = logits + jax.lax.dot_general(
            act, w_c,
            dimension_numbers=(((1,), (1,)), ((), ())),       # act @ w_c.T
            preferred_element_type=jnp.float32)               # (TB, 10)

    out_ref[...] = logits + bfc_ref[...]


# ---------------- wrappers ----------------

def prepare_params(w_conv, b_conv, w_fc, b_fc):
    """One-time parameter prep (outside the per-step hot path)."""
    # Conv weight (16,1,3,3) -> (16,9) scalar table, tap index k = dh*3 + dw.
    w_conv_tab = w_conv.reshape(C_OUT, 9).astype(jnp.float32)
    # FC weight (10, 16*26*26) in PyTorch (c,h,w) flatten order -> zero-padded
    # per-channel (32,28) blocks so K is dense on the lane axis.
    # NOTE: the zeros in the padded (h>=26, w>=26) positions neutralize the
    # wrapped/garbage conv values that land in those activation lanes -- the
    # kernel relies on this; keep the padding here and BLK_H/BLK_W in lockstep.
    w = w_fc.reshape(N_CLASSES, C_OUT, H_OUT, W_OUT)
    w = jnp.pad(w, ((0, 0), (0, 0), (0, BLK_H - H_OUT), (0, BLK_W - W_OUT)))
    w_fc_blk = w.reshape(N_CLASSES, K_BLK).astype(jnp.float32)
    b_fc_row = b_fc.reshape(1, N_CLASSES).astype(jnp.float32)
    return w_conv_tab, b_conv.astype(jnp.float32), w_fc_blk, b_fc_row


def cnn_forward(x, w_conv_tab, b_conv, w_fc_blk, b_fc_row, *, tile_b=128):
    """x: (B, 1, 28, 28) f32 NCHW.  Params must come from prepare_params().

    tile_b: batch tile; 128 is a good default (MXU M on v5e), use 256 on
    v6e/v7x for large batches.  The batch is padded to a multiple of the tile.
    """
    B = x.shape[0]
    TB = min(tile_b, _round_up(B, 8))       # keep sublanes full even at tiny B
    B_pad = _round_up(B, TB)

    # Glue: flatten the image, zero-pad the batch to a multiple of TB and the
    # lane dim to 1024 (8*128) so every conv-tap slice is in-bounds.
    x_flat = x.reshape(B, H_IN * W_IN)
    x_pad = jnp.pad(x_flat, ((0, B_pad - B), (0, X_W - H_IN * W_IN)))

    flops = B_pad * (C_OUT * BLK * 2 * 9 + 2 * K_BLK * N_CLASSES)
    bytes_accessed = 4 * (B_pad * X_W + N_CLASSES * K_BLK + B_pad * N_CLASSES)

    out = pl.pallas_call(
        cnn_fused_kernel,
        out_shape=jax.ShapeDtypeStruct((B_pad, N_CLASSES), jnp.float32),
        grid=(B_pad // TB,),
        in_specs=[
            pl.BlockSpec((TB, X_W), lambda i: (i, 0)),
            pl.BlockSpec(memory_space=pltpu.MemorySpace.SMEM),   # conv weights
            pl.BlockSpec(memory_space=pltpu.MemorySpace.SMEM),   # conv bias
            pl.BlockSpec((N_CLASSES, K_BLK), lambda i: (0, 0)),  # resident FC W
            pl.BlockSpec((1, N_CLASSES), lambda i: (0, 0)),      # FC bias
        ],
        out_specs=pl.BlockSpec((TB, N_CLASSES), lambda i: (i, 0)),
        compiler_params=pltpu.CompilerParams(
            dimension_semantics=("parallel",),
            vmem_limit_bytes=32 * 1024 * 1024),
        cost_estimate=pl.CostEstimate(
            flops=flops, transcendentals=0, bytes_accessed=bytes_accessed),
    )(x_pad, w_conv_tab, b_conv, w_fc_blk, b_fc_row)
    return out[:B]


# ---------------- reference & init ----------------

def init_params(key):
    """Deterministic init matching PyTorch default shapes (not values)."""
    k1, k2, k3, k4 = jax.random.split(key, 4)
    fan_conv = 1 * 3 * 3
    bound_c = 1.0 / jnp.sqrt(fan_conv)
    w_conv = jax.random.uniform(k1, (C_OUT, 1, 3, 3), jnp.float32, -bound_c, bound_c)
    b_conv = jax.random.uniform(k2, (C_OUT,), jnp.float32, -bound_c, bound_c)
    bound_f = 1.0 / jnp.sqrt(K_FC)
    w_fc = jax.random.uniform(k3, (N_CLASSES, K_FC), jnp.float32, -bound_f, bound_f)
    b_fc = jax.random.uniform(k4, (N_CLASSES,), jnp.float32, -bound_f, bound_f)
    return w_conv, b_conv, w_fc, b_fc


def cnn_reference(x, w_conv, b_conv, w_fc, b_fc):
    """Plain-JAX reference with PyTorch NCHW semantics."""
    y = jax.lax.conv_general_dilated(
        x, w_conv, window_strides=(1, 1), padding="VALID",
        dimension_numbers=("NCHW", "OIHW", "NCHW"),
    )
    y = jax.nn.relu(y + b_conv.reshape(1, C_OUT, 1, 1))
    y = y.reshape(x.shape[0], -1)              # PyTorch (c, h, w) flatten order
    return y @ w_fc.T + b_fc


if __name__ == "__main__":
    key = jax.random.PRNGKey(0)
    k_x, k_p = jax.random.split(key)

    B = 2
    x = jax.random.normal(k_x, (B, 1, H_IN, W_IN), jnp.float32)
    w_conv, b_conv, w_fc, b_fc = init_params(k_p)

    params = prepare_params(w_conv, b_conv, w_fc, b_fc)   # one-time prep
    fwd = jax.jit(cnn_forward)
    out = jax.block_until_ready(fwd(x, *params))

    ref = cnn_reference(x, w_conv, b_conv, w_fc, b_fc)
    assert out.shape == (B, N_CLASSES)
    err = jnp.max(jnp.abs(out - ref))
    assert jnp.allclose(out, ref, atol=5e-4, rtol=5e-4), f"max abs err = {err}"
    print("KERNEL_OK")
</pallas_src>

<mosaic_0001>
module attributes {stable_mosaic.version = 11 : i64} {
  func.func @cnn_fused_kernel(%arg0: i32, %arg1: memref<8x1024xf32, #tpu.memory_space<vmem>>, %arg2: memref<16x9xf32, #tpu.memory_space<smem>>, %arg3: memref<16xf32, #tpu.memory_space<smem>>, %arg4: memref<10x14336xf32, #tpu.memory_space<vmem>>, %arg5: memref<1x10xf32, #tpu.memory_space<vmem>>, %arg6: memref<8x10xf32, #tpu.memory_space<vmem>>) attributes {dimension_semantics = [#tpu.dimension_semantics<parallel>], iteration_bounds = array<i64: 1>, scalar_prefetch = 0 : i64, scratch_operands = 0 : i64, tpu.core_type = #tpu.core_type<tc>, window_params = [{transform_indices = @transform_0, window_bounds = array<i64: 8, 1024>}, {transform_indices = @transform_1, window_bounds = array<i64: 16, 9>}, {transform_indices = @transform_2, window_bounds = array<i64: 16>}, {pipeline_mode = #tpu.pipeline_mode<synchronous>, transform_indices = @transform_3, window_bounds = array<i64: 10, 14336>}, {pipeline_mode = #tpu.pipeline_mode<synchronous>, transform_indices = @transform_4, window_bounds = array<i64: 1, 10>}, {transform_indices = @transform_5, window_bounds = array<i64: 8, 10>}]} {
    %c0 = arith.constant 0 : index
    %c0_0 = arith.constant 0 : index
    %0 = vector.load %arg1[%c0, %c0_0] : memref<8x1024xf32, #tpu.memory_space<vmem>>, vector<8x1024xf32>
    %1 = vector.extract_strided_slice %0 {offsets = [0, 0], sizes = [8, 896], strides = [1, 1]} : vector<8x1024xf32> to vector<8x896xf32>
    %2 = vector.extract_strided_slice %0 {offsets = [0, 1], sizes = [8, 896], strides = [1, 1]} : vector<8x1024xf32> to vector<8x896xf32>
    %3 = vector.extract_strided_slice %0 {offsets = [0, 2], sizes = [8, 896], strides = [1, 1]} : vector<8x1024xf32> to vector<8x896xf32>
    %4 = vector.extract_strided_slice %0 {offsets = [0, 28], sizes = [8, 896], strides = [1, 1]} : vector<8x1024xf32> to vector<8x896xf32>
    %5 = vector.extract_strided_slice %0 {offsets = [0, 29], sizes = [8, 896], strides = [1, 1]} : vector<8x1024xf32> to vector<8x896xf32>
    %6 = vector.extract_strided_slice %0 {offsets = [0, 30], sizes = [8, 896], strides = [1, 1]} : vector<8x1024xf32> to vector<8x896xf32>
    %7 = vector.extract_strided_slice %0 {offsets = [0, 56], sizes = [8, 896], strides = [1, 1]} : vector<8x1024xf32> to vector<8x896xf32>
    %8 = vector.extract_strided_slice %0 {offsets = [0, 57], sizes = [8, 896], strides = [1, 1]} : vector<8x1024xf32> to vector<8x896xf32>
    %9 = vector.extract_strided_slice %0 {offsets = [0, 58], sizes = [8, 896], strides = [1, 1]} : vector<8x1024xf32> to vector<8x896xf32>
    %cst = arith.constant 0.000000e+00 : f32
    %10 = vector.broadcast %cst : f32 to vector<8x10xf32>
    %c0_1 = arith.constant 0 : index
    %c0_2 = arith.constant 0 : index
    %11 = memref.load %arg2[%c0_1, %c0_2] : memref<16x9xf32, #tpu.memory_space<smem>>
    %12 = vector.broadcast %11 : f32 to vector<8x896xf32>
    %13 = arith.mulf %1, %12 : vector<8x896xf32>
    %c0_3 = arith.constant 0 : index
    %c1 = arith.constant 1 : index
    %14 = memref.load %arg2[%c0_3, %c1] : memref<16x9xf32, #tpu.memory_space<smem>>
    %15 = vector.broadcast %14 : f32 to vector<8x896xf32>
    %16 = arith.mulf %2, %15 : vector<8x896xf32>
    %17 = arith.addf %13, %16 : vector<8x896xf32>
    %c0_4 = arith.constant 0 : index
    %c2 = arith.constant 2 : index
    %18 = memref.load %arg2[%c0_4, %c2] : memref<16x9xf32, #tpu.memory_space<smem>>
    %19 = vector.broadcast %18 : f32 to vector<8x896xf32>
    %20 = arith.mulf %3, %19 : vector<8x896xf32>
    %21 = arith.addf %17, %20 : vector<8x896xf32>
    %c0_5 = arith.constant 0 : index
    %c3 = arith.constant 3 : index
    %22 = memref.load %arg2[%c0_5, %c3] : memref<16x9xf32, #tpu.memory_space<smem>>
    %23 = vector.broadcast %22 : f32 to vector<8x896xf32>
    %24 = arith.mulf %4, %23 : vector<8x896xf32>
    %25 = arith.addf %21, %24 : vector<8x896xf32>
    %c0_6 = arith.constant 0 : index
    %c4 = arith.constant 4 : index
    %26 = memref.load %arg2[%c0_6, %c4] : memref<16x9xf32, #tpu.memory_space<smem>>
    %27 = vector.broadcast %26 : f32 to vector<8x896xf32>
    %28 = arith.mulf %5, %27 : vector<8x896xf32>
    %29 = arith.addf %25, %28 : vector<8x896xf32>
    %c0_7 = arith.constant 0 : index
    %c5 = arith.constant 5 : index
    %30 = memref.load %arg2[%c0_7, %c5] : memref<16x9xf32, #tpu.memory_space<smem>>
    %31 = vector.broadcast %30 : f32 to vector<8x896xf32>
    %32 = arith.mulf %6, %31 : vector<8x896xf32>
    %33 = arith.addf %29, %32 : vector<8x896xf32>
    %c0_8 = arith.constant 0 : index
    %c6 = arith.constant 6 : index
    %34 = memref.load %arg2[%c0_8, %c6] : memref<16x9xf32, #tpu.memory_space<smem>>
    %35 = vector.broadcast %34 : f32 to vector<8x896xf32>
    %36 = arith.mulf %7, %35 : vector<8x896xf32>
    %37 = arith.addf %33, %36 : vector<8x896xf32>
    %c0_9 = arith.constant 0 : index
    %c7 = arith.constant 7 : index
    %38 = memref.load %arg2[%c0_9, %c7] : memref<16x9xf32, #tpu.memory_space<smem>>
    %39 = vector.broadcast %38 : f32 to vector<8x896xf32>
    %40 = arith.mulf %8, %39 : vector<8x896xf32>
    %41 = arith.addf %37, %40 : vector<8x896xf32>
    %c0_10 = arith.constant 0 : index
    %c8 = arith.constant 8 : index
    %42 = memref.load %arg2[%c0_10, %c8] : memref<16x9xf32, #tpu.memory_space<smem>>
    %43 = vector.broadcast %42 : f32 to vector<8x896xf32>
    %44 = arith.mulf %9, %43 : vector<8x896xf32>
    %45 = arith.addf %41, %44 : vector<8x896xf32>
    %c0_11 = arith.constant 0 : index
    %46 = memref.load %arg3[%c0_11] : memref<16xf32, #tpu.memory_space<smem>>
    %47 = vector.broadcast %46 : f32 to vector<8x896xf32>
    %48 = arith.addf %45, %47 : vector<8x896xf32>
    %cst_12 = arith.constant 0.000000e+00 : f32
    %49 = vector.broadcast %cst_12 : f32 to vector<8x896xf32>
    %50 = arith.maximumf %48, %49 : vector<8x896xf32>
    %c0_13 = arith.constant 0 : index
    %c0_14 = arith.constant 0 : index
    %51 = vector.load %arg4[%c0_13, %c0_14] : memref<10x14336xf32, #tpu.memory_space<vmem>>, vector<10x896xf32>
    %cst_15 = arith.constant dense<0.000000e+00> : vector<8x10xf32>
    %52 = tpu.matmul %50, %51, %cst_15 {dimension_numbers = #tpu.dot_dimension_numbers<[1], [1], [0], [0], [0, 0, 1, 0], [], []>} : vector<8x896xf32>, vector<10x896xf32>, vector<8x10xf32> -> vector<8x10xf32>
    %53 = arith.addf %10, %52 : vector<8x10xf32>
    %c1_16 = arith.constant 1 : index
    %c0_17 = arith.constant 0 : index
    %54 = memref.load %arg2[%c1_16, %c0_17] : memref<16x9xf32, #tpu.memory_space<smem>>
    %55 = vector.broadcast %54 : f32 to vector<8x896xf32>
    %56 = arith.mulf %1, %55 : vector<8x896xf32>
    %c1_18 = arith.constant 1 : index
    %c1_19 = arith.constant 1 : index
    %57 = memref.load %arg2[%c1_18, %c1_19] : memref<16x9xf32, #tpu.memory_space<smem>>
    %58 = vector.broadcast %57 : f32 to vector<8x896xf32>
    %59 = arith.mulf %2, %58 : vector<8x896xf32>
    %60 = arith.addf %56, %59 : vector<8x896xf32>
    %c1_20 = arith.constant 1 : index
    %c2_21 = arith.constant 2 : index
    %61 = memref.load %arg2[%c1_20, %c2_21] : memref<16x9xf32, #tpu.memory_space<smem>>
    %62 = vector.broadcast %61 : f32 to vector<8x896xf32>
    %63 = arith.mulf %3, %62 : vector<8x896xf32>
    %64 = arith.addf %60, %63 : vector<8x896xf32>
    %c1_22 = arith.constant 1 : index
    %c3_23 = arith.constant 3 : index
    %65 = memref.load %arg2[%c1_22, %c3_23] : memref<16x9xf32, #tpu.memory_space<smem>>
    %66 = vector.broadcast %65 : f32 to vector<8x896xf32>
    %67 = arith.mulf %4, %66 : vector<8x896xf32>
    %68 = arith.addf %64, %67 : vector<8x896xf32>
    %c1_24 = arith.constant 1 : index
    %c4_25 = arith.constant 4 : index
    %69 = memref.load %arg2[%c1_24, %c4_25] : memref<16x9xf32, #tpu.memory_space<smem>>
    %70 = vector.broadcast %69 : f32 to vector<8x896xf32>
    %71 = arith.mulf %5, %70 : vector<8x896xf32>
    %72 = arith.addf %68, %71 : vector<8x896xf32>
    %c1_26 = arith.constant 1 : index
    %c5_27 = arith.constant 5 : index
    %73 = memref.load %arg2[%c1_26, %c5_27] : memref<16x9xf32, #tpu.memory_space<smem>>
    %74 = vector.broadcast %73 : f32 to vector<8x896xf32>
    %75 = arith.mulf %6, %74 : vector<8x896xf32>
    %76 = arith.addf %72, %75 : vector<8x896xf32>
    %c1_28 = arith.constant 1 : index
    %c6_29 = arith.constant 6 : index
    %77 = memref.load %arg2[%c1_28, %c6_29] : memref<16x9xf32, #tpu.memory_space<smem>>
    %78 = vector.broadcast %77 : f32 to vector<8x896xf32>
    %79 = arith.mulf %7, %78 : vector<8x896xf32>
    %80 = arith.addf %76, %79 : vector<8x896xf32>
    %c1_30 = arith.constant 1 : index
    %c7_31 = arith.constant 7 : index
    %81 = memref.load %arg2[%c1_30, %c7_31] : memref<16x9xf32, #tpu.memory_space<smem>>
    %82 = vector.broadcast %81 : f32 to vector<8x896xf32>
    %83 = arith.mulf %8, %82 : vector<8x896xf32>
    %84 = arith.addf %80, %83 : vector<8x896xf32>
    %c1_32 = arith.constant 1 : index
    %c8_33 = arith.constant 8 : index
    %85 = memref.load %arg2[%c1_32, %c8_33] : memref<16x9xf32, #tpu.memory_space<smem>>
    %86 = vector.broadcast %85 : f32 to vector<8x896xf32>
    %87 = arith.mulf %9, %86 : vector<8x896xf32>
    %88 = arith.addf %84, %87 : vector<8x896xf32>
    %c1_34 = arith.constant 1 : index
    %89 = memref.load %arg3[%c1_34] : memref<16xf32, #tpu.memory_space<smem>>
    %90 = vector.broadcast %89 : f32 to vector<8x896xf32>
    %91 = arith.addf %88, %90 : vector<8x896xf32>
    %cst_35 = arith.constant 0.000000e+00 : f32
    %92 = vector.broadcast %cst_35 : f32 to vector<8x896xf32>
    %93 = arith.maximumf %91, %92 : vector<8x896xf32>
    %c0_36 = arith.constant 0 : index
    %c896 = arith.constant 896 : index
    %94 = vector.load %arg4[%c0_36, %c896] : memref<10x14336xf32, #tpu.memory_space<vmem>>, vector<10x896xf32>
    %cst_37 = arith.constant dense<0.000000e+00> : vector<8x10xf32>
    %95 = tpu.matmul %93, %94, %cst_37 {dimension_numbers = #tpu.dot_dimension_numbers<[1], [1], [0], [0], [0, 0, 1, 0], [], []>} : vector<8x896xf32>, vector<10x896xf32>, vector<8x10xf32> -> vector<8x10xf32>
    %96 = arith.addf %53, %95 : vector<8x10xf32>
    %c2_38 = arith.constant 2 : index
    %c0_39 = arith.constant 0 : index
    %97 = memref.load %arg2[%c2_38, %c0_39] : memref<16x9xf32, #tpu.memory_space<smem>>
    %98 = vector.broadcast %97 : f32 to vector<8x896xf32>
    %99 = arith.mulf %1, %98 : vector<8x896xf32>
    %c2_40 = arith.constant 2 : index
    %c1_41 = arith.constant 1 : index
    %100 = memref.load %arg2[%c2_40, %c1_41] : memref<16x9xf32, #tpu.memory_space<smem>>
    %101 = vector.broadcast %100 : f32 to vector<8x896xf32>
    %102 = arith.mulf %2, %101 : vector<8x896xf32>
    %103 = arith.addf %99, %102 : vector<8x896xf32>
    %c2_42 = arith.constant 2 : index
    %c2_43 = arith.constant 2 : index
    %104 = memref.load %arg2[%c2_42, %c2_43] : memref<16x9xf32, #tpu.memory_space<smem>>
    %105 = vector.broadcast %104 : f32 to vector<8x896xf32>
    %106 = arith.mulf %3, %105 : vector<8x896xf32>
    %107 = arith.addf %103, %106 : vector<8x896xf32>
    %c2_44 = arith.constant 2 : index
    %c3_45 = arith.constant 3 : index
    %108 = memref.load %arg2[%c2_44, %c3_45] : memref<16x9xf32, #tpu.memory_space<smem>>
    %109 = vector.broadcast %108 : f32 to vector<8x896xf32>
    %110 = arith.mulf %4, %109 : vector<8x896xf32>
    %111 = arith.addf %107, %110 : vector<8x896xf32>
    %c2_46 = arith.constant 2 : index
    %c4_47 = arith.constant 4 : index
    %112 = memref.load %arg2[%c2_46, %c4_47] : memref<16x9xf32, #tpu.memory_space<smem>>
    %113 = vector.broadcast %112 : f32 to vector<8x896xf32>
    %114 = arith.mulf %5, %113 : vector<8x896xf32>
    %115 = arith.addf %111, %114 : vector<8x896xf32>
    %c2_48 = arith.constant 2 : index
    %c5_49 = arith.constant 5 : index
    %116 = memref.load %arg2[%c2_48, %c5_49] : memref<16x9xf32, #tpu.memory_space<smem>>
    %117 = vector.broadcast %116 : f32 to vector<8x896xf32>
    %118 = arith.mulf %6, %117 : vector<8x896xf32>
    %119 = arith.addf %115, %118 : vector<8x896xf32>
    %c2_50 = arith.constant 2 : index
    %c6_51 = arith.constant 6 : index
    %120 = memref.load %arg2[%c2_50, %c6_51] : memref<16x9xf32, #tpu.memory_space<smem>>
    %121 = vector.broadcast %120 : f32 to vector<8x896xf32>
    %122 = arith.mulf %7, %121 : vector<8x896xf32>
    %123 = arith.addf %119, %122 : vector<8x896xf32>
    %c2_52 = arith.constant 2 : index
    %c7_53 = arith.constant 7 : index
    %124 = memref.load %arg2[%c2_52, %c7_53] : memref<16x9xf32, #tpu.memory_space<smem>>
    %125 = vector.broadcast %124 : f32 to vector<8x896xf32>
    %126 = arith.mulf %8, %125 : vector<8x896xf32>
    %127 = arith.addf %123, %126 : vector<8x896xf32>
    %c2_54 = arith.constant 2 : index
    %c8_55 = arith.constant 8 : index
    %128 = memref.load %arg2[%c2_54, %c8_55] : memref<16x9xf32, #tpu.memory_space<smem>>
    %129 = vector.broadcast %128 : f32 to vector<8x896xf32>
    %130 = arith.mulf %9, %129 : vector<8x896xf32>
    %131 = arith.addf %127, %130 : vector<8x896xf32>
    %c2_56 = arith.constant 2 : index
    %132 = memref.load %arg3[%c2_56] : memref<16xf32, #tpu.memory_space<smem>>
    %133 = vector.broadcast %132 : f32 to vector<8x896xf32>
    %134 = arith.addf %131, %133 : vector<8x896xf32>
    %cst_57 = arith.constant 0.000000e+00 : f32
    %135 = vector.broadcast %cst_57 : f32 to vector<8x896xf32>
    %136 = arith.maximumf %134, %135 : vector<8x896xf32>
    %c0_58 = arith.constant 0 : index
    %c1792 = arith.constant 1792 : index
    %137 = vector.load %arg4[%c0_58, %c1792] : memref<10x14336xf32, #tpu.memory_space<vmem>>, vector<10x896xf32>
    %cst_59 = arith.constant dense<0.000000e+00> : vector<8x10xf32>
    %138 = tpu.matmul %136, %137, %cst_59 {dimension_numbers = #tpu.dot_dimension_numbers<[1], [1], [0], [0], [0, 0, 1, 0], [], []>} : vector<8x896xf32>, vector<10x896xf32>, vector<8x10xf32> -> vector<8x10xf32>
    %139 = arith.addf %96, %138 : vector<8x10xf32>
    %c3_60 = arith.constant 3 : index
    %c0_61 = arith.constant 0 : index
    %140 = memref.load %arg2[%c3_60, %c0_61] : memref<16x9xf32, #tpu.memory_space<smem>>
    %141 = vector.broadcast %140 : f32 to vector<8x896xf32>
    %142 = arith.mulf %1, %141 : vector<8x896xf32>
    %c3_62 = arith.constant 3 : index
    %c1_63 = arith.constant 1 : index
    %143 = memref.load %arg2[%c3_62, %c1_63] : memref<16x9xf32, #tpu.memory_space<smem>>
    %144 = vector.broadcast %143 : f32 to vector<8x896xf32>
    %145 = arith.mulf %2, %144 : vector<8x896xf32>
    %146 = arith.addf %142, %145 : vector<8x896xf32>
    %c3_64 = arith.constant 3 : index
    %c2_65 = arith.constant 2 : index
    %147 = memref.load %arg2[%c3_64, %c2_65] : memref<16x9xf32, #tpu.memory_space<smem>>
    %148 = vector.broadcast %147 : f32 to vector<8x896xf32>
    %149 = arith.mulf %3, %148 : vector<8x896xf32>
    %150 = arith.addf %146, %149 : vector<8x896xf32>
    %c3_66 = arith.constant 3 : index
    %c3_67 = arith.constant 3 : index
    %151 = memref.load %arg2[%c3_66, %c3_67] : memref<16x9xf32, #tpu.memory_space<smem>>
    %152 = vector.broadcast %151 : f32 to vector<8x896xf32>
    %153 = arith.mulf %4, %152 : vector<8x896xf32>
    %154 = arith.addf %150, %153 : vector<8x896xf32>
    %c3_68 = arith.constant 3 : index
    %c4_69 = arith.constant 4 : index
    %155 = memref.load %arg2[%c3_68, %c4_69] : memref<16x9xf32, #tpu.memory_space<smem>>
    %156 = vector.broadcast %155 : f32 to vector<8x896xf32>
    %157 = arith.mulf %5, %156 : vector<8x896xf32>
    %158 = arith.addf %154, %157 : vector<8x896xf32>
    %c3_70 = arith.constant 3 : index
    %c5_71 = arith.constant 5 : index
    %159 = memref.load %arg2[%c3_70, %c5_71] : memref<16x9xf32, #tpu.memory_space<smem>>
    %160 = vector.broadcast %159 : f32 to vector<8x896xf32>
    %161 = arith.mulf %6, %160 : vector<8x896xf32>
    %162 = arith.addf %158, %161 : vector<8x896xf32>
    %c3_72 = arith.constant 3 : index
    %c6_73 = arith.constant 6 : index
    %163 = memref.load %arg2[%c3_72, %c6_73] : memref<16x9xf32, #tpu.memory_space<smem>>
    %164 = vector.broadcast %163 : f32 to vector<8x896xf32>
    %165 = arith.mulf %7, %164 : vector<8x896xf32>
    %166 = arith.addf %162, %165 : vector<8x896xf32>
    %c3_74 = arith.constant 3 : index
    %c7_75 = arith.constant 7 : index
    %167 = memref.load %arg2[%c3_74, %c7_75] : memref<16x9xf32, #tpu.memory_space<smem>>
    %168 = vector.broadcast %167 : f32 to vector<8x896xf32>
    %169 = arith.mulf %8, %168 : vector<8x896xf32>
    %170 = arith.addf %166, %169 : vector<8x896xf32>
    %c3_76 = arith.constant 3 : index
    %c8_77 = arith.constant 8 : index
    %171 = memref.load %arg2[%c3_76, %c8_77] : memref<16x9xf32, #tpu.memory_space<smem>>
    %172 = vector.broadcast %171 : f32 to vector<8x896xf32>
    %173 = arith.mulf %9, %172 : vector<8x896xf32>
    %174 = arith.addf %170, %173 : vector<8x896xf32>
    %c3_78 = arith.constant 3 : index
    %175 = memref.load %arg3[%c3_78] : memref<16xf32, #tpu.memory_space<smem>>
    %176 = vector.broadcast %175 : f32 to vector<8x896xf32>
    %177 = arith.addf %174, %176 : vector<8x896xf32>
    %cst_79 = arith.constant 0.000000e+00 : f32
    %178 = vector.broadcast %cst_79 : f32 to vector<8x896xf32>
    %179 = arith.maximumf %177, %178 : vector<8x896xf32>
    %c0_80 = arith.constant 0 : index
    %c2688 = arith.constant 2688 : index
    %180 = vector.load %arg4[%c0_80, %c2688] : memref<10x14336xf32, #tpu.memory_space<vmem>>, vector<10x896xf32>
    %cst_81 = arith.constant dense<0.000000e+00> : vector<8x10xf32>
    %181 = tpu.matmul %179, %180, %cst_81 {dimension_numbers = #tpu.dot_dimension_numbers<[1], [1], [0], [0], [0, 0, 1, 0], [], []>} : vector<8x896xf32>, vector<10x896xf32>, vector<8x10xf32> -> vector<8x10xf32>
    %182 = arith.addf %139, %181 : vector<8x10xf32>
    %c4_82 = arith.constant 4 : index
    %c0_83 = arith.constant 0 : index
    %183 = memref.load %arg2[%c4_82, %c0_83] : memref<16x9xf32, #tpu.memory_space<smem>>
    %184 = vector.broadcast %183 : f32 to vector<8x896xf32>
    %185 = arith.mulf %1, %184 : vector<8x896xf32>
    %c4_84 = arith.constant 4 : index
    %c1_85 = arith.constant 1 : index
    %186 = memref.load %arg2[%c4_84, %c1_85] : memref<16x9xf32, #tpu.memory_space<smem>>
    %187 = vector.broadcast %186 : f32 to vector<8x896xf32>
    %188 = arith.mulf %2, %187 : vector<8x896xf32>
    %189 = arith.addf %185, %188 : vector<8x896xf32>
    %c4_86 = arith.constant 4 : index
    %c2_87 = arith.constant 2 : index
    %190 = memref.load %arg2[%c4_86, %c2_87] : memref<16x9xf32, #tpu.memory_space<smem>>
    %191 = vector.broadcast %190 : f32 to vector<8x896xf32>
    %192 = arith.mulf %3, %191 : vector<8x896xf32>
    %193 = arith.addf %189, %192 : vector<8x896xf32>
    %c4_88 = arith.constant 4 : index
    %c3_89 = arith.constant 3 : index
    %194 = memref.load %arg2[%c4_88, %c3_89] : memref<16x9xf32, #tpu.memory_space<smem>>
    %195 = vector.broadcast %194 : f32 to vector<8x896xf32>
    %196 = arith.mulf %4, %195 : vector<8x896xf32>
    %197 = arith.addf %193, %196 : vector<8x896xf32>
    %c4_90 = arith.constant 4 : index
    %c4_91 = arith.constant 4 : index
    %198 = memref.load %arg2[%c4_90, %c4_91] : memref<16x9xf32, #tpu.memory_space<smem>>
    %199 = vector.broadcast %198 : f32 to vector<8x896xf32>
    %200 = arith.mulf %5, %199 : vector<8x896xf32>
    %201 = arith.addf %197, %200 : vector<8x896xf32>
    %c4_92 = arith.constant 4 : index
    %c5_93 = arith.constant 5 : index
    %202 = memref.load %arg2[%c4_92, %c5_93] : memref<16x9xf32, #tpu.memory_space<smem>>
    %203 = vector.broadcast %202 : f32 to vector<8x896xf32>
    %204 = arith.mulf %6, %203 : vector<8x896xf32>
    %205 = arith.addf %201, %204 : vector<8x896xf32>
    %c4_94 = arith.constant 4 : index
    %c6_95 = arith.constant 6 : index
    %206 = memref.load %arg2[%c4_94, %c6_95] : memref<16x9xf32, #tpu.memory_space<smem>>
    %207 = vector.broadcast %206 : f32 to vector<8x896xf32>
    %208 = arith.mulf %7, %207 : vector<8x896xf32>
    %209 = arith.addf %205, %208 : vector<8x896xf32>
    %c4_96 = arith.constant 4 : index
    %c7_97 = arith.constant 7 : index
    %210 = memref.load %arg2[%c4_96, %c7_97] : memref<16x9xf32, #tpu.memory_space<smem>>
    %211 = vector.broadcast %210 : f32 to vector<8x896xf32>
    %212 = arith.mulf %8, %211 : vector<8x896xf32>
    %213 = arith.addf %209, %212 : vector<8x896xf32>
    %c4_98 = arith.constant 4 : index
    %c8_99 = arith.constant 8 : index
    %214 = memref.load %arg2[%c4_98, %c8_99] : memref<16x9xf32, #tpu.memory_space<smem>>
    %215 = vector.broadcast %214 : f32 to vector<8x896xf32>
    %216 = arith.mulf %9, %215 : vector<8x896xf32>
    %217 = arith.addf %213, %216 : vector<8x896xf32>
    %c4_100 = arith.constant 4 : index
    %218 = memref.load %arg3[%c4_100] : memref<16xf32, #tpu.memory_space<smem>>
    %219 = vector.broadcast %218 : f32 to vector<8x896xf32>
    %220 = arith.addf %217, %219 : vector<8x896xf32>
    %cst_101 = arith.constant 0.000000e+00 : f32
    %221 = vector.broadcast %cst_101 : f32 to vector<8x896xf32>
    %222 = arith.maximumf %220, %221 : vector<8x896xf32>
    %c0_102 = arith.constant 0 : index
    %c3584 = arith.constant 3584 : index
    %223 = vector.load %arg4[%c0_102, %c3584] : memref<10x14336xf32, #tpu.memory_space<vmem>>, vector<10x896xf32>
    %cst_103 = arith.constant dense<0.000000e+00> : vector<8x10xf32>
    %224 = tpu.matmul %222, %223, %cst_103 {dimension_numbers = #tpu.dot_dimension_numbers<[1], [1], [0], [0], [0, 0, 1, 0], [], []>} : vector<8x896xf32>, vector<10x896xf32>, vector<8x10xf32> -> vector<8x10xf32>
    %225 = arith.addf %182, %224 : vector<8x10xf32>
    %c5_104 = arith.constant 5 : index
    %c0_105 = arith.constant 0 : index
    %226 = memref.load %arg2[%c5_104, %c0_105] : memref<16x9xf32, #tpu.memory_space<smem>>
    %227 = vector.broadcast %226 : f32 to vector<8x896xf32>
    %228 = arith.mulf %1, %227 : vector<8x896xf32>
    %c5_106 = arith.constant 5 : index
    %c1_107 = arith.constant 1 : index
    %229 = memref.load %arg2[%c5_106, %c1_107] : memref<16x9xf32, #tpu.memory_space<smem>>
    %230 = vector.broadcast %229 : f32 to vector<8x896xf32>
    %231 = arith.mulf %2, %230 : vector<8x896xf32>
    %232 = arith.addf %228, %231 : vector<8x896xf32>
    %c5_108 = arith.constant 5 : index
    %c2_109 = arith.constant 2 : index
    %233 = memref.load %arg2[%c5_108, %c2_109] : memref<16x9xf32, #tpu.memory_space<smem>>
    %234 = vector.broadcast %233 : f32 to vector<8x896xf32>
    %235 = arith.mulf %3, %234 : vector<8x896xf32>
    %236 = arith.addf %232, %235 : vector<8x896xf32>
    %c5_110 = arith.constant 5 : index
    %c3_111 = arith.constant 3 : index
    %237 = memref.load %arg2[%c5_110, %c3_111] : memref<16x9xf32, #tpu.memory_space<smem>>
    %238 = vector.broadcast %237 : f32 to vector<8x896xf32>
    %239 = arith.mulf %4, %238 : vector<8x896xf32>
    %240 = arith.addf %236, %239 : vector<8x896xf32>
    %c5_112 = arith.constant 5 : index
    %c4_113 = arith.constant 4 : index
    %241 = memref.load %arg2[%c5_112, %c4_113] : memref<16x9xf32, #tpu.memory_space<smem>>
    %242 = vector.broadcast %241 : f32 to vector<8x896xf32>
    %243 = arith.mulf %5, %242 : vector<8x896xf32>
    %244 = arith.addf %240, %243 : vector<8x896xf32>
    %c5_114 = arith.constant 5 : index
    %c5_115 = arith.constant 5 : index
    %245 = memref.load %arg2[%c5_114, %c5_115] : memref<16x9xf32, #tpu.memory_space<smem>>
    %246 = vector.broadcast %245 : f32 to vector<8x896xf32>
    %247 = arith.mulf %6, %246 : vector<8x896xf32>
    %248 = arith.addf %244, %247 : vector<8x896xf32>
    %c5_116 = arith.constant 5 : index
    %c6_117 = arith.constant 6 : index
    %249 = memref.load %arg2[%c5_116, %c6_117] : memref<16x9xf32, #tpu.memory_space<smem>>
    %250 = vector.broadcast %249 : f32 to vector<8x896xf32>
    %251 = arith.mulf %7, %250 : vector<8x896xf32>
    %252 = arith.addf %248, %251 : vector<8x896xf32>
    %c5_118 = arith.constant 5 : index
    %c7_119 = arith.constant 7 : index
    %253 = memref.load %arg2[%c5_118, %c7_119] : memref<16x9xf32, #tpu.memory_space<smem>>
    %254 = vector.broadcast %253 : f32 to vector<8x896xf32>
    %255 = arith.mulf %8, %254 : vector<8x896xf32>
    %256 = arith.addf %252, %255 : vector<8x896xf32>
    %c5_120 = arith.constant 5 : index
    %c8_121 = arith.constant 8 : index
    %257 = memref.load %arg2[%c5_120, %c8_121] : memref<16x9xf32, #tpu.memory_space<smem>>
    %258 = vector.broadcast %257 : f32 to vector<8x896xf32>
    %259 = arith.mulf %9, %258 : vector<8x896xf32>
    %260 = arith.addf %256, %259 : vector<8x896xf32>
    %c5_122 = arith.constant 5 : index
    %261 = memref.load %arg3[%c5_122] : memref<16xf32, #tpu.memory_space<smem>>
    %262 = vector.broadcast %261 : f32 to vector<8x896xf32>
    %263 = arith.addf %260, %262 : vector<8x896xf32>
    %cst_123 = arith.constant 0.000000e+00 : f32
    %264 = vector.broadcast %cst_123 : f32 to vector<8x896xf32>
    %265 = arith.maximumf %263, %264 : vector<8x896xf32>
    %c0_124 = arith.constant 0 : index
    %c4480 = arith.constant 4480 : index
    %266 = vector.load %arg4[%c0_124, %c4480] : memref<10x14336xf32, #tpu.memory_space<vmem>>, vector<10x896xf32>
    %cst_125 = arith.constant dense<0.000000e+00> : vector<8x10xf32>
    %267 = tpu.matmul %265, %266, %cst_125 {dimension_numbers = #tpu.dot_dimension_numbers<[1], [1], [0], [0], [0, 0, 1, 0], [], []>} : vector<8x896xf32>, vector<10x896xf32>, vector<8x10xf32> -> vector<8x10xf32>
    %268 = arith.addf %225, %267 : vector<8x10xf32>
    %c6_126 = arith.constant 6 : index
    %c0_127 = arith.constant 0 : index
    %269 = memref.load %arg2[%c6_126, %c0_127] : memref<16x9xf32, #tpu.memory_space<smem>>
    %270 = vector.broadcast %269 : f32 to vector<8x896xf32>
    %271 = arith.mulf %1, %270 : vector<8x896xf32>
    %c6_128 = arith.constant 6 : index
    %c1_129 = arith.constant 1 : index
    %272 = memref.load %arg2[%c6_128, %c1_129] : memref<16x9xf32, #tpu.memory_space<smem>>
    %273 = vector.broadcast %272 : f32 to vector<8x896xf32>
    %274 = arith.mulf %2, %273 : vector<8x896xf32>
    %275 = arith.addf %271, %274 : vector<8x896xf32>
    %c6_130 = arith.constant 6 : index
    %c2_131 = arith.constant 2 : index
    %276 = memref.load %arg2[%c6_130, %c2_131] : memref<16x9xf32, #tpu.memory_space<smem>>
    %277 = vector.broadcast %276 : f32 to vector<8x896xf32>
    %278 = arith.mulf %3, %277 : vector<8x896xf32>
    %279 = arith.addf %275, %278 : vector<8x896xf32>
    %c6_132 = arith.constant 6 : index
    %c3_133 = arith.constant 3 : index
    %280 = memref.load %arg2[%c6_132, %c3_133] : memref<16x9xf32, #tpu.memory_space<smem>>
    %281 = vector.broadcast %280 : f32 to vector<8x896xf32>
    %282 = arith.mulf %4, %281 : vector<8x896xf32>
    %283 = arith.addf %279, %282 : vector<8x896xf32>
    %c6_134 = arith.constant 6 : index
    %c4_135 = arith.constant 4 : index
    %284 = memref.load %arg2[%c6_134, %c4_135] : memref<16x9xf32, #tpu.memory_space<smem>>
    %285 = vector.broadcast %284 : f32 to vector<8x896xf32>
    %286 = arith.mulf %5, %285 : vector<8x896xf32>
    %287 = arith.addf %283, %286 : vector<8x896xf32>
    %c6_136 = arith.constant 6 : index
    %c5_137 = arith.constant 5 : index
    %288 = memref.load %arg2[%c6_136, %c5_137] : memref<16x9xf32, #tpu.memory_space<smem>>
    %289 = vector.broadcast %288 : f32 to vector<8x896xf32>
    %290 = arith.mulf %6, %289 : vector<8x896xf32>
    %291 = arith.addf %287, %290 : vector<8x896xf32>
    %c6_138 = arith.constant 6 : index
    %c6_139 = arith.constant 6 : index
    %292 = memref.load %arg2[%c6_138, %c6_139] : memref<16x9xf32, #tpu.memory_space<smem>>
    %293 = vector.broadcast %292 : f32 to vector<8x896xf32>
    %294 = arith.mulf %7, %293 : vector<8x896xf32>
    %295 = arith.addf %291, %294 : vector<8x896xf32>
    %c6_140 = arith.constant 6 : index
    %c7_141 = arith.constant 7 : index
    %296 = memref.load %arg2[%c6_140, %c7_141] : memref<16x9xf32, #tpu.memory_space<smem>>
    %297 = vector.broadcast %296 : f32 to vector<8x896xf32>
    %298 = arith.mulf %8, %297 : vector<8x896xf32>
    %299 = arith.addf %295, %298 : vector<8x896xf32>
    %c6_142 = arith.constant 6 : index
    %c8_143 = arith.constant 8 : index
    %300 = memref.load %arg2[%c6_142, %c8_143] : memref<16x9xf32, #tpu.memory_space<smem>>
    %301 = vector.broadcast %300 : f32 to vector<8x896xf32>
    %302 = arith.mulf %9, %301 : vector<8x896xf32>
    %303 = arith.addf %299, %302 : vector<8x896xf32>
    %c6_144 = arith.constant 6 : index
    %304 = memref.load %arg3[%c6_144] : memref<16xf32, #tpu.memory_space<smem>>
    %305 = vector.broadcast %304 : f32 to vector<8x896xf32>
    %306 = arith.addf %303, %305 : vector<8x896xf32>
    %cst_145 = arith.constant 0.000000e+00 : f32
    %307 = vector.broadcast %cst_145 : f32 to vector<8x896xf32>
    %308 = arith.maximumf %306, %307 : vector<8x896xf32>
    %c0_146 = arith.constant 0 : index
    %c5376 = arith.constant 5376 : index
    %309 = vector.load %arg4[%c0_146, %c5376] : memref<10x14336xf32, #tpu.memory_space<vmem>>, vector<10x896xf32>
    %cst_147 = arith.constant dense<0.000000e+00> : vector<8x10xf32>
    %310 = tpu.matmul %308, %309, %cst_147 {dimension_numbers = #tpu.dot_dimension_numbers<[1], [1], [0], [0], [0, 0, 1, 0], [], []>} : vector<8x896xf32>, vector<10x896xf32>, vector<8x10xf32> -> vector<8x10xf32>
    %311 = arith.addf %268, %310 : vector<8x10xf32>
    %c7_148 = arith.constant 7 : index
    %c0_149 = arith.constant 0 : index
    %312 = memref.load %arg2[%c7_148, %c0_149] : memref<16x9xf32, #tpu.memory_space<smem>>
    %313 = vector.broadcast %312 : f32 to vector<8x896xf32>
    %314 = arith.mulf %1, %313 : vector<8x896xf32>
    %c7_150 = arith.constant 7 : index
    %c1_151 = arith.constant 1 : index
    %315 = memref.load %arg2[%c7_150, %c1_151] : memref<16x9xf32, #tpu.memory_space<smem>>
    %316 = vector.broadcast %315 : f32 to vector<8x896xf32>
    %317 = arith.mulf %2, %316 : vector<8x896xf32>
    %318 = arith.addf %314, %317 : vector<8x896xf32>
    %c7_152 = arith.constant 7 : index
    %c2_153 = arith.constant 2 : index
    %319 = memref.load %arg2[%c7_152, %c2_153] : memref<16x9xf32, #tpu.memory_space<smem>>
    %320 = vector.broadcast %319 : f32 to vector<8x896xf32>
    %321 = arith.mulf %3, %320 : vector<8x896xf32>
    %322 = arith.addf %318, %321 : vector<8x896xf32>
    %c7_154 = arith.constant 7 : index
    %c3_155 = arith.constant 3 : index
    %323 = memref.load %arg2[%c7_154, %c3_155] : memref<16x9xf32, #tpu.memory_space<smem>>
    %324 = vector.broadcast %323 : f32 to vector<8x896xf32>
    %325 = arith.mulf %4, %324 : vector<8x896xf32>
    %326 = arith.addf %322, %325 : vector<8x896xf32>
    %c7_156 = arith.constant 7 : index
    %c4_157 = arith.constant 4 : index
    %327 = memref.load %arg2[%c7_156, %c4_157] : memref<16x9xf32, #tpu.memory_space<smem>>
    %328 = vector.broadcast %327 : f32 to vector<8x896xf32>
    %329 = arith.mulf %5, %328 : vector<8x896xf32>
    %330 = arith.addf %326, %329 : vector<8x896xf32>
    %c7_158 = arith.constant 7 : index
    %c5_159 = arith.constant 5 : index
    %331 = memref.load %arg2[%c7_158, %c5_159] : memref<16x9xf32, #tpu.memory_space<smem>>
    %332 = vector.broadcast %331 : f32 to vector<8x896xf32>
    %333 = arith.mulf %6, %332 : vector<8x896xf32>
    %334 = arith.addf %330, %333 : vector<8x896xf32>
    %c7_160 = arith.constant 7 : index
    %c6_161 = arith.constant 6 : index
    %335 = memref.load %arg2[%c7_160, %c6_161] : memref<16x9xf32, #tpu.memory_space<smem>>
    %336 = vector.broadcast %335 : f32 to vector<8x896xf32>
    %337 = arith.mulf %7, %336 : vector<8x896xf32>
    %338 = arith.addf %334, %337 : vector<8x896xf32>
    %c7_162 = arith.constant 7 : index
    %c7_163 = arith.constant 7 : index
    %339 = memref.load %arg2[%c7_162, %c7_163] : memref<16x9xf32, #tpu.memory_space<smem>>
    %340 = vector.broadcast %339 : f32 to vector<8x896xf32>
    %341 = arith.mulf %8, %340 : vector<8x896xf32>
    %342 = arith.addf %338, %341 : vector<8x896xf32>
    %c7_164 = arith.constant 7 : index
    %c8_165 = arith.constant 8 : index
    %343 = memref.load %arg2[%c7_164, %c8_165] : memref<16x9xf32, #tpu.memory_space<smem>>
    %344 = vector.broadcast %343 : f32 to vector<8x896xf32>
    %345 = arith.mulf %9, %344 : vector<8x896xf32>
    %346 = arith.addf %342, %345 : vector<8x896xf32>
    %c7_166 = arith.constant 7 : index
    %347 = memref.load %arg3[%c7_166] : memref<16xf32, #tpu.memory_space<smem>>
    %348 = vector.broadcast %347 : f32 to vector<8x896xf32>
    %349 = arith.addf %346, %348 : vector<8x896xf32>
    %cst_167 = arith.constant 0.000000e+00 : f32
    %350 = vector.broadcast %cst_167 : f32 to vector<8x896xf32>
    %351 = arith.maximumf %349, %350 : vector<8x896xf32>
    %c0_168 = arith.constant 0 : index
    %c6272 = arith.constant 6272 : index
    %352 = vector.load %arg4[%c0_168, %c6272] : memref<10x14336xf32, #tpu.memory_space<vmem>>, vector<10x896xf32>
    %cst_169 = arith.constant dense<0.000000e+00> : vector<8x10xf32>
    %353 = tpu.matmul %351, %352, %cst_169 {dimension_numbers = #tpu.dot_dimension_numbers<[1], [1], [0], [0], [0, 0, 1, 0], [], []>} : vector<8x896xf32>, vector<10x896xf32>, vector<8x10xf32> -> vector<8x10xf32>
    %354 = arith.addf %311, %353 : vector<8x10xf32>
    %c8_170 = arith.constant 8 : index
    %c0_171 = arith.constant 0 : index
    %355 = memref.load %arg2[%c8_170, %c0_171] : memref<16x9xf32, #tpu.memory_space<smem>>
    %356 = vector.broadcast %355 : f32 to vector<8x896xf32>
    %357 = arith.mulf %1, %356 : vector<8x896xf32>
    %c8_172 = arith.constant 8 : index
    %c1_173 = arith.constant 1 : index
    %358 = memref.load %arg2[%c8_172, %c1_173] : memref<16x9xf32, #tpu.memory_space<smem>>
    %359 = vector.broadcast %358 : f32 to vector<8x896xf32>
    %360 = arith.mulf %2, %359 : vector<8x896xf32>
    %361 = arith.addf %357, %360 : vector<8x896xf32>
    %c8_174 = arith.constant 8 : index
    %c2_175 = arith.constant 2 : index
    %362 = memref.load %arg2[%c8_174, %c2_175] : memref<16x9xf32, #tpu.memory_space<smem>>
    %363 = vector.broadcast %362 : f32 to vector<8x896xf32>
    %364 = arith.mulf %3, %363 : vector<8x896xf32>
    %365 = arith.addf %361, %364 : vector<8x896xf32>
    %c8_176 = arith.constant 8 : index
    %c3_177 = arith.constant 3 : index
    %366 = memref.load %arg2[%c8_176, %c3_177] : memref<16x9xf32, #tpu.memory_space<smem>>
    %367 = vector.broadcast %366 : f32 to vector<8x896xf32>
    %368 = arith.mulf %4, %367 : vector<8x896xf32>
    %369 = arith.addf %365, %368 : vector<8x896xf32>
    %c8_178 = arith.constant 8 : index
    %c4_179 = arith.constant 4 : index
    %370 = memref.load %arg2[%c8_178, %c4_179] : memref<16x9xf32, #tpu.memory_space<smem>>
    %371 = vector.broadcast %370 : f32 to vector<8x896xf32>
    %372 = arith.mulf %5, %371 : vector<8x896xf32>
    %373 = arith.addf %369, %372 : vector<8x896xf32>
    %c8_180 = arith.constant 8 : index
    %c5_181 = arith.constant 5 : index
    %374 = memref.load %arg2[%c8_180, %c5_181] : memref<16x9xf32, #tpu.memory_space<smem>>
    %375 = vector.broadcast %374 : f32 to vector<8x896xf32>
    %376 = arith.mulf %6, %375 : vector<8x896xf32>
    %377 = arith.addf %373, %376 : vector<8x896xf32>
    %c8_182 = arith.constant 8 : index
    %c6_183 = arith.constant 6 : index
    %378 = memref.load %arg2[%c8_182, %c6_183] : memref<16x9xf32, #tpu.memory_space<smem>>
    %379 = vector.broadcast %378 : f32 to vector<8x896xf32>
    %380 = arith.mulf %7, %379 : vector<8x896xf32>
    %381 = arith.addf %377, %380 : vector<8x896xf32>
    %c8_184 = arith.constant 8 : index
    %c7_185 = arith.constant 7 : index
    %382 = memref.load %arg2[%c8_184, %c7_185] : memref<16x9xf32, #tpu.memory_space<smem>>
    %383 = vector.broadcast %382 : f32 to vector<8x896xf32>
    %384 = arith.mulf %8, %383 : vector<8x896xf32>
    %385 = arith.addf %381, %384 : vector<8x896xf32>
    %c8_186 = arith.constant 8 : index
    %c8_187 = arith.constant 8 : index
    %386 = memref.load %arg2[%c8_186, %c8_187] : memref<16x9xf32, #tpu.memory_space<smem>>
    %387 = vector.broadcast %386 : f32 to vector<8x896xf32>
    %388 = arith.mulf %9, %387 : vector<8x896xf32>
    %389 = arith.addf %385, %388 : vector<8x896xf32>
    %c8_188 = arith.constant 8 : index
    %390 = memref.load %arg3[%c8_188] : memref<16xf32, #tpu.memory_space<smem>>
    %391 = vector.broadcast %390 : f32 to vector<8x896xf32>
    %392 = arith.addf %389, %391 : vector<8x896xf32>
    %cst_189 = arith.constant 0.000000e+00 : f32
    %393 = vector.broadcast %cst_189 : f32 to vector<8x896xf32>
    %394 = arith.maximumf %392, %393 : vector<8x896xf32>
    %c0_190 = arith.constant 0 : index
    %c7168 = arith.constant 7168 : index
    %395 = vector.load %arg4[%c0_190, %c7168] : memref<10x14336xf32, #tpu.memory_space<vmem>>, vector<10x896xf32>
    %cst_191 = arith.constant dense<0.000000e+00> : vector<8x10xf32>
    %396 = tpu.matmul %394, %395, %cst_191 {dimension_numbers = #tpu.dot_dimension_numbers<[1], [1], [0], [0], [0, 0, 1, 0], [], []>} : vector<8x896xf32>, vector<10x896xf32>, vector<8x10xf32> -> vector<8x10xf32>
    %397 = arith.addf %354, %396 : vector<8x10xf32>
    %c9 = arith.constant 9 : index
    %c0_192 = arith.constant 0 : index
    %398 = memref.load %arg2[%c9, %c0_192] : memref<16x9xf32, #tpu.memory_space<smem>>
    %399 = vector.broadcast %398 : f32 to vector<8x896xf32>
    %400 = arith.mulf %1, %399 : vector<8x896xf32>
    %c9_193 = arith.constant 9 : index
    %c1_194 = arith.constant 1 : index
    %401 = memref.load %arg2[%c9_193, %c1_194] : memref<16x9xf32, #tpu.memory_space<smem>>
    %402 = vector.broadcast %401 : f32 to vector<8x896xf32>
    %403 = arith.mulf %2, %402 : vector<8x896xf32>
    %404 = arith.addf %400, %403 : vector<8x896xf32>
    %c9_195 = arith.constant 9 : index
    %c2_196 = arith.constant 2 : index
    %405 = memref.load %arg2[%c9_195, %c2_196] : memref<16x9xf32, #tpu.memory_space<smem>>
    %406 = vector.broadcast %405 : f32 to vector<8x896xf32>
    %407 = arith.mulf %3, %406 : vector<8x896xf32>
    %408 = arith.addf %404, %407 : vector<8x896xf32>
    %c9_197 = arith.constant 9 : index
    %c3_198 = arith.constant 3 : index
    %409 = memref.load %arg2[%c9_197, %c3_198] : memref<16x9xf32, #tpu.memory_space<smem>>
    %410 = vector.broadcast %409 : f32 to vector<8x896xf32>
    %411 = arith.mulf %4, %410 : vector<8x896xf32>
    %412 = arith.addf %408, %411 : vector<8x896xf32>
    %c9_199 = arith.constant 9 : index
    %c4_200 = arith.constant 4 : index
    %413 = memref.load %arg2[%c9_199, %c4_200] : memref<16x9xf32, #tpu.memory_space<smem>>
    %414 = vector.broadcast %413 : f32 to vector<8x896xf32>
    %415 = arith.mulf %5, %414 : vector<8x896xf32>
    %416 = arith.addf %412, %415 : vector<8x896xf32>
    %c9_201 = arith.constant 9 : index
    %c5_202 = arith.constant 5 : index
    %417 = memref.load %arg2[%c9_201, %c5_202] : memref<16x9xf32, #tpu.memory_space<smem>>
    %418 = vector.broadcast %417 : f32 to vector<8x896xf32>
    %419 = arith.mulf %6, %418 : vector<8x896xf32>
    %420 = arith.addf %416, %419 : vector<8x896xf32>
    %c9_203 = arith.constant 9 : index
    %c6_204 = arith.constant 6 : index
    %421 = memref.load %arg2[%c9_203, %c6_204] : memref<16x9xf32, #tpu.memory_space<smem>>
    %422 = vector.broadcast %421 : f32 to vector<8x896xf32>
    %423 = arith.mulf %7, %422 : vector<8x896xf32>
    %424 = arith.addf %420, %423 : vector<8x896xf32>
    %c9_205 = arith.constant 9 : index
    %c7_206 = arith.constant 7 : index
    %425 = memref.load %arg2[%c9_205, %c7_206] : memref<16x9xf32, #tpu.memory_space<smem>>
    %426 = vector.broadcast %425 : f32 to vector<8x896xf32>
    %427 = arith.mulf %8, %426 : vector<8x896xf32>
    %428 = arith.addf %424, %427 : vector<8x896xf32>
    %c9_207 = arith.constant 9 : index
    %c8_208 = arith.constant 8 : index
    %429 = memref.load %arg2[%c9_207, %c8_208] : memref<16x9xf32, #tpu.memory_space<smem>>
    %430 = vector.broadcast %429 : f32 to vector<8x896xf32>
    %431 = arith.mulf %9, %430 : vector<8x896xf32>
    %432 = arith.addf %428, %431 : vector<8x896xf32>
    %c9_209 = arith.constant 9 : index
    %433 = memref.load %arg3[%c9_209] : memref<16xf32, #tpu.memory_space<smem>>
    %434 = vector.broadcast %433 : f32 to vector<8x896xf32>
    %435 = arith.addf %432, %434 : vector<8x896xf32>
    %cst_210 = arith.constant 0.000000e+00 : f32
    %436 = vector.broadcast %cst_210 : f32 to vector<8x896xf32>
    %437 = arith.maximumf %435, %436 : vector<8x896xf32>
    %c0_211 = arith.constant 0 : index
    %c8064 = arith.constant 8064 : index
    %438 = vector.load %arg4[%c0_211, %c8064] : memref<10x14336xf32, #tpu.memory_space<vmem>>, vector<10x896xf32>
    %cst_212 = arith.constant dense<0.000000e+00> : vector<8x10xf32>
    %439 = tpu.matmul %437, %438, %cst_212 {dimension_numbers = #tpu.dot_dimension_numbers<[1], [1], [0], [0], [0, 0, 1, 0], [], []>} : vector<8x896xf32>, vector<10x896xf32>, vector<8x10xf32> -> vector<8x10xf32>
    %440 = arith.addf %397, %439 : vector<8x10xf32>
    %c10 = arith.constant 10 : index
    %c0_213 = arith.constant 0 : index
    %441 = memref.load %arg2[%c10, %c0_213] : memref<16x9xf32, #tpu.memory_space<smem>>
    %442 = vector.broadcast %441 : f32 to vector<8x896xf32>
    %443 = arith.mulf %1, %442 : vector<8x896xf32>
    %c10_214 = arith.constant 10 : index
    %c1_215 = arith.constant 1 : index
    %444 = memref.load %arg2[%c10_214, %c1_215] : memref<16x9xf32, #tpu.memory_space<smem>>
    %445 = vector.broadcast %444 : f32 to vector<8x896xf32>
    %446 = arith.mulf %2, %445 : vector<8x896xf32>
    %447 = arith.addf %443, %446 : vector<8x896xf32>
    %c10_216 = arith.constant 10 : index
    %c2_217 = arith.constant 2 : index
    %448 = memref.load %arg2[%c10_216, %c2_217] : memref<16x9xf32, #tpu.memory_space<smem>>
    %449 = vector.broadcast %448 : f32 to vector<8x896xf32>
    %450 = arith.mulf %3, %449 : vector<8x896xf32>
    %451 = arith.addf %447, %450 : vector<8x896xf32>
    %c10_218 = arith.constant 10 : index
    %c3_219 = arith.constant 3 : index
    %452 = memref.load %arg2[%c10_218, %c3_219] : memref<16x9xf32, #tpu.memory_space<smem>>
    %453 = vector.broadcast %452 : f32 to vector<8x896xf32>
    %454 = arith.mulf %4, %453 : vector<8x896xf32>
    %455 = arith.addf %451, %454 : vector<8x896xf32>
    %c10_220 = arith.constant 10 : index
    %c4_221 = arith.constant 4 : index
    %456 = memref.load %arg2[%c10_220, %c4_221] : memref<16x9xf32, #tpu.memory_space<smem>>
    %457 = vector.broadcast %456 : f32 to vector<8x896xf32>
    %458 = arith.mulf %5, %457 : vector<8x896xf32>
    %459 = arith.addf %455, %458 : vector<8x896xf32>
    %c10_222 = arith.constant 10 : index
    %c5_223 = arith.constant 5 : index
    %460 = memref.load %arg2[%c10_222, %c5_223] : memref<16x9xf32, #tpu.memory_space<smem>>
    %461 = vector.broadcast %460 : f32 to vector<8x896xf32>
    %462 = arith.mulf %6, %461 : vector<8x896xf32>
    %463 = arith.addf %459, %462 : vector<8x896xf32>
    %c10_224 = arith.constant 10 : index
    %c6_225 = arith.constant 6 : index
    %464 = memref.load %arg2[%c10_224, %c6_225] : memref<16x9xf32, #tpu.memory_space<smem>>
    %465 = vector.broadcast %464 : f32 to vector<8x896xf32>
    %466 = arith.mulf %7, %465 : vector<8x896xf32>
    %467 = arith.addf %463, %466 : vector<8x896xf32>
    %c10_226 = arith.constant 10 : index
    %c7_227 = arith.constant 7 : index
    %468 = memref.load %arg2[%c10_226, %c7_227] : memref<16x9xf32, #tpu.memory_space<smem>>
    %469 = vector.broadcast %468 : f32 to vector<8x896xf32>
    %470 = arith.mulf %8, %469 : vector<8x896xf32>
    %471 = arith.addf %467, %470 : vector<8x896xf32>
    %c10_228 = arith.constant 10 : index
    %c8_229 = arith.constant 8 : index
    %472 = memref.load %arg2[%c10_228, %c8_229] : memref<16x9xf32, #tpu.memory_space<smem>>
    %473 = vector.broadcast %472 : f32 to vector<8x896xf32>
    %474 = arith.mulf %9, %473 : vector<8x896xf32>
    %475 = arith.addf %471, %474 : vector<8x896xf32>
    %c10_230 = arith.constant 10 : index
    %476 = memref.load %arg3[%c10_230] : memref<16xf32, #tpu.memory_space<smem>>
    %477 = vector.broadcast %476 : f32 to vector<8x896xf32>
    %478 = arith.addf %475, %477 : vector<8x896xf32>
    %cst_231 = arith.constant 0.000000e+00 : f32
    %479 = vector.broadcast %cst_231 : f32 to vector<8x896xf32>
    %480 = arith.maximumf %478, %479 : vector<8x896xf32>
    %c0_232 = arith.constant 0 : index
    %c8960 = arith.constant 8960 : index
    %481 = vector.load %arg4[%c0_232, %c8960] : memref<10x14336xf32, #tpu.memory_space<vmem>>, vector<10x896xf32>
    %cst_233 = arith.constant dense<0.000000e+00> : vector<8x10xf32>
    %482 = tpu.matmul %480, %481, %cst_233 {dimension_numbers = #tpu.dot_dimension_numbers<[1], [1], [0], [0], [0, 0, 1, 0], [], []>} : vector<8x896xf32>, vector<10x896xf32>, vector<8x10xf32> -> vector<8x10xf32>
    %483 = arith.addf %440, %482 : vector<8x10xf32>
    %c11 = arith.constant 11 : index
    %c0_234 = arith.constant 0 : index
    %484 = memref.load %arg2[%c11, %c0_234] : memref<16x9xf32, #tpu.memory_space<smem>>
    %485 = vector.broadcast %484 : f32 to vector<8x896xf32>
    %486 = arith.mulf %1, %485 : vector<8x896xf32>
    %c11_235 = arith.constant 11 : index
    %c1_236 = arith.constant 1 : index
    %487 = memref.load %arg2[%c11_235, %c1_236] : memref<16x9xf32, #tpu.memory_space<smem>>
    %488 = vector.broadcast %487 : f32 to vector<8x896xf32>
    %489 = arith.mulf %2, %488 : vector<8x896xf32>
    %490 = arith.addf %486, %489 : vector<8x896xf32>
    %c11_237 = arith.constant 11 : index
    %c2_238 = arith.constant 2 : index
    %491 = memref.load %arg2[%c11_237, %c2_238] : memref<16x9xf32, #tpu.memory_space<smem>>
    %492 = vector.broadcast %491 : f32 to vector<8x896xf32>
    %493 = arith.mulf %3, %492 : vector<8x896xf32>
    %494 = arith.addf %490, %493 : vector<8x896xf32>
    %c11_239 = arith.constant 11 : index
    %c3_240 = arith.constant 3 : index
    %495 = memref.load %arg2[%c11_239, %c3_240] : memref<16x9xf32, #tpu.memory_space<smem>>
    %496 = vector.broadcast %495 : f32 to vector<8x896xf32>
    %497 = arith.mulf %4, %496 : vector<8x896xf32>
    %498 = arith.addf %494, %497 : vector<8x896xf32>
    %c11_241 = arith.constant 11 : index
    %c4_242 = arith.constant 4 : index
    %499 = memref.load %arg2[%c11_241, %c4_242] : memref<16x9xf32, #tpu.memory_space<smem>>
    %500 = vector.broadcast %499 : f32 to vector<8x896xf32>
    %501 = arith.mulf %5, %500 : vector<8x896xf32>
    %502 = arith.addf %498, %501 : vector<8x896xf32>
    %c11_243 = arith.constant 11 : index
    %c5_244 = arith.constant 5 : index
    %503 = memref.load %arg2[%c11_243, %c5_244] : memref<16x9xf32, #tpu.memory_space<smem>>
    %504 = vector.broadcast %503 : f32 to vector<8x896xf32>
    %505 = arith.mulf %6, %504 : vector<8x896xf32>
    %506 = arith.addf %502, %505 : vector<8x896xf32>
    %c11_245 = arith.constant 11 : index
    %c6_246 = arith.constant 6 : index
    %507 = memref.load %arg2[%c11_245, %c6_246] : memref<16x9xf32, #tpu.memory_space<smem>>
    %508 = vector.broadcast %507 : f32 to vector<8x896xf32>
    %509 = arith.mulf %7, %508 : vector<8x896xf32>
    %510 = arith.addf %506, %509 : vector<8x896xf32>
    %c11_247 = arith.constant 11 : index
    %c7_248 = arith.constant 7 : index
    %511 = memref.load %arg2[%c11_247, %c7_248] : memref<16x9xf32, #tpu.memory_space<smem>>
    %512 = vector.broadcast %511 : f32 to vector<8x896xf32>
    %513 = arith.mulf %8, %512 : vector<8x896xf32>
    %514 = arith.addf %510, %513 : vector<8x896xf32>
    %c11_249 = arith.constant 11 : index
    %c8_250 = arith.constant 8 : index
    %515 = memref.load %arg2[%c11_249, %c8_250] : memref<16x9xf32, #tpu.memory_space<smem>>
    %516 = vector.broadcast %515 : f32 to vector<8x896xf32>
    %517 = arith.mulf %9, %516 : vector<8x896xf32>
    %518 = arith.addf %514, %517 : vector<8x896xf32>
    %c11_251 = arith.constant 11 : index
    %519 = memref.load %arg3[%c11_251] : memref<16xf32, #tpu.memory_space<smem>>
    %520 = vector.broadcast %519 : f32 to vector<8x896xf32>
    %521 = arith.addf %518, %520 : vector<8x896xf32>
    %cst_252 = arith.constant 0.000000e+00 : f32
    %522 = vector.broadcast %cst_252 : f32 to vector<8x896xf32>
    %523 = arith.maximumf %521, %522 : vector<8x896xf32>
    %c0_253 = arith.constant 0 : index
    %c9856 = arith.constant 9856 : index
    %524 = vector.load %arg4[%c0_253, %c9856] : memref<10x14336xf32, #tpu.memory_space<vmem>>, vector<10x896xf32>
    %cst_254 = arith.constant dense<0.000000e+00> : vector<8x10xf32>
    %525 = tpu.matmul %523, %524, %cst_254 {dimension_numbers = #tpu.dot_dimension_numbers<[1], [1], [0], [0], [0, 0, 1, 0], [], []>} : vector<8x896xf32>, vector<10x896xf32>, vector<8x10xf32> -> vector<8x10xf32>
    %526 = arith.addf %483, %525 : vector<8x10xf32>
    %c12 = arith.constant 12 : index
    %c0_255 = arith.constant 0 : index
    %527 = memref.load %arg2[%c12, %c0_255] : memref<16x9xf32, #tpu.memory_space<smem>>
    %528 = vector.broadcast %527 : f32 to vector<8x896xf32>
    %529 = arith.mulf %1, %528 : vector<8x896xf32>
    %c12_256 = arith.constant 12 : index
    %c1_257 = arith.constant 1 : index
    %530 = memref.load %arg2[%c12_256, %c1_257] : memref<16x9xf32, #tpu.memory_space<smem>>
    %531 = vector.broadcast %530 : f32 to vector<8x896xf32>
    %532 = arith.mulf %2, %531 : vector<8x896xf32>
    %533 = arith.addf %529, %532 : vector<8x896xf32>
    %c12_258 = arith.constant 12 : index
    %c2_259 = arith.constant 2 : index
    %534 = memref.load %arg2[%c12_258, %c2_259] : memref<16x9xf32, #tpu.memory_space<smem>>
    %535 = vector.broadcast %534 : f32 to vector<8x896xf32>
    %536 = arith.mulf %3, %535 : vector<8x896xf32>
    %537 = arith.addf %533, %536 : vector<8x896xf32>
    %c12_260 = arith.constant 12 : index
    %c3_261 = arith.constant 3 : index
    %538 = memref.load %arg2[%c12_260, %c3_261] : memref<16x9xf32, #tpu.memory_space<smem>>
    %539 = vector.broadcast %538 : f32 to vector<8x896xf32>
    %540 = arith.mulf %4, %539 : vector<8x896xf32>
    %541 = arith.addf %537, %540 : vector<8x896xf32>
    %c12_262 = arith.constant 12 : index
    %c4_263 = arith.constant 4 : index
    %542 = memref.load %arg2[%c12_262, %c4_263] : memref<16x9xf32, #tpu.memory_space<smem>>
    %543 = vector.broadcast %542 : f32 to vector<8x896xf32>
    %544 = arith.mulf %5, %543 : vector<8x896xf32>
    %545 = arith.addf %541, %544 : vector<8x896xf32>
    %c12_264 = arith.constant 12 : index
    %c5_265 = arith.constant 5 : index
    %546 = memref.load %arg2[%c12_264, %c5_265] : memref<16x9xf32, #tpu.memory_space<smem>>
    %547 = vector.broadcast %546 : f32 to vector<8x896xf32>
    %548 = arith.mulf %6, %547 : vector<8x896xf32>
    %549 = arith.addf %545, %548 : vector<8x896xf32>
    %c12_266 = arith.constant 12 : index
    %c6_267 = arith.constant 6 : index
    %550 = memref.load %arg2[%c12_266, %c6_267] : memref<16x9xf32, #tpu.memory_space<smem>>
    %551 = vector.broadcast %550 : f32 to vector<8x896xf32>
    %552 = arith.mulf %7, %551 : vector<8x896xf32>
    %553 = arith.addf %549, %552 : vector<8x896xf32>
    %c12_268 = arith.constant 12 : index
    %c7_269 = arith.constant 7 : index
    %554 = memref.load %arg2[%c12_268, %c7_269] : memref<16x9xf32, #tpu.memory_space<smem>>
    %555 = vector.broadcast %554 : f32 to vector<8x896xf32>
    %556 = arith.mulf %8, %555 : vector<8x896xf32>
    %557 = arith.addf %553, %556 : vector<8x896xf32>
    %c12_270 = arith.constant 12 : index
    %c8_271 = arith.constant 8 : index
    %558 = memref.load %arg2[%c12_270, %c8_271] : memref<16x9xf32, #tpu.memory_space<smem>>
    %559 = vector.broadcast %558 : f32 to vector<8x896xf32>
    %560 = arith.mulf %9, %559 : vector<8x896xf32>
    %561 = arith.addf %557, %560 : vector<8x896xf32>
    %c12_272 = arith.constant 12 : index
    %562 = memref.load %arg3[%c12_272] : memref<16xf32, #tpu.memory_space<smem>>
    %563 = vector.broadcast %562 : f32 to vector<8x896xf32>
    %564 = arith.addf %561, %563 : vector<8x896xf32>
    %cst_273 = arith.constant 0.000000e+00 : f32
    %565 = vector.broadcast %cst_273 : f32 to vector<8x896xf32>
    %566 = arith.maximumf %564, %565 : vector<8x896xf32>
    %c0_274 = arith.constant 0 : index
    %c10752 = arith.constant 10752 : index
    %567 = vector.load %arg4[%c0_274, %c10752] : memref<10x14336xf32, #tpu.memory_space<vmem>>, vector<10x896xf32>
    %cst_275 = arith.constant dense<0.000000e+00> : vector<8x10xf32>
    %568 = tpu.matmul %566, %567, %cst_275 {dimension_numbers = #tpu.dot_dimension_numbers<[1], [1], [0], [0], [0, 0, 1, 0], [], []>} : vector<8x896xf32>, vector<10x896xf32>, vector<8x10xf32> -> vector<8x10xf32>
    %569 = arith.addf %526, %568 : vector<8x10xf32>
    %c13 = arith.constant 13 : index
    %c0_276 = arith.constant 0 : index
    %570 = memref.load %arg2[%c13, %c0_276] : memref<16x9xf32, #tpu.memory_space<smem>>
    %571 = vector.broadcast %570 : f32 to vector<8x896xf32>
    %572 = arith.mulf %1, %571 : vector<8x896xf32>
    %c13_277 = arith.constant 13 : index
    %c1_278 = arith.constant 1 : index
    %573 = memref.load %arg2[%c13_277, %c1_278] : memref<16x9xf32, #tpu.memory_space<smem>>
    %574 = vector.broadcast %573 : f32 to vector<8x896xf32>
    %575 = arith.mulf %2, %574 : vector<8x896xf32>
    %576 = arith.addf %572, %575 : vector<8x896xf32>
    %c13_279 = arith.constant 13 : index
    %c2_280 = arith.constant 2 : index
    %577 = memref.load %arg2[%c13_279, %c2_280] : memref<16x9xf32, #tpu.memory_space<smem>>
    %578 = vector.broadcast %577 : f32 to vector<8x896xf32>
    %579 = arith.mulf %3, %578 : vector<8x896xf32>
    %580 = arith.addf %576, %579 : vector<8x896xf32>
    %c13_281 = arith.constant 13 : index
    %c3_282 = arith.constant 3 : index
    %581 = memref.load %arg2[%c13_281, %c3_282] : memref<16x9xf32, #tpu.memory_space<smem>>
    %582 = vector.broadcast %581 : f32 to vector<8x896xf32>
    %583 = arith.mulf %4, %582 : vector<8x896xf32>
    %584 = arith.addf %580, %583 : vector<8x896xf32>
    %c13_283 = arith.constant 13 : index
    %c4_284 = arith.constant 4 : index
    %585 = memref.load %arg2[%c13_283, %c4_284] : memref<16x9xf32, #tpu.memory_space<smem>>
    %586 = vector.broadcast %585 : f32 to vector<8x896xf32>
    %587 = arith.mulf %5, %586 : vector<8x896xf32>
    %588 = arith.addf %584, %587 : vector<8x896xf32>
    %c13_285 = arith.constant 13 : index
    %c5_286 = arith.constant 5 : index
    %589 = memref.load %arg2[%c13_285, %c5_286] : memref<16x9xf32, #tpu.memory_space<smem>>
    %590 = vector.broadcast %589 : f32 to vector<8x896xf32>
    %591 = arith.mulf %6, %590 : vector<8x896xf32>
    %592 = arith.addf %588, %591 : vector<8x896xf32>
    %c13_287 = arith.constant 13 : index
    %c6_288 = arith.constant 6 : index
    %593 = memref.load %arg2[%c13_287, %c6_288] : memref<16x9xf32, #tpu.memory_space<smem>>
    %594 = vector.broadcast %593 : f32 to vector<8x896xf32>
    %595 = arith.mulf %7, %594 : vector<8x896xf32>
    %596 = arith.addf %592, %595 : vector<8x896xf32>
    %c13_289 = arith.constant 13 : index
    %c7_290 = arith.constant 7 : index
    %597 = memref.load %arg2[%c13_289, %c7_290] : memref<16x9xf32, #tpu.memory_space<smem>>
    %598 = vector.broadcast %597 : f32 to vector<8x896xf32>
    %599 = arith.mulf %8, %598 : vector<8x896xf32>
    %600 = arith.addf %596, %599 : vector<8x896xf32>
    %c13_291 = arith.constant 13 : index
    %c8_292 = arith.constant 8 : index
    %601 = memref.load %arg2[%c13_291, %c8_292] : memref<16x9xf32, #tpu.memory_space<smem>>
    %602 = vector.broadcast %601 : f32 to vector<8x896xf32>
    %603 = arith.mulf %9, %602 : vector<8x896xf32>
    %604 = arith.addf %600, %603 : vector<8x896xf32>
    %c13_293 = arith.constant 13 : index
    %605 = memref.load %arg3[%c13_293] : memref<16xf32, #tpu.memory_space<smem>>
    %606 = vector.broadcast %605 : f32 to vector<8x896xf32>
    %607 = arith.addf %604, %606 : vector<8x896xf32>
    %cst_294 = arith.constant 0.000000e+00 : f32
    %608 = vector.broadcast %cst_294 : f32 to vector<8x896xf32>
    %609 = arith.maximumf %607, %608 : vector<8x896xf32>
    %c0_295 = arith.constant 0 : index
    %c11648 = arith.constant 11648 : index
    %610 = vector.load %arg4[%c0_295, %c11648] : memref<10x14336xf32, #tpu.memory_space<vmem>>, vector<10x896xf32>
    %cst_296 = arith.constant dense<0.000000e+00> : vector<8x10xf32>
    %611 = tpu.matmul %609, %610, %cst_296 {dimension_numbers = #tpu.dot_dimension_numbers<[1], [1], [0], [0], [0, 0, 1, 0], [], []>} : vector<8x896xf32>, vector<10x896xf32>, vector<8x10xf32> -> vector<8x10xf32>
    %612 = arith.addf %569, %611 : vector<8x10xf32>
    %c14 = arith.constant 14 : index
    %c0_297 = arith.constant 0 : index
    %613 = memref.load %arg2[%c14, %c0_297] : memref<16x9xf32, #tpu.memory_space<smem>>
    %614 = vector.broadcast %613 : f32 to vector<8x896xf32>
    %615 = arith.mulf %1, %614 : vector<8x896xf32>
    %c14_298 = arith.constant 14 : index
    %c1_299 = arith.constant 1 : index
    %616 = memref.load %arg2[%c14_298, %c1_299] : memref<16x9xf32, #tpu.memory_space<smem>>
    %617 = vector.broadcast %616 : f32 to vector<8x896xf32>
    %618 = arith.mulf %2, %617 : vector<8x896xf32>
    %619 = arith.addf %615, %618 : vector<8x896xf32>
    %c14_300 = arith.constant 14 : index
    %c2_301 = arith.constant 2 : index
    %620 = memref.load %arg2[%c14_300, %c2_301] : memref<16x9xf32, #tpu.memory_space<smem>>
    %621 = vector.broadcast %620 : f32 to vector<8x896xf32>
    %622 = arith.mulf %3, %621 : vector<8x896xf32>
    %623 = arith.addf %619, %622 : vector<8x896xf32>
    %c14_302 = arith.constant 14 : index
    %c3_303 = arith.constant 3 : index
    %624 = memref.load %arg2[%c14_302, %c3_303] : memref<16x9xf32, #tpu.memory_space<smem>>
    %625 = vector.broadcast %624 : f32 to vector<8x896xf32>
    %626 = arith.mulf %4, %625 : vector<8x896xf32>
    %627 = arith.addf %623, %626 : vector<8x896xf32>
    %c14_304 = arith.constant 14 : index
    %c4_305 = arith.constant 4 : index
    %628 = memref.load %arg2[%c14_304, %c4_305] : memref<16x9xf32, #tpu.memory_space<smem>>
    %629 = vector.broadcast %628 : f32 to vector<8x896xf32>
    %630 = arith.mulf %5, %629 : vector<8x896xf32>
    %631 = arith.addf %627, %630 : vector<8x896xf32>
    %c14_306 = arith.constant 14 : index
    %c5_307 = arith.constant 5 : index
    %632 = memref.load %arg2[%c14_306, %c5_307] : memref<16x9xf32, #tpu.memory_space<smem>>
    %633 = vector.broadcast %632 : f32 to vector<8x896xf32>
    %634 = arith.mulf %6, %633 : vector<8x896xf32>
    %635 = arith.addf %631, %634 : vector<8x896xf32>
    %c14_308 = arith.constant 14 : index
    %c6_309 = arith.constant 6 : index
    %636 = memref.load %arg2[%c14_308, %c6_309] : memref<16x9xf32, #tpu.memory_space<smem>>
    %637 = vector.broadcast %636 : f32 to vector<8x896xf32>
    %638 = arith.mulf %7, %637 : vector<8x896xf32>
    %639 = arith.addf %635, %638 : vector<8x896xf32>
    %c14_310 = arith.constant 14 : index
    %c7_311 = arith.constant 7 : index
    %640 = memref.load %arg2[%c14_310, %c7_311] : memref<16x9xf32, #tpu.memory_space<smem>>
    %641 = vector.broadcast %640 : f32 to vector<8x896xf32>
    %642 = arith.mulf %8, %641 : vector<8x896xf32>
    %643 = arith.addf %639, %642 : vector<8x896xf32>
    %c14_312 = arith.constant 14 : index
    %c8_313 = arith.constant 8 : index
    %644 = memref.load %arg2[%c14_312, %c8_313] : memref<16x9xf32, #tpu.memory_space<smem>>
    %645 = vector.broadcast %644 : f32 to vector<8x896xf32>
    %646 = arith.mulf %9, %645 : vector<8x896xf32>
    %647 = arith.addf %643, %646 : vector<8x896xf32>
    %c14_314 = arith.constant 14 : index
    %648 = memref.load %arg3[%c14_314] : memref<16xf32, #tpu.memory_space<smem>>
    %649 = vector.broadcast %648 : f32 to vector<8x896xf32>
    %650 = arith.addf %647, %649 : vector<8x896xf32>
    %cst_315 = arith.constant 0.000000e+00 : f32
    %651 = vector.broadcast %cst_315 : f32 to vector<8x896xf32>
    %652 = arith.maximumf %650, %651 : vector<8x896xf32>
    %c0_316 = arith.constant 0 : index
    %c12544 = arith.constant 12544 : index
    %653 = vector.load %arg4[%c0_316, %c12544] : memref<10x14336xf32, #tpu.memory_space<vmem>>, vector<10x896xf32>
    %cst_317 = arith.constant dense<0.000000e+00> : vector<8x10xf32>
    %654 = tpu.matmul %652, %653, %cst_317 {dimension_numbers = #tpu.dot_dimension_numbers<[1], [1], [0], [0], [0, 0, 1, 0], [], []>} : vector<8x896xf32>, vector<10x896xf32>, vector<8x10xf32> -> vector<8x10xf32>
    %655 = arith.addf %612, %654 : vector<8x10xf32>
    %c15 = arith.constant 15 : index
    %c0_318 = arith.constant 0 : index
    %656 = memref.load %arg2[%c15, %c0_318] : memref<16x9xf32, #tpu.memory_space<smem>>
    %657 = vector.broadcast %656 : f32 to vector<8x896xf32>
    %658 = arith.mulf %1, %657 : vector<8x896xf32>
    %c15_319 = arith.constant 15 : index
    %c1_320 = arith.constant 1 : index
    %659 = memref.load %arg2[%c15_319, %c1_320] : memref<16x9xf32, #tpu.memory_space<smem>>
    %660 = vector.broadcast %659 : f32 to vector<8x896xf32>
    %661 = arith.mulf %2, %660 : vector<8x896xf32>
    %662 = arith.addf %658, %661 : vector<8x896xf32>
    %c15_321 = arith.constant 15 : index
    %c2_322 = arith.constant 2 : index
    %663 = memref.load %arg2[%c15_321, %c2_322] : memref<16x9xf32, #tpu.memory_space<smem>>
    %664 = vector.broadcast %663 : f32 to vector<8x896xf32>
    %665 = arith.mulf %3, %664 : vector<8x896xf32>
    %666 = arith.addf %662, %665 : vector<8x896xf32>
    %c15_323 = arith.constant 15 : index
    %c3_324 = arith.constant 3 : index
    %667 = memref.load %arg2[%c15_323, %c3_324] : memref<16x9xf32, #tpu.memory_space<smem>>
    %668 = vector.broadcast %667 : f32 to vector<8x896xf32>
    %669 = arith.mulf %4, %668 : vector<8x896xf32>
    %670 = arith.addf %666, %669 : vector<8x896xf32>
    %c15_325 = arith.constant 15 : index
    %c4_326 = arith.constant 4 : index
    %671 = memref.load %arg2[%c15_325, %c4_326] : memref<16x9xf32, #tpu.memory_space<smem>>
    %672 = vector.broadcast %671 : f32 to vector<8x896xf32>
    %673 = arith.mulf %5, %672 : vector<8x896xf32>
    %674 = arith.addf %670, %673 : vector<8x896xf32>
    %c15_327 = arith.constant 15 : index
    %c5_328 = arith.constant 5 : index
    %675 = memref.load %arg2[%c15_327, %c5_328] : memref<16x9xf32, #tpu.memory_space<smem>>
    %676 = vector.broadcast %675 : f32 to vector<8x896xf32>
    %677 = arith.mulf %6, %676 : vector<8x896xf32>
    %678 = arith.addf %674, %677 : vector<8x896xf32>
    %c15_329 = arith.constant 15 : index
    %c6_330 = arith.constant 6 : index
    %679 = memref.load %arg2[%c15_329, %c6_330] : memref<16x9xf32, #tpu.memory_space<smem>>
    %680 = vector.broadcast %679 : f32 to vector<8x896xf32>
    %681 = arith.mulf %7, %680 : vector<8x896xf32>
    %682 = arith.addf %678, %681 : vector<8x896xf32>
    %c15_331 = arith.constant 15 : index
    %c7_332 = arith.constant 7 : index
    %683 = memref.load %arg2[%c15_331, %c7_332] : memref<16x9xf32, #tpu.memory_space<smem>>
    %684 = vector.broadcast %683 : f32 to vector<8x896xf32>
    %685 = arith.mulf %8, %684 : vector<8x896xf32>
    %686 = arith.addf %682, %685 : vector<8x896xf32>
    %c15_333 = arith.constant 15 : index
    %c8_334 = arith.constant 8 : index
    %687 = memref.load %arg2[%c15_333, %c8_334] : memref<16x9xf32, #tpu.memory_space<smem>>
    %688 = vector.broadcast %687 : f32 to vector<8x896xf32>
    %689 = arith.mulf %9, %688 : vector<8x896xf32>
    %690 = arith.addf %686, %689 : vector<8x896xf32>
    %c15_335 = arith.constant 15 : index
    %691 = memref.load %arg3[%c15_335] : memref<16xf32, #tpu.memory_space<smem>>
    %692 = vector.broadcast %691 : f32 to vector<8x896xf32>
    %693 = arith.addf %690, %692 : vector<8x896xf32>
    %cst_336 = arith.constant 0.000000e+00 : f32
    %694 = vector.broadcast %cst_336 : f32 to vector<8x896xf32>
    %695 = arith.maximumf %693, %694 : vector<8x896xf32>
    %c0_337 = arith.constant 0 : index
    %c13440 = arith.constant 13440 : index
    %696 = vector.load %arg4[%c0_337, %c13440] : memref<10x14336xf32, #tpu.memory_space<vmem>>, vector<10x896xf32>
    %cst_338 = arith.constant dense<0.000000e+00> : vector<8x10xf32>
    %697 = tpu.matmul %695, %696, %cst_338 {dimension_numbers = #tpu.dot_dimension_numbers<[1], [1], [0], [0], [0, 0, 1, 0], [], []>} : vector<8x896xf32>, vector<10x896xf32>, vector<8x10xf32> -> vector<8x10xf32>
    %698 = arith.addf %655, %697 : vector<8x10xf32>
    %c0_339 = arith.constant 0 : index
    %c0_340 = arith.constant 0 : index
    %699 = vector.load %arg5[%c0_339, %c0_340] : memref<1x10xf32, #tpu.memory_space<vmem>>, vector<1x10xf32>
    %700 = vector.broadcast %699 : vector<1x10xf32> to vector<8x10xf32>
    %701 = arith.addf %698, %700 : vector<8x10xf32>
    %c0_341 = arith.constant 0 : index
    %c0_342 = arith.constant 0 : index
    %702 = vector.load %arg6[%c0_341, %c0_342] : memref<8x10xf32, #tpu.memory_space<vmem>>, vector<8x10xf32>
    tpu.vector_store %arg6[%c0_341, %c0_342], %701 {strides = array<i32>} : memref<8x10xf32, #tpu.memory_space<vmem>>, vector<8x10xf32>,
    return
  }
  func.func @transform_0(%arg0: i32) -> (i32, i32) {
    %c0_i32 = arith.constant 0 : i32
    %c0_i32_0 = arith.constant 0 : i32
    return %arg0, %c0_i32 : i32, i32
  }
  func.func @transform_1(%arg0: i32) -> (i32, i32) {
    %c0_i32 = arith.constant 0 : i32
    %c0_i32_0 = arith.constant 0 : i32
    %c0_i32_1 = arith.constant 0 : i32
    return %c0_i32, %c0_i32_0 : i32, i32
  }
  func.func @transform_2(%arg0: i32) -> i32 {
    %c0_i32 = arith.constant 0 : i32
    %c0_i32_0 = arith.constant 0 : i32
    return %c0_i32 : i32
  }
  func.func @transform_3(%arg0: i32) -> (i32, i32) {
    %c0_i32 = arith.constant 0 : i32
    %c0_i32_0 = arith.constant 0 : i32
    %c0_i32_1 = arith.constant 0 : i32
    return %c0_i32, %c0_i32_0 : i32, i32
  }
  func.func @transform_4(%arg0: i32) -> (i32, i32) {
    %c0_i32 = arith.constant 0 : i32
    %c0_i32_0 = arith.constant 0 : i32
    %c0_i32_1 = arith.constant 0 : i32
    return %c0_i32, %c0_i32_0 : i32, i32
  }
  func.func @transform_5(%arg0: i32) -> (i32, i32) {
    %c0_i32 = arith.constant 0 : i32
    %c0_i32_0 = arith.constant 0 : i32
    return %arg0, %c0_i32 : i32, i32
  }
}

</mosaic_0001>

<llo_original>
// kernel: cnn_forward.1
$region0: #{cnn_forward.1}
  #allocation0 [shape = 'u32[]', space=smem, size = 0x4, offset = 0x4, fixed_abs, tag = 'smem constant byte address 0x4 - core index']
  #allocation1 [shape = 'u32[144,128]{1,0:T(1,128)}', space=vmem, size = 0x12000, scoped, tag = 'internal scratch']
  %s0 = inlined_call_operand.vmem [shape: f32[8,1024], index: 0, kind: input, shape index: {}]
  %s1 = inlined_call_operand.vmem [shape: f32[16,9], index: 1, kind: input, shape index: {}]
  %s2 = inlined_call_operand.vmem [shape: f32[16], index: 2, kind: input, shape index: {}]
  %s3 = inlined_call_operand.hbm [shape: f32[10,14336], index: 3, kind: input, shape index: {}]
  %s4 = inlined_call_operand.vmem [shape: f32[1,10], index: 4, kind: input, shape index: {}]
  %s5 = inlined_call_operand.vmem [shape: f32[8,10], index: 5, kind: output, shape index: {}]
  %s6 = sld [smem:[#allocation0]]
  $region42: #{cnn_forward.1} parent=0
    _
  %s8 = ssub.s32 1, %s6
  %s9 = scalar_select 0, %s8, %s6
  $region1: #{cnn_forward.1} parent=0
    #allocation2 [shape = 'u8[8192]{0}', space=smem, size = 0x2000, scoped, tag = 'input window, operand 1, single buffered']
    #allocation3 [shape = 's32[1]{0}', space=sflag, size = 0x4, scoped, tag = 'scoped memory for cnn_forward.1']
    #allocation4 [shape = 's32[1]{0}', space=sflag, size = 0x4, scoped, tag = 'scoped memory for cnn_forward.1']
    #allocation5 [shape = 'u8[512]{0}', space=smem, size = 0x200, scoped, tag = 'input window, operand 2, single buffered']
    #allocation6 [shape = 's32[1]{0}', space=sflag, size = 0x4, scoped, tag = 'scoped memory for cnn_forward.1']
    #allocation7 [shape = 'u8[917504]{0}', space=vmem, size = 0xe0000, scoped, tag = 'input window, operand 3, single buffered']
    %10 = vsyncpa [#allocation4], 0
    %11 = vsyncpa [#allocation6], 0
    %12 = vsyncpa [#allocation3], 0
    // Predicated region
    $region2: #{cnn_forward.1} parent=1 // pred_check
      _
    $region3: #{cnn_forward.1} parent=1 // pred_check_branch
      %14 = sbr.rel (0) target = $region5
    $region4: #{cnn_forward.1} parent=1 // pred_region
      _
    $region5: #{cnn_forward.1} parent=1 // pred_fallthru
      _
    // Predicated region
    $region6: #{cnn_forward.1} parent=1 // pred_check
      _
    $region7: #{cnn_forward.1} parent=1 // pred_check_branch
      %16 = sbr.rel (0) target = $region9
    $region8: #{cnn_forward.1} parent=1 // pred_region
      %s18 = ssub.s32 256, 256
      %19 = vsyncadd [#allocation4], %s18
      %s20 = sshll.u32 %s1, 4
      %s21 = int_to_ptr.vmem [resolvable:$true] %s20
      %26 = dma.vmem_to_smem %s21, 256, [#allocation2], [#allocation4], 128, 128, 8
    $region9: #{cnn_forward.1} parent=1 // pred_fallthru
      _
    // Predicated region
    $region10: #{cnn_forward.1} parent=1 // pred_check
      _
    $region11: #{cnn_forward.1} parent=1 // pred_check_branch
      %28 = sbr.rel (0) target = $region13
    $region12: #{cnn_forward.1} parent=1 // pred_region
      %s30 = ssub.s32 16, 16
      %31 = vsyncadd [#allocation6], %s30
      %s33 = sshll.u32 %s2, 4
      %s34 = int_to_ptr.vmem [resolvable:$true] %s33
      %36 = dma.vmem_to_smem %s34, 16, [#allocation5], [#allocation6]
    $region13: #{cnn_forward.1} parent=1 // pred_fallthru
      _
    // Predicated region
    $region14: #{cnn_forward.1} parent=1 // pred_check
      _
    $region15: #{cnn_forward.1} parent=1 // pred_check_branch
      %38 = sbr.rel (0) target = $region17
    $region16: #{cnn_forward.1} parent=1 // pred_region
      %s40 = ssub.s32 28672, 28672
      %41 = vsyncadd [#allocation3], %s40
      %s42 = sshll.u32 [#allocation7], 4
      %s43 = int_to_ptr.vmem [resolvable:$true] %s42
      %48 = dma.hbm_to_vmem [thread:$0]  %s3, 28672, %s43, [#allocation3], 14336, 14336, 896
    $region17: #{cnn_forward.1} parent=1 // pred_fallthru
      _
    // Predicated region
    $region18: #{cnn_forward.1} parent=1 // pred_check
      _
    $region19: #{cnn_forward.1} parent=1 // pred_check_branch
      %50 = sbr.rel (0) target = $region21
    $region20: #{cnn_forward.1} parent=1 // pred_region
      _
    $region21: #{cnn_forward.1} parent=1 // pred_fallthru
      _
    // Predicated region
    $region22: #{cnn_forward.1} parent=1 // pred_check
      _
    $region23: #{cnn_forward.1} parent=1 // pred_check_branch
      %52 = sbr.rel (0) target = $region25
    $region24: #{cnn_forward.1} parent=1 // pred_region
      %53 = dma.done [#allocation4], 256
    $region25: #{cnn_forward.1} parent=1 // pred_fallthru
      _
    // Predicated region
    $region26: #{cnn_forward.1} parent=1 // pred_check
      _
    $region27: #{cnn_forward.1} parent=1 // pred_check_branch
      %55 = sbr.rel (0) target = $region29
    $region28: #{cnn_forward.1} parent=1 // pred_region
      %56 = dma.done [#allocation6], 16
    $region29: #{cnn_forward.1} parent=1 // pred_fallthru
      _
    // Predicated region
    $region30: #{cnn_forward.1} parent=1 // pred_check
      _
    $region31: #{cnn_forward.1} parent=1 // pred_check_branch
      %58 = sbr.rel (0) target = $region33
    $region32: #{cnn_forward.1} parent=1 // pred_region
      %59 = dma.done [#allocation3], 28672
    $region33: #{cnn_forward.1} parent=1 // pred_fallthru
      _
    %60 = sfence
    %v61 = vld [vmem:[%s0] sm:$0xff]
    %v62 = vld [vmem:[%s0 + $0x8] sm:$0xff]
    %v63 = vld [vmem:[%s0 + $0x10] sm:$0xff]
    %v64 = vld [vmem:[%s0 + $0x18] sm:$0xff]
    %v65 = vld [vmem:[%s0 + $0x20] sm:$0xff]
    %v66 = vld [vmem:[%s0 + $0x28] sm:$0xff]
    %v67 = vld [vmem:[%s0 + $0x30] sm:$0xff]
    %v68 = vld [vmem:[%s0 + $0x38] sm:$0xff]
    %s69 = sld [smem:[#allocation2]]
    %v70 = vstv %s69
    %v71 = vmul.f32 %v61, %v70
    %v72 = vmul.f32 %v62, %v70
    %v73 = vmul.f32 %v63, %v70
    %v74 = vmul.f32 %v64, %v70
    %v75 = vmul.f32 %v65, %v70
    %v76 = vmul.f32 %v66, %v70
    %v77 = vmul.f32 %v67, %v70
    %s78 = sld [smem:[#allocation2 + $0x1]]
    %v79 = vstv %s78
    %v80 = vmul.f32 %v61, %v79
    %v81 = vmul.f32 %v62, %v79
    %v82 = vmul.f32 %v63, %v79
    %v83 = vmul.f32 %v64, %v79
    %v84 = vmul.f32 %v65, %v79
    %v85 = vmul.f32 %v66, %v79
    %v86 = vmul.f32 %v67, %v79
    %v87 = vmul.f32 %v68, %v79
    %96 = vrot.lane.b32.xlu0 %v80, 127
    %v97 = vpop.permute.xlu0 %96
    %98 = vrot.lane.b32.xlu0 %v81, 127
    %v99 = vpop.permute.xlu0 %98
    %100 = vrot.lane.b32.xlu0 %v82, 127
    %v101 = vpop.permute.xlu0 %100
    %102 = vrot.lane.b32.xlu0 %v83, 127
    %v103 = vpop.permute.xlu0 %102
    %104 = vrot.lane.b32.xlu0 %v84, 127
    %v105 = vpop.permute.xlu0 %104
    %106 = vrot.lane.b32.xlu0 %v85, 127
    %v107 = vpop.permute.xlu0 %106
    %108 = vrot.lane.b32.xlu0 %v86, 127
    %v109 = vpop.permute.xlu0 %108
    %110 = vrot.lane.b32.xlu0 %v87, 127
    %v111 = vpop.permute.xlu0 %110
    %vm112 = vcmask 1039360
    %v113 = vsel %vm112, %v97, %v99
    %v114 = vsel %vm112, %v99, %v101
    %v115 = vsel %vm112, %v101, %v103
    %v116 = vsel %vm112, %v103, %v105
    %v117 = vsel %vm112, %v105, %v107
    %v118 = vsel %vm112, %v107, %v109
    %v119 = vsel %vm112, %v109, %v111
    %v127 = vadd.f32 %v71, %v113
    %v128 = vadd.f32 %v72, %v114
    %v129 = vadd.f32 %v73, %v115
    %v130 = vadd.f32 %v74, %v116
    %v131 = vadd.f32 %v75, %v117
    %v132 = vadd.f32 %v76, %v118
    %v133 = vadd.f32 %v77, %v119
    %s134 = sld [smem:[#allocation2 + $0x2]]
    %v135 = vstv %s134
    %v136 = vmul.f32 %v61, %v135
    %v137 = vmul.f32 %v62, %v135
    %v138 = vmul.f32 %v63, %v135
    %v139 = vmul.f32 %v64, %v135
    %v140 = vmul.f32 %v65, %v135
    %v141 = vmul.f32 %v66, %v135
    %v142 = vmul.f32 %v67, %v135
    %v143 = vmul.f32 %v68, %v135
    %152 = vrot.lane.b32.xlu0 %v136, 126
    %v153 = vpop.permute.xlu0 %152
    %154 = vrot.lane.b32.xlu0 %v137, 126
    %v155 = vpop.permute.xlu0 %154
    %156 = vrot.lane.b32.xlu0 %v138, 126
    %v157 = vpop.permute.xlu0 %156
    %158 = vrot.lane.b32.xlu0 %v139, 126
    %v159 = vpop.permute.xlu0 %158
    %160 = vrot.lane.b32.xlu0 %v140, 126
    %v161 = vpop.permute.xlu0 %160
    %162 = vrot.lane.b32.xlu0 %v141, 126
    %v163 = vpop.permute.xlu0 %162
    %164 = vrot.lane.b32.xlu0 %v142, 126
    %v165 = vpop.permute.xlu0 %164
    %166 = vrot.lane.b32.xlu0 %v143, 126
    %v167 = vpop.permute.xlu0 %166
    %vm168 = vcmask 1031168
    %v169 = vsel %vm168, %v153, %v155
    %v170 = vsel %vm168, %v155, %v157
    %v171 = vsel %vm168, %v157, %v159
    %v172 = vsel %vm168, %v159, %v161
    %v173 = vsel %vm168, %v161, %v163
    %v174 = vsel %vm168, %v163, %v165
    %v175 = vsel %vm168, %v165, %v167
    %v183 = vadd.f32 %v127, %v169
    %v184 = vadd.f32 %v128, %v170
    %v185 = vadd.f32 %v129, %v171
    %v186 = vadd.f32 %v130, %v172
    %v187 = vadd.f32 %v131, %v173
    %v188 = vadd.f32 %v132, %v174
    %v189 = vadd.f32 %v133, %v175
    %s190 = sld [smem:[#allocation2 + $0x3]]
    %v191 = vstv %s190
    %v192 = vmul.f32 %v61, %v191
    %v193 = vmul.f32 %v62, %v191
    %v194 = vmul.f32 %v63, %v191
    %v195 = vmul.f32 %v64, %v191
    %v196 = vmul.f32 %v65, %v191
    %v197 = vmul.f32 %v66, %v191
    %v198 = vmul.f32 %v67, %v191
    %v199 = vmul.f32 %v68, %v191
    %208 = vrot.lane.b32.xlu0 %v192, 100
    %v209 = vpop.permute.xlu0 %208
    %210 = vrot.lane.b32.xlu0 %v193, 100
    %v211 = vpop.permute.xlu0 %210
    %212 = vrot.lane.b32.xlu0 %v194, 100
    %v213 = vpop.permute.xlu0 %212
    %214 = vrot.lane.b32.xlu0 %v195, 100
    %v215 = vpop.permute.xlu0 %214
    %216 = vrot.lane.b32.xlu0 %v196, 100
    %v217 = vpop.permute.xlu0 %216
    %218 = vrot.lane.b32.xlu0 %v197, 100
    %v219 = vpop.permute.xlu0 %218
    %220 = vrot.lane.b32.xlu0 %v198, 100
    %v221 = vpop.permute.xlu0 %220
    %222 = vrot.lane.b32.xlu0 %v199, 100
    %v223 = vpop.permute.xlu0 %222
    %vm224 = vcmask 818176
    %v225 = vsel %vm224, %v209, %v211
    %v226 = vsel %vm224, %v211, %v213
    %v227 = vsel %vm224, %v213, %v215
    %v228 = vsel %vm224, %v215, %v217
    %v229 = vsel %vm224, %v217, %v219
    %v230 = vsel %vm224, %v219, %v221
    %v231 = vsel %vm224, %v221, %v223
    %v239 = vadd.f32 %v183, %v225
    %v240 = vadd.f32 %v184, %v226
    %v241 = vadd.f32 %v185, %v227
    %v242 = vadd.f32 %v186, %v228
    %v243 = vadd.f32 %v187, %v229
    %v244 = vadd.f32 %v188, %v230
    %v245 = vadd.f32 %v189, %v231
    %s246 = sld [smem:[#allocation2 + $0x4]]
    %v247 = vstv %s246
    %v248 = vmul.f32 %v61, %v247
    %v249 = vmul.f32 %v62, %v247
    %v250 = vmul.f32 %v63, %v247
    %v251 = vmul.f32 %v64, %v247
    %v252 = vmul.f32 %v65, %v247
    %v253 = vmul.f32 %v66, %v247
    %v254 = vmul.f32 %v67, %v247
    %v255 = vmul.f32 %v68, %v247
    %264 = vrot.lane.b32.xlu0 %v248, 99
    %v265 = vpop.permute.xlu0 %264
    %266 = vrot.lane.b32.xlu0 %v249, 99
    %v267 = vpop.permute.xlu0 %266
    %268 = vrot.lane.b32.xlu0 %v250, 99
    %v269 = vpop.permute.xlu0 %268
    %270 = vrot.lane.b32.xlu0 %v251, 99
    %v271 = vpop.permute.xlu0 %270
    %272 = vrot.lane.b32.xlu0 %v252, 99
    %v273 = vpop.permute.xlu0 %272
    %274 = vrot.lane.b32.xlu0 %v253, 99
    %v275 = vpop.permute.xlu0 %274
    %276 = vrot.lane.b32.xlu0 %v254, 99
    %v277 = vpop.permute.xlu0 %276
    %278 = vrot.lane.b32.xlu0 %v255, 99
    %v279 = vpop.permute.xlu0 %278
    %vm280 = vcmask 809984
    %v281 = vsel %vm280, %v265, %v267
    %v282 = vsel %vm280, %v267, %v269
    %v283 = vsel %vm280, %v269, %v271
    %v284 = vsel %vm280, %v271, %v273
    %v285 = vsel %vm280, %v273, %v275
    %v286 = vsel %vm280, %v275, %v277
    %v287 = vsel %vm280, %v277, %v279
    %v295 = vadd.f32 %v239, %v281
    %v296 = vadd.f32 %v240, %v282
    %v297 = vadd.f32 %v241, %v283
    %v298 = vadd.f32 %v242, %v284
    %v299 = vadd.f32 %v243, %v285
    %v300 = vadd.f32 %v244, %v286
    %v301 = vadd.f32 %v245, %v287
    %s302 = sld [smem:[#allocation2 + $0x5]]
    %v303 = vstv %s302
    %v304 = vmul.f32 %v61, %v303
    %v305 = vmul.f32 %v62, %v303
    %v306 = vmul.f32 %v63, %v303
    %v307 = vmul.f32 %v64, %v303
    %v308 = vmul.f32 %v65, %v303
    %v309 = vmul.f32 %v66, %v303
    %v310 = vmul.f32 %v67, %v303
    %v311 = vmul.f32 %v68, %v303
    %320 = vrot.lane.b32.xlu0 %v304, 98
    %v321 = vpop.permute.xlu0 %320
    %322 = vrot.lane.b32.xlu0 %v305, 98
    %v323 = vpop.permute.xlu0 %322
    %324 = vrot.lane.b32.xlu0 %v306, 98
    %v325 = vpop.permute.xlu0 %324
    %326 = vrot.lane.b32.xlu0 %v307, 98
    %v327 = vpop.permute.xlu0 %326
    %328 = vrot.lane.b32.xlu0 %v308, 98
    %v329 = vpop.permute.xlu0 %328
    %330 = vrot.lane.b32.xlu0 %v309, 98
    %v331 = vpop.permute.xlu0 %330
    %332 = vrot.lane.b32.xlu0 %v310, 98
    %v333 = vpop.permute.xlu0 %332
    %334 = vrot.lane.b32.xlu0 %v311, 98
    %v335 = vpop.permute.xlu0 %334
    %vm336 = vcmask 801792
    %v337 = vsel %vm336, %v321, %v323
    %v338 = vsel %vm336, %v323, %v325
    %v339 = vsel %vm336, %v325, %v327
    %v340 = vsel %vm336, %v327, %v329
    %v341 = vsel %vm336, %v329, %v331
    %v342 = vsel %vm336, %v331, %v333
    %v343 = vsel %vm336, %v333, %v335
    %v351 = vadd.f32 %v295, %v337
    %v352 = vadd.f32 %v296, %v338
    %v353 = vadd.f32 %v297, %v339
    %v354 = vadd.f32 %v298, %v340
    %v355 = vadd.f32 %v299, %v341
    %v356 = vadd.f32 %v300, %v342
    %v357 = vadd.f32 %v301, %v343
    %s358 = sld [smem:[#allocation2 + $0x6]]
    %v359 = vstv %s358
    %v360 = vmul.f32 %v61, %v359
    %v361 = vmul.f32 %v62, %v359
    %v362 = vmul.f32 %v63, %v359
    %v363 = vmul.f32 %v64, %v359
    %v364 = vmul.f32 %v65, %v359
    %v365 = vmul.f32 %v66, %v359
    %v366 = vmul.f32 %v67, %v359
    %v367 = vmul.f32 %v68, %v359
    %376 = vrot.lane.b32.xlu0 %v360, 72
    %v377 = vpop.permute.xlu0 %376
    %378 = vrot.lane.b32.xlu0 %v361, 72
    %v379 = vpop.permute.xlu0 %378
    %380 = vrot.lane.b32.xlu0 %v362, 72
    %v381 = vpop.permute.xlu0 %380
    %382 = vrot.lane.b32.xlu0 %v363, 72
    %v383 = vpop.permute.xlu0 %382
    %384 = vrot.lane.b32.xlu0 %v364, 72
    %v385 = vpop.permute.xlu0 %384
    %386 = vrot.lane.b32.xlu0 %v365, 72
    %v387 = vpop.permute.xlu0 %386
    %388 = vrot.lane.b32.xlu0 %v366, 72
    %v389 = vpop.permute.xlu0 %388
    %390 = vrot.lane.b32.xlu0 %v367, 72
    %v391 = vpop.permute.xlu0 %390
    %vm392 = vcmask 588800
    %v393 = vsel %vm392, %v377, %v379
    %v394 = vsel %vm392, %v379, %v381
    %v395 = vsel %vm392, %v381, %v383
    %v396 = vsel %vm392, %v383, %v385
    %v397 = vsel %vm392, %v385, %v387
    %v398 = vsel %vm392, %v387, %v389
    %v399 = vsel %vm392, %v389, %v391
    %v407 = vadd.f32 %v351, %v393
    %v408 = vadd.f32 %v352, %v394
    %v409 = vadd.f32 %v353, %v395
    %v410 = vadd.f32 %v354, %v396
    %v411 = vadd.f32 %v355, %v397
    %v412 = vadd.f32 %v356, %v398
    %v413 = vadd.f32 %v357, %v399
    %s414 = sld [smem:[#allocation2 + $0x7]]
    %v415 = vstv %s414
    %v416 = vmul.f32 %v61, %v415
    %v417 = vmul.f32 %v62, %v415
    %v418 = vmul.f32 %v63, %v415
    %v419 = vmul.f32 %v64, %v415
    %v420 = vmul.f32 %v65, %v415
    %v421 = vmul.f32 %v66, %v415
    %v422 = vmul.f32 %v67, %v415
    %v423 = vmul.f32 %v68, %v415
    %432 = vrot.lane.b32.xlu0 %v416, 71
    %v433 = vpop.permute.xlu0 %432
    %434 = vrot.lane.b32.xlu0 %v417, 71
    %v435 = vpop.permute.xlu0 %434
    %436 = vrot.lane.b32.xlu0 %v418, 71
    %v437 = vpop.permute.xlu0 %436
    %438 = vrot.lane.b32.xlu0 %v419, 71
    %v439 = vpop.permute.xlu0 %438
    %440 = vrot.lane.b32.xlu0 %v420, 71
    %v441 = vpop.permute.xlu0 %440
    %442 = vrot.lane.b32.xlu0 %v421, 71
    %v443 = vpop.permute.xlu0 %442
    %444 = vrot.lane.b32.xlu0 %v422, 71
    %v445 = vpop.permute.xlu0 %444
    %446 = vrot.lane.b32.xlu0 %v423, 71
    %v447 = vpop.permute.xlu0 %446
    %vm448 = vcmask 580608
    %v449 = vsel %vm448, %v433, %v435
    %v450 = vsel %vm448, %v435, %v437
    %v451 = vsel %vm448, %v437, %v439
    %v452 = vsel %vm448, %v439, %v441
    %v453 = vsel %vm448, %v441, %v443
    %v454 = vsel %vm448, %v443, %v445
    %v455 = vsel %vm448, %v445, %v447
    %v463 = vadd.f32 %v407, %v449
    %v464 = vadd.f32 %v408, %v450
    %v465 = vadd.f32 %v409, %v451
    %v466 = vadd.f32 %v410, %v452
    %v467 = vadd.f32 %v411, %v453
    %v468 = vadd.f32 %v412, %v454
    %v469 = vadd.f32 %v413, %v455
    %s470 = sld [smem:[#allocation2 + $0x8]]
    %v471 = vstv %s470
    %v472 = vmul.f32 %v61, %v471
    %v473 = vmul.f32 %v62, %v471
    %v474 = vmul.f32 %v63, %v471
    %v475 = vmul.f32 %v64, %v471
    %v476 = vmul.f32 %v65, %v471
    %v477 = vmul.f32 %v66, %v471
    %v478 = vmul.f32 %v67, %v471
    %v479 = vmul.f32 %v68, %v471
    %488 = vrot.lane.b32.xlu0 %v472, 70
    %v489 = vpop.permute.xlu0 %488
    %490 = vrot.lane.b32.xlu0 %v473, 70
    %v491 = vpop.permute.xlu0 %490
    %492 = vrot.lane.b32.xlu0 %v474, 70
    %v493 = vpop.permute.xlu0 %492
    %494 = vrot.lane.b32.xlu0 %v475, 70
    %v495 = vpop.permute.xlu0 %494
    %496 = vrot.lane.b32.xlu0 %v476, 70
    %v497 = vpop.permute.xlu0 %496
    %498 = vrot.lane.b32.xlu0 %v477, 70
    %v499 = vpop.permute.xlu0 %498
    %500 = vrot.lane.b32.xlu0 %v478, 70
    %v501 = vpop.permute.xlu0 %500
    %502 = vrot.lane.b32.xlu0 %v479, 70
    %v503 = vpop.permute.xlu0 %502
    %vm504 = vcmask 572416
    %v505 = vsel %vm504, %v489, %v491
    %v506 = vsel %vm504, %v491, %v493
    %v507 = vsel %vm504, %v493, %v495
    %v508 = vsel %vm504, %v495, %v497
    %v509 = vsel %vm504, %v497, %v499
    %v510 = vsel %vm504, %v499, %v501
    %v511 = vsel %vm504, %v501, %v503
    %v519 = vadd.f32 %v463, %v505
    %v520 = vadd.f32 %v464, %v506
    %v521 = vadd.f32 %v465, %v507
    %v522 = vadd.f32 %v466, %v508
    %v523 = vadd.f32 %v467, %v509
    %v524 = vadd.f32 %v468, %v510
    %v525 = vadd.f32 %v469, %v511
    %s526 = sld [smem:[#allocation5]]
    %v527 = vstv %s526
    %v528 = vadd.f32 %v519, %v527
    %v529 = vadd.f32 %v520, %v527
    %v530 = vadd.f32 %v521, %v527
    %v531 = vadd.f32 %v522, %v527
    %v532 = vadd.f32 %v523, %v527
    %v533 = vadd.f32 %v524, %v527
    %v534 = vadd.f32 %v525, %v527
    %v535 = vmax.f32 %v528, 0.0
    %v536 = vmax.f32 %v529, 0.0
    %v537 = vmax.f32 %v530, 0.0
    %v538 = vmax.f32 %v531, 0.0
    %v539 = vmax.f32 %v532, 0.0
    %v540 = vmax.f32 %v533, 0.0
    %v541 = vmax.f32 %v534, 0.0
    %v542 = vld [vmem:[#allocation7] sm:$0xff]
    %v543 = vld [vmem:[#allocation7 + $0x8] sm:$0xff]
    %v544 = vld [vmem:[#allocation7 + $0x10] sm:$0xff]
    %v545 = vld [vmem:[#allocation7 + $0x18] sm:$0xff]
    %v546 = vld [vmem:[#allocation7 + $0x20] sm:$0xff]
    %v547 = vld [vmem:[#allocation7 + $0x28] sm:$0xff]
    %v548 = vld [vmem:[#allocation7 + $0x30] sm:$0xff]
    %v549 = vld [vmem:[#allocation7 + $0x380] sm:$0x3]
    %v550 = vld [vmem:[#allocation7 + $0x388] sm:$0x3]
    %v551 = vld [vmem:[#allocation7 + $0x390] sm:$0x3]
    %v552 = vld [vmem:[#allocation7 + $0x398] sm:$0x3]
    %v553 = vld [vmem:[#allocation7 + $0x3a0] sm:$0x3]
    %v554 = vld [vmem:[#allocation7 + $0x3a8] sm:$0x3]
    %v555 = vld [vmem:[#allocation7 + $0x3b0] sm:$0x3]
    %s556 = sld [smem:[#allocation2 + $0x80]]
    %v557 = vstv %s556
    %v558 = vmul.f32 %v61, %v557
    %v559 = vmul.f32 %v62, %v557
    %v560 = vmul.f32 %v63, %v557
    %v561 = vmul.f32 %v64, %v557
    %v562 = vmul.f32 %v65, %v557
    %v563 = vmul.f32 %v66, %v557
    %v564 = vmul.f32 %v67, %v557
    %s565 = sld [smem:[#allocation2 + $0x81]]
    %v566 = vstv %s565
    %v567 = vmul.f32 %v61, %v566
    %v568 = vmul.f32 %v62, %v566
    %v569 = vmul.f32 %v63, %v566
    %v570 = vmul.f32 %v64, %v566
    %v571 = vmul.f32 %v65, %v566
    %v572 = vmul.f32 %v66, %v566
    %v573 = vmul.f32 %v67, %v566
    %v574 = vmul.f32 %v68, %v566
    %583 = vrot.lane.b32.xlu0 %v567, 127
    %v584 = vpop.permute.xlu0 %583
    %585 = vrot.lane.b32.xlu0 %v568, 127
    %v586 = vpop.permute.xlu0 %585
    %587 = vrot.lane.b32.xlu0 %v569, 127
    %v588 = vpop.permute.xlu0 %587
    %589 = vrot.lane.b32.xlu0 %v570, 127
    %v590 = vpop.permute.xlu0 %589
    %591 = vrot.lane.b32.xlu0 %v571, 127
    %v592 = vpop.permute.xlu0 %591
    %593 = vrot.lane.b32.xlu0 %v572, 127
    %v594 = vpop.permute.xlu0 %593
    %595 = vrot.lane.b32.xlu0 %v573, 127
    %v596 = vpop.permute.xlu0 %595
    %597 = vrot.lane.b32.xlu0 %v574, 127
    %v598 = vpop.permute.xlu0 %597
    %v599 = vsel %vm112, %v584, %v586
    %v600 = vsel %vm112, %v586, %v588
    %v601 = vsel %vm112, %v588, %v590
    %v602 = vsel %vm112, %v590, %v592
    %v603 = vsel %vm112, %v592, %v594
    %v604 = vsel %vm112, %v594, %v596
    %v605 = vsel %vm112, %v596, %v598
    %v613 = vadd.f32 %v558, %v599
    %v614 = vadd.f32 %v559, %v600
    %v615 = vadd.f32 %v560, %v601
    %v616 = vadd.f32 %v561, %v602
    %v617 = vadd.f32 %v562, %v603
    %v618 = vadd.f32 %v563, %v604
    %v619 = vadd.f32 %v564, %v605
    %s620 = sld [smem:[#allocation2 + $0x82]]
    %v621 = vstv %s620
    %v622 = vmul.f32 %v61, %v621
    %v623 = vmul.f32 %v62, %v621
    %v624 = vmul.f32 %v63, %v621
    %v625 = vmul.f32 %v64, %v621
    %v626 = vmul.f32 %v65, %v621
    %v627 = vmul.f32 %v66, %v621
    %v628 = vmul.f32 %v67, %v621
    %v629 = vmul.f32 %v68, %v621
    %638 = vrot.lane.b32.xlu0 %v622, 126
    %v639 = vpop.permute.xlu0 %638
    %640 = vrot.lane.b32.xlu0 %v623, 126
    %v641 = vpop.permute.xlu0 %640
    %642 = vrot.lane.b32.xlu0 %v624, 126
    %v643 = vpop.permute.xlu0 %642
    %644 = vrot.lane.b32.xlu0 %v625, 126
    %v645 = vpop.permute.xlu0 %644
    %646 = vrot.lane.b32.xlu0 %v626, 126
    %v647 = vpop.permute.xlu0 %646
    %648 = vrot.lane.b32.xlu0 %v627, 126
    %v649 = vpop.permute.xlu0 %648
    %650 = vrot.lane.b32.xlu0 %v628, 126
    %v651 = vpop.permute.xlu0 %650
    %652 = vrot.lane.b32.xlu0 %v629, 126
    %v653 = vpop.permute.xlu0 %652
    %v654 = vsel %vm168, %v639, %v641
    %v655 = vsel %vm168, %v641, %v643
    %v656 = vsel %vm168, %v643, %v645
    %v657 = vsel %vm168, %v645, %v647
    %v658 = vsel %vm168, %v647, %v649
    %v659 = vsel %vm168, %v649, %v651
    %v660 = vsel %vm168, %v651, %v653
    %v668 = vadd.f32 %v613, %v654
    %v669 = vadd.f32 %v614, %v655
    %v670 = vadd.f32 %v615, %v656
    %v671 = vadd.f32 %v616, %v657
    %v672 = vadd.f32 %v617, %v658
    %v673 = vadd.f32 %v618, %v659
    %v674 = vadd.f32 %v619, %v660
    %s675 = sld [smem:[#allocation2 + $0x83]]
    %v676 = vstv %s675
    %v677 = vmul.f32 %v61, %v676
    %v678 = vmul.f32 %v62, %v676
    %v679 = vmul.f32 %v63, %v676
    %v680 = vmul.f32 %v64, %v676
    %v681 = vmul.f32 %v65, %v676
    %v682 = vmul.f32 %v66, %v676
    %v683 = vmul.f32 %v67, %v676
    %v684 = vmul.f32 %v68, %v676
    %693 = vrot.lane.b32.xlu0 %v677, 100
    %v694 = vpop.permute.xlu0 %693
    %695 = vrot.lane.b32.xlu0 %v678, 100
    %v696 = vpop.permute.xlu0 %695
    %697 = vrot.lane.b32.xlu0 %v679, 100
    %v698 = vpop.permute.xlu0 %697
    %699 = vrot.lane.b32.xlu0 %v680, 100
    %v700 = vpop.permute.xlu0 %699
    %701 = vrot.lane.b32.xlu0 %v681, 100
    %v702 = vpop.permute.xlu0 %701
    %703 = vrot.lane.b32.xlu0 %v682, 100
    %v704 = vpop.permute.xlu0 %703
    %705 = vrot.lane.b32.xlu0 %v683, 100
    %v706 = vpop.permute.xlu0 %705
    %707 = vrot.lane.b32.xlu0 %v684, 100
    %v708 = vpop.permute.xlu0 %707
    %v709 = vsel %vm224, %v694, %v696
    %v710 = vsel %vm224, %v696, %v698
    %v711 = vsel %vm224, %v698, %v700
    %v712 = vsel %vm224, %v700, %v702
    %v713 = vsel %vm224, %v702, %v704
    %v714 = vsel %vm224, %v704, %v706
    %v715 = vsel %vm224, %v706, %v708
    %v723 = vadd.f32 %v668, %v709
    %v724 = vadd.f32 %v669, %v710
    %v725 = vadd.f32 %v670, %v711
    %v726 = vadd.f32 %v671, %v712
    %v727 = vadd.f32 %v672, %v713
    %v728 = vadd.f32 %v673, %v714
    %v729 = vadd.f32 %v674, %v715
    %s730 = sld [smem:[#allocation2 + $0x84]]
    %v731 = vstv %s730
    %v732 = vmul.f32 %v61, %v731
    %v733 = vmul.f32 %v62, %v731
    %v734 = vmul.f32 %v63, %v731
    %v735 = vmul.f32 %v64, %v731
    %v736 = vmul.f32 %v65, %v731
    %v737 = vmul.f32 %v66, %v731
    %v738 = vmul.f32 %v67, %v731
    %v739 = vmul.f32 %v68, %v731
    %748 = vrot.lane.b32.xlu0 %v732, 99
    %v749 = vpop.permute.xlu0 %748
    %750 = vrot.lane.b32.xlu0 %v733, 99
    %v751 = vpop.permute.xlu0 %750
    %752 = vrot.lane.b32.xlu0 %v734, 99
    %v753 = vpop.permute.xlu0 %752
    %754 = vrot.lane.b32.xlu0 %v735, 99
    %v755 = vpop.permute.xlu0 %754
    %756 = vrot.lane.b32.xlu0 %v736, 99
    %v757 = vpop.permute.xlu0 %756
    %758 = vrot.lane.b32.xlu0 %v737, 99
    %v759 = vpop.permute.xlu0 %758
    %760 = vrot.lane.b32.xlu0 %v738, 99
    %v761 = vpop.permute.xlu0 %760
    %762 = vrot.lane.b32.xlu0 %v739, 99
    %v763 = vpop.permute.xlu0 %762
    %v764 = vsel %vm280, %v749, %v751
    %v765 = vsel %vm280, %v751, %v753
    %v766 = vsel %vm280, %v753, %v755
    %v767 = vsel %vm280, %v755, %v757
    %v768 = vsel %vm280, %v757, %v759
    %v769 = vsel %vm280, %v759, %v761
    %v770 = vsel %vm280, %v761, %v763
    %v778 = vadd.f32 %v723, %v764
    %v779 = vadd.f32 %v724, %v765
    %v780 = vadd.f32 %v725, %v766
    %v781 = vadd.f32 %v726, %v767
    %v782 = vadd.f32 %v727, %v768
    %v783 = vadd.f32 %v728, %v769
    %v784 = vadd.f32 %v729, %v770
    %s785 = sld [smem:[#allocation2 + $0x85]]
    %v786 = vstv %s785
    %v787 = vmul.f32 %v61, %v786
    %v788 = vmul.f32 %v62, %v786
    %v789 = vmul.f32 %v63, %v786
    %v790 = vmul.f32 %v64, %v786
    %v791 = vmul.f32 %v65, %v786
    %v792 = vmul.f32 %v66, %v786
    %v793 = vmul.f32 %v67, %v786
    %v794 = vmul.f32 %v68, %v786
    %803 = vrot.lane.b32.xlu0 %v787, 98
    %v804 = vpop.permute.xlu0 %803
    %805 = vrot.lane.b32.xlu0 %v788, 98
    %v806 = vpop.permute.xlu0 %805
    %807 = vrot.lane.b32.xlu0 %v789, 98
    %v808 = vpop.permute.xlu0 %807
    %809 = vrot.lane.b32.xlu0 %v790, 98
    %v810 = vpop.permute.xlu0 %809
    %811 = vrot.lane.b32.xlu0 %v791, 98
    %v812 = vpop.permute.xlu0 %811
    %813 = vrot.lane.b32.xlu0 %v792, 98
    %v814 = vpop.permute.xlu0 %813
    %815 = vrot.lane.b32.xlu0 %v793, 98
    %v816 = vpop.permute.xlu0 %815
    %817 = vrot.lane.b32.xlu0 %v794, 98
    %v818 = vpop.permute.xlu0 %817
    %v819 = vsel %vm336, %v804, %v806
    %v820 = vsel %vm336, %v806, %v808
    %v821 = vsel %vm336, %v808, %v810
    %v822 = vsel %vm336, %v810, %v812
    %v823 = vsel %vm336, %v812, %v814
    %v824 = vsel %vm336, %v814, %v816
    %v825 = vsel %vm336, %v816, %v818
    %v833 = vadd.f32 %v778, %v819
    %v834 = vadd.f32 %v779, %v820
    %v835 = vadd.f32 %v780, %v821
    %v836 = vadd.f32 %v781, %v822
    %v837 = vadd.f32 %v782, %v823
    %v838 = vadd.f32 %v783, %v824
    %v839 = vadd.f32 %v784, %v825
    %s840 = sld [smem:[#allocation2 + $0x86]]
    %v841 = vstv %s840
    %v842 = vmul.f32 %v61, %v841
    %v843 = vmul.f32 %v62, %v841
    %v844 = vmul.f32 %v63, %v841
    %v845 = vmul.f32 %v64, %v841
    %v846 = vmul.f32 %v65, %v841
    %v847 = vmul.f32 %v66, %v841
    %v848 = vmul.f32 %v67, %v841
    %v849 = vmul.f32 %v68, %v841
    %858 = vrot.lane.b32.xlu0 %v842, 72
    %v859 = vpop.permute.xlu0 %858
    %860 = vrot.lane.b32.xlu0 %v843, 72
    %v861 = vpop.permute.xlu0 %860
    %862 = vrot.lane.b32.xlu0 %v844, 72
    %v863 = vpop.permute.xlu0 %862
    %864 = vrot.lane.b32.xlu0 %v845, 72
    %v865 = vpop.permute.xlu0 %864
    %866 = vrot.lane.b32.xlu0 %v846, 72
    %v867 = vpop.permute.xlu0 %866
    %868 = vrot.lane.b32.xlu0 %v847, 72
    %v869 = vpop.permute.xlu0 %868
    %870 = vrot.lane.b32.xlu0 %v848, 72
    %v871 = vpop.permute.xlu0 %870
    %872 = vrot.lane.b32.xlu0 %v849, 72
    %v873 = vpop.permute.xlu0 %872
    %v874 = vsel %vm392, %v859, %v861
    %v875 = vsel %vm392, %v861, %v863
    %v876 = vsel %vm392, %v863, %v865
    %v877 = vsel %vm392, %v865, %v867
    %v878 = vsel %vm392, %v867, %v869
    %v879 = vsel %vm392, %v869, %v871
    %v880 = vsel %vm392, %v871, %v873
    %v888 = vadd.f32 %v833, %v874
    %v889 = vadd.f32 %v834, %v875
    %v890 = vadd.f32 %v835, %v876
    %v891 = vadd.f32 %v836, %v877
    %v892 = vadd.f32 %v837, %v878
    %v893 = vadd.f32 %v838, %v879
    %v894 = vadd.f32 %v839, %v880
    %s895 = sld [smem:[#allocation2 + $0x87]]
    %v896 = vstv %s895
    %v897 = vmul.f32 %v61, %v896
    %v898 = vmul.f32 %v62, %v896
    %v899 = vmul.f32 %v63, %v896
    %v900 = vmul.f32 %v64, %v896
    %v901 = vmul.f32 %v65, %v896
    %v902 = vmul.f32 %v66, %v896
    %v903 = vmul.f32 %v67, %v896
    %v904 = vmul.f32 %v68, %v896
    %913 = vrot.lane.b32.xlu0 %v897, 71
    %v914 = vpop.permute.xlu0 %913
    %915 = vrot.lane.b32.xlu0 %v898, 71
    %v916 = vpop.permute.xlu0 %915
    %917 = vrot.lane.b32.xlu0 %v899, 71
    %v918 = vpop.permute.xlu0 %917
    %919 = vrot.lane.b32.xlu0 %v900, 71
    %v920 = vpop.permute.xlu0 %919
    %921 = vrot.lane.b32.xlu0 %v901, 71
    %v922 = vpop.permute.xlu0 %921
    %923 = vrot.lane.b32.xlu0 %v902, 71
    %v924 = vpop.permute.xlu0 %923
    %925 = vrot.lane.b32.xlu0 %v903, 71
    %v926 = vpop.permute.xlu0 %925
    %927 = vrot.lane.b32.xlu0 %v904, 71
    %v928 = vpop.permute.xlu0 %927
    %v929 = vsel %vm448, %v914, %v916
    %v930 = vsel %vm448, %v916, %v918
    %v931 = vsel %vm448, %v918, %v920
    %v932 = vsel %vm448, %v920, %v922
    %v933 = vsel %vm448, %v922, %v924
    %v934 = vsel %vm448, %v924, %v926
    %v935 = vsel %vm448, %v926, %v928
    %v943 = vadd.f32 %v888, %v929
    %v944 = vadd.f32 %v889, %v930
    %v945 = vadd.f32 %v890, %v931
    %v946 = vadd.f32 %v891, %v932
    %v947 = vadd.f32 %v892, %v933
    %v948 = vadd.f32 %v893, %v934
    %v949 = vadd.f32 %v894, %v935
    %s950 = sld [smem:[#allocation2 + $0x88]]
    %v951 = vstv %s950
    %v952 = vmul.f32 %v61, %v951
    %v953 = vmul.f32 %v62, %v951
    %v954 = vmul.f32 %v63, %v951
    %v955 = vmul.f32 %v64, %v951
    %v956 = vmul.f32 %v65, %v951
    %v957 = vmul.f32 %v66, %v951
    %v958 = vmul.f32 %v67, %v951
    %v959 = vmul.f32 %v68, %v951
    %968 = vrot.lane.b32.xlu0 %v952, 70
    %v969 = vpop.permute.xlu0 %968
    %970 = vrot.lane.b32.xlu0 %v953, 70
    %v971 = vpop.permute.xlu0 %970
    %972 = vrot.lane.b32.xlu0 %v954, 70
    %v973 = vpop.permute.xlu0 %972
    %974 = vrot.lane.b32.xlu0 %v955, 70
    %v975 = vpop.permute.xlu0 %974
    %976 = vrot.lane.b32.xlu0 %v956, 70
    %v977 = vpop.permute.xlu0 %976
    %978 = vrot.lane.b32.xlu0 %v957, 70
    %v979 = vpop.permute.xlu0 %978
    %980 = vrot.lane.b32.xlu0 %v958, 70
    %v981 = vpop.permute.xlu0 %980
    %982 = vrot.lane.b32.xlu0 %v959, 70
    %v983 = vpop.permute.xlu0 %982
    %v984 = vsel %vm504, %v969, %v971
    %v985 = vsel %vm504, %v971, %v973
    %v986 = vsel %vm504, %v973, %v975
    %v987 = vsel %vm504, %v975, %v977
    %v988 = vsel %vm504, %v977, %v979
    %v989 = vsel %vm504, %v979, %v981
    %v990 = vsel %vm504, %v981, %v983
    %v998 = vadd.f32 %v943, %v984
    %v999 = vadd.f32 %v944, %v985
    %v1000 = vadd.f32 %v945, %v986
    %v1001 = vadd.f32 %v946, %v987
    %v1002 = vadd.f32 %v947, %v988
    %v1003 = vadd.f32 %v948, %v989
    %v1004 = vadd.f32 %v949, %v990
    %s1005 = sld [smem:[#allocation5 + $0x1]]
    %v1006 = vstv %s1005
    %v1007 = vadd.f32 %v998, %v1006
    %v1008 = vadd.f32 %v999, %v1006
    %v1009 = vadd.f32 %v1000, %v1006
    %v1010 = vadd.f32 %v1001, %v1006
    %v1011 = vadd.f32 %v1002, %v1006
    %v1012 = vadd.f32 %v1003, %v1006
    %v1013 = vadd.f32 %v1004, %v1006
    %v1014 = vmax.f32 %v1007, 0.0
    %v1015 = vmax.f32 %v1008, 0.0
    %v1016 = vmax.f32 %v1009, 0.0
    %v1017 = vmax.f32 %v1010, 0.0
    %v1018 = vmax.f32 %v1011, 0.0
    %v1019 = vmax.f32 %v1012, 0.0
    %v1020 = vmax.f32 %v1013, 0.0
    %v1021 = vld [vmem:[#allocation7 + $0x38] sm:$0xff]
    %v1022 = vld [vmem:[#allocation7 + $0x40] sm:$0xff]
    %v1023 = vld [vmem:[#allocation7 + $0x48] sm:$0xff]
    %v1024 = vld [vmem:[#allocation7 + $0x50] sm:$0xff]
    %v1025 = vld [vmem:[#allocation7 + $0x58] sm:$0xff]
    %v1026 = vld [vmem:[#allocation7 + $0x60] sm:$0xff]
    %v1027 = vld [vmem:[#allocation7 + $0x68] sm:$0xff]
    %v1028 = vld [vmem:[#allocation7 + $0x3b8] sm:$0x3]
    %v1029 = vld [vmem:[#allocation7 + $0x3c0] sm:$0x3]
    %v1030 = vld [vmem:[#allocation7 + $0x3c8] sm:$0x3]
    %v1031 = vld [vmem:[#allocation7 + $0x3d0] sm:$0x3]
    %v1032 = vld [vmem:[#allocation7 + $0x3d8] sm:$0x3]
    %v1033 = vld [vmem:[#allocation7 + $0x3e0] sm:$0x3]
    %v1034 = vld [vmem:[#allocation7 + $0x3e8] sm:$0x3]
    %1035 = vmatprep.subr.mxu0 %v1022
    %1036 = vmatpush1.xpose.msra.mxu0 %v1021
    %1037 = vmatprep.subr.mxu0 %v1029
    %1038 = vmatpush1.xpose.msra.mxu0 %v1028
    %1039 = vmatprep.subr.mxu0 0.0
    %1040 = vmatpush1.xpose.msra.mxu0 0.0
    %1041 = vmatprep.subr.mxu0 0.0
    %1042 = vmatpush1.xpose.msra.mxu0 0.0
    %1043 = vmatprep.subr.mxu0 0.0
    %1044 = vmatpush1.xpose.msra.mxu0 0.0
    %1045 = vmatprep.subr.mxu0 0.0
    %1046 = vmatpush1.xpose.msra.mxu0 0.0
    %1047 = vmatprep.subr.mxu0 0.0
    %1048 = vmatpush1.xpose.msra.mxu0 0.0
    %1049 = vmatprep.subr.mxu0 0.0
    %1050 = vmatpush1.xpose.msra.mxu0 0.0
    %1051 = vmatprep.subr.mxu0 0.0
    %1052 = vmatpush1.xpose.msra.mxu0 0.0
    %1053 = vmatprep.subr.mxu0 0.0
    %1054 = vmatpush1.xpose.msra.mxu0 0.0
    %1055 = vmatprep.subr.mxu0 0.0
    %1056 = vmatpush1.xpose.msra.mxu0 0.0
    %1057 = vmatprep.subr.mxu0 0.0
    %1058 = vmatpush1.xpose.msra.mxu0 0.0
    %1059 = vmatprep.subr.mxu0 0.0
    %1060 = vmatpush1.xpose.msra.mxu0 0.0
    %1061 = vmatprep.subr.mxu0 0.0
    %1062 = vmatpush1.xpose.msra.mxu0 0.0
    %1063 = vmatprep.subr.mxu0 0.0
    %1064 = vmatpush1.xpose.msra.mxu0 0.0
    %1065 = vmatprep.subr.mxu0 0.0
    %1066 = vmatpush1.xpose.msra.mxu0 0.0
    %1067 = vmatprep.subr.mxu0 0.0
    %1068 = vmatpush1.xpose.msra.mxu0 0.0
    %1069 = vmatprep.subr.mxu0 0.0
    %1070 = vmatpush1.xpose.msra.mxu0 0.0
    %1071 = vmatprep.subr.mxu0 0.0
    %1072 = vmatpush1.xpose.msra.mxu0 0.0
    %1073 = vmatprep.subr.mxu0 0.0
    %1074 = vmatpush1.xpose.msra.mxu0 0.0
    %1075 = vmatprep.subr.mxu0 0.0
    %1076 = vmatpush1.xpose.msra.mxu0 0.0
    %1077 = vmatprep.subr.mxu0 0.0
    %1078 = vmatpush1.xpose.msra.mxu0 0.0
    %1079 = vmatprep.subr.mxu0 0.0
    %1080 = vmatpush1.xpose.msra.mxu0 0.0
    %1081 = vmatprep.subr.mxu0 0.0
    %1082 = vmatpush1.xpose.msra.mxu0 0.0
    %1083 = vmatprep.subr.mxu0 0.0
    %1084 = vmatpush1.xpose.msra.mxu0 0.0
    %1085 = vmatprep.subr.mxu0 0.0
    %1086 = vmatpush1.xpose.msra.mxu0 0.0
    %1087 = vmatprep.subr.mxu0 0.0
    %1088 = vmatpush1.xpose.msra.mxu0 0.0
    %1089 = vmatprep.subr.mxu0 0.0
    %1090 = vmatpush1.xpose.msra.mxu0 0.0
    %1091 = vmatprep.subr.mxu0 0.0
    %1092 = vmatpush1.xpose.msra.mxu0 0.0
    %1093 = vmatprep.subr.mxu0 0.0
    %1094 = vmatpush1.xpose.msra.mxu0 0.0
    %1095 = vmatprep.subr.mxu0 0.0
    %1096 = vmatpush1.xpose.msra.mxu0 0.0
    %1097 = vmatprep.subr.mxu0 0.0
    %1098 = vmatpush1.xpose.msra.mxu0 0.0
    %1099 = vmatprep.mubr.f32.mxu0 %v1015
    %1100 = vmatmul.mubr.f32.gmra.mrb[0].mxu0 %v1014
    %v1101 = vpop.f32.mrb[0].mxu0
    %v1102 = vadd.f32 0.0, %v1101
    %v1103 = vpop.f32.mrb[0].mxu0
    %1104 = vdwg.mxu0
    %1105 = vmatprep.subr.mxu0 %v1024
    %1106 = vmatpush1.xpose.msra.mxu0 %v1023
    %1107 = vmatprep.subr.mxu0 %v1031
    %1108 = vmatpush1.xpose.msra.mxu0 %v1030
    %1109 = vmatprep.subr.mxu0 0.0
    %1110 = vmatpush1.xpose.msra.mxu0 0.0
    %1111 = vmatprep.subr.mxu0 0.0
    %1112 = vmatpush1.xpose.msra.mxu0 0.0
    %1113 = vmatprep.subr.mxu0 0.0
    %1114 = vmatpush1.xpose.msra.mxu0 0.0
    %1115 = vmatprep.subr.mxu0 0.0
    %1116 = vmatpush1.xpose.msra.mxu0 0.0
    %1117 = vmatprep.subr.mxu0 0.0
    %1118 = vmatpush1.xpose.msra.mxu0 0.0
    %1119 = vmatprep.subr.mxu0 0.0
    %1120 = vmatpush1.xpose.msra.mxu0 0.0
    %1121 = vmatprep.subr.mxu0 0.0
    %1122 = vmatpush1.xpose.msra.mxu0 0.0
    %1123 = vmatprep.subr.mxu0 0.0
    %1124 = vmatpush1.xpose.msra.mxu0 0.0
    %1125 = vmatprep.subr.mxu0 0.0
    %1126 = vmatpush1.xpose.msra.mxu0 0.0
    %1127 = vmatprep.subr.mxu0 0.0
    %1128 = vmatpush1.xpose.msra.mxu0 0.0
    %1129 = vmatprep.subr.mxu0 0.0
    %1130 = vmatpush1.xpose.msra.mxu0 0.0
    %1131 = vmatprep.subr.mxu0 0.0
    %1132 = vmatpush1.xpose.msra.mxu0 0.0
    %1133 = vmatprep.subr.mxu0 0.0
    %1134 = vmatpush1.xpose.msra.mxu0 0.0
    %1135 = vmatprep.subr.mxu0 0.0
    %1136 = vmatpush1.xpose.msra.mxu0 0.0
    %1137 = vmatprep.subr.mxu0 0.0
    %1138 = vmatpush1.xpose.msra.mxu0 0.0
    %1139 = vmatprep.subr.mxu0 0.0
    %1140 = vmatpush1.xpose.msra.mxu0 0.0
    %1141 = vmatprep.subr.mxu0 0.0
    %1142 = vmatpush1.xpose.msra.mxu0 0.0
    %1143 = vmatprep.subr.mxu0 0.0
    %1144 = vmatpush1.xpose.msra.mxu0 0.0
    %1145 = vmatprep.subr.mxu0 0.0
    %1146 = vmatpush1.xpose.msra.mxu0 0.0
    %1147 = vmatprep.subr.mxu0 0.0
    %1148 = vmatpush1.xpose.msra.mxu0 0.0
    %1149 = vmatprep.subr.mxu0 0.0
    %1150 = vmatpush1.xpose.msra.mxu0 0.0
    %1151 = vmatprep.subr.mxu0 0.0
    %1152 = vmatpush1.xpose.msra.mxu0 0.0
    %1153 = vmatprep.subr.mxu0 0.0
    %1154 = vmatpush1.xpose.msra.mxu0 0.0
    %1155 = vmatprep.subr.mxu0 0.0
    %1156 = vmatpush1.xpose.msra.mxu0 0.0
    %1157 = vmatprep.subr.mxu0 0.0
    %1158 = vmatpush1.xpose.msra.mxu0 0.0
    %1159 = vmatprep.subr.mxu0 0.0
    %1160 = vmatpush1.xpose.msra.mxu0 0.0
    %1161 = vmatprep.subr.mxu0 0.0
    %1162 = vmatpush1.xpose.msra.mxu0 0.0
    %1163 = vmatprep.subr.mxu0 0.0
    %1164 = vmatpush1.xpose.msra.mxu0 0.0
    %1165 = vmatprep.subr.mxu0 0.0
    %1166 = vmatpush1.xpose.msra.mxu0 0.0
    %1167 = vmatprep.subr.mxu0 0.0
    %1168 = vmatpush1.xpose.msra.mxu0 0.0
    %1169 = vmatprep.mubr.f32.mxu0 %v1017
    %1170 = vmatmul.mubr.f32.gmra.mrb[0].mxu0 %v1016
    %v1171 = vpop.f32.mrb[0].mxu0
    %v1172 = vadd.f32 %v1102, %v1171
    %v1173 = vpop.f32.mrb[0].mxu0
    %1174 = vdwg.mxu0
    %1175 = vmatprep.subr.mxu0 %v1026
    %1176 = vmatpush1.xpose.msra.mxu0 %v1025
    %1177 = vmatprep.subr.mxu0 %v1033
    %1178 = vmatpush1.xpose.msra.mxu0 %v1032
    %1179 = vmatprep.subr.mxu0 0.0
    %1180 = vmatpush1.xpose.msra.mxu0 0.0
    %1181 = vmatprep.subr.mxu0 0.0
    %1182 = vmatpush1.xpose.msra.mxu0 0.0
    %1183 = vmatprep.subr.mxu0 0.0
    %1184 = vmatpush1.xpose.msra.mxu0 0.0
    %1185 = vmatprep.subr.mxu0 0.0
    %1186 = vmatpush1.xpose.msra.mxu0 0.0
    %1187 = vmatprep.subr.mxu0 0.0
    %1188 = vmatpush1.xpose.msra.mxu0 0.0
    %1189 = vmatprep.subr.mxu0 0.0
    %1190 = vmatpush1.xpose.msra.mxu0 0.0
    %1191 = vmatprep.subr.mxu0 0.0
    %1192 = vmatpush1.xpose.msra.mxu0 0.0
    %1193 = vmatprep.subr.mxu0 0.0
    %1194 = vmatpush1.xpose.msra.mxu0 0.0
    %1195 = vmatprep.subr.mxu0 0.0
    %1196 = vmatpush1.xpose.msra.mxu0 0.0
    %1197 = vmatprep.subr.mxu0 0.0
    %1198 = vmatpush1.xpose.msra.mxu0 0.0
    %1199 = vmatprep.subr.mxu0 0.0
    %1200 = vmatpush1.xpose.msra.mxu0 0.0
    %1201 = vmatprep.subr.mxu0 0.0
    %1202 = vmatpush1.xpose.msra.mxu0 0.0
    %1203 = vmatprep.subr.mxu0 0.0
    %1204 = vmatpush1.xpose.msra.mxu0 0.0
    %1205 = vmatprep.subr.mxu0 0.0
    %1206 = vmatpush1.xpose.msra.mxu0 0.0
    %1207 = vmatprep.subr.mxu0 0.0
    %1208 = vmatpush1.xpose.msra.mxu0 0.0
    %1209 = vmatprep.subr.mxu0 0.0
    %1210 = vmatpush1.xpose.msra.mxu0 0.0
    %1211 = vmatprep.subr.mxu0 0.0
    %1212 = vmatpush1.xpose.msra.mxu0 0.0
    %1213 = vmatprep.subr.mxu0 0.0
    %1214 = vmatpush1.xpose.msra.mxu0 0.0
    %1215 = vmatprep.subr.mxu0 0.0
    %1216 = vmatpush1.xpose.msra.mxu0 0.0
    %1217 = vmatprep.subr.mxu0 0.0
    %1218 = vmatpush1.xpose.msra.mxu0 0.0
    %1219 = vmatprep.subr.mxu0 0.0
    %1220 = vmatpush1.xpose.msra.mxu0 0.0
    %1221 = vmatprep.subr.mxu0 0.0
    %1222 = vmatpush1.xpose.msra.mxu0 0.0
    %1223 = vmatprep.subr.mxu0 0.0
    %1224 = vmatpush1.xpose.msra.mxu0 0.0
    %1225 = vmatprep.subr.mxu0 0.0
    %1226 = vmatpush1.xpose.msra.mxu0 0.0
    %1227 = vmatprep.subr.mxu0 0.0
    %1228 = vmatpush1.xpose.msra.mxu0 0.0
    %1229 = vmatprep.subr.mxu0 0.0
    %1230 = vmatpush1.xpose.msra.mxu0 0.0
    %1231 = vmatprep.subr.mxu0 0.0
    %1232 = vmatpush1.xpose.msra.mxu0 0.0
    %1233 = vmatprep.subr.mxu0 0.0
    %1234 = vmatpush1.xpose.msra.mxu0 0.0
    %1235 = vmatprep.subr.mxu0 0.0
    %1236 = vmatpush1.xpose.msra.mxu0 0.0
    %1237 = vmatprep.subr.mxu0 0.0
    %1238 = vmatpush1.xpose.msra.mxu0 0.0
    %1239 = vmatprep.mubr.f32.mxu0 %v1019
    %1240 = vmatmul.mubr.f32.gmra.mrb[0].mxu0 %v1018
    %v1241 = vpop.f32.mrb[0].mxu0
    %v1242 = vadd.f32 %v1172, %v1241
    %v1243 = vpop.f32.mrb[0].mxu0
    %1244 = vdwg.mxu0
    %1245 = vmatprep.subr.mxu0 0.0
    %1246 = vmatpush1.xpose.msra.mxu0 %v1027
    %1247 = vmatprep.subr.mxu0 0.0
    %1248 = vmatpush1.xpose.msra.mxu0 %v1034
    %1249 = vmatprep.subr.mxu0 0.0
    %1250 = vmatpush1.xpose.msra.mxu0 0.0
    %1251 = vmatprep.subr.mxu0 0.0
    %1252 = vmatpush1.xpose.msra.mxu0 0.0
    %1253 = vmatprep.subr.mxu0 0.0
    %1254 = vmatpush1.xpose.msra.mxu0 0.0
    %1255 = vmatprep.subr.mxu0 0.0
    %1256 = vmatpush1.xpose.msra.mxu0 0.0
    %1257 = vmatprep.subr.mxu0 0.0
    %1258 = vmatpush1.xpose.msra.mxu0 0.0
    %1259 = vmatprep.subr.mxu0 0.0
    %1260 = vmatpush1.xpose.msra.mxu0 0.0
    %1261 = vmatprep.subr.mxu0 0.0
    %1262 = vmatpush1.xpose.msra.mxu0 0.0
    %1263 = vmatprep.subr.mxu0 0.0
    %1264 = vmatpush1.xpose.msra.mxu0 0.0
    %1265 = vmatprep.subr.mxu0 0.0
    %1266 = vmatpush1.xpose.msra.mxu0 0.0
    %1267 = vmatprep.subr.mxu0 0.0
    %1268 = vmatpush1.xpose.msra.mxu0 0.0
    %1269 = vmatprep.subr.mxu0 0.0
    %1270 = vmatpush1.xpose.msra.mxu0 0.0
    %1271 = vmatprep.subr.mxu0 0.0
    %1272 = vmatpush1.xpose.msra.mxu0 0.0
    %1273 = vmatprep.subr.mxu0 0.0
    %1274 = vmatpush1.xpose.msra.mxu0 0.0
    %1275 = vmatprep.subr.mxu0 0.0
    %1276 = vmatpush1.xpose.msra.mxu0 0.0
    %1277 = vmatprep.subr.mxu0 0.0
    %1278 = vmatpush1.xpose.msra.mxu0 0.0
    %1279 = vmatprep.subr.mxu0 0.0
    %1280 = vmatpush1.xpose.msra.mxu0 0.0
    %1281 = vmatprep.subr.mxu0 0.0
    %1282 = vmatpush1.xpose.msra.mxu0 0.0
    %1283 = vmatprep.subr.mxu0 0.0
    %1284 = vmatpush1.xpose.msra.mxu0 0.0
    %1285 = vmatprep.subr.mxu0 0.0
    %1286 = vmatpush1.xpose.msra.mxu0 0.0
    %1287 = vmatprep.subr.mxu0 0.0
    %1288 = vmatpush1.xpose.msra.mxu0 0.0
    %1289 = vmatprep.subr.mxu0 0.0
    %1290 = vmatpush1.xpose.msra.mxu0 0.0
    %1291 = vmatprep.subr.mxu0 0.0
    %1292 = vmatpush1.xpose.msra.mxu0 0.0
    %1293 = vmatprep.subr.mxu0 0.0
    %1294 = vmatpush1.xpose.msra.mxu0 0.0
    %1295 = vmatprep.subr.mxu0 0.0
    %1296 = vmatpush1.xpose.msra.mxu0 0.0
    %1297 = vmatprep.subr.mxu0 0.0
    %1298 = vmatpush1.xpose.msra.mxu0 0.0
    %1299 = vmatprep.subr.mxu0 0.0
    %1300 = vmatpush1.xpose.msra.mxu0 0.0
    %1301 = vmatprep.subr.mxu0 0.0
    %1302 = vmatpush1.xpose.msra.mxu0 0.0
    %1303 = vmatprep.subr.mxu0 0.0
    %1304 = vmatpush1.xpose.msra.mxu0 0.0
    %1305 = vmatprep.subr.mxu0 0.0
    %1306 = vmatpush1.xpose.msra.mxu0 0.0
    %1307 = vmatprep.subr.mxu0 0.0
    %1308 = vmatpush1.xpose.msra.mxu0 0.0
    %1309 = vmatprep.mubr.f32.mxu0 0.0
    %1310 = vmatmul.mubr.f32.gmra.mrb[0].mxu0 %v1020
    %v1311 = vpop.f32.mrb[0].mxu0
    %v1312 = vadd.f32 %v1242, %v1311
    %v1313 = vpop.f32.mrb[0].mxu0
    %1314 = vdwg.mxu0
    %1315 = vmatprep.subr.mxu0 %v543
    %1316 = vmatpush1.xpose.msra.mxu0 %v542
    %1317 = vmatprep.subr.mxu0 %v550
    %1318 = vmatpush1.xpose.msra.mxu0 %v549
    %1319 = vmatprep.subr.mxu0 0.0
    %1320 = vmatpush1.xpose.msra.mxu0 0.0
    %1321 = vmatprep.subr.mxu0 0.0
    %1322 = vmatpush1.xpose.msra.mxu0 0.0
    %1323 = vmatprep.subr.mxu0 0.0
    %1324 = vmatpush1.xpose.msra.mxu0 0.0
    %1325 = vmatprep.subr.mxu0 0.0
    %1326 = vmatpush1.xpose.msra.mxu0 0.0
    %1327 = vmatprep.subr.mxu0 0.0
    %1328 = vmatpush1.xpose.msra.mxu0 0.0
    %1329 = vmatprep.subr.mxu0 0.0
    %1330 = vmatpush1.xpose.msra.mxu0 0.0
    %1331 = vmatprep.subr.mxu0 0.0
    %1332 = vmatpush1.xpose.msra.mxu0 0.0
    %1333 = vmatprep.subr.mxu0 0.0
    %1334 = vmatpush1.xpose.msra.mxu0 0.0
    %1335 = vmatprep.subr.mxu0 0.0
    %1336 = vmatpush1.xpose.msra.mxu0 0.0
    %1337 = vmatprep.subr.mxu0 0.0
    %1338 = vmatpush1.xpose.msra.mxu0 0.0
    %1339 = vmatprep.subr.mxu0 0.0
    %1340 = vmatpush1.xpose.msra.mxu0 0.0
    %1341 = vmatprep.subr.mxu0 0.0
    %1342 = vmatpush1.xpose.msra.mxu0 0.0
    %1343 = vmatprep.subr.mxu0 0.0
    %1344 = vmatpush1.xpose.msra.mxu0 0.0
    %1345 = vmatprep.subr.mxu0 0.0
    %1346 = vmatpush1.xpose.msra.mxu0 0.0
    %1347 = vmatprep.subr.mxu0 0.0
    %1348 = vmatpush1.xpose.msra.mxu0 0.0
    %1349 = vmatprep.subr.mxu0 0.0
    %1350 = vmatpush1.xpose.msra.mxu0 0.0
    %1351 = vmatprep.subr.mxu0 0.0
    %1352 = vmatpush1.xpose.msra.mxu0 0.0
    %1353 = vmatprep.subr.mxu0 0.0
    %1354 = vmatpush1.xpose.msra.mxu0 0.0
    %1355 = vmatprep.subr.mxu0 0.0
    %1356 = vmatpush1.xpose.msra.mxu0 0.0
    %1357 = vmatprep.subr.mxu0 0.0
    %1358 = vmatpush1.xpose.msra.mxu0 0.0
    %1359 = vmatprep.subr.mxu0 0.0
    %1360 = vmatpush1.xpose.msra.mxu0 0.0
    %1361 = vmatprep.subr.mxu0 0.0
    %1362 = vmatpush1.xpose.msra.mxu0 0.0
    %1363 = vmatprep.subr.mxu0 0.0
    %1364 = vmatpush1.xpose.msra.mxu0 0.0
    %1365 = vmatprep.subr.mxu0 0.0
    %1366 = vmatpush1.xpose.msra.mxu0 0.0
    %1367 = vmatprep.subr.mxu0 0.0
    %1368 = vmatpush1.xpose.msra.mxu0 0.0
    %1369 = vmatprep.subr.mxu0 0.0
    %1370 = vmatpush1.xpose.msra.mxu0 0.0
    %1371 = vmatprep.subr.mxu0 0.0
    %1372 = vmatpush1.xpose.msra.mxu0 0.0
    %1373 = vmatprep.subr.mxu0 0.0
    %1374 = vmatpush1.xpose.msra.mxu0 0.0
    %1375 = vmatprep.subr.mxu0 0.0
    %1376 = vmatpush1.xpose.msra.mxu0 0.0
    %1377 = vmatprep.subr.mxu0 0.0
    %1378 = vmatpush1.xpose.msra.mxu0 0.0
    %1379 = vmatprep.mubr.f32.mxu0 %v536
    %1380 = vmatmul.mubr.f32.gmra.mrb[0].mxu0 %v535
    %v1381 = vpop.f32.mrb[0].mxu0
    %v1382 = vadd.f32 %v1312, %v1381
    %v1383 = vpop.f32.mrb[0].mxu0
    %1384 = vdwg.mxu0
    %1385 = vmatprep.subr.mxu0 %v545
    %1386 = vmatpush1.xpose.msra.mxu0 %v544
    %1387 = vmatprep.subr.mxu0 %v552
    %1388 = vmatpush1.xpose.msra.mxu0 %v551
    %1389 = vmatprep.subr.mxu0 0.0
    %1390 = vmatpush1.xpose.msra.mxu0 0.0
    %1391 = vmatprep.subr.mxu0 0.0
    %1392 = vmatpush1.xpose.msra.mxu0 0.0
    %1393 = vmatprep.subr.mxu0 0.0
    %1394 = vmatpush1.xpose.msra.mxu0 0.0
    %1395 = vmatprep.subr.mxu0 0.0
    %1396 = vmatpush1.xpose.msra.mxu0 0.0
    %1397 = vmatprep.subr.mxu0 0.0
    %1398 = vmatpush1.xpose.msra.mxu0 0.0
    %1399 = vmatprep.subr.mxu0 0.0
    %1400 = vmatpush1.xpose.msra.mxu0 0.0
    %1401 = vmatprep.subr.mxu0 0.0
    %1402 = vmatpush1.xpose.msra.mxu0 0.0
    %1403 = vmatprep.subr.mxu0 0.0
    %1404 = vmatpush1.xpose.msra.mxu0 0.0
    %1405 = vmatprep.subr.mxu0 0.0
    %1406 = vmatpush1.xpose.msra.mxu0 0.0
    %1407 = vmatprep.subr.mxu0 0.0
    %1408 = vmatpush1.xpose.msra.mxu0 0.0
    %1409 = vmatprep.subr.mxu0 0.0
    %1410 = vmatpush1.xpose.msra.mxu0 0.0
    %1411 = vmatprep.subr.mxu0 0.0
    %1412 = vmatpush1.xpose.msra.mxu0 0.0
    %1413 = vmatprep.subr.mxu0 0.0
    %1414 = vmatpush1.xpose.msra.mxu0 0.0
    %1415 = vmatprep.subr.mxu0 0.0
    %1416 = vmatpush1.xpose.msra.mxu0 0.0
    %1417 = vmatprep.subr.mxu0 0.0
    %1418 = vmatpush1.xpose.msra.mxu0 0.0
    %1419 = vmatprep.subr.mxu0 0.0
    %1420 = vmatpush1.xpose.msra.mxu0 0.0
    %1421 = vmatprep.subr.mxu0 0.0
    %1422 = vmatpush1.xpose.msra.mxu0 0.0
    %1423 = vmatprep.subr.mxu0 0.0
    %1424 = vmatpush1.xpose.msra.mxu0 0.0
    %1425 = vmatprep.subr.mxu0 0.0
    %1426 = vmatpush1.xpose.msra.mxu0 0.0
    %1427 = vmatprep.subr.mxu0 0.0
    %1428 = vmatpush1.xpose.msra.mxu0 0.0
    %1429 = vmatprep.subr.mxu0 0.0
    %1430 = vmatpush1.xpose.msra.mxu0 0.0
    %1431 = vmatprep.subr.mxu0 0.0
    %1432 = vmatpush1.xpose.msra.mxu0 0.0
    %1433 = vmatprep.subr.mxu0 0.0
    %1434 = vmatpush1.xpose.msra.mxu0 0.0
    %1435 = vmatprep.subr.mxu0 0.0
    %1436 = vmatpush1.xpose.msra.mxu0 0.0
    %1437 = vmatprep.subr.mxu0 0.0
    %1438 = vmatpush1.xpose.msra.mxu0 0.0
    %1439 = vmatprep.subr.mxu0 0.0
    %1440 = vmatpush1.xpose.msra.mxu0 0.0
    %1441 = vmatprep.subr.mxu0 0.0
    %1442 = vmatpush1.xpose.msra.mxu0 0.0
    %1443 = vmatprep.subr.mxu0 0.0
    %1444 = vmatpush1.xpose.msra.mxu0 0.0
    %1445 = vmatprep.subr.mxu0 0.0
    %1446 = vmatpush1.xpose.msra.mxu0 0.0
    %1447 = vmatprep.subr.mxu0 0.0
    %1448 = vmatpush1.xpose.msra.mxu0 0.0
    %1449 = vmatprep.mubr.f32.mxu0 %v538
    %1450 = vmatmul.mubr.f32.gmra.mrb[0].mxu0 %v537
    %v1451 = vpop.f32.mrb[0].mxu0
    %v1452 = vadd.f32 %v1382, %v1451
    %v1453 = vpop.f32.mrb[0].mxu0
    %1454 = vdwg.mxu0
    %1455 = vmatprep.subr.mxu0 %v547
    %1456 = vmatpush1.xpose.msra.mxu0 %v546
    %1457 = vmatprep.subr.mxu0 %v554
    %1458 = vmatpush1.xpose.msra.mxu0 %v553
    %1459 = vmatprep.subr.mxu0 0.0
    %1460 = vmatpush1.xpose.msra.mxu0 0.0
    %1461 = vmatprep.subr.mxu0 0.0
    %1462 = vmatpush1.xpose.msra.mxu0 0.0
    %1463 = vmatprep.subr.mxu0 0.0
    %1464 = vmatpush1.xpose.msra.mxu0 0.0
    %1465 = vmatprep.subr.mxu0 0.0
    %1466 = vmatpush1.xpose.msra.mxu0 0.0
    %1467 = vmatprep.subr.mxu0 0.0
    %1468 = vmatpush1.xpose.msra.mxu0 0.0
    %1469 = vmatprep.subr.mxu0 0.0
    %1470 = vmatpush1.xpose.msra.mxu0 0.0
    %1471 = vmatprep.subr.mxu0 0.0
    %1472 = vmatpush1.xpose.msra.mxu0 0.0
    %1473 = vmatprep.subr.mxu0 0.0
    %1474 = vmatpush1.xpose.msra.mxu0 0.0
    %1475 = vmatprep.subr.mxu0 0.0
    %1476 = vmatpush1.xpose.msra.mxu0 0.0
    %1477 = vmatprep.subr.mxu0 0.0
    %1478 = vmatpush1.xpose.msra.mxu0 0.0
    %1479 = vmatprep.subr.mxu0 0.0
    %1480 = vmatpush1.xpose.msra.mxu0 0.0
    %1481 = vmatprep.subr.mxu0 0.0
    %1482 = vmatpush1.xpose.msra.mxu0 0.0
    %1483 = vmatprep.subr.mxu0 0.0
    %1484 = vmatpush1.xpose.msra.mxu0 0.0
    %1485 = vmatprep.subr.mxu0 0.0
    %1486 = vmatpush1.xpose.msra.mxu0 0.0
    %1487 = vmatprep.subr.mxu0 0.0
    %1488 = vmatpush1.xpose.msra.mxu0 0.0
    %1489 = vmatprep.subr.mxu0 0.0
    %1490 = vmatpush1.xpose.msra.mxu0 0.0
    %1491 = vmatprep.subr.mxu0 0.0
    %1492 = vmatpush1.xpose.msra.mxu0 0.0
    %1493 = vmatprep.subr.mxu0 0.0
    %1494 = vmatpush1.xpose.msra.mxu0 0.0
    %1495 = vmatprep.subr.mxu0 0.0
    %1496 = vmatpush1.xpose.msra.mxu0 0.0
    %1497 = vmatprep.subr.mxu0 0.0
    %1498 = vmatpush1.xpose.msra.mxu0 0.0
    %1499 = vmatprep.subr.mxu0 0.0
    %1500 = vmatpush1.xpose.msra.mxu0 0.0
    %1501 = vmatprep.subr.mxu0 0.0
    %1502 = vmatpush1.xpose.msra.mxu0 0.0
    %1503 = vmatprep.subr.mxu0 0.0
    %1504 = vmatpush1.xpose.msra.mxu0 0.0
    %1505 = vmatprep.subr.mxu0 0.0
    %1506 = vmatpush1.xpose.msra.mxu0 0.0
    %1507 = vmatprep.subr.mxu0 0.0
    %1508 = vmatpush1.xpose.msra.mxu0 0.0
    %1509 = vmatprep.subr.mxu0 0.0
    %1510 = vmatpush1.xpose.msra.mxu0 0.0
    %1511 = vmatprep.subr.mxu0 0.0
    %1512 = vmatpush1.xpose.msra.mxu0 0.0
    %1513 = vmatprep.subr.mxu0 0.0
    %1514 = vmatpush1.xpose.msra.mxu0 0.0
    %1515 = vmatprep.subr.mxu0 0.0
    %1516 = vmatpush1.xpose.msra.mxu0 0.0
    %1517 = vmatprep.subr.mxu0 0.0
    %1518 = vmatpush1.xpose.msra.mxu0 0.0
    %1519 = vmatprep.mubr.f32.mxu0 %v540
    %1520 = vmatmul.mubr.f32.gmra.mrb[0].mxu0 %v539
    %v1521 = vpop.f32.mrb[0].mxu0
    %v1522 = vadd.f32 %v1452, %v1521
    %v1523 = vpop.f32.mrb[0].mxu0
    %1524 = vdwg.mxu0
    %1525 = vmatprep.subr.mxu0 0.0
    %1526 = vmatpush1.xpose.msra.mxu0 %v548
    %1527 = vmatprep.subr.mxu0 0.0
    %1528 = vmatpush1.xpose.msra.mxu0 %v555
    %1529 = vmatprep.subr.mxu0 0.0
    %1530 = vmatpush1.xpose.msra.mxu0 0.0
    %1531 = vmatprep.subr.mxu0 0.0
    %1532 = vmatpush1.xpose.msra.mxu0 0.0
    %1533 = vmatprep.subr.mxu0 0.0
    %1534 = vmatpush1.xpose.msra.mxu0 0.0
    %1535 = vmatprep.subr.mxu0 0.0
    %1536 = vmatpush1.xpose.msra.mxu0 0.0
    %1537 = vmatprep.subr.mxu0 0.0
    %1538 = vmatpush1.xpose.msra.mxu0 0.0
    %1539 = vmatprep.subr.mxu0 0.0
    %1540 = vmatpush1.xpose.msra.mxu0 0.0
    %1541 = vmatprep.subr.mxu0 0.0
    %1542 = vmatpush1.xpose.msra.mxu0 0.0
    %1543 = vmatprep.subr.mxu0 0.0
    %1544 = vmatpush1.xpose.msra.mxu0 0.0
    %1545 = vmatprep.subr.mxu0 0.0
    %1546 = vmatpush1.xpose.msra.mxu0 0.0
    %1547 = vmatprep.subr.mxu0 0.0
    %1548 = vmatpush1.xpose.msra.mxu0 0.0
    %1549 = vmatprep.subr.mxu0 0.0
    %1550 = vmatpush1.xpose.msra.mxu0 0.0
    %1551 = vmatprep.subr.mxu0 0.0
    %1552 = vmatpush1.xpose.msra.mxu0 0.0
    %1553 = vmatprep.subr.mxu0 0.0
    %1554 = vmatpush1.xpose.msra.mxu0 0.0
    %1555 = vmatprep.subr.mxu0 0.0
    %1556 = vmatpush1.xpose.msra.mxu0 0.0
    %1557 = vmatprep.subr.mxu0 0.0
    %1558 = vmatpush1.xpose.msra.mxu0 0.0
    %1559 = vmatprep.subr.mxu0 0.0
    %1560 = vmatpush1.xpose.msra.mxu0 0.0
    %1561 = vmatprep.subr.mxu0 0.0
    %1562 = vmatpush1.xpose.msra.mxu0 0.0
    %1563 = vmatprep.subr.mxu0 0.0
    %1564 = vmatpush1.xpose.msra.mxu0 0.0
    %1565 = vmatprep.subr.mxu0 0.0
    %1566 = vmatpush1.xpose.msra.mxu0 0.0
    %1567 = vmatprep.subr.mxu0 0.0
    %1568 = vmatpush1.xpose.msra.mxu0 0.0
    %1569 = vmatprep.subr.mxu0 0.0
    %1570 = vmatpush1.xpose.msra.mxu0 0.0
    %1571 = vmatprep.subr.mxu0 0.0
    %1572 = vmatpush1.xpose.msra.mxu0 0.0
    %1573 = vmatprep.subr.mxu0 0.0
    %1574 = vmatpush1.xpose.msra.mxu0 0.0
    %1575 = vmatprep.subr.mxu0 0.0
    %1576 = vmatpush1.xpose.msra.mxu0 0.0
    %1577 = vmatprep.subr.mxu0 0.0
    %1578 = vmatpush1.xpose.msra.mxu0 0.0
    %1579 = vmatprep.subr.mxu0 0.0
    %1580 = vmatpush1.xpose.msra.mxu0 0.0
    %1581 = vmatprep.subr.mxu0 0.0
    %1582 = vmatpush1.xpose.msra.mxu0 0.0
    %1583 = vmatprep.subr.mxu0 0.0
    %1584 = vmatpush1.xpose.msra.mxu0 0.0
    %1585 = vmatprep.subr.mxu0 0.0
    %1586 = vmatpush1.xpose.msra.mxu0 0.0
    %1587 = vmatprep.subr.mxu0 0.0
    %1588 = vmatpush1.xpose.msra.mxu0 0.0
    %1589 = vmatprep.mubr.f32.mxu0 0.0
    %1590 = vmatmul.mubr.f32.gmra.mrb[0].mxu0 %v541
    %v1591 = vpop.f32.mrb[0].mxu0
    %v1592 = vadd.f32 %v1522, %v1591
    %v1593 = vpop.f32.mrb[0].mxu0
    %1594 = vdwg.mxu0
    %s1595 = sld [smem:[#allocation2 + $0x100]]
    %v1596 = vstv %s1595
    %v1597 = vmul.f32 %v61, %v1596
    %v1598 = vmul.f32 %v62, %v1596
    %v1599 = vmul.f32 %v63, %v1596
    %v1600 = vmul.f32 %v64, %v1596
    %v1601 = vmul.f32 %v65, %v1596
    %v1602 = vmul.f32 %v66, %v1596
    %v1603 = vmul.f32 %v67, %v1596
    %s1604 = sld [smem:[#allocation2 + $0x101]]
    %v1605 = vstv %s1604
    %v1606 = vmul.f32 %v61, %v1605
    %v1607 = vmul.f32 %v62, %v1605
    %v1608 = vmul.f32 %v63, %v1605
    %v1609 = vmul.f32 %v64, %v1605
    %v1610 = vmul.f32 %v65, %v1605
    %v1611 = vmul.f32 %v66, %v1605
    %v1612 = vmul.f32 %v67, %v1605
    %v1613 = vmul.f32 %v68, %v1605
    %1622 = vrot.lane.b32.xlu0 %v1606, 127
    %v1623 = vpop.permute.xlu0 %1622
    %1624 = vrot.lane.b32.xlu0 %v1607, 127
    %v1625 = vpop.permute.xlu0 %1624
    %1626 = vrot.lane.b32.xlu0 %v1608, 127
    %v1627 = vpop.permute.xlu0 %1626
    %1628 = vrot.lane.b32.xlu0 %v1609, 127
    %v1629 = vpop.permute.xlu0 %1628
    %1630 = vrot.lane.b32.xlu0 %v1610, 127
    %v1631 = vpop.permute.xlu0 %1630
    %1632 = vrot.lane.b32.xlu0 %v1611, 127
    %v1633 = vpop.permute.xlu0 %1632
    %1634 = vrot.lane.b32.xlu0 %v1612, 127
    %v1635 = vpop.permute.xlu0 %1634
    %1636 = vrot.lane.b32.xlu0 %v1613, 127
    %v1637 = vpop.permute.xlu0 %1636
    %v1638 = vsel %vm112, %v1623, %v1625
    %v1639 = vsel %vm112, %v1625, %v1627
    %v1640 = vsel %vm112, %v1627, %v1629
    %v1641 = vsel %vm112, %v1629, %v1631
    %v1642 = vsel %vm112, %v1631, %v1633
    %v1643 = vsel %vm112, %v1633, %v1635
    %v1644 = vsel %vm112, %v1635, %v1637
    %v1652 = vadd.f32 %v1597, %v1638
    %v1653 = vadd.f32 %v1598, %v1639
    %v1654 = vadd.f32 %v1599, %v1640
    %v1655 = vadd.f32 %v1600, %v1641
    %v1656 = vadd.f32 %v1601, %v1642
    %v1657 = vadd.f32 %v1602, %v1643
    %v1658 = vadd.f32 %v1603, %v1644
    %s1659 = sld [smem:[#allocation2 + $0x102]]
    %v1660 = vstv %s1659
    %v1661 = vmul.f32 %v61, %v1660
    %v1662 = vmul.f32 %v62, %v1660
    %v1663 = vmul.f32 %v63, %v1660
    %v1664 = vmul.f32 %v64, %v1660
    %v1665 = vmul.f32 %v65, %v1660
    %v1666 = vmul.f32 %v66, %v1660
    %v1667 = vmul.f32 %v67, %v1660
    %v1668 = vmul.f32 %v68, %v1660
    %1677 = vrot.lane.b32.xlu0 %v1661, 126
    %v1678 = vpop.permute.xlu0 %1677
    %1679 = vrot.lane.b32.xlu0 %v1662, 126
    %v1680 = vpop.permute.xlu0 %1679
    %1681 = vrot.lane.b32.xlu0 %v1663, 126
    %v1682 = vpop.permute.xlu0 %1681
    %1683 = vrot.lane.b32.xlu0 %v1664, 126
    %v1684 = vpop.permute.xlu0 %1683
    %1685 = vrot.lane.b32.xlu0 %v1665, 126
    %v1686 = vpop.permute.xlu0 %1685
    %1687 = vrot.lane.b32.xlu0 %v1666, 126
    %v1688 = vpop.permute.xlu0 %1687
    %1689 = vrot.lane.b32.xlu0 %v1667, 126
    %v1690 = vpop.permute.xlu0 %1689
    %1691 = vrot.lane.b32.xlu0 %v1668, 126
    %v1692 = vpop.permute.xlu0 %1691
    %v1693 = vsel %vm168, %v1678, %v1680
    %v1694 = vsel %vm168, %v1680, %v1682
    %v1695 = vsel %vm168, %v1682, %v1684
    %v1696 = vsel %vm168, %v1684, %v1686
    %v1697 = vsel %vm168, %v1686, %v1688
    %v1698 = vsel %vm168, %v1688, %v1690
    %v1699 = vsel %vm168, %v1690, %v1692
    %v1707 = vadd.f32 %v1652, %v1693
    %v1708 = vadd.f32 %v1653, %v1694
    %v1709 = vadd.f32 %v1654, %v1695
    %v1710 = vadd.f32 %v1655, %v1696
    %v1711 = vadd.f32 %v1656, %v1697
    %v1712 = vadd.f32 %v1657, %v1698
    %v1713 = vadd.f32 %v1658, %v1699
    %s1714 = sld [smem:[#allocation2 + $0x103]]
    %v1715 = vstv %s1714
    %v1716 = vmul.f32 %v61, %v1715
    %v1717 = vmul.f32 %v62, %v1715
    %v1718 = vmul.f32 %v63, %v1715
    %v1719 = vmul.f32 %v64, %v1715
    %v1720 = vmul.f32 %v65, %v1715
    %v1721 = vmul.f32 %v66, %v1715
    %v1722 = vmul.f32 %v67, %v1715
    %v1723 = vmul.f32 %v68, %v1715
    %1732 = vrot.lane.b32.xlu0 %v1716, 100
    %v1733 = vpop.permute.xlu0 %1732
    %1734 = vrot.lane.b32.xlu0 %v1717, 100
    %v1735 = vpop.permute.xlu0 %1734
    %1736 = vrot.lane.b32.xlu0 %v1718, 100
    %v1737 = vpop.permute.xlu0 %1736
    %1738 = vrot.lane.b32.xlu0 %v1719, 100
    %v1739 = vpop.permute.xlu0 %1738
    %1740 = vrot.lane.b32.xlu0 %v1720, 100
    %v1741 = vpop.permute.xlu0 %1740
    %1742 = vrot.lane.b32.xlu0 %v1721, 100
    %v1743 = vpop.permute.xlu0 %1742
    %1744 = vrot.lane.b32.xlu0 %v1722, 100
    %v1745 = vpop.permute.xlu0 %1744
    %1746 = vrot.lane.b32.xlu0 %v1723, 100
    %v1747 = vpop.permute.xlu0 %1746
    %v1748 = vsel %vm224, %v1733, %v1735
    %v1749 = vsel %vm224, %v1735, %v1737
    %v1750 = vsel %vm224, %v1737, %v1739
    %v1751 = vsel %vm224, %v1739, %v1741
    %v1752 = vsel %vm224, %v1741, %v1743
    %v1753 = vsel %vm224, %v1743, %v1745
    %v1754 = vsel %vm224, %v1745, %v1747
    %v1762 = vadd.f32 %v1707, %v1748
    %v1763 = vadd.f32 %v1708, %v1749
    %v1764 = vadd.f32 %v1709, %v1750
    %v1765 = vadd.f32 %v1710, %v1751
    %v1766 = vadd.f32 %v1711, %v1752
    %v1767 = vadd.f32 %v1712, %v1753
    %v1768 = vadd.f32 %v1713, %v1754
    %s1769 = sld [smem:[#allocation2 + $0x104]]
    %v1770 = vstv %s1769
    %v1771 = vmul.f32 %v61, %v1770
    %v1772 = vmul.f32 %v62, %v1770
    %v1773 = vmul.f32 %v63, %v1770
    %v1774 = vmul.f32 %v64, %v1770
    %v1775 = vmul.f32 %v65, %v1770
    %v1776 = vmul.f32 %v66, %v1770
    %v1777 = vmul.f32 %v67, %v1770
    %v1778 = vmul.f32 %v68, %v1770
    %1787 = vrot.lane.b32.xlu0 %v1771, 99
    %v1788 = vpop.permute.xlu0 %1787
    %1789 = vrot.lane.b32.xlu0 %v1772, 99
    %v1790 = vpop.permute.xlu0 %1789
    %1791 = vrot.lane.b32.xlu0 %v1773, 99
    %v1792 = vpop.permute.xlu0 %1791
    %1793 = vrot.lane.b32.xlu0 %v1774, 99
    %v1794 = vpop.permute.xlu0 %1793
    %1795 = vrot.lane.b32.xlu0 %v1775, 99
    %v1796 = vpop.permute.xlu0 %1795
    %1797 = vrot.lane.b32.xlu0 %v1776, 99
    %v1798 = vpop.permute.xlu0 %1797
    %1799 = vrot.lane.b32.xlu0 %v1777, 99
    %v1800 = vpop.permute.xlu0 %1799
    %1801 = vrot.lane.b32.xlu0 %v1778, 99
    %v1802 = vpop.permute.xlu0 %1801
    %v1803 = vsel %vm280, %v1788, %v1790
    %v1804 = vsel %vm280, %v1790, %v1792
    %v1805 = vsel %vm280, %v1792, %v1794
    %v1806 = vsel %vm280, %v1794, %v1796
    %v1807 = vsel %vm280, %v1796, %v1798
    %v1808 = vsel %vm280, %v1798, %v1800
    %v1809 = vsel %vm280, %v1800, %v1802
    %v1817 = vadd.f32 %v1762, %v1803
    %v1818 = vadd.f32 %v1763, %v1804
    %v1819 = vadd.f32 %v1764, %v1805
    %v1820 = vadd.f32 %v1765, %v1806
    %v1821 = vadd.f32 %v1766, %v1807
    %v1822 = vadd.f32 %v1767, %v1808
    %v1823 = vadd.f32 %v1768, %v1809
    %s1824 = sld [smem:[#allocation2 + $0x105]]
    %v1825 = vstv %s1824
    %v1826 = vmul.f32 %v61, %v1825
    %v1827 = vmul.f32 %v62, %v1825
    %v1828 = vmul.f32 %v63, %v1825
    %v1829 = vmul.f32 %v64, %v1825
    %v1830 = vmul.f32 %v65, %v1825
    %v1831 = vmul.f32 %v66, %v1825
    %v1832 = vmul.f32 %v67, %v1825
    %v1833 = vmul.f32 %v68, %v1825
    %1842 = vrot.lane.b32.xlu0 %v1826, 98
    %v1843 = vpop.permute.xlu0 %1842
    %1844 = vrot.lane.b32.xlu0 %v1827, 98
    %v1845 = vpop.permute.xlu0 %1844
    %1846 = vrot.lane.b32.xlu0 %v1828, 98
    %v1847 = vpop.permute.xlu0 %1846
    %1848 = vrot.lane.b32.xlu0 %v1829, 98
    %v1849 = vpop.permute.xlu0 %1848
    %1850 = vrot.lane.b32.xlu0 %v1830, 98
    %v1851 = vpop.permute.xlu0 %1850
    %1852 = vrot.lane.b32.xlu0 %v1831, 98
    %v1853 = vpop.permute.xlu0 %1852
    %1854 = vrot.lane.b32.xlu0 %v1832, 98
    %v1855 = vpop.permute.xlu0 %1854
    %1856 = vrot.lane.b32.xlu0 %v1833, 98
    %v1857 = vpop.permute.xlu0 %1856
    %v1858 = vsel %vm336, %v1843, %v1845
    %v1859 = vsel %vm336, %v1845, %v1847
    %v1860 = vsel %vm336, %v1847, %v1849
    %v1861 = vsel %vm336, %v1849, %v1851
    %v1862 = vsel %vm336, %v1851, %v1853
    %v1863 = vsel %vm336, %v1853, %v1855
    %v1864 = vsel %vm336, %v1855, %v1857
    %v1872 = vadd.f32 %v1817, %v1858
    %v1873 = vadd.f32 %v1818, %v1859
    %v1874 = vadd.f32 %v1819, %v1860
    %v1875 = vadd.f32 %v1820, %v1861
    %v1876 = vadd.f32 %v1821, %v1862
    %v1877 = vadd.f32 %v1822, %v1863
    %v1878 = vadd.f32 %v1823, %v1864
    %s1879 = sld [smem:[#allocation2 + $0x106]]
    %v1880 = vstv %s1879
    %v1881 = vmul.f32 %v61, %v1880
    %v1882 = vmul.f32 %v62, %v1880
    %v1883 = vmul.f32 %v63, %v1880
    %v1884 = vmul.f32 %v64, %v1880
    %v1885 = vmul.f32 %v65, %v1880
    %v1886 = vmul.f32 %v66, %v1880
    %v1887 = vmul.f32 %v67, %v1880
    %v1888 = vmul.f32 %v68, %v1880
    %1897 = vrot.lane.b32.xlu0 %v1881, 72
    %v1898 = vpop.permute.xlu0 %1897
    %1899 = vrot.lane.b32.xlu0 %v1882, 72
    %v1900 = vpop.permute.xlu0 %1899
    %1901 = vrot.lane.b32.xlu0 %v1883, 72
    %v1902 = vpop.permute.xlu0 %1901
    %1903 = vrot.lane.b32.xlu0 %v1884, 72
    %v1904 = vpop.permute.xlu0 %1903
    %1905 = vrot.lane.b32.xlu0 %v1885, 72
    %v1906 = vpop.permute.xlu0 %1905
    %1907 = vrot.lane.b32.xlu0 %v1886, 72
    %v1908 = vpop.permute.xlu0 %1907
    %1909 = vrot.lane.b32.xlu0 %v1887, 72
    %v1910 = vpop.permute.xlu0 %1909
    %1911 = vrot.lane.b32.xlu0 %v1888, 72
    %v1912 = vpop.permute.xlu0 %1911
    %v1913 = vsel %vm392, %v1898, %v1900
    %v1914 = vsel %vm392, %v1900, %v1902
    %v1915 = vsel %vm392, %v1902, %v1904
    %v1916 = vsel %vm392, %v1904, %v1906
    %v1917 = vsel %vm392, %v1906, %v1908
    %v1918 = vsel %vm392, %v1908, %v1910
    %v1919 = vsel %vm392, %v1910, %v1912
    %v1927 = vadd.f32 %v1872, %v1913
    %v1928 = vadd.f32 %v1873, %v1914
    %v1929 = vadd.f32 %v1874, %v1915
    %v1930 = vadd.f32 %v1875, %v1916
    %v1931 = vadd.f32 %v1876, %v1917
    %v1932 = vadd.f32 %v1877, %v1918
    %v1933 = vadd.f32 %v1878, %v1919
    %s1934 = sld [smem:[#allocation2 + $0x107]]
    %v1935 = vstv %s1934
    %v1936 = vmul.f32 %v61, %v1935
    %v1937 = vmul.f32 %v62, %v1935
    %v1938 = vmul.f32 %v63, %v1935
    %v1939 = vmul.f32 %v64, %v1935
    %v1940 = vmul.f32 %v65, %v1935
    %v1941 = vmul.f32 %v66, %v1935
    %v1942 = vmul.f32 %v67, %v1935
    %v1943 = vmul.f32 %v68, %v1935
    %1952 = vrot.lane.b32.xlu0 %v1936, 71
    %v1953 = vpop.permute.xlu0 %1952
    %1954 = vrot.lane.b32.xlu0 %v1937, 71
    %v1955 = vpop.permute.xlu0 %1954
    %1956 = vrot.lane.b32.xlu0 %v1938, 71
    %v1957 = vpop.permute.xlu0 %1956
    %1958 = vrot.lane.b32.xlu0 %v1939, 71
    %v1959 = vpop.permute.xlu0 %1958
    %1960 = vrot.lane.b32.xlu0 %v1940, 71
    %v1961 = vpop.permute.xlu0 %1960
    %1962 = vrot.lane.b32.xlu0 %v1941, 71
    %v1963 = vpop.permute.xlu0 %1962
    %1964 = vrot.lane.b32.xlu0 %v1942, 71
    %v1965 = vpop.permute.xlu0 %1964
    %1966 = vrot.lane.b32.xlu0 %v1943, 71
    %v1967 = vpop.permute.xlu0 %1966
    %v1968 = vsel %vm448, %v1953, %v1955
    %v1969 = vsel %vm448, %v1955, %v1957
    %v1970 = vsel %vm448, %v1957, %v1959
    %v1971 = vsel %vm448, %v1959, %v1961
    %v1972 = vsel %vm448, %v1961, %v1963
    %v1973 = vsel %vm448, %v1963, %v1965
    %v1974 = vsel %vm448, %v1965, %v1967
    %v1982 = vadd.f32 %v1927, %v1968
    %v1983 = vadd.f32 %v1928, %v1969
    %v1984 = vadd.f32 %v1929, %v1970
    %v1985 = vadd.f32 %v1930, %v1971
    %v1986 = vadd.f32 %v1931, %v1972
    %v1987 = vadd.f32 %v1932, %v1973
    %v1988 = vadd.f32 %v1933, %v1974
    %s1989 = sld [smem:[#allocation2 + $0x108]]
    %v1990 = vstv %s1989
    %v1991 = vmul.f32 %v61, %v1990
    %v1992 = vmul.f32 %v62, %v1990
    %v1993 = vmul.f32 %v63, %v1990
    %v1994 = vmul.f32 %v64, %v1990
    %v1995 = vmul.f32 %v65, %v1990
    %v1996 = vmul.f32 %v66, %v1990
    %v1997 = vmul.f32 %v67, %v1990
    %v1998 = vmul.f32 %v68, %v1990
    %2007 = vrot.lane.b32.xlu0 %v1991, 70
    %v2008 = vpop.permute.xlu0 %2007
    %2009 = vrot.lane.b32.xlu0 %v1992, 70
    %v2010 = vpop.permute.xlu0 %2009
    %2011 = vrot.lane.b32.xlu0 %v1993, 70
    %v2012 = vpop.permute.xlu0 %2011
    %2013 = vrot.lane.b32.xlu0 %v1994, 70
    %v2014 = vpop.permute.xlu0 %2013
    %2015 = vrot.lane.b32.xlu0 %v1995, 70
    %v2016 = vpop.permute.xlu0 %2015
    %2017 = vrot.lane.b32.xlu0 %v1996, 70
    %v2018 = vpop.permute.xlu0 %2017
    %2019 = vrot.lane.b32.xlu0 %v1997, 70
    %v2020 = vpop.permute.xlu0 %2019
    %2021 = vrot.lane.b32.xlu0 %v1998, 70
    %v2022 = vpop.permute.xlu0 %2021
    %v2023 = vsel %vm504, %v2008, %v2010
    %v2024 = vsel %vm504, %v2010, %v2012
    %v2025 = vsel %vm504, %v2012, %v2014
    %v2026 = vsel %vm504, %v2014, %v2016
    %v2027 = vsel %vm504, %v2016, %v2018
    %v2028 = vsel %vm504, %v2018, %v2020
    %v2029 = vsel %vm504, %v2020, %v2022
    %v2037 = vadd.f32 %v1982, %v2023
    %v2038 = vadd.f32 %v1983, %v2024
    %v2039 = vadd.f32 %v1984, %v2025
    %v2040 = vadd.f32 %v1985, %v2026
    %v2041 = vadd.f32 %v1986, %v2027
    %v2042 = vadd.f32 %v1987, %v2028
    %v2043 = vadd.f32 %v1988, %v2029
    %s2044 = sld [smem:[#allocation5 + $0x2]]
    %v2045 = vstv %s2044
    %v2046 = vadd.f32 %v2037, %v2045
    %v2047 = vadd.f32 %v2038, %v2045
    %v2048 = vadd.f32 %v2039, %v2045
    %v2049 = vadd.f32 %v2040, %v2045
    %v2050 = vadd.f32 %v2041, %v2045
    %v2051 = vadd.f32 %v2042, %v2045
    %v2052 = vadd.f32 %v2043, %v2045
    %v2053 = vmax.f32 %v2046, 0.0
    %v2054 = vmax.f32 %v2047, 0.0
    %v2055 = vmax.f32 %v2048, 0.0
    %v2056 = vmax.f32 %v2049, 0.0
    %v2057 = vmax.f32 %v2050, 0.0
    %v2058 = vmax.f32 %v2051, 0.0
    %v2059 = vmax.f32 %v2052, 0.0
    %v2060 = vld [vmem:[#allocation7 + $0x70] sm:$0xff]
    %v2061 = vld [vmem:[#allocation7 + $0x78] sm:$0xff]
    %v2062 = vld [vmem:[#allocation7 + $0x80] sm:$0xff]
    %v2063 = vld [vmem:[#allocation7 + $0x88] sm:$0xff]
    %v2064 = vld [vmem:[#allocation7 + $0x90] sm:$0xff]
    %v2065 = vld [vmem:[#allocation7 + $0x98] sm:$0xff]
    %v2066 = vld [vmem:[#allocation7 + $0xa0] sm:$0xff]
    %v2067 = vld [vmem:[#allocation7 + $0x3f0] sm:$0x3]
    %v2068 = vld [vmem:[#allocation7 + $0x3f8] sm:$0x3]
    %v2069 = vld [vmem:[#allocation7 + $0x400] sm:$0x3]
    %v2070 = vld [vmem:[#allocation7 + $0x408] sm:$0x3]
    %v2071 = vld [vmem:[#allocation7 + $0x410] sm:$0x3]
    %v2072 = vld [vmem:[#allocation7 + $0x418] sm:$0x3]
    %v2073 = vld [vmem:[#allocation7 + $0x420] sm:$0x3]
    %2074 = vmatprep.subr.mxu0 %v2061
    %2075 = vmatpush1.xpose.msra.mxu0 %v2060
    %2076 = vmatprep.subr.mxu0 %v2068
    %2077 = vmatpush1.xpose.msra.mxu0 %v2067
    %2078 = vmatprep.subr.mxu0 0.0
    %2079 = vmatpush1.xpose.msra.mxu0 0.0
    %2080 = vmatprep.subr.mxu0 0.0
    %2081 = vmatpush1.xpose.msra.mxu0 0.0
    %2082 = vmatprep.subr.mxu0 0.0
    %2083 = vmatpush1.xpose.msra.mxu0 0.0
    %2084 = vmatprep.subr.mxu0 0.0
    %2085 = vmatpush1.xpose.msra.mxu0 0.0
    %2086 = vmatprep.subr.mxu0 0.0
    %2087 = vmatpush1.xpose.msra.mxu0 0.0
    %2088 = vmatprep.subr.mxu0 0.0
    %2089 = vmatpush1.xpose.msra.mxu0 0.0
    %2090 = vmatprep.subr.mxu0 0.0
    %2091 = vmatpush1.xpose.msra.mxu0 0.0
    %2092 = vmatprep.subr.mxu0 0.0
    %2093 = vmatpush1.xpose.msra.mxu0 0.0
    %2094 = vmatprep.subr.mxu0 0.0
    %2095 = vmatpush1.xpose.msra.mxu0 0.0
    %2096 = vmatprep.subr.mxu0 0.0
    %2097 = vmatpush1.xpose.msra.mxu0 0.0
    %2098 = vmatprep.subr.mxu0 0.0
    %2099 = vmatpush1.xpose.msra.mxu0 0.0
    %2100 = vmatprep.subr.mxu0 0.0
    %2101 = vmatpush1.xpose.msra.mxu0 0.0
    %2102 = vmatprep.subr.mxu0 0.0
    %2103 = vmatpush1.xpose.msra.mxu0 0.0
    %2104 = vmatprep.subr.mxu0 0.0
    %2105 = vmatpush1.xpose.msra.mxu0 0.0
    %2106 = vmatprep.subr.mxu0 0.0
    %2107 = vmatpush1.xpose.msra.mxu0 0.0
    %2108 = vmatprep.subr.mxu0 0.0
    %2109 = vmatpush1.xpose.msra.mxu0 0.0
    %2110 = vmatprep.subr.mxu0 0.0
    %2111 = vmatpush1.xpose.msra.mxu0 0.0
    %2112 = vmatprep.subr.mxu0 0.0
    %2113 = vmatpush1.xpose.msra.mxu0 0.0
    %2114 = vmatprep.subr.mxu0 0.0
    %2115 = vmatpush1.xpose.msra.mxu0 0.0
    %2116 = vmatprep.subr.mxu0 0.0
    %2117 = vmatpush1.xpose.msra.mxu0 0.0
    %2118 = vmatprep.subr.mxu0 0.0
    %2119 = vmatpush1.xpose.msra.mxu0 0.0
    %2120 = vmatprep.subr.mxu0 0.0
    %2121 = vmatpush1.xpose.msra.mxu0 0.0
    %2122 = vmatprep.subr.mxu0 0.0
    %2123 = vmatpush1.xpose.msra.mxu0 0.0
    %2124 = vmatprep.subr.mxu0 0.0
    %2125 = vmatpush1.xpose.msra.mxu0 0.0
    %2126 = vmatprep.subr.mxu0 0.0
    %2127 = vmatpush1.xpose.msra.mxu0 0.0
    %2128 = vmatprep.subr.mxu0 0.0
    %2129 = vmatpush1.xpose.msra.mxu0 0.0
    %2130 = vmatprep.subr.mxu0 0.0
    %2131 = vmatpush1.xpose.msra.mxu0 0.0
    %2132 = vmatprep.subr.mxu0 0.0
    %2133 = vmatpush1.xpose.msra.mxu0 0.0
    %2134 = vmatprep.subr.mxu0 0.0
    %2135 = vmatpush1.xpose.msra.mxu0 0.0
    %2136 = vmatprep.subr.mxu0 0.0
    %2137 = vmatpush1.xpose.msra.mxu0 0.0
    %2138 = vmatprep.mubr.f32.mxu0 %v2054
    %2139 = vmatmul.mubr.f32.gmra.mrb[0].mxu0 %v2053
    %v2140 = vpop.f32.mrb[0].mxu0
    %v2141 = vadd.f32 0.0, %v2140
    %v2142 = vpop.f32.mrb[0].mxu0
    %2143 = vdwg.mxu0
    %2144 = vmatprep.subr.mxu0 %v2063
    %2145 = vmatpush1.xpose.msra.mxu0 %v2062
    %2146 = vmatprep.subr.mxu0 %v2070
    %2147 = vmatpush1.xpose.msra.mxu0 %v2069
    %2148 = vmatprep.subr.mxu0 0.0
    %2149 = vmatpush1.xpose.msra.mxu0 0.0
    %2150 = vmatprep.subr.mxu0 0.0
    %2151 = vmatpush1.xpose.msra.mxu0 0.0
    %2152 = vmatprep.subr.mxu0 0.0
    %2153 = vmatpush1.xpose.msra.mxu0 0.0
    %2154 = vmatprep.subr.mxu0 0.0
    %2155 = vmatpush1.xpose.msra.mxu0 0.0
    %2156 = vmatprep.subr.mxu0 0.0
    %2157 = vmatpush1.xpose.msra.mxu0 0.0
    %2158 = vmatprep.subr.mxu0 0.0
    %2159 = vmatpush1.xpose.msra.mxu0 0.0
    %2160 = vmatprep.subr.mxu0 0.0
    %2161 = vmatpush1.xpose.msra.mxu0 0.0
    %2162 = vmatprep.subr.mxu0 0.0
    %2163 = vmatpush1.xpose.msra.mxu0 0.0
    %2164 = vmatprep.subr.mxu0 0.0
    %2165 = vmatpush1.xpose.msra.mxu0 0.0
    %2166 = vmatprep.subr.mxu0 0.0
    %2167 = vmatpush1.xpose.msra.mxu0 0.0
    %2168 = vmatprep.subr.mxu0 0.0
    %2169 = vmatpush1.xpose.msra.mxu0 0.0
    %2170 = vmatprep.subr.mxu0 0.0
    %2171 = vmatpush1.xpose.msra.mxu0 0.0
    %2172 = vmatprep.subr.mxu0 0.0
    %2173 = vmatpush1.xpose.msra.mxu0 0.0
    %2174 = vmatprep.subr.mxu0 0.0
    %2175 = vmatpush1.xpose.msra.mxu0 0.0
    %2176 = vmatprep.subr.mxu0 0.0
    %2177 = vmatpush1.xpose.msra.mxu0 0.0
    %2178 = vmatprep.subr.mxu0 0.0
    %2179 = vmatpush1.xpose.msra.mxu0 0.0
    %2180 = vmatprep.subr.mxu0 0.0
    %2181 = vmatpush1.xpose.msra.mxu0 0.0
    %2182 = vmatprep.subr.mxu0 0.0
    %2183 = vmatpush1.xpose.msra.mxu0 0.0
    %2184 = vmatprep.subr.mxu0 0.0
    %2185 = vmatpush1.xpose.msra.mxu0 0.0
    %2186 = vmatprep.subr.mxu0 0.0
    %2187 = vmatpush1.xpose.msra.mxu0 0.0
    %2188 = vmatprep.subr.mxu0 0.0
    %2189 = vmatpush1.xpose.msra.mxu0 0.0
    %2190 = vmatprep.subr.mxu0 0.0
    %2191 = vmatpush1.xpose.msra.mxu0 0.0
    %2192 = vmatprep.subr.mxu0 0.0
    %2193 = vmatpush1.xpose.msra.mxu0 0.0
    %2194 = vmatprep.subr.mxu0 0.0
    %2195 = vmatpush1.xpose.msra.mxu0 0.0
    %2196 = vmatprep.subr.mxu0 0.0
    %2197 = vmatpush1.xpose.msra.mxu0 0.0
    %2198 = vmatprep.subr.mxu0 0.0
    %2199 = vmatpush1.xpose.msra.mxu0 0.0
    %2200 = vmatprep.subr.mxu0 0.0
    %2201 = vmatpush1.xpose.msra.mxu0 0.0
    %2202 = vmatprep.subr.mxu0 0.0
    %2203 = vmatpush1.xpose.msra.mxu0 0.0
    %2204 = vmatprep.subr.mxu0 0.0
    %2205 = vmatpush1.xpose.msra.mxu0 0.0
    %2206 = vmatprep.subr.mxu0 0.0
    %2207 = vmatpush1.xpose.msra.mxu0 0.0
    %2208 = vmatprep.mubr.f32.mxu0 %v2056
    %2209 = vmatmul.mubr.f32.gmra.mrb[0].mxu0 %v2055
    %v2210 = vpop.f32.mrb[0].mxu0
    %v2211 = vadd.f32 %v2141, %v2210
    %v2212 = vpop.f32.mrb[0].mxu0
    %2213 = vdwg.mxu0
    %2214 = vmatprep.subr.mxu0 %v2065
    %2215 = vmatpush1.xpose.msra.mxu0 %v2064
    %2216 = vmatprep.subr.mxu0 %v2072
    %2217 = vmatpush1.xpose.msra.mxu0 %v2071
    %2218 = vmatprep.subr.mxu0 0.0
    %2219 = vmatpush1.xpose.msra.mxu0 0.0
    %2220 = vmatprep.subr.mxu0 0.0
    %2221 = vmatpush1.xpose.msra.mxu0 0.0
    %2222 = vmatprep.subr.mxu0 0.0
    %2223 = vmatpush1.xpose.msra.mxu0 0.0
    %2224 = vmatprep.subr.mxu0 0.0
    %2225 = vmatpush1.xpose.msra.mxu0 0.0
    %2226 = vmatprep.subr.mxu0 0.0
    %2227 = vmatpush1.xpose.msra.mxu0 0.0
    %2228 = vmatprep.subr.mxu0 0.0
    %2229 = vmatpush1.xpose.msra.mxu0 0.0
    %2230 = vmatprep.subr.mxu0 0.0
    %2231 = vmatpush1.xpose.msra.mxu0 0.0
    %2232 = vmatprep.subr.mxu0 0.0
    %2233 = vmatpush1.xpose.msra.mxu0 0.0
    %2234 = vmatprep.subr.mxu0 0.0
    %2235 = vmatpush1.xpose.msra.mxu0 0.0
    %2236 = vmatprep.subr.mxu0 0.0
    %2237 = vmatpush1.xpose.msra.mxu0 0.0
    %2238 = vmatprep.subr.mxu0 0.0
    %2239 = vmatpush1.xpose.msra.mxu0 0.0
    %2240 = vmatprep.subr.mxu0 0.0
    %2241 = vmatpush1.xpose.msra.mxu0 0.0
    %2242 = vmatprep.subr.mxu0 0.0
    %2243 = vmatpush1.xpose.msra.mxu0 0.0
    %2244 = vmatprep.subr.mxu0 0.0
    %2245 = vmatpush1.xpose.msra.mxu0 0.0
    %2246 = vmatprep.subr.mxu0 0.0
    %2247 = vmatpush1.xpose.msra.mxu0 0.0
    %2248 = vmatprep.subr.mxu0 0.0
    %2249 = vmatpush1.xpose.msra.mxu0 0.0
    %2250 = vmatprep.subr.mxu0 0.0
    %2251 = vmatpush1.xpose.msra.mxu0 0.0
    %2252 = vmatprep.subr.mxu0 0.0
    %2253 = vmatpush1.xpose.msra.mxu0 0.0
    %2254 = vmatprep.subr.mxu0 0.0
    %2255 = vmatpush1.xpose.msra.mxu0 0.0
    %2256 = vmatprep.subr.mxu0 0.0
    %2257 = vmatpush1.xpose.msra.mxu0 0.0
    %2258 = vmatprep.subr.mxu0 0.0
    %2259 = vmatpush1.xpose.msra.mxu0 0.0
    %2260 = vmatprep.subr.mxu0 0.0
    %2261 = vmatpush1.xpose.msra.mxu0 0.0
    %2262 = vmatprep.subr.mxu0 0.0
    %2263 = vmatpush1.xpose.msra.mxu0 0.0
    %2264 = vmatprep.subr.mxu0 0.0
    %2265 = vmatpush1.xpose.msra.mxu0 0.0
    %2266 = vmatprep.subr.mxu0 0.0
    %2267 = vmatpush1.xpose.msra.mxu0 0.0
    %2268 = vmatprep.subr.mxu0 0.0
    %2269 = vmatpush1.xpose.msra.mxu0 0.0
    %2270 = vmatprep.subr.mxu0 0.0
    %2271 = vmatpush1.xpose.msra.mxu0 0.0
    %2272 = vmatprep.subr.mxu0 0.0
    %2273 = vmatpush1.xpose.msra.mxu0 0.0
    %2274 = vmatprep.subr.mxu0 0.0
    %2275 = vmatpush1.xpose.msra.mxu0 0.0
    %2276 = vmatprep.subr.mxu0 0.0
    %2277 = vmatpush1.xpose.msra.mxu0 0.0
    %2278 = vmatprep.mubr.f32.mxu0 %v2058
    %2279 = vmatmul.mubr.f32.gmra.mrb[0].mxu0 %v2057
    %v2280 = vpop.f32.mrb[0].mxu0
    %v2281 = vadd.f32 %v2211, %v2280
    %v2282 = vpop.f32.mrb[0].mxu0
    %2283 = vdwg.mxu0
    %2284 = vmatprep.subr.mxu0 0.0
    %2285 = vmatpush1.xpose.msra.mxu0 %v2066
    %2286 = vmatprep.subr.mxu0 0.0
    %2287 = vmatpush1.xpose.msra.mxu0 %v2073
    %2288 = vmatprep.subr.mxu0 0.0
    %2289 = vmatpush1.xpose.msra.mxu0 0.0
    %2290 = vmatprep.subr.mxu0 0.0
    %2291 = vmatpush1.xpose.msra.mxu0 0.0
    %2292 = vmatprep.subr.mxu0 0.0
    %2293 = vmatpush1.xpose.msra.mxu0 0.0
    %2294 = vmatprep.subr.mxu0 0.0
    %2295 = vmatpush1.xpose.msra.mxu0 0.0
    %2296 = vmatprep.subr.mxu0 0.0
    %2297 = vmatpush1.xpose.msra.mxu0 0.0
    %2298 = vmatprep.subr.mxu0 0.0
    %2299 = vmatpush1.xpose.msra.mxu0 0.0
    %2300 = vmatprep.subr.mxu0 0.0
    %2301 = vmatpush1.xpose.msra.mxu0 0.0
    %2302 = vmatprep.subr.mxu0 0.0
    %2303 = vmatpush1.xpose.msra.mxu0 0.0
    %2304 = vmatprep.subr.mxu0 0.0
    %2305 = vmatpush1.xpose.msra.mxu0 0.0
    %2306 = vmatprep.subr.mxu0 0.0
    %2307 = vmatpush1.xpose.msra.mxu0 0.0
    %2308 = vmatprep.subr.mxu0 0.0
    %2309 = vmatpush1.xpose.msra.mxu0 0.0
    %2310 = vmatprep.subr.mxu0 0.0
    %2311 = vmatpush1.xpose.msra.mxu0 0.0
    %2312 = vmatprep.subr.mxu0 0.0
    %2313 = vmatpush1.xpose.msra.mxu0 0.0
    %2314 = vmatprep.subr.mxu0 0.0
    %2315 = vmatpush1.xpose.msra.mxu0 0.0
    %2316 = vmatprep.subr.mxu0 0.0
    %2317 = vmatpush1.xpose.msra.mxu0 0.0
    %2318 = vmatprep.subr.mxu0 0.0
    %2319 = vmatpush1.xpose.msra.mxu0 0.0
    %2320 = vmatprep.subr.mxu0 0.0
    %2321 = vmatpush1.xpose.msra.mxu0 0.0
    %2322 = vmatprep.subr.mxu0 0.0
    %2323 = vmatpush1.xpose.msra.mxu0 0.0
    %2324 = vmatprep.subr.mxu0 0.0
    %2325 = vmatpush1.xpose.msra.mxu0 0.0
    %2326 = vmatprep.subr.mxu0 0.0
    %2327 = vmatpush1.xpose.msra.mxu0 0.0
    %2328 = vmatprep.subr.mxu0 0.0
    %2329 = vmatpush1.xpose.msra.mxu0 0.0
    %2330 = vmatprep.subr.mxu0 0.0
    %2331 = vmatpush1.xpose.msra.mxu0 0.0
    %2332 = vmatprep.subr.mxu0 0.0
    %2333 = vmatpush1.xpose.msra.mxu0 0.0
    %2334 = vmatprep.subr.mxu0 0.0
    %2335 = vmatpush1.xpose.msra.mxu0 0.0
    %2336 = vmatprep.subr.mxu0 0.0
    %2337 = vmatpush1.xpose.msra.mxu0 0.0
    %2338 = vmatprep.subr.mxu0 0.0
    %2339 = vmatpush1.xpose.msra.mxu0 0.0
    %2340 = vmatprep.subr.mxu0 0.0
    %2341 = vmatpush1.xpose.msra.mxu0 0.0
    %2342 = vmatprep.subr.mxu0 0.0
    %2343 = vmatpush1.xpose.msra.mxu0 0.0
    %2344 = vmatprep.subr.mxu0 0.0
    %2345 = vmatpush1.xpose.msra.mxu0 0.0
    %2346 = vmatprep.subr.mxu0 0.0
    %2347 = vmatpush1.xpose.msra.mxu0 0.0
    %2348 = vmatprep.mubr.f32.mxu0 0.0
    %2349 = vmatmul.mubr.f32.gmra.mrb[0].mxu0 %v2059
    %v2350 = vpop.f32.mrb[0].mxu0
    %v2351 = vadd.f32 %v2281, %v2350
    %v2352 = vpop.f32.mrb[0].mxu0
    %2353 = vdwg.mxu0
    %v2354 = vadd.f32 %v1592, %v2351
    %s2355 = sld [smem:[#allocation2 + $0x180]]
    %v2356 = vstv %s2355
    %v2357 = vmul.f32 %v61, %v2356
    %v2358 = vmul.f32 %v62, %v2356
    %v2359 = vmul.f32 %v63, %v2356
    %v2360 = vmul.f32 %v64, %v2356
    %v2361 = vmul.f32 %v65, %v2356
    %v2362 = vmul.f32 %v66, %v2356
    %v2363 = vmul.f32 %v67, %v2356
    %s2364 = sld [smem:[#allocation2 + $0x181]]
    %v2365 = vstv %s2364
    %v2366 = vmul.f32 %v61, %v2365
    %v2367 = vmul.f32 %v62, %v2365
    %v2368 = vmul.f32 %v63, %v2365
    %v2369 = vmul.f32 %v64, %v2365
    %v2370 = vmul.f32 %v65, %v2365
    %v2371 = vmul.f32 %v66, %v2365
    %v2372 = vmul.f32 %v67, %v2365
    %v2373 = vmul.f32 %v68, %v2365
    %2382 = vrot.lane.b32.xlu0 %v2366, 127
    %v2383 = vpop.permute.xlu0 %2382
    %2384 = vrot.lane.b32.xlu0 %v2367, 127
    %v2385 = vpop.permute.xlu0 %2384
    %2386 = vrot.lane.b32.xlu0 %v2368, 127
    %v2387 = vpop.permute.xlu0 %2386
    %2388 = vrot.lane.b32.xlu0 %v2369, 127
    %v2389 = vpop.permute.xlu0 %2388
    %2390 = vrot.lane.b32.xlu0 %v2370, 127
    %v2391 = vpop.permute.xlu0 %2390
    %2392 = vrot.lane.b32.xlu0 %v2371, 127
    %v2393 = vpop.permute.xlu0 %2392
    %2394 = vrot.lane.b32.xlu0 %v2372, 127
    %v2395 = vpop.permute.xlu0 %2394
    %2396 = vrot.lane.b32.xlu0 %v2373, 127
    %v2397 = vpop.permute.xlu0 %2396
    %v2398 = vsel %vm112, %v2383, %v2385
    %v2399 = vsel %vm112, %v2385, %v2387
    %v2400 = vsel %vm112, %v2387, %v2389
    %v2401 = vsel %vm112, %v2389, %v2391
    %v2402 = vsel %vm112, %v2391, %v2393
    %v2403 = vsel %vm112, %v2393, %v2395
    %v2404 = vsel %vm112, %v2395, %v2397
    %v2412 = vadd.f32 %v2357, %v2398
    %v2413 = vadd.f32 %v2358, %v2399
    %v2414 = vadd.f32 %v2359, %v2400
    %v2415 = vadd.f32 %v2360, %v2401
    %v2416 = vadd.f32 %v2361, %v2402
    %v2417 = vadd.f32 %v2362, %v2403
    %v2418 = vadd.f32 %v2363, %v2404
    %s2419 = sld [smem:[#allocation2 + $0x182]]
    %v2420 = vstv %s2419
    %v2421 = vmul.f32 %v61, %v2420
    %v2422 = vmul.f32 %v62, %v2420
    %v2423 = vmul.f32 %v63, %v2420
    %v2424 = vmul.f32 %v64, %v2420
    %v2425 = vmul.f32 %v65, %v2420
    %v2426 = vmul.f32 %v66, %v2420
    %v2427 = vmul.f32 %v67, %v2420
    %v2428 = vmul.f32 %v68, %v2420
    %2437 = vrot.lane.b32.xlu0 %v2421, 126
    %v2438 = vpop.permute.xlu0 %2437
    %2439 = vrot.lane.b32.xlu0 %v2422, 126
    %v2440 = vpop.permute.xlu0 %2439
    %2441 = vrot.lane.b32.xlu0 %v2423, 126
    %v2442 = vpop.permute.xlu0 %2441
    %2443 = vrot.lane.b32.xlu0 %v2424, 126
    %v2444 = vpop.permute.xlu0 %2443
    %2445 = vrot.lane.b32.xlu0 %v2425, 126
    %v2446 = vpop.permute.xlu0 %2445
    %2447 = vrot.lane.b32.xlu0 %v2426, 126
    %v2448 = vpop.permute.xlu0 %2447
    %2449 = vrot.lane.b32.xlu0 %v2427, 126
    %v2450 = vpop.permute.xlu0 %2449
    %2451 = vrot.lane.b32.xlu0 %v2428, 126
    %v2452 = vpop.permute.xlu0 %2451
    %v2453 = vsel %vm168, %v2438, %v2440
    %v2454 = vsel %vm168, %v2440, %v2442
    %v2455 = vsel %vm168, %v2442, %v2444
    %v2456 = vsel %vm168, %v2444, %v2446
    %v2457 = vsel %vm168, %v2446, %v2448
    %v2458 = vsel %vm168, %v2448, %v2450
    %v2459 = vsel %vm168, %v2450, %v2452
    %v2467 = vadd.f32 %v2412, %v2453
    %v2468 = vadd.f32 %v2413, %v2454
    %v2469 = vadd.f32 %v2414, %v2455
    %v2470 = vadd.f32 %v2415, %v2456
    %v2471 = vadd.f32 %v2416, %v2457
    %v2472 = vadd.f32 %v2417, %v2458
    %v2473 = vadd.f32 %v2418, %v2459
    %s2474 = sld [smem:[#allocation2 + $0x183]]
    %v2475 = vstv %s2474
    %v2476 = vmul.f32 %v61, %v2475
    %v2477 = vmul.f32 %v62, %v2475
    %v2478 = vmul.f32 %v63, %v2475
    %v2479 = vmul.f32 %v64, %v2475
    %v2480 = vmul.f32 %v65, %v2475
    %v2481 = vmul.f32 %v66, %v2475
    %v2482 = vmul.f32 %v67, %v2475
    %v2483 = vmul.f32 %v68, %v2475
    %2492 = vrot.lane.b32.xlu0 %v2476, 100
    %v2493 = vpop.permute.xlu0 %2492
    %2494 = vrot.lane.b32.xlu0 %v2477, 100
    %v2495 = vpop.permute.xlu0 %2494
    %2496 = vrot.lane.b32.xlu0 %v2478, 100
    %v2497 = vpop.permute.xlu0 %2496
    %2498 = vrot.lane.b32.xlu0 %v2479, 100
    %v2499 = vpop.permute.xlu0 %2498
    %2500 = vrot.lane.b32.xlu0 %v2480, 100
    %v2501 = vpop.permute.xlu0 %2500
    %2502 = vrot.lane.b32.xlu0 %v2481, 100
    %v2503 = vpop.permute.xlu0 %2502
    %2504 = vrot.lane.b32.xlu0 %v2482, 100
    %v2505 = vpop.permute.xlu0 %2504
    %2506 = vrot.lane.b32.xlu0 %v2483, 100
    %v2507 = vpop.permute.xlu0 %2506
    %v2508 = vsel %vm224, %v2493, %v2495
    %v2509 = vsel %vm224, %v2495, %v2497
    %v2510 = vsel %vm224, %v2497, %v2499
    %v2511 = vsel %vm224, %v2499, %v2501
    %v2512 = vsel %vm224, %v2501, %v2503
    %v2513 = vsel %vm224, %v2503, %v2505
    %v2514 = vsel %vm224, %v2505, %v2507
    %v2522 = vadd.f32 %v2467, %v2508
    %v2523 = vadd.f32 %v2468, %v2509
    %v2524 = vadd.f32 %v2469, %v2510
    %v2525 = vadd.f32 %v2470, %v2511
    %v2526 = vadd.f32 %v2471, %v2512
    %v2527 = vadd.f32 %v2472, %v2513
    %v2528 = vadd.f32 %v2473, %v2514
    %s2529 = sld [smem:[#allocation2 + $0x184]]
    %v2530 = vstv %s2529
    %v2531 = vmul.f32 %v61, %v2530
    %v2532 = vmul.f32 %v62, %v2530
    %v2533 = vmul.f32 %v63, %v2530
    %v2534 = vmul.f32 %v64, %v2530
    %v2535 = vmul.f32 %v65, %v2530
    %v2536 = vmul.f32 %v66, %v2530
    %v2537 = vmul.f32 %v67, %v2530
    %v2538 = vmul.f32 %v68, %v2530
    %2547 = vrot.lane.b32.xlu0 %v2531, 99
    %v2548 = vpop.permute.xlu0 %2547
    %2549 = vrot.lane.b32.xlu0 %v2532, 99
    %v2550 = vpop.permute.xlu0 %2549
    %2551 = vrot.lane.b32.xlu0 %v2533, 99
    %v2552 = vpop.permute.xlu0 %2551
    %2553 = vrot.lane.b32.xlu0 %v2534, 99
    %v2554 = vpop.permute.xlu0 %2553
    %2555 = vrot.lane.b32.xlu0 %v2535, 99
    %v2556 = vpop.permute.xlu0 %2555
    %2557 = vrot.lane.b32.xlu0 %v2536, 99
    %v2558 = vpop.permute.xlu0 %2557
    %2559 = vrot.lane.b32.xlu0 %v2537, 99
    %v2560 = vpop.permute.xlu0 %2559
    %2561 = vrot.lane.b32.xlu0 %v2538, 99
    %v2562 = vpop.permute.xlu0 %2561
    %v2563 = vsel %vm280, %v2548, %v2550
    %v2564 = vsel %vm280, %v2550, %v2552
    %v2565 = vsel %vm280, %v2552, %v2554
    %v2566 = vsel %vm280, %v2554, %v2556
    %v2567 = vsel %vm280, %v2556, %v2558
    %v2568 = vsel %vm280, %v2558, %v2560
    %v2569 = vsel %vm280, %v2560, %v2562
    %v2577 = vadd.f32 %v2522, %v2563
    %v2578 = vadd.f32 %v2523, %v2564
    %v2579 = vadd.f32 %v2524, %v2565
    %v2580 = vadd.f32 %v2525, %v2566
    %v2581 = vadd.f32 %v2526, %v2567
    %v2582 = vadd.f32 %v2527, %v2568
    %v2583 = vadd.f32 %v2528, %v2569
    %s2584 = sld [smem:[#allocation2 + $0x185]]
    %v2585 = vstv %s2584
    %v2586 = vmul.f32 %v61, %v2585
    %v2587 = vmul.f32 %v62, %v2585
    %v2588 = vmul.f32 %v63, %v2585
    %v2589 = vmul.f32 %v64, %v2585
    %v2590 = vmul.f32 %v65, %v2585
    %v2591 = vmul.f32 %v66, %v2585
    %v2592 = vmul.f32 %v67, %v2585
    %v2593 = vmul.f32 %v68, %v2585
    %2602 = vrot.lane.b32.xlu0 %v2586, 98
    %v2603 = vpop.permute.xlu0 %2602
    %2604 = vrot.lane.b32.xlu0 %v2587, 98
    %v2605 = vpop.permute.xlu0 %2604
    %2606 = vrot.lane.b32.xlu0 %v2588, 98
    %v2607 = vpop.permute.xlu0 %2606
    %2608 = vrot.lane.b32.xlu0 %v2589, 98
    %v2609 = vpop.permute.xlu0 %2608
    %2610 = vrot.lane.b32.xlu0 %v2590, 98
    %v2611 = vpop.permute.xlu0 %2610
    %2612 = vrot.lane.b32.xlu0 %v2591, 98
    %v2613 = vpop.permute.xlu0 %2612
    %2614 = vrot.lane.b32.xlu0 %v2592, 98
    %v2615 = vpop.permute.xlu0 %2614
    %2616 = vrot.lane.b32.xlu0 %v2593, 98
    %v2617 = vpop.permute.xlu0 %2616
    %v2618 = vsel %vm336, %v2603, %v2605
    %v2619 = vsel %vm336, %v2605, %v2607
    %v2620 = vsel %vm336, %v2607, %v2609
    %v2621 = vsel %vm336, %v2609, %v2611
    %v2622 = vsel %vm336, %v2611, %v2613
    %v2623 = vsel %vm336, %v2613, %v2615
    %v2624 = vsel %vm336, %v2615, %v2617
    %v2632 = vadd.f32 %v2577, %v2618
    %v2633 = vadd.f32 %v2578, %v2619
    %v2634 = vadd.f32 %v2579, %v2620
    %v2635 = vadd.f32 %v2580, %v2621
    %v2636 = vadd.f32 %v2581, %v2622
    %v2637 = vadd.f32 %v2582, %v2623
    %v2638 = vadd.f32 %v2583, %v2624
    %s2639 = sld [smem:[#allocation2 + $0x186]]
    %v2640 = vstv %s2639
    %v2641 = vmul.f32 %v61, %v2640
    %v2642 = vmul.f32 %v62, %v2640
    %v2643 = vmul.f32 %v63, %v2640
    %v2644 = vmul.f32 %v64, %v2640
    %v2645 = vmul.f32 %v65, %v2640
    %v2646 = vmul.f32 %v66, %v2640
    %v2647 = vmul.f32 %v67, %v2640
    %v2648 = vmul.f32 %v68, %v2640
    %2657 = vrot.lane.b32.xlu0 %v2641, 72
    %v2658 = vpop.permute.xlu0 %2657
    %2659 = vrot.lane.b32.xlu0 %v2642, 72
    %v2660 = vpop.permute.xlu0 %2659
    %2661 = vrot.lane.b32.xlu0 %v2643, 72
    %v2662 = vpop.permute.xlu0 %2661
    %2663 = vrot.lane.b32.xlu0 %v2644, 72
    %v2664 = vpop.permute.xlu0 %2663
    %2665 = vrot.lane.b32.xlu0 %v2645, 72
    %v2666 = vpop.permute.xlu0 %2665
    %2667 = vrot.lane.b32.xlu0 %v2646, 72
    %v2668 = vpop.permute.xlu0 %2667
    %2669 = vrot.lane.b32.xlu0 %v2647, 72
    %v2670 = vpop.permute.xlu0 %2669
    %2671 = vrot.lane.b32.xlu0 %v2648, 72
    %v2672 = vpop.permute.xlu0 %2671
    %v2673 = vsel %vm392, %v2658, %v2660
    %v2674 = vsel %vm392, %v2660, %v2662
    %v2675 = vsel %vm392, %v2662, %v2664
    %v2676 = vsel %vm392, %v2664, %v2666
    %v2677 = vsel %vm392, %v2666, %v2668
    %v2678 = vsel %vm392, %v2668, %v2670
    %v2679 = vsel %vm392, %v2670, %v2672
    %v2687 = vadd.f32 %v2632, %v2673
    %v2688 = vadd.f32 %v2633, %v2674
    %v2689 = vadd.f32 %v2634, %v2675
    %v2690 = vadd.f32 %v2635, %v2676
    %v2691 = vadd.f32 %v2636, %v2677
    %v2692 = vadd.f32 %v2637, %v2678
    %v2693 = vadd.f32 %v2638, %v2679
    %s2694 = sld [smem:[#allocation2 + $0x187]]
    %v2695 = vstv %s2694
    %v2696 = vmul.f32 %v61, %v2695
    %v2697 = vmul.f32 %v62, %v2695
    %v2698 = vmul.f32 %v63, %v2695
    %v2699 = vmul.f32 %v64, %v2695
    %v2700 = vmul.f32 %v65, %v2695
    %v2701 = vmul.f32 %v66, %v2695
    %v2702 = vmul.f32 %v67, %v2695
    %v2703 = vmul.f32 %v68, %v2695
    %2712 = vrot.lane.b32.xlu0 %v2696, 71
    %v2713 = vpop.permute.xlu0 %2712
    %2714 = vrot.lane.b32.xlu0 %v2697, 71
    %v2715 = vpop.permute.xlu0 %2714
    %2716 = vrot.lane.b32.xlu0 %v2698, 71
    %v2717 = vpop.permute.xlu0 %2716
    %2718 = vrot.lane.b32.xlu0 %v2699, 71
    %v2719 = vpop.permute.xlu0 %2718
    %2720 = vrot.lane.b32.xlu0 %v2700, 71
    %v2721 = vpop.permute.xlu0 %2720
    %2722 = vrot.lane.b32.xlu0 %v2701, 71
    %v2723 = vpop.permute.xlu0 %2722
    %2724 = vrot.lane.b32.xlu0 %v2702, 71
    %v2725 = vpop.permute.xlu0 %2724
    %2726 = vrot.lane.b32.xlu0 %v2703, 71
    %v2727 = vpop.permute.xlu0 %2726
    %v2728 = vsel %vm448, %v2713, %v2715
    %v2729 = vsel %vm448, %v2715, %v2717
    %v2730 = vsel %vm448, %v2717, %v2719
    %v2731 = vsel %vm448, %v2719, %v2721
    %v2732 = vsel %vm448, %v2721, %v2723
    %v2733 = vsel %vm448, %v2723, %v2725
    %v2734 = vsel %vm448, %v2725, %v2727
    %v2742 = vadd.f32 %v2687, %v2728
    %v2743 = vadd.f32 %v2688, %v2729
    %v2744 = vadd.f32 %v2689, %v2730
    %v2745 = vadd.f32 %v2690, %v2731
    %v2746 = vadd.f32 %v2691, %v2732
    %v2747 = vadd.f32 %v2692, %v2733
    %v2748 = vadd.f32 %v2693, %v2734
    %s2749 = sld [smem:[#allocation2 + $0x188]]
    %v2750 = vstv %s2749
    %v2751 = vmul.f32 %v61, %v2750
    %v2752 = vmul.f32 %v62, %v2750
    %v2753 = vmul.f32 %v63, %v2750
    %v2754 = vmul.f32 %v64, %v2750
    %v2755 = vmul.f32 %v65, %v2750
    %v2756 = vmul.f32 %v66, %v2750
    %v2757 = vmul.f32 %v67, %v2750
    %v2758 = vmul.f32 %v68, %v2750
    %2767 = vrot.lane.b32.xlu0 %v2751, 70
    %v2768 = vpop.permute.xlu0 %2767
    %2769 = vrot.lane.b32.xlu0 %v2752, 70
    %v2770 = vpop.permute.xlu0 %2769
    %2771 = vrot.lane.b32.xlu0 %v2753, 70
    %v2772 = vpop.permute.xlu0 %2771
    %2773 = vrot.lane.b32.xlu0 %v2754, 70
    %v2774 = vpop.permute.xlu0 %2773
    %2775 = vrot.lane.b32.xlu0 %v2755, 70
    %v2776 = vpop.permute.xlu0 %2775
    %2777 = vrot.lane.b32.xlu0 %v2756, 70
    %v2778 = vpop.permute.xlu0 %2777
    %2779 = vrot.lane.b32.xlu0 %v2757, 70
    %v2780 = vpop.permute.xlu0 %2779
    %2781 = vrot.lane.b32.xlu0 %v2758, 70
    %v2782 = vpop.permute.xlu0 %2781
    %v2783 = vsel %vm504, %v2768, %v2770
    %v2784 = vsel %vm504, %v2770, %v2772
    %v2785 = vsel %vm504, %v2772, %v2774
    %v2786 = vsel %vm504, %v2774, %v2776
    %v2787 = vsel %vm504, %v2776, %v2778
    %v2788 = vsel %vm504, %v2778, %v2780
    %v2789 = vsel %vm504, %v2780, %v2782
    %v2797 = vadd.f32 %v2742, %v2783
    %v2798 = vadd.f32 %v2743, %v2784
    %v2799 = vadd.f32 %v2744, %v2785
    %v2800 = vadd.f32 %v2745, %v2786
    %v2801 = vadd.f32 %v2746, %v2787
    %v2802 = vadd.f32 %v2747, %v2788
    %v2803 = vadd.f32 %v2748, %v2789
    %s2804 = sld [smem:[#allocation5 + $0x3]]
    %v2805 = vstv %s2804
    %v2806 = vadd.f32 %v2797, %v2805
    %v2807 = vadd.f32 %v2798, %v2805
    %v2808 = vadd.f32 %v2799, %v2805
    %v2809 = vadd.f32 %v2800, %v2805
    %v2810 = vadd.f32 %v2801, %v2805
    %v2811 = vadd.f32 %v2802, %v2805
    %v2812 = vadd.f32 %v2803, %v2805
    %v2813 = vmax.f32 %v2806, 0.0
    %v2814 = vmax.f32 %v2807, 0.0
    %v2815 = vmax.f32 %v2808, 0.0
    %v2816 = vmax.f32 %v2809, 0.0
    %v2817 = vmax.f32 %v2810, 0.0
    %v2818 = vmax.f32 %v2811, 0.0
    %v2819 = vmax.f32 %v2812, 0.0
    %v2820 = vld [vmem:[#allocation7 + $0xa8] sm:$0xff]
    %v2821 = vld [vmem:[#allocation7 + $0xb0] sm:$0xff]
    %v2822 = vld [vmem:[#allocation7 + $0xb8] sm:$0xff]
    %v2823 = vld [vmem:[#allocation7 + $0xc0] sm:$0xff]
    %v2824 = vld [vmem:[#allocation7 + $0xc8] sm:$0xff]
    %v2825 = vld [vmem:[#allocation7 + $0xd0] sm:$0xff]
    %v2826 = vld [vmem:[#allocation7 + $0xd8] sm:$0xff]
    %v2827 = vld [vmem:[#allocation7 + $0x428] sm:$0x3]
    %v2828 = vld [vmem:[#allocation7 + $0x430] sm:$0x3]
    %v2829 = vld [vmem:[#allocation7 + $0x438] sm:$0x3]
    %v2830 = vld [vmem:[#allocation7 + $0x440] sm:$0x3]
    %v2831 = vld [vmem:[#allocation7 + $0x448] sm:$0x3]
    %v2832 = vld [vmem:[#allocation7 + $0x450] sm:$0x3]
    %v2833 = vld [vmem:[#allocation7 + $0x458] sm:$0x3]
    %2834 = vmatprep.subr.mxu0 %v2821
    %2835 = vmatpush1.xpose.msra.mxu0 %v2820
    %2836 = vmatprep.subr.mxu0 %v2828
    %2837 = vmatpush1.xpose.msra.mxu0 %v2827
    %2838 = vmatprep.subr.mxu0 0.0
    %2839 = vmatpush1.xpose.msra.mxu0 0.0
    %2840 = vmatprep.subr.mxu0 0.0
    %2841 = vmatpush1.xpose.msra.mxu0 0.0
    %2842 = vmatprep.subr.mxu0 0.0
    %2843 = vmatpush1.xpose.msra.mxu0 0.0
    %2844 = vmatprep.subr.mxu0 0.0
    %2845 = vmatpush1.xpose.msra.mxu0 0.0
    %2846 = vmatprep.subr.mxu0 0.0
    %2847 = vmatpush1.xpose.msra.mxu0 0.0
    %2848 = vmatprep.subr.mxu0 0.0
    %2849 = vmatpush1.xpose.msra.mxu0 0.0
    %2850 = vmatprep.subr.mxu0 0.0
    %2851 = vmatpush1.xpose.msra.mxu0 0.0
    %2852 = vmatprep.subr.mxu0 0.0
    %2853 = vmatpush1.xpose.msra.mxu0 0.0
    %2854 = vmatprep.subr.mxu0 0.0
    %2855 = vmatpush1.xpose.msra.mxu0 0.0
    %2856 = vmatprep.subr.mxu0 0.0
    %2857 = vmatpush1.xpose.msra.mxu0 0.0
    %2858 = vmatprep.subr.mxu0 0.0
    %2859 = vmatpush1.xpose.msra.mxu0 0.0
    %2860 = vmatprep.subr.mxu0 0.0
    %2861 = vmatpush1.xpose.msra.mxu0 0.0
    %2862 = vmatprep.subr.mxu0 0.0
    %2863 = vmatpush1.xpose.msra.mxu0 0.0
    %2864 = vmatprep.subr.mxu0 0.0
    %2865 = vmatpush1.xpose.msra.mxu0 0.0
    %2866 = vmatprep.subr.mxu0 0.0
    %2867 = vmatpush1.xpose.msra.mxu0 0.0
    %2868 = vmatprep.subr.mxu0 0.0
    %2869 = vmatpush1.xpose.msra.mxu0 0.0
    %2870 = vmatprep.subr.mxu0 0.0
    %2871 = vmatpush1.xpose.msra.mxu0 0.0
    %2872 = vmatprep.subr.mxu0 0.0
    %2873 = vmatpush1.xpose.msra.mxu0 0.0
    %2874 = vmatprep.subr.mxu0 0.0
    %2875 = vmatpush1.xpose.msra.mxu0 0.0
    %2876 = vmatprep.subr.mxu0 0.0
    %2877 = vmatpush1.xpose.msra.mxu0 0.0
    %2878 = vmatprep.subr.mxu0 0.0
    %2879 = vmatpush1.xpose.msra.mxu0 0.0
    %2880 = vmatprep.subr.mxu0 0.0
    %2881 = vmatpush1.xpose.msra.mxu0 0.0
    %2882 = vmatprep.subr.mxu0 0.0
    %2883 = vmatpush1.xpose.msra.mxu0 0.0
    %2884 = vmatprep.subr.mxu0 0.0
    %2885 = vmatpush1.xpose.msra.mxu0 0.0
    %2886 = vmatprep.subr.mxu0 0.0
    %2887 = vmatpush1.xpose.msra.mxu0 0.0
    %2888 = vmatprep.subr.mxu0 0.0
    %2889 = vmatpush1.xpose.msra.mxu0 0.0
    %2890 = vmatprep.subr.mxu0 0.0
    %2891 = vmatpush1.xpose.msra.mxu0 0.0
    %2892 = vmatprep.subr.mxu0 0.0
    %2893 = vmatpush1.xpose.msra.mxu0 0.0
    %2894 = vmatprep.subr.mxu0 0.0
    %2895 = vmatpush1.xpose.msra.mxu0 0.0
    %2896 = vmatprep.subr.mxu0 0.0
    %2897 = vmatpush1.xpose.msra.mxu0 0.0
    %2898 = vmatprep.mubr.f32.mxu0 %v2814
    %2899 = vmatmul.mubr.f32.gmra.mrb[0].mxu0 %v2813
    %v2900 = vpop.f32.mrb[0].mxu0
    %v2901 = vadd.f32 0.0, %v2900
    %v2902 = vpop.f32.mrb[0].mxu0
    %2903 = vdwg.mxu0
    %2904 = vmatprep.subr.mxu0 %v2823
    %2905 = vmatpush1.xpose.msra.mxu0 %v2822
    %2906 = vmatprep.subr.mxu0 %v2830
    %2907 = vmatpush1.xpose.msra.mxu0 %v2829
    %2908 = vmatprep.subr.mxu0 0.0
    %2909 = vmatpush1.xpose.msra.mxu0 0.0
    %2910 = vmatprep.subr.mxu0 0.0
    %2911 = vmatpush1.xpose.msra.mxu0 0.0
    %2912 = vmatprep.subr.mxu0 0.0
    %2913 = vmatpush1.xpose.msra.mxu0 0.0
    %2914 = vmatprep.subr.mxu0 0.0
    %2915 = vmatpush1.xpose.msra.mxu0 0.0
    %2916 = vmatprep.subr.mxu0 0.0
    %2917 = vmatpush1.xpose.msra.mxu0 0.0
    %2918 = vmatprep.subr.mxu0 0.0
    %2919 = vmatpush1.xpose.msra.mxu0 0.0
    %2920 = vmatprep.subr.mxu0 0.0
    %2921 = vmatpush1.xpose.msra.mxu0 0.0
    %2922 = vmatprep.subr.mxu0 0.0
    %2923 = vmatpush1.xpose.msra.mxu0 0.0
    %2924 = vmatprep.subr.mxu0 0.0
    %2925 = vmatpush1.xpose.msra.mxu0 0.0
    %2926 = vmatprep.subr.mxu0 0.0
    %2927 = vmatpush1.xpose.msra.mxu0 0.0
    %2928 = vmatprep.subr.mxu0 0.0
    %2929 = vmatpush1.xpose.msra.mxu0 0.0
    %2930 = vmatprep.subr.mxu0 0.0
    %2931 = vmatpush1.xpose.msra.mxu0 0.0
    %2932 = vmatprep.subr.mxu0 0.0
    %2933 = vmatpush1.xpose.msra.mxu0 0.0
    %2934 = vmatprep.subr.mxu0 0.0
    %2935 = vmatpush1.xpose.msra.mxu0 0.0
    %2936 = vmatprep.subr.mxu0 0.0
    %2937 = vmatpush1.xpose.msra.mxu0 0.0
    %2938 = vmatprep.subr.mxu0 0.0
    %2939 = vmatpush1.xpose.msra.mxu0 0.0
    %2940 = vmatprep.subr.mxu0 0.0
    %2941 = vmatpush1.xpose.msra.mxu0 0.0
    %2942 = vmatprep.subr.mxu0 0.0
    %2943 = vmatpush1.xpose.msra.mxu0 0.0
    %2944 = vmatprep.subr.mxu0 0.0
    %2945 = vmatpush1.xpose.msra.mxu0 0.0
    %2946 = vmatprep.subr.mxu0 0.0
    %2947 = vmatpush1.xpose.msra.mxu0 0.0
    %2948 = vmatprep.subr.mxu0 0.0
    %2949 = vmatpush1.xpose.msra.mxu0 0.0
    %2950 = vmatprep.subr.mxu0 0.0
    %2951 = vmatpush1.xpose.msra.mxu0 0.0
    %2952 = vmatprep.subr.mxu0 0.0
    %2953 = vmatpush1.xpose.msra.mxu0 0.0
    %2954 = vmatprep.subr.mxu0 0.0
    %2955 = vmatpush1.xpose.msra.mxu0 0.0
    %2956 = vmatprep.subr.mxu0 0.0
    %2957 = vmatpush1.xpose.msra.mxu0 0.0
    %2958 = vmatprep.subr.mxu0 0.0
    %2959 = vmatpush1.xpose.msra.mxu0 0.0
    %2960 = vmatprep.subr.mxu0 0.0
    %2961 = vmatpush1.xpose.msra.mxu0 0.0
    %2962 = vmatprep.subr.mxu0 0.0
    %2963 = vmatpush1.xpose.msra.mxu0 0.0
    %2964 = vmatprep.subr.mxu0 0.0
    %2965 = vmatpush1.xpose.msra.mxu0 0.0
    %2966 = vmatprep.subr.mxu0 0.0
    %2967 = vmatpush1.xpose.msra.mxu0 0.0
    %2968 = vmatprep.mubr.f32.mxu0 %v2816
    %2969 = vmatmul.mubr.f32.gmra.mrb[0].mxu0 %v2815
    %v2970 = vpop.f32.mrb[0].mxu0
    %v2971 = vadd.f32 %v2901, %v2970
    %v2972 = vpop.f32.mrb[0].mxu0
    %2973 = vdwg.mxu0
    %2974 = vmatprep.subr.mxu0 %v2825
    %2975 = vmatpush1.xpose.msra.mxu0 %v2824
    %2976 = vmatprep.subr.mxu0 %v2832
    %2977 = vmatpush1.xpose.msra.mxu0 %v2831
    %2978 = vmatprep.subr.mxu0 0.0
    %2979 = vmatpush1.xpose.msra.mxu0 0.0
    %2980 = vmatprep.subr.mxu0 0.0
    %2981 = vmatpush1.xpose.msra.mxu0 0.0
    %2982 = vmatprep.subr.mxu0 0.0
    %2983 = vmatpush1.xpose.msra.mxu0 0.0
    %2984 = vmatprep.subr.mxu0 0.0
    %2985 = vmatpush1.xpose.msra.mxu0 0.0
    %2986 = vmatprep.subr.mxu0 0.0
    %2987 = vmatpush1.xpose.msra.mxu0 0.0
    %2988 = vmatprep.subr.mxu0 0.0
    %2989 = vmatpush1.xpose.msra.mxu0 0.0
    %2990 = vmatprep.subr.mxu0 0.0
    %2991 = vmatpush1.xpose.msra.mxu0 0.0
    %2992 = vmatprep.subr.mxu0 0.0
    %2993 = vmatpush1.xpose.msra.mxu0 0.0
    %2994 = vmatprep.subr.mxu0 0.0
    %2995 = vmatpush1.xpose.msra.mxu0 0.0
    %2996 = vmatprep.subr.mxu0 0.0
    %2997 = vmatpush1.xpose.msra.mxu0 0.0
    %2998 = vmatprep.subr.mxu0 0.0
    %2999 = vmatpush1.xpose.msra.mxu0 0.0
    %3000 = vmatprep.subr.mxu0 0.0
    %3001 = vmatpush1.xpose.msra.mxu0 0.0
    %3002 = vmatprep.subr.mxu0 0.0
    %3003 = vmatpush1.xpose.msra.mxu0 0.0
    %3004 = vmatprep.subr.mxu0 0.0
    %3005 = vmatpush1.xpose.msra.mxu0 0.0
    %3006 = vmatprep.subr.mxu0 0.0
    %3007 = vmatpush1.xpose.msra.mxu0 0.0
    %3008 = vmatprep.subr.mxu0 0.0
    %3009 = vmatpush1.xpose.msra.mxu0 0.0
    %3010 = vmatprep.subr.mxu0 0.0
    %3011 = vmatpush1.xpose.msra.mxu0 0.0
    %3012 = vmatprep.subr.mxu0 0.0
    %3013 = vmatpush1.xpose.msra.mxu0 0.0
    %3014 = vmatprep.subr.mxu0 0.0
    %3015 = vmatpush1.xpose.msra.mxu0 0.0
    %3016 = vmatprep.subr.mxu0 0.0
    %3017 = vmatpush1.xpose.msra.mxu0 0.0
    %3018 = vmatprep.subr.mxu0 0.0
    %3019 = vmatpush1.xpose.msra.mxu0 0.0
    %3020 = vmatprep.subr.mxu0 0.0
    %3021 = vmatpush1.xpose.msra.mxu0 0.0
    %3022 = vmatprep.subr.mxu0 0.0
    %3023 = vmatpush1.xpose.msra.mxu0 0.0
    %3024 = vmatprep.subr.mxu0 0.0
    %3025 = vmatpush1.xpose.msra.mxu0 0.0
    %3026 = vmatprep.subr.mxu0 0.0
    %3027 = vmatpush1.xpose.msra.mxu0 0.0
    %3028 = vmatprep.subr.mxu0 0.0
    %3029 = vmatpush1.xpose.msra.mxu0 0.0
    %3030 = vmatprep.subr.mxu0 0.0
    %3031 = vmatpush1.xpose.msra.mxu0 0.0
    %3032 = vmatprep.subr.mxu0 0.0
    %3033 = vmatpush1.xpose.msra.mxu0 0.0
    %3034 = vmatprep.subr.mxu0 0.0
    %3035 = vmatpush1.xpose.msra.mxu0 0.0
    %3036 = vmatprep.subr.mxu0 0.0
    %3037 = vmatpush1.xpose.msra.mxu0 0.0
    %3038 = vmatprep.mubr.f32.mxu0 %v2818
    %3039 = vmatmul.mubr.f32.gmra.mrb[0].mxu0 %v2817
    %v3040 = vpop.f32.mrb[0].mxu0
    %v3041 = vadd.f32 %v2971, %v3040
    %v3042 = vpop.f32.mrb[0].mxu0
    %3043 = vdwg.mxu0
    %3044 = vmatprep.subr.mxu0 0.0
    %3045 = vmatpush1.xpose.msra.mxu0 %v2826
    %3046 = vmatprep.subr.mxu0 0.0
    %3047 = vmatpush1.xpose.msra.mxu0 %v2833
    %3048 = vmatprep.subr.mxu0 0.0
    %3049 = vmatpush1.xpose.msra.mxu0 0.0
    %3050 = vmatprep.subr.mxu0 0.0
    %3051 = vmatpush1.xpose.msra.mxu0 0.0
    %3052 = vmatprep.subr.mxu0 0.0
    %3053 = vmatpush1.xpose.msra.mxu0 0.0
    %3054 = vmatprep.subr.mxu0 0.0
    %3055 = vmatpush1.xpose.msra.mxu0 0.0
    %3056 = vmatprep.subr.mxu0 0.0
    %3057 = vmatpush1.xpose.msra.mxu0 0.0
    %3058 = vmatprep.subr.mxu0 0.0
    %3059 = vmatpush1.xpose.msra.mxu0 0.0
    %3060 = vmatprep.subr.mxu0 0.0
    %3061 = vmatpush1.xpose.msra.mxu0 0.0
    %3062 = vmatprep.subr.mxu0 0.0
    %3063 = vmatpush1.xpose.msra.mxu0 0.0
    %3064 = vmatprep.subr.mxu0 0.0
    %3065 = vmatpush1.xpose.msra.mxu0 0.0
    %3066 = vmatprep.subr.mxu0 0.0
    %3067 = vmatpush1.xpose.msra.mxu0 0.0
    %3068 = vmatprep.subr.mxu0 0.0
    %3069 = vmatpush1.xpose.msra.mxu0 0.0
    %3070 = vmatprep.subr.mxu0 0.0
    %3071 = vmatpush1.xpose.msra.mxu0 0.0
    %3072 = vmatprep.subr.mxu0 0.0
    %3073 = vmatpush1.xpose.msra.mxu0 0.0
    %3074 = vmatprep.subr.mxu0 0.0
    %3075 = vmatpush1.xpose.msra.mxu0 0.0
    %3076 = vmatprep.subr.mxu0 0.0
    %3077 = vmatpush1.xpose.msra.mxu0 0.0
    %3078 = vmatprep.subr.mxu0 0.0
    %3079 = vmatpush1.xpose.msra.mxu0 0.0
    %3080 = vmatprep.subr.mxu0 0.0
    %3081 = vmatpush1.xpose.msra.mxu0 0.0
    %3082 = vmatprep.subr.mxu0 0.0
    %3083 = vmatpush1.xpose.msra.mxu0 0.0
    %3084 = vmatprep.subr.mxu0 0.0
    %3085 = vmatpush1.xpose.msra.mxu0 0.0
    %3086 = vmatprep.subr.mxu0 0.0
    %3087 = vmatpush1.xpose.msra.mxu0 0.0
    %3088 = vmatprep.subr.mxu0 0.0
    %3089 = vmatpush1.xpose.msra.mxu0 0.0
    %3090 = vmatprep.subr.mxu0 0.0
    %3091 = vmatpush1.xpose.msra.mxu0 0.0
    %3092 = vmatprep.subr.mxu0 0.0
    %3093 = vmatpush1.xpose.msra.mxu0 0.0
    %3094 = vmatprep.subr.mxu0 0.0
    %3095 = vmatpush1.xpose.msra.mxu0 0.0
    %3096 = vmatprep.subr.mxu0 0.0
    %3097 = vmatpush1.xpose.msra.mxu0 0.0
    %3098 = vmatprep.subr.mxu0 0.0
    %3099 = vmatpush1.xpose.msra.mxu0 0.0
    %3100 = vmatprep.subr.mxu0 0.0
    %3101 = vmatpush1.xpose.msra.mxu0 0.0
    %3102 = vmatprep.subr.mxu0 0.0
    %3103 = vmatpush1.xpose.msra.mxu0 0.0
    %3104 = vmatprep.subr.mxu0 0.0
    %3105 = vmatpush1.xpose.msra.mxu0 0.0
    %3106 = vmatprep.subr.mxu0 0.0
    %3107 = vmatpush1.xpose.msra.mxu0 0.0
    %3108 = vmatprep.mubr.f32.mxu0 0.0
    %3109 = vmatmul.mubr.f32.gmra.mrb[0].mxu0 %v2819
    %v3110 = vpop.f32.mrb[0].mxu0
    %v3111 = vadd.f32 %v3041, %v3110
    %v3112 = vpop.f32.mrb[0].mxu0
    %3113 = vdwg.mxu0
    %v3114 = vadd.f32 %v2354, %v3111
    %s3115 = sld [smem:[#allocation2 + $0x200]]
    %v3116 = vstv %s3115
    %v3117 = vmul.f32 %v61, %v3116
    %v3118 = vmul.f32 %v62, %v3116
    %v3119 = vmul.f32 %v63, %v3116
    %v3120 = vmul.f32 %v64, %v3116
    %v3121 = vmul.f32 %v65, %v3116
    %v3122 = vmul.f32 %v66, %v3116
    %v3123 = vmul.f32 %v67, %v3116
    %s3124 = sld [smem:[#allocation2 + $0x201]]
    %v3125 = vstv %s3124
    %v3126 = vmul.f32 %v61, %v3125
    %v3127 = vmul.f32 %v62, %v3125
    %v3128 = vmul.f32 %v63, %v3125
    %v3129 = vmul.f32 %v64, %v3125
    %v3130 = vmul.f32 %v65, %v3125
    %v3131 = vmul.f32 %v66, %v3125
    %v3132 = vmul.f32 %v67, %v3125
    %v3133 = vmul.f32 %v68, %v3125
    %3142 = vrot.lane.b32.xlu0 %v3126, 127
    %v3143 = vpop.permute.xlu0 %3142
    %3144 = vrot.lane.b32.xlu0 %v3127, 127
    %v3145 = vpop.permute.xlu0 %3144
    %3146 = vrot.lane.b32.xlu0 %v3128, 127
    %v3147 = vpop.permute.xlu0 %3146
    %3148 = vrot.lane.b32.xlu0 %v3129, 127
    %v3149 = vpop.permute.xlu0 %3148
    %3150 = vrot.lane.b32.xlu0 %v3130, 127
    %v3151 = vpop.permute.xlu0 %3150
    %3152 = vrot.lane.b32.xlu0 %v3131, 127
    %v3153 = vpop.permute.xlu0 %3152
    %3154 = vrot.lane.b32.xlu0 %v3132, 127
    %v3155 = vpop.permute.xlu0 %3154
    %3156 = vrot.lane.b32.xlu0 %v3133, 127
    %v3157 = vpop.permute.xlu0 %3156
    %v3158 = vsel %vm112, %v3143, %v3145
    %v3159 = vsel %vm112, %v3145, %v3147
    %v3160 = vsel %vm112, %v3147, %v3149
    %v3161 = vsel %vm112, %v3149, %v3151
    %v3162 = vsel %vm112, %v3151, %v3153
    %v3163 = vsel %vm112, %v3153, %v3155
    %v3164 = vsel %vm112, %v3155, %v3157
    %v3172 = vadd.f32 %v3117, %v3158
    %v3173 = vadd.f32 %v3118, %v3159
    %v3174 = vadd.f32 %v3119, %v3160
    %v3175 = vadd.f32 %v3120, %v3161
    %v3176 = vadd.f32 %v3121, %v3162
    %v3177 = vadd.f32 %v3122, %v3163
    %v3178 = vadd.f32 %v3123, %v3164
    %s3179 = sld [smem:[#allocation2 + $0x202]]
    %v3180 = vstv %s3179
    %v3181 = vmul.f32 %v61, %v3180
    %v3182 = vmul.f32 %v62, %v3180
    %v3183 = vmul.f32 %v63, %v3180
    %v3184 = vmul.f32 %v64, %v3180
    %v3185 = vmul.f32 %v65, %v3180
    %v3186 = vmul.f32 %v66, %v3180
    %v3187 = vmul.f32 %v67, %v3180
    %v3188 = vmul.f32 %v68, %v3180
    %3197 = vrot.lane.b32.xlu0 %v3181, 126
    %v3198 = vpop.permute.xlu0 %3197
    %3199 = vrot.lane.b32.xlu0 %v3182, 126
    %v3200 = vpop.permute.xlu0 %3199
    %3201 = vrot.lane.b32.xlu0 %v3183, 126
    %v3202 = vpop.permute.xlu0 %3201
    %3203 = vrot.lane.b32.xlu0 %v3184, 126
    %v3204 = vpop.permute.xlu0 %3203
    %3205 = vrot.lane.b32.xlu0 %v3185, 126
    %v3206 = vpop.permute.xlu0 %3205
    %3207 = vrot.lane.b32.xlu0 %v3186, 126
    %v3208 = vpop.permute.xlu0 %3207
    %3209 = vrot.lane.b32.xlu0 %v3187, 126
    %v3210 = vpop.permute.xlu0 %3209
    %3211 = vrot.lane.b32.xlu0 %v3188, 126
    %v3212 = vpop.permute.xlu0 %3211
    %v3213 = vsel %vm168, %v3198, %v3200
    %v3214 = vsel %vm168, %v3200, %v3202
    %v3215 = vsel %vm168, %v3202, %v3204
    %v3216 = vsel %vm168, %v3204, %v3206
    %v3217 = vsel %vm168, %v3206, %v3208
    %v3218 = vsel %vm168, %v3208, %v3210
    %v3219 = vsel %vm168, %v3210, %v3212
    %v3227 = vadd.f32 %v3172, %v3213
    %v3228 = vadd.f32 %v3173, %v3214
    %v3229 = vadd.f32 %v3174, %v3215
    %v3230 = vadd.f32 %v3175, %v3216
    %v3231 = vadd.f32 %v3176, %v3217
    %v3232 = vadd.f32 %v3177, %v3218
    %v3233 = vadd.f32 %v3178, %v3219
    %s3234 = sld [smem:[#allocation2 + $0x203]]
    %v3235 = vstv %s3234
    %v3236 = vmul.f32 %v61, %v3235
    %v3237 = vmul.f32 %v62, %v3235
    %v3238 = vmul.f32 %v63, %v3235
    %v3239 = vmul.f32 %v64, %v3235
    %v3240 = vmul.f32 %v65, %v3235
    %v3241 = vmul.f32 %v66, %v3235
    %v3242 = vmul.f32 %v67, %v3235
    %v3243 = vmul.f32 %v68, %v3235
    %3252 = vrot.lane.b32.xlu0 %v3236, 100
    %v3253 = vpop.permute.xlu0 %3252
    %3254 = vrot.lane.b32.xlu0 %v3237, 100
    %v3255 = vpop.permute.xlu0 %3254
    %3256 = vrot.lane.b32.xlu0 %v3238, 100
    %v3257 = vpop.permute.xlu0 %3256
    %3258 = vrot.lane.b32.xlu0 %v3239, 100
    %v3259 = vpop.permute.xlu0 %3258
    %3260 = vrot.lane.b32.xlu0 %v3240, 100
    %v3261 = vpop.permute.xlu0 %3260
    %3262 = vrot.lane.b32.xlu0 %v3241, 100
    %v3263 = vpop.permute.xlu0 %3262
    %3264 = vrot.lane.b32.xlu0 %v3242, 100
    %v3265 = vpop.permute.xlu0 %3264
    %3266 = vrot.lane.b32.xlu0 %v3243, 100
    %v3267 = vpop.permute.xlu0 %3266
    %v3268 = vsel %vm224, %v3253, %v3255
    %v3269 = vsel %vm224, %v3255, %v3257
    %v3270 = vsel %vm224, %v3257, %v3259
    %v3271 = vsel %vm224, %v3259, %v3261
    %v3272 = vsel %vm224, %v3261, %v3263
    %v3273 = vsel %vm224, %v3263, %v3265
    %v3274 = vsel %vm224, %v3265, %v3267
    %v3282 = vadd.f32 %v3227, %v3268
    %v3283 = vadd.f32 %v3228, %v3269
    %v3284 = vadd.f32 %v3229, %v3270
    %v3285 = vadd.f32 %v3230, %v3271
    %v3286 = vadd.f32 %v3231, %v3272
    %v3287 = vadd.f32 %v3232, %v3273
    %v3288 = vadd.f32 %v3233, %v3274
    %s3289 = sld [smem:[#allocation2 + $0x204]]
    %v3290 = vstv %s3289
    %v3291 = vmul.f32 %v61, %v3290
    %v3292 = vmul.f32 %v62, %v3290
    %v3293 = vmul.f32 %v63, %v3290
    %v3294 = vmul.f32 %v64, %v3290
    %v3295 = vmul.f32 %v65, %v3290
    %v3296 = vmul.f32 %v66, %v3290
    %v3297 = vmul.f32 %v67, %v3290
    %v3298 = vmul.f32 %v68, %v3290
    %3307 = vrot.lane.b32.xlu0 %v3291, 99
    %v3308 = vpop.permute.xlu0 %3307
    %3309 = vrot.lane.b32.xlu0 %v3292, 99
    %v3310 = vpop.permute.xlu0 %3309
    %3311 = vrot.lane.b32.xlu0 %v3293, 99
    %v3312 = vpop.permute.xlu0 %3311
    %3313 = vrot.lane.b32.xlu0 %v3294, 99
    %v3314 = vpop.permute.xlu0 %3313
    %3315 = vrot.lane.b32.xlu0 %v3295, 99
    %v3316 = vpop.permute.xlu0 %3315
    %3317 = vrot.lane.b32.xlu0 %v3296, 99
    %v3318 = vpop.permute.xlu0 %3317
    %3319 = vrot.lane.b32.xlu0 %v3297, 99
    %v3320 = vpop.permute.xlu0 %3319
    %3321 = vrot.lane.b32.xlu0 %v3298, 99
    %v3322 = vpop.permute.xlu0 %3321
    %v3323 = vsel %vm280, %v3308, %v3310
    %v3324 = vsel %vm280, %v3310, %v3312
    %v3325 = vsel %vm280, %v3312, %v3314
    %v3326 = vsel %vm280, %v3314, %v3316
    %v3327 = vsel %vm280, %v3316, %v3318
    %v3328 = vsel %vm280, %v3318, %v3320
    %v3329 = vsel %vm280, %v3320, %v3322
    %v3337 = vadd.f32 %v3282, %v3323
    %v3338 = vadd.f32 %v3283, %v3324
    %v3339 = vadd.f32 %v3284, %v3325
    %v3340 = vadd.f32 %v3285, %v3326
    %v3341 = vadd.f32 %v3286, %v3327
    %v3342 = vadd.f32 %v3287, %v3328
    %v3343 = vadd.f32 %v3288, %v3329
    %s3344 = sld [smem:[#allocation2 + $0x205]]
    %v3345 = vstv %s3344
    %v3346 = vmul.f32 %v61, %v3345
    %v3347 = vmul.f32 %v62, %v3345
    %v3348 = vmul.f32 %v63, %v3345
    %v3349 = vmul.f32 %v64, %v3345
    %v3350 = vmul.f32 %v65, %v3345
    %v3351 = vmul.f32 %v66, %v3345
    %v3352 = vmul.f32 %v67, %v3345
    %v3353 = vmul.f32 %v68, %v3345
    %3362 = vrot.lane.b32.xlu0 %v3346, 98
    %v3363 = vpop.permute.xlu0 %3362
    %3364 = vrot.lane.b32.xlu0 %v3347, 98
    %v3365 = vpop.permute.xlu0 %3364
    %3366 = vrot.lane.b32.xlu0 %v3348, 98
    %v3367 = vpop.permute.xlu0 %3366
    %3368 = vrot.lane.b32.xlu0 %v3349, 98
    %v3369 = vpop.permute.xlu0 %3368
    %3370 = vrot.lane.b32.xlu0 %v3350, 98
    %v3371 = vpop.permute.xlu0 %3370
    %3372 = vrot.lane.b32.xlu0 %v3351, 98
    %v3373 = vpop.permute.xlu0 %3372
    %3374 = vrot.lane.b32.xlu0 %v3352, 98
    %v3375 = vpop.permute.xlu0 %3374
    %3376 = vrot.lane.b32.xlu0 %v3353, 98
    %v3377 = vpop.permute.xlu0 %3376
    %v3378 = vsel %vm336, %v3363, %v3365
    %v3379 = vsel %vm336, %v3365, %v3367
    %v3380 = vsel %vm336, %v3367, %v3369
    %v3381 = vsel %vm336, %v3369, %v3371
    %v3382 = vsel %vm336, %v3371, %v3373
    %v3383 = vsel %vm336, %v3373, %v3375
    %v3384 = vsel %vm336, %v3375, %v3377
    %v3392 = vadd.f32 %v3337, %v3378
    %v3393 = vadd.f32 %v3338, %v3379
    %v3394 = vadd.f32 %v3339, %v3380
    %v3395 = vadd.f32 %v3340, %v3381
    %v3396 = vadd.f32 %v3341, %v3382
    %v3397 = vadd.f32 %v3342, %v3383
    %v3398 = vadd.f32 %v3343, %v3384
    %s3399 = sld [smem:[#allocation2 + $0x206]]
    %v3400 = vstv %s3399
    %v3401 = vmul.f32 %v61, %v3400
    %v3402 = vmul.f32 %v62, %v3400
    %v3403 = vmul.f32 %v63, %v3400
    %v3404 = vmul.f32 %v64, %v3400
    %v3405 = vmul.f32 %v65, %v3400
    %v3406 = vmul.f32 %v66, %v3400
    %v3407 = vmul.f32 %v67, %v3400
    %v3408 = vmul.f32 %v68, %v3400
    %3417 = vrot.lane.b32.xlu0 %v3401, 72
    %v3418 = vpop.permute.xlu0 %3417
    %3419 = vrot.lane.b32.xlu0 %v3402, 72
    %v3420 = vpop.permute.xlu0 %3419
    %3421 = vrot.lane.b32.xlu0 %v3403, 72
    %v3422 = vpop.permute.xlu0 %3421
    %3423 = vrot.lane.b32.xlu0 %v3404, 72
    %v3424 = vpop.permute.xlu0 %3423
    %3425 = vrot.lane.b32.xlu0 %v3405, 72
    %v3426 = vpop.permute.xlu0 %3425
    %3427 = vrot.lane.b32.xlu0 %v3406, 72
    %v3428 = vpop.permute.xlu0 %3427
    %3429 = vrot.lane.b32.xlu0 %v3407, 72
    %v3430 = vpop.permute.xlu0 %3429
    %3431 = vrot.lane.b32.xlu0 %v3408, 72
    %v3432 = vpop.permute.xlu0 %3431
    %v3433 = vsel %vm392, %v3418, %v3420
    %v3434 = vsel %vm392, %v3420, %v3422
    %v3435 = vsel %vm392, %v3422, %v3424
    %v3436 = vsel %vm392, %v3424, %v3426
    %v3437 = vsel %vm392, %v3426, %v3428
    %v3438 = vsel %vm392, %v3428, %v3430
    %v3439 = vsel %vm392, %v3430, %v3432
    %v3447 = vadd.f32 %v3392, %v3433
    %v3448 = vadd.f32 %v3393, %v3434
    %v3449 = vadd.f32 %v3394, %v3435
    %v3450 = vadd.f32 %v3395, %v3436
    %v3451 = vadd.f32 %v3396, %v3437
    %v3452 = vadd.f32 %v3397, %v3438
    %v3453 = vadd.f32 %v3398, %v3439
    %s3454 = sld [smem:[#allocation2 + $0x207]]
    %v3455 = vstv %s3454
    %v3456 = vmul.f32 %v61, %v3455
    %v3457 = vmul.f32 %v62, %v3455
    %v3458 = vmul.f32 %v63, %v3455
    %v3459 = vmul.f32 %v64, %v3455
    %v3460 = vmul.f32 %v65, %v3455
    %v3461 = vmul.f32 %v66, %v3455
    %v3462 = vmul.f32 %v67, %v3455
    %v3463 = vmul.f32 %v68, %v3455
    %3472 = vrot.lane.b32.xlu0 %v3456, 71
    %v3473 = vpop.permute.xlu0 %3472
    %3474 = vrot.lane.b32.xlu0 %v3457, 71
    %v3475 = vpop.permute.xlu0 %3474
    %3476 = vrot.lane.b32.xlu0 %v3458, 71
    %v3477 = vpop.permute.xlu0 %3476
    %3478 = vrot.lane.b32.xlu0 %v3459, 71
    %v3479 = vpop.permute.xlu0 %3478
    %3480 = vrot.lane.b32.xlu0 %v3460, 71
    %v3481 = vpop.permute.xlu0 %3480
    %3482 = vrot.lane.b32.xlu0 %v3461, 71
    %v3483 = vpop.permute.xlu0 %3482
    %3484 = vrot.lane.b32.xlu0 %v3462, 71
    %v3485 = vpop.permute.xlu0 %3484
    %3486 = vrot.lane.b32.xlu0 %v3463, 71
    %v3487 = vpop.permute.xlu0 %3486
    %v3488 = vsel %vm448, %v3473, %v3475
    %v3489 = vsel %vm448, %v3475, %v3477
    %v3490 = vsel %vm448, %v3477, %v3479
    %v3491 = vsel %vm448, %v3479, %v3481
    %v3492 = vsel %vm448, %v3481, %v3483
    %v3493 = vsel %vm448, %v3483, %v3485
    %v3494 = vsel %vm448, %v3485, %v3487
    %v3502 = vadd.f32 %v3447, %v3488
    %v3503 = vadd.f32 %v3448, %v3489
    %v3504 = vadd.f32 %v3449, %v3490
    %v3505 = vadd.f32 %v3450, %v3491
    %v3506 = vadd.f32 %v3451, %v3492
    %v3507 = vadd.f32 %v3452, %v3493
    %v3508 = vadd.f32 %v3453, %v3494
    %s3509 = sld [smem:[#allocation2 + $0x208]]
    %v3510 = vstv %s3509
    %v3511 = vmul.f32 %v61, %v3510
    %v3512 = vmul.f32 %v62, %v3510
    %v3513 = vmul.f32 %v63, %v3510
    %v3514 = vmul.f32 %v64, %v3510
    %v3515 = vmul.f32 %v65, %v3510
    %v3516 = vmul.f32 %v66, %v3510
    %v3517 = vmul.f32 %v67, %v3510
    %v3518 = vmul.f32 %v68, %v3510
    %3527 = vrot.lane.b32.xlu0 %v3511, 70
    %v3528 = vpop.permute.xlu0 %3527
    %3529 = vrot.lane.b32.xlu0 %v3512, 70
    %v3530 = vpop.permute.xlu0 %3529
    %3531 = vrot.lane.b32.xlu0 %v3513, 70
    %v3532 = vpop.permute.xlu0 %3531
    %3533 = vrot.lane.b32.xlu0 %v3514, 70
    %v3534 = vpop.permute.xlu0 %3533
    %3535 = vrot.lane.b32.xlu0 %v3515, 70
    %v3536 = vpop.permute.xlu0 %3535
    %3537 = vrot.lane.b32.xlu0 %v3516, 70
    %v3538 = vpop.permute.xlu0 %3537
    %3539 = vrot.lane.b32.xlu0 %v3517, 70
    %v3540 = vpop.permute.xlu0 %3539
    %3541 = vrot.lane.b32.xlu0 %v3518, 70
    %v3542 = vpop.permute.xlu0 %3541
    %v3543 = vsel %vm504, %v3528, %v3530
    %v3544 = vsel %vm504, %v3530, %v3532
    %v3545 = vsel %vm504, %v3532, %v3534
    %v3546 = vsel %vm504, %v3534, %v3536
    %v3547 = vsel %vm504, %v3536, %v3538
    %v3548 = vsel %vm504, %v3538, %v3540
    %v3549 = vsel %vm504, %v3540, %v3542
    %v3557 = vadd.f32 %v3502, %v3543
    %v3558 = vadd.f32 %v3503, %v3544
    %v3559 = vadd.f32 %v3504, %v3545
    %v3560 = vadd.f32 %v3505, %v3546
    %v3561 = vadd.f32 %v3506, %v3547
    %v3562 = vadd.f32 %v3507, %v3548
    %v3563 = vadd.f32 %v3508, %v3549
    %s3564 = sld [smem:[#allocation5 + $0x4]]
    %v3565 = vstv %s3564
    %v3566 = vadd.f32 %v3557, %v3565
    %v3567 = vadd.f32 %v3558, %v3565
    %v3568 = vadd.f32 %v3559, %v3565
    %v3569 = vadd.f32 %v3560, %v3565
    %v3570 = vadd.f32 %v3561, %v3565
    %v3571 = vadd.f32 %v3562, %v3565
    %v3572 = vadd.f32 %v3563, %v3565
    %v3573 = vmax.f32 %v3566, 0.0
    %v3574 = vmax.f32 %v3567, 0.0
    %v3575 = vmax.f32 %v3568, 0.0
    %v3576 = vmax.f32 %v3569, 0.0
    %v3577 = vmax.f32 %v3570, 0.0
    %v3578 = vmax.f32 %v3571, 0.0
    %v3579 = vmax.f32 %v3572, 0.0
    %v3580 = vld [vmem:[#allocation7 + $0xe0] sm:$0xff]
    %v3581 = vld [vmem:[#allocation7 + $0xe8] sm:$0xff]
    %v3582 = vld [vmem:[#allocation7 + $0xf0] sm:$0xff]
    %v3583 = vld [vmem:[#allocation7 + $0xf8] sm:$0xff]
    %v3584 = vld [vmem:[#allocation7 + $0x100] sm:$0xff]
    %v3585 = vld [vmem:[#allocation7 + $0x108] sm:$0xff]
    %v3586 = vld [vmem:[#allocation7 + $0x110] sm:$0xff]
    %v3587 = vld [vmem:[#allocation7 + $0x460] sm:$0x3]
    %v3588 = vld [vmem:[#allocation7 + $0x468] sm:$0x3]
    %v3589 = vld [vmem:[#allocation7 + $0x470] sm:$0x3]
    %v3590 = vld [vmem:[#allocation7 + $0x478] sm:$0x3]
    %v3591 = vld [vmem:[#allocation7 + $0x480] sm:$0x3]
    %v3592 = vld [vmem:[#allocation7 + $0x488] sm:$0x3]
    %v3593 = vld [vmem:[#allocation7 + $0x490] sm:$0x3]
    %3594 = vmatprep.subr.mxu0 %v3581
    %3595 = vmatpush1.xpose.msra.mxu0 %v3580
    %3596 = vmatprep.subr.mxu0 %v3588
    %3597 = vmatpush1.xpose.msra.mxu0 %v3587
    %3598 = vmatprep.subr.mxu0 0.0
    %3599 = vmatpush1.xpose.msra.mxu0 0.0
    %3600 = vmatprep.subr.mxu0 0.0
    %3601 = vmatpush1.xpose.msra.mxu0 0.0
    %3602 = vmatprep.subr.mxu0 0.0
    %3603 = vmatpush1.xpose.msra.mxu0 0.0
    %3604 = vmatprep.subr.mxu0 0.0
    %3605 = vmatpush1.xpose.msra.mxu0 0.0
    %3606 = vmatprep.subr.mxu0 0.0
    %3607 = vmatpush1.xpose.msra.mxu0 0.0
    %3608 = vmatprep.subr.mxu0 0.0
    %3609 = vmatpush1.xpose.msra.mxu0 0.0
    %3610 = vmatprep.subr.mxu0 0.0
    %3611 = vmatpush1.xpose.msra.mxu0 0.0
    %3612 = vmatprep.subr.mxu0 0.0
    %3613 = vmatpush1.xpose.msra.mxu0 0.0
    %3614 = vmatprep.subr.mxu0 0.0
    %3615 = vmatpush1.xpose.msra.mxu0 0.0
    %3616 = vmatprep.subr.mxu0 0.0
    %3617 = vmatpush1.xpose.msra.mxu0 0.0
    %3618 = vmatprep.subr.mxu0 0.0
    %3619 = vmatpush1.xpose.msra.mxu0 0.0
    %3620 = vmatprep.subr.mxu0 0.0
    %3621 = vmatpush1.xpose.msra.mxu0 0.0
    %3622 = vmatprep.subr.mxu0 0.0
    %3623 = vmatpush1.xpose.msra.mxu0 0.0
    %3624 = vmatprep.subr.mxu0 0.0
    %3625 = vmatpush1.xpose.msra.mxu0 0.0
    %3626 = vmatprep.subr.mxu0 0.0
    %3627 = vmatpush1.xpose.msra.mxu0 0.0
    %3628 = vmatprep.subr.mxu0 0.0
    %3629 = vmatpush1.xpose.msra.mxu0 0.0
    %3630 = vmatprep.subr.mxu0 0.0
    %3631 = vmatpush1.xpose.msra.mxu0 0.0
    %3632 = vmatprep.subr.mxu0 0.0
    %3633 = vmatpush1.xpose.msra.mxu0 0.0
    %3634 = vmatprep.subr.mxu0 0.0
    %3635 = vmatpush1.xpose.msra.mxu0 0.0
    %3636 = vmatprep.subr.mxu0 0.0
    %3637 = vmatpush1.xpose.msra.mxu0 0.0
    %3638 = vmatprep.subr.mxu0 0.0
    %3639 = vmatpush1.xpose.msra.mxu0 0.0
    %3640 = vmatprep.subr.mxu0 0.0
    %3641 = vmatpush1.xpose.msra.mxu0 0.0
    %3642 = vmatprep.subr.mxu0 0.0
    %3643 = vmatpush1.xpose.msra.mxu0 0.0
    %3644 = vmatprep.subr.mxu0 0.0
    %3645 = vmatpush1.xpose.msra.mxu0 0.0
    %3646 = vmatprep.subr.mxu0 0.0
    %3647 = vmatpush1.xpose.msra.mxu0 0.0
    %3648 = vmatprep.subr.mxu0 0.0
    %3649 = vmatpush1.xpose.msra.mxu0 0.0
    %3650 = vmatprep.subr.mxu0 0.0
    %3651 = vmatpush1.xpose.msra.mxu0 0.0
    %3652 = vmatprep.subr.mxu0 0.0
    %3653 = vmatpush1.xpose.msra.mxu0 0.0
    %3654 = vmatprep.subr.mxu0 0.0
    %3655 = vmatpush1.xpose.msra.mxu0 0.0
    %3656 = vmatprep.subr.mxu0 0.0
    %3657 = vmatpush1.xpose.msra.mxu0 0.0
    %3658 = vmatprep.mubr.f32.mxu0 %v3574
    %3659 = vmatmul.mubr.f32.gmra.mrb[0].mxu0 %v3573
    %v3660 = vpop.f32.mrb[0].mxu0
    %v3661 = vadd.f32 0.0, %v3660
    %v3662 = vpop.f32.mrb[0].mxu0
    %3663 = vdwg.mxu0
    %3664 = vmatprep.subr.mxu0 %v3583
    %3665 = vmatpush1.xpose.msra.mxu0 %v3582
    %3666 = vmatprep.subr.mxu0 %v3590
    %3667 = vmatpush1.xpose.msra.mxu0 %v3589
    %3668 = vmatprep.subr.mxu0 0.0
    %3669 = vmatpush1.xpose.msra.mxu0 0.0
    %3670 = vmatprep.subr.mxu0 0.0
    %3671 = vmatpush1.xpose.msra.mxu0 0.0
    %3672 = vmatprep.subr.mxu0 0.0
    %3673 = vmatpush1.xpose.msra.mxu0 0.0
    %3674 = vmatprep.subr.mxu0 0.0
    %3675 = vmatpush1.xpose.msra.mxu0 0.0
    %3676 = vmatprep.subr.mxu0 0.0
    %3677 = vmatpush1.xpose.msra.mxu0 0.0
    %3678 = vmatprep.subr.mxu0 0.0
    %3679 = vmatpush1.xpose.msra.mxu0 0.0
    %3680 = vmatprep.subr.mxu0 0.0
    %3681 = vmatpush1.xpose.msra.mxu0 0.0
    %3682 = vmatprep.subr.mxu0 0.0
    %3683 = vmatpush1.xpose.msra.mxu0 0.0
    %3684 = vmatprep.subr.mxu0 0.0
    %3685 = vmatpush1.xpose.msra.mxu0 0.0
    %3686 = vmatprep.subr.mxu0 0.0
    %3687 = vmatpush1.xpose.msra.mxu0 0.0
    %3688 = vmatprep.subr.mxu0 0.0
    %3689 = vmatpush1.xpose.msra.mxu0 0.0
    %3690 = vmatprep.subr.mxu0 0.0
    %3691 = vmatpush1.xpose.msra.mxu0 0.0
    %3692 = vmatprep.subr.mxu0 0.0
    %3693 = vmatpush1.xpose.msra.mxu0 0.0
    %3694 = vmatprep.subr.mxu0 0.0
    %3695 = vmatpush1.xpose.msra.mxu0 0.0
    %3696 = vmatprep.subr.mxu0 0.0
    %3697 = vmatpush1.xpose.msra.mxu0 0.0
    %3698 = vmatprep.subr.mxu0 0.0
    %3699 = vmatpush1.xpose.msra.mxu0 0.0
    %3700 = vmatprep.subr.mxu0 0.0
    %3701 = vmatpush1.xpose.msra.mxu0 0.0
    %3702 = vmatprep.subr.mxu0 0.0
    %3703 = vmatpush1.xpose.msra.mxu0 0.0
    %3704 = vmatprep.subr.mxu0 0.0
    %3705 = vmatpush1.xpose.msra.mxu0 0.0
    %3706 = vmatprep.subr.mxu0 0.0
    %3707 = vmatpush1.xpose.msra.mxu0 0.0
    %3708 = vmatprep.subr.mxu0 0.0
    %3709 = vmatpush1.xpose.msra.mxu0 0.0
    %3710 = vmatprep.subr.mxu0 0.0
    %3711 = vmatpush1.xpose.msra.mxu0 0.0
    %3712 = vmatprep.subr.mxu0 0.0
    %3713 = vmatpush1.xpose.msra.mxu0 0.0
    %3714 = vmatprep.subr.mxu0 0.0
    %3715 = vmatpush1.xpose.msra.mxu0 0.0
    %3716 = vmatprep.subr.mxu0 0.0
    %3717 = vmatpush1.xpose.msra.mxu0 0.0
    %3718 = vmatprep.subr.mxu0 0.0
    %3719 = vmatpush1.xpose.msra.mxu0 0.0
    %3720 = vmatprep.subr.mxu0 0.0
    %3721 = vmatpush1.xpose.msra.mxu0 0.0
    %3722 = vmatprep.subr.mxu0 0.0
    %3723 = vmatpush1.xpose.msra.mxu0 0.0
    %3724 = vmatprep.subr.mxu0 0.0
    %3725 = vmatpush1.xpose.msra.mxu0 0.0
    %3726 = vmatprep.subr.mxu0 0.0
    %3727 = vmatpush1.xpose.msra.mxu0 0.0
    %3728 = vmatprep.mubr.f32.mxu0 %v3576
    %3729 = vmatmul.mubr.f32.gmra.mrb[0].mxu0 %v3575
    %v3730 = vpop.f32.mrb[0].mxu0
    %v3731 = vadd.f32 %v3661, %v3730
    %v3732 = vpop.f32.mrb[0].mxu0
    %3733 = vdwg.mxu0
    %3734 = vmatprep.subr.mxu0 %v3585
    %3735 = vmatpush1.xpose.msra.mxu0 %v3584
    %3736 = vmatprep.subr.mxu0 %v3592
    %3737 = vmatpush1.xpose.msra.mxu0 %v3591
    %3738 = vmatprep.subr.mxu0 0.0
    %3739 = vmatpush1.xpose.msra.mxu0 0.0
    %3740 = vmatprep.subr.mxu0 0.0
    %3741 = vmatpush1.xpose.msra.mxu0 0.0
    %3742 = vmatprep.subr.mxu0 0.0
    %3743 = vmatpush1.xpose.msra.mxu0 0.0
    %3744 = vmatprep.subr.mxu0 0.0
    %3745 = vmatpush1.xpose.msra.mxu0 0.0
    %3746 = vmatprep.subr.mxu0 0.0
    %3747 = vmatpush1.xpose.msra.mxu0 0.0
    %3748 = vmatprep.subr.mxu0 0.0
    %3749 = vmatpush1.xpose.msra.mxu0 0.0
    %3750 = vmatprep.subr.mxu0 0.0
    %3751 = vmatpush1.xpose.msra.mxu0 0.0
    %3752 = vmatprep.subr.mxu0 0.0
    %3753 = vmatpush1.xpose.msra.mxu0 0.0
    %3754 = vmatprep.subr.mxu0 0.0
    %3755 = vmatpush1.xpose.msra.mxu0 0.0
    %3756 = vmatprep.subr.mxu0 0.0
    %3757 = vmatpush1.xpose.msra.mxu0 0.0
    %3758 = vmatprep.subr.mxu0 0.0
    %3759 = vmatpush1.xpose.msra.mxu0 0.0
    %3760 = vmatprep.subr.mxu0 0.0
    %3761 = vmatpush1.xpose.msra.mxu0 0.0
    %3762 = vmatprep.subr.mxu0 0.0
    %3763 = vmatpush1.xpose.msra.mxu0 0.0
    %3764 = vmatprep.subr.mxu0 0.0
    %3765 = vmatpush1.xpose.msra.mxu0 0.0
    %3766 = vmatprep.subr.mxu0 0.0
    %3767 = vmatpush1.xpose.msra.mxu0 0.0
    %3768 = vmatprep.subr.mxu0 0.0
    %3769 = vmatpush1.xpose.msra.mxu0 0.0
    %3770 = vmatprep.subr.mxu0 0.0
    %3771 = vmatpush1.xpose.msra.mxu0 0.0
    %3772 = vmatprep.subr.mxu0 0.0
    %3773 = vmatpush1.xpose.msra.mxu0 0.0
    %3774 = vmatprep.subr.mxu0 0.0
    %3775 = vmatpush1.xpose.msra.mxu0 0.0
    %3776 = vmatprep.subr.mxu0 0.0
    %3777 = vmatpush1.xpose.msra.mxu0 0.0
    %3778 = vmatprep.subr.mxu0 0.0
    %3779 = vmatpush1.xpose.msra.mxu0 0.0
    %3780 = vmatprep.subr.mxu0 0.0
    %3781 = vmatpush1.xpose.msra.mxu0 0.0
    %3782 = vmatprep.subr.mxu0 0.0
    %3783 = vmatpush1.xpose.msra.mxu0 0.0
    %3784 = vmatprep.subr.mxu0 0.0
    %3785 = vmatpush1.xpose.msra.mxu0 0.0
    %3786 = vmatprep.subr.mxu0 0.0
    %3787 = vmatpush1.xpose.msra.mxu0 0.0
    %3788 = vmatprep.subr.mxu0 0.0
    %3789 = vmatpush1.xpose.msra.mxu0 0.0
    %3790 = vmatprep.subr.mxu0 0.0
    %3791 = vmatpush1.xpose.msra.mxu0 0.0
    %3792 = vmatprep.subr.mxu0 0.0
    %3793 = vmatpush1.xpose.msra.mxu0 0.0
    %3794 = vmatprep.subr.mxu0 0.0
    %3795 = vmatpush1.xpose.msra.mxu0 0.0
    %3796 = vmatprep.subr.mxu0 0.0
    %3797 = vmatpush1.xpose.msra.mxu0 0.0
    %3798 = vmatprep.mubr.f32.mxu0 %v3578
    %3799 = vmatmul.mubr.f32.gmra.mrb[0].mxu0 %v3577
    %v3800 = vpop.f32.mrb[0].mxu0
    %v3801 = vadd.f32 %v3731, %v3800
    %v3802 = vpop.f32.mrb[0].mxu0
    %3803 = vdwg.mxu0
    %3804 = vmatprep.subr.mxu0 0.0
    %3805 = vmatpush1.xpose.msra.mxu0 %v3586
    %3806 = vmatprep.subr.mxu0 0.0
    %3807 = vmatpush1.xpose.msra.mxu0 %v3593
    %3808 = vmatprep.subr.mxu0 0.0
    %3809 = vmatpush1.xpose.msra.mxu0 0.0
    %3810 = vmatprep.subr.mxu0 0.0
    %3811 = vmatpush1.xpose.msra.mxu0 0.0
    %3812 = vmatprep.subr.mxu0 0.0
    %3813 = vmatpush1.xpose.msra.mxu0 0.0
    %3814 = vmatprep.subr.mxu0 0.0
    %3815 = vmatpush1.xpose.msra.mxu0 0.0
    %3816 = vmatprep.subr.mxu0 0.0
    %3817 = vmatpush1.xpose.msra.mxu0 0.0
    %3818 = vmatprep.subr.mxu0 0.0
    %3819 = vmatpush1.xpose.msra.mxu0 0.0
    %3820 = vmatprep.subr.mxu0 0.0
    %3821 = vmatpush1.xpose.msra.mxu0 0.0
    %3822 = vmatprep.subr.mxu0 0.0
    %3823 = vmatpush1.xpose.msra.mxu0 0.0
    %3824 = vmatprep.subr.mxu0 0.0
    %3825 = vmatpush1.xpose.msra.mxu0 0.0
    %3826 = vmatprep.subr.mxu0 0.0
    %3827 = vmatpush1.xpose.msra.mxu0 0.0
    %3828 = vmatprep.subr.mxu0 0.0
    %3829 = vmatpush1.xpose.msra.mxu0 0.0
    %3830 = vmatprep.subr.mxu0 0.0
    %3831 = vmatpush1.xpose.msra.mxu0 0.0
    %3832 = vmatprep.subr.mxu0 0.0
    %3833 = vmatpush1.xpose.msra.mxu0 0.0
    %3834 = vmatprep.subr.mxu0 0.0
    %3835 = vmatpush1.xpose.msra.mxu0 0.0
    %3836 = vmatprep.subr.mxu0 0.0
    %3837 = vmatpush1.xpose.msra.mxu0 0.0
    %3838 = vmatprep.subr.mxu0 0.0
    %3839 = vmatpush1.xpose.msra.mxu0 0.0
    %3840 = vmatprep.subr.mxu0 0.0
    %3841 = vmatpush1.xpose.msra.mxu0 0.0
    %3842 = vmatprep.subr.mxu0 0.0
    %3843 = vmatpush1.xpose.msra.mxu0 0.0
    %3844 = vmatprep.subr.mxu0 0.0
    %3845 = vmatpush1.xpose.msra.mxu0 0.0
    %3846 = vmatprep.subr.mxu0 0.0
    %3847 = vmatpush1.xpose.msra.mxu0 0.0
    %3848 = vmatprep.subr.mxu0 0.0
    %3849 = vmatpush1.xpose.msra.mxu0 0.0
    %3850 = vmatprep.subr.mxu0 0.0
    %3851 = vmatpush1.xpose.msra.mxu0 0.0
    %3852 = vmatprep.subr.mxu0 0.0
    %3853 = vmatpush1.xpose.msra.mxu0 0.0
    %3854 = vmatprep.subr.mxu0 0.0
    %3855 = vmatpush1.xpose.msra.mxu0 0.0
    %3856 = vmatprep.subr.mxu0 0.0
    %3857 = vmatpush1.xpose.msra.mxu0 0.0
    %3858 = vmatprep.subr.mxu0 0.0
    %3859 = vmatpush1.xpose.msra.mxu0 0.0
    %3860 = vmatprep.subr.mxu0 0.0
    %3861 = vmatpush1.xpose.msra.mxu0 0.0
    %3862 = vmatprep.subr.mxu0 0.0
    %3863 = vmatpush1.xpose.msra.mxu0 0.0
    %3864 = vmatprep.subr.mxu0 0.0
    %3865 = vmatpush1.xpose.msra.mxu0 0.0
    %3866 = vmatprep.subr.mxu0 0.0
    %3867 = vmatpush1.xpose.msra.mxu0 0.0
    %3868 = vmatprep.mubr.f32.mxu0 0.0
    %3869 = vmatmul.mubr.f32.gmra.mrb[0].mxu0 %v3579
    %v3870 = vpop.f32.mrb[0].mxu0
    %v3871 = vadd.f32 %v3801, %v3870
    %v3872 = vpop.f32.mrb[0].mxu0
    %3873 = vdwg.mxu0
    %v3874 = vadd.f32 %v3114, %v3871
    %s3875 = sld [smem:[#allocation2 + $0x280]]
    %v3876 = vstv %s3875
    %v3877 = vmul.f32 %v61, %v3876
    %v3878 = vmul.f32 %v62, %v3876
    %v3879 = vmul.f32 %v63, %v3876
    %v3880 = vmul.f32 %v64, %v3876
    %v3881 = vmul.f32 %v65, %v3876
    %v3882 = vmul.f32 %v66, %v3876
    %v3883 = vmul.f32 %v67, %v3876
    %s3884 = sld [smem:[#allocation2 + $0x281]]
    %v3885 = vstv %s3884
    %v3886 = vmul.f32 %v61, %v3885
    %v3887 = vmul.f32 %v62, %v3885
    %v3888 = vmul.f32 %v63, %v3885
    %v3889 = vmul.f32 %v64, %v3885
    %v3890 = vmul.f32 %v65, %v3885
    %v3891 = vmul.f32 %v66, %v3885
    %v3892 = vmul.f32 %v67, %v3885
    %v3893 = vmul.f32 %v68, %v3885
    %3902 = vrot.lane.b32.xlu0 %v3886, 127
    %v3903 = vpop.permute.xlu0 %3902
    %3904 = vrot.lane.b32.xlu0 %v3887, 127
    %v3905 = vpop.permute.xlu0 %3904
    %3906 = vrot.lane.b32.xlu0 %v3888, 127
    %v3907 = vpop.permute.xlu0 %3906
    %3908 = vrot.lane.b32.xlu0 %v3889, 127
    %v3909 = vpop.permute.xlu0 %3908
    %3910 = vrot.lane.b32.xlu0 %v3890, 127
    %v3911 = vpop.permute.xlu0 %3910
    %3912 = vrot.lane.b32.xlu0 %v3891, 127
    %v3913 = vpop.permute.xlu0 %3912
    %3914 = vrot.lane.b32.xlu0 %v3892, 127
    %v3915 = vpop.permute.xlu0 %3914
    %3916 = vrot.lane.b32.xlu0 %v3893, 127
    %v3917 = vpop.permute.xlu0 %3916
    %v3918 = vsel %vm112, %v3903, %v3905
    %v3919 = vsel %vm112, %v3905, %v3907
    %v3920 = vsel %vm112, %v3907, %v3909
    %v3921 = vsel %vm112, %v3909, %v3911
    %v3922 = vsel %vm112, %v3911, %v3913
    %v3923 = vsel %vm112, %v3913, %v3915
    %v3924 = vsel %vm112, %v3915, %v3917
    %v3932 = vadd.f32 %v3877, %v3918
    %v3933 = vadd.f32 %v3878, %v3919
    %v3934 = vadd.f32 %v3879, %v3920
    %v3935 = vadd.f32 %v3880, %v3921
    %v3936 = vadd.f32 %v3881, %v3922
    %v3937 = vadd.f32 %v3882, %v3923
    %v3938 = vadd.f32 %v3883, %v3924
    %s3939 = sld [smem:[#allocation2 + $0x282]]
    %v3940 = vstv %s3939
    %v3941 = vmul.f32 %v61, %v3940
    %v3942 = vmul.f32 %v62, %v3940
    %v3943 = vmul.f32 %v63, %v3940
    %v3944 = vmul.f32 %v64, %v3940
    %v3945 = vmul.f32 %v65, %v3940
    %v3946 = vmul.f32 %v66, %v3940
    %v3947 = vmul.f32 %v67, %v3940
    %v3948 = vmul.f32 %v68, %v3940
    %3957 = vrot.lane.b32.xlu0 %v3941, 126
    %v3958 = vpop.permute.xlu0 %3957
    %3959 = vrot.lane.b32.xlu0 %v3942, 126
    %v3960 = vpop.permute.xlu0 %3959
    %3961 = vrot.lane.b32.xlu0 %v3943, 126
    %v3962 = vpop.permute.xlu0 %3961
    %3963 = vrot.lane.b32.xlu0 %v3944, 126
    %v3964 = vpop.permute.xlu0 %3963
    %3965 = vrot.lane.b32.xlu0 %v3945, 126
    %v3966 = vpop.permute.xlu0 %3965
    %3967 = vrot.lane.b32.xlu0 %v3946, 126
    %v3968 = vpop.permute.xlu0 %3967
    %3969 = vrot.lane.b32.xlu0 %v3947, 126
    %v3970 = vpop.permute.xlu0 %3969
    %3971 = vrot.lane.b32.xlu0 %v3948, 126
    %v3972 = vpop.permute.xlu0 %3971
    %v3973 = vsel %vm168, %v3958, %v3960
    %v3974 = vsel %vm168, %v3960, %v3962
    %v3975 = vsel %vm168, %v3962, %v3964
    %v3976 = vsel %vm168, %v3964, %v3966
    %v3977 = vsel %vm168, %v3966, %v3968
    %v3978 = vsel %vm168, %v3968, %v3970
    %v3979 = vsel %vm168, %v3970, %v3972
    %v3987 = vadd.f32 %v3932, %v3973
    %v3988 = vadd.f32 %v3933, %v3974
    %v3989 = vadd.f32 %v3934, %v3975
    %v3990 = vadd.f32 %v3935, %v3976
    %v3991 = vadd.f32 %v3936, %v3977
    %v3992 = vadd.f32 %v3937, %v3978
    %v3993 = vadd.f32 %v3938, %v3979
    %s3994 = sld [smem:[#allocation2 + $0x283]]
    %v3995 = vstv %s3994
    %v3996 = vmul.f32 %v61, %v3995
    %v3997 = vmul.f32 %v62, %v3995
    %v3998 = vmul.f32 %v63, %v3995
    %v3999 = vmul.f32 %v64, %v3995
    %v4000 = vmul.f32 %v65, %v3995
    %v4001 = vmul.f32 %v66, %v3995
    %v4002 = vmul.f32 %v67, %v3995
    %v4003 = vmul.f32 %v68, %v3995
    %4012 = vrot.lane.b32.xlu0 %v3996, 100
    %v4013 = vpop.permute.xlu0 %4012
    %4014 = vrot.lane.b32.xlu0 %v3997, 100
    %v4015 = vpop.permute.xlu0 %4014
    %4016 = vrot.lane.b32.xlu0 %v3998, 100
    %v4017 = vpop.permute.xlu0 %4016
    %4018 = vrot.lane.b32.xlu0 %v3999, 100
    %v4019 = vpop.permute.xlu0 %4018
    %4020 = vrot.lane.b32.xlu0 %v4000, 100
    %v4021 = vpop.permute.xlu0 %4020
    %4022 = vrot.lane.b32.xlu0 %v4001, 100
    %v4023 = vpop.permute.xlu0 %4022
    %4024 = vrot.lane.b32.xlu0 %v4002, 100
    %v4025 = vpop.permute.xlu0 %4024
    %4026 = vrot.lane.b32.xlu0 %v4003, 100
    %v4027 = vpop.permute.xlu0 %4026
    %v4028 = vsel %vm224, %v4013, %v4015
    %v4029 = vsel %vm224, %v4015, %v4017
    %v4030 = vsel %vm224, %v4017, %v4019
    %v4031 = vsel %vm224, %v4019, %v4021
    %v4032 = vsel %vm224, %v4021, %v4023
    %v4033 = vsel %vm224, %v4023, %v4025
    %v4034 = vsel %vm224, %v4025, %v4027
    %v4042 = vadd.f32 %v3987, %v4028
    %v4043 = vadd.f32 %v3988, %v4029
    %v4044 = vadd.f32 %v3989, %v4030
    %v4045 = vadd.f32 %v3990, %v4031
    %v4046 = vadd.f32 %v3991, %v4032
    %v4047 = vadd.f32 %v3992, %v4033
    %v4048 = vadd.f32 %v3993, %v4034
    %s4049 = sld [smem:[#allocation2 + $0x284]]
    %v4050 = vstv %s4049
    %v4051 = vmul.f32 %v61, %v4050
    %v4052 = vmul.f32 %v62, %v4050
    %v4053 = vmul.f32 %v63, %v4050
    %v4054 = vmul.f32 %v64, %v4050
    %v4055 = vmul.f32 %v65, %v4050
    %v4056 = vmul.f32 %v66, %v4050
    %v4057 = vmul.f32 %v67, %v4050
    %v4058 = vmul.f32 %v68, %v4050
    %4067 = vrot.lane.b32.xlu0 %v4051, 99
    %v4068 = vpop.permute.xlu0 %4067
    %4069 = vrot.lane.b32.xlu0 %v4052, 99
    %v4070 = vpop.permute.xlu0 %4069
    %4071 = vrot.lane.b32.xlu0 %v4053, 99
    %v4072 = vpop.permute.xlu0 %4071
    %4073 = vrot.lane.b32.xlu0 %v4054, 99
    %v4074 = vpop.permute.xlu0 %4073
    %4075 = vrot.lane.b32.xlu0 %v4055, 99
    %v4076 = vpop.permute.xlu0 %4075
    %4077 = vrot.lane.b32.xlu0 %v4056, 99
    %v4078 = vpop.permute.xlu0 %4077
    %4079 = vrot.lane.b32.xlu0 %v4057, 99
    %v4080 = vpop.permute.xlu0 %4079
    %4081 = vrot.lane.b32.xlu0 %v4058, 99
    %v4082 = vpop.permute.xlu0 %4081
    %v4083 = vsel %vm280, %v4068, %v4070
    %v4084 = vsel %vm280, %v4070, %v4072
    %v4085 = vsel %vm280, %v4072, %v4074
    %v4086 = vsel %vm280, %v4074, %v4076
    %v4087 = vsel %vm280, %v4076, %v4078
    %v4088 = vsel %vm280, %v4078, %v4080
    %v4089 = vsel %vm280, %v4080, %v4082
    %v4097 = vadd.f32 %v4042, %v4083
    %v4098 = vadd.f32 %v4043, %v4084
    %v4099 = vadd.f32 %v4044, %v4085
    %v4100 = vadd.f32 %v4045, %v4086
    %v4101 = vadd.f32 %v4046, %v4087
    %v4102 = vadd.f32 %v4047, %v4088
    %v4103 = vadd.f32 %v4048, %v4089
    %s4104 = sld [smem:[#allocation2 + $0x285]]
    %v4105 = vstv %s4104
    %v4106 = vmul.f32 %v61, %v4105
    %v4107 = vmul.f32 %v62, %v4105
    %v4108 = vmul.f32 %v63, %v4105
    %v4109 = vmul.f32 %v64, %v4105
    %v4110 = vmul.f32 %v65, %v4105
    %v4111 = vmul.f32 %v66, %v4105
    %v4112 = vmul.f32 %v67, %v4105
    %v4113 = vmul.f32 %v68, %v4105
    %4122 = vrot.lane.b32.xlu0 %v4106, 98
    %v4123 = vpop.permute.xlu0 %4122
    %4124 = vrot.lane.b32.xlu0 %v4107, 98
    %v4125 = vpop.permute.xlu0 %4124
    %4126 = vrot.lane.b32.xlu0 %v4108, 98
    %v4127 = vpop.permute.xlu0 %4126
    %4128 = vrot.lane.b32.xlu0 %v4109, 98
    %v4129 = vpop.permute.xlu0 %4128
    %4130 = vrot.lane.b32.xlu0 %v4110, 98
    %v4131 = vpop.permute.xlu0 %4130
    %4132 = vrot.lane.b32.xlu0 %v4111, 98
    %v4133 = vpop.permute.xlu0 %4132
    %4134 = vrot.lane.b32.xlu0 %v4112, 98
    %v4135 = vpop.permute.xlu0 %4134
    %4136 = vrot.lane.b32.xlu0 %v4113, 98
    %v4137 = vpop.permute.xlu0 %4136
    %v4138 = vsel %vm336, %v4123, %v4125
    %v4139 = vsel %vm336, %v4125, %v4127
    %v4140 = vsel %vm336, %v4127, %v4129
    %v4141 = vsel %vm336, %v4129, %v4131
    %v4142 = vsel %vm336, %v4131, %v4133
    %v4143 = vsel %vm336, %v4133, %v4135
    %v4144 = vsel %vm336, %v4135, %v4137
    %v4152 = vadd.f32 %v4097, %v4138
    %v4153 = vadd.f32 %v4098, %v4139
    %v4154 = vadd.f32 %v4099, %v4140
    %v4155 = vadd.f32 %v4100, %v4141
    %v4156 = vadd.f32 %v4101, %v4142
    %v4157 = vadd.f32 %v4102, %v4143
    %v4158 = vadd.f32 %v4103, %v4144
    %s4159 = sld [smem:[#allocation2 + $0x286]]
    %v4160 = vstv %s4159
    %v4161 = vmul.f32 %v61, %v4160
    %v4162 = vmul.f32 %v62, %v4160
    %v4163 = vmul.f32 %v63, %v4160
    %v4164 = vmul.f32 %v64, %v4160
    %v4165 = vmul.f32 %v65, %v4160
    %v4166 = vmul.f32 %v66, %v4160
    %v4167 = vmul.f32 %v67, %v4160
    %v4168 = vmul.f32 %v68, %v4160
    %4177 = vrot.lane.b32.xlu0 %v4161, 72
    %v4178 = vpop.permute.xlu0 %4177
    %4179 = vrot.lane.b32.xlu0 %v4162, 72
    %v4180 = vpop.permute.xlu0 %4179
    %4181 = vrot.lane.b32.xlu0 %v4163, 72
    %v4182 = vpop.permute.xlu0 %4181
    %4183 = vrot.lane.b32.xlu0 %v4164, 72
    %v4184 = vpop.permute.xlu0 %4183
    %4185 = vrot.lane.b32.xlu0 %v4165, 72
    %v4186 = vpop.permute.xlu0 %4185
    %4187 = vrot.lane.b32.xlu0 %v4166, 72
    %v4188 = vpop.permute.xlu0 %4187
    %4189 = vrot.lane.b32.xlu0 %v4167, 72
    %v4190 = vpop.permute.xlu0 %4189
    %4191 = vrot.lane.b32.xlu0 %v4168, 72
    %v4192 = vpop.permute.xlu0 %4191
    %v4193 = vsel %vm392, %v4178, %v4180
    %v4194 = vsel %vm392, %v4180, %v4182
    %v4195 = vsel %vm392, %v4182, %v4184
    %v4196 = vsel %vm392, %v4184, %v4186
    %v4197 = vsel %vm392, %v4186, %v4188
    %v4198 = vsel %vm392, %v4188, %v4190
    %v4199 = vsel %vm392, %v4190, %v4192
    %v4207 = vadd.f32 %v4152, %v4193
    %v4208 = vadd.f32 %v4153, %v4194
    %v4209 = vadd.f32 %v4154, %v4195
    %v4210 = vadd.f32 %v4155, %v4196
    %v4211 = vadd.f32 %v4156, %v4197
    %v4212 = vadd.f32 %v4157, %v4198
    %v4213 = vadd.f32 %v4158, %v4199
    %s4214 = sld [smem:[#allocation2 + $0x287]]
    %v4215 = vstv %s4214
    %v4216 = vmul.f32 %v61, %v4215
    %v4217 = vmul.f32 %v62, %v4215
    %v4218 = vmul.f32 %v63, %v4215
    %v4219 = vmul.f32 %v64, %v4215
    %v4220 = vmul.f32 %v65, %v4215
    %v4221 = vmul.f32 %v66, %v4215
    %v4222 = vmul.f32 %v67, %v4215
    %v4223 = vmul.f32 %v68, %v4215
    %4232 = vrot.lane.b32.xlu0 %v4216, 71
    %v4233 = vpop.permute.xlu0 %4232
    %4234 = vrot.lane.b32.xlu0 %v4217, 71
    %v4235 = vpop.permute.xlu0 %4234
    %4236 = vrot.lane.b32.xlu0 %v4218, 71
    %v4237 = vpop.permute.xlu0 %4236
    %4238 = vrot.lane.b32.xlu0 %v4219, 71
    %v4239 = vpop.permute.xlu0 %4238
    %4240 = vrot.lane.b32.xlu0 %v4220, 71
    %v4241 = vpop.permute.xlu0 %4240
    %4242 = vrot.lane.b32.xlu0 %v4221, 71
    %v4243 = vpop.permute.xlu0 %4242
    %4244 = vrot.lane.b32.xlu0 %v4222, 71
    %v4245 = vpop.permute.xlu0 %4244
    %4246 = vrot.lane.b32.xlu0 %v4223, 71
    %v4247 = vpop.permute.xlu0 %4246
    %v4248 = vsel %vm448, %v4233, %v4235
    %v4249 = vsel %vm448, %v4235, %v4237
    %v4250 = vsel %vm448, %v4237, %v4239
    %v4251 = vsel %vm448, %v4239, %v4241
    %v4252 = vsel %vm448, %v4241, %v4243
    %v4253 = vsel %vm448, %v4243, %v4245
    %v4254 = vsel %vm448, %v4245, %v4247
    %v4262 = vadd.f32 %v4207, %v4248
    %v4263 = vadd.f32 %v4208, %v4249
    %v4264 = vadd.f32 %v4209, %v4250
    %v4265 = vadd.f32 %v4210, %v4251
    %v4266 = vadd.f32 %v4211, %v4252
    %v4267 = vadd.f32 %v4212, %v4253
    %v4268 = vadd.f32 %v4213, %v4254
    %s4269 = sld [smem:[#allocation2 + $0x288]]
    %v4270 = vstv %s4269
    %v4271 = vmul.f32 %v61, %v4270
    %v4272 = vmul.f32 %v62, %v4270
    %v4273 = vmul.f32 %v63, %v4270
    %v4274 = vmul.f32 %v64, %v4270
    %v4275 = vmul.f32 %v65, %v4270
    %v4276 = vmul.f32 %v66, %v4270
    %v4277 = vmul.f32 %v67, %v4270
    %v4278 = vmul.f32 %v68, %v4270
    %4287 = vrot.lane.b32.xlu0 %v4271, 70
    %v4288 = vpop.permute.xlu0 %4287
    %4289 = vrot.lane.b32.xlu0 %v4272, 70
    %v4290 = vpop.permute.xlu0 %4289
    %4291 = vrot.lane.b32.xlu0 %v4273, 70
    %v4292 = vpop.permute.xlu0 %4291
    %4293 = vrot.lane.b32.xlu0 %v4274, 70
    %v4294 = vpop.permute.xlu0 %4293
    %4295 = vrot.lane.b32.xlu0 %v4275, 70
    %v4296 = vpop.permute.xlu0 %4295
    %4297 = vrot.lane.b32.xlu0 %v4276, 70
    %v4298 = vpop.permute.xlu0 %4297
    %4299 = vrot.lane.b32.xlu0 %v4277, 70
    %v4300 = vpop.permute.xlu0 %4299
    %4301 = vrot.lane.b32.xlu0 %v4278, 70
    %v4302 = vpop.permute.xlu0 %4301
    %v4303 = vsel %vm504, %v4288, %v4290
    %v4304 = vsel %vm504, %v4290, %v4292
    %v4305 = vsel %vm504, %v4292, %v4294
    %v4306 = vsel %vm504, %v4294, %v4296
    %v4307 = vsel %vm504, %v4296, %v4298
    %v4308 = vsel %vm504, %v4298, %v4300
    %v4309 = vsel %vm504, %v4300, %v4302
    %v4317 = vadd.f32 %v4262, %v4303
    %v4318 = vadd.f32 %v4263, %v4304
    %v4319 = vadd.f32 %v4264, %v4305
    %v4320 = vadd.f32 %v4265, %v4306
    %v4321 = vadd.f32 %v4266, %v4307
    %v4322 = vadd.f32 %v4267, %v4308
    %v4323 = vadd.f32 %v4268, %v4309
    %s4324 = sld [smem:[#allocation5 + $0x5]]
    %v4325 = vstv %s4324
    %v4326 = vadd.f32 %v4317, %v4325
    %v4327 = vadd.f32 %v4318, %v4325
    %v4328 = vadd.f32 %v4319, %v4325
    %v4329 = vadd.f32 %v4320, %v4325
    %v4330 = vadd.f32 %v4321, %v4325
    %v4331 = vadd.f32 %v4322, %v4325
    %v4332 = vadd.f32 %v4323, %v4325
    %v4333 = vmax.f32 %v4326, 0.0
    %v4334 = vmax.f32 %v4327, 0.0
    %v4335 = vmax.f32 %v4328, 0.0
    %v4336 = vmax.f32 %v4329, 0.0
    %v4337 = vmax.f32 %v4330, 0.0
    %v4338 = vmax.f32 %v4331, 0.0
    %v4339 = vmax.f32 %v4332, 0.0
    %v4340 = vld [vmem:[#allocation7 + $0x118] sm:$0xff]
    %v4341 = vld [vmem:[#allocation7 + $0x120] sm:$0xff]
    %v4342 = vld [vmem:[#allocation7 + $0x128] sm:$0xff]
    %v4343 = vld [vmem:[#allocation7 + $0x130] sm:$0xff]
    %v4344 = vld [vmem:[#allocation7 + $0x138] sm:$0xff]
    %v4345 = vld [vmem:[#allocation7 + $0x140] sm:$0xff]
    %v4346 = vld [vmem:[#allocation7 + $0x148] sm:$0xff]
    %v4347 = vld [vmem:[#allocation7 + $0x498] sm:$0x3]
    %v4348 = vld [vmem:[#allocation7 + $0x4a0] sm:$0x3]
    %v4349 = vld [vmem:[#allocation7 + $0x4a8] sm:$0x3]
    %v4350 = vld [vmem:[#allocation7 + $0x4b0] sm:$0x3]
    %v4351 = vld [vmem:[#allocation7 + $0x4b8] sm:$0x3]
    %v4352 = vld [vmem:[#allocation7 + $0x4c0] sm:$0x3]
    %v4353 = vld [vmem:[#allocation7 + $0x4c8] sm:$0x3]
    %4354 = vmatprep.subr.mxu0 %v4341
    %4355 = vmatpush1.xpose.msra.mxu0 %v4340
    %4356 = vmatprep.subr.mxu0 %v4348
    %4357 = vmatpush1.xpose.msra.mxu0 %v4347
    %4358 = vmatprep.subr.mxu0 0.0
    %4359 = vmatpush1.xpose.msra.mxu0 0.0
    %4360 = vmatprep.subr.mxu0 0.0
    %4361 = vmatpush1.xpose.msra.mxu0 0.0
    %4362 = vmatprep.subr.mxu0 0.0
    %4363 = vmatpush1.xpose.msra.mxu0 0.0
    %4364 = vmatprep.subr.mxu0 0.0
    %4365 = vmatpush1.xpose.msra.mxu0 0.0
    %4366 = vmatprep.subr.mxu0 0.0
    %4367 = vmatpush1.xpose.msra.mxu0 0.0
    %4368 = vmatprep.subr.mxu0 0.0
    %4369 = vmatpush1.xpose.msra.mxu0 0.0
    %4370 = vmatprep.subr.mxu0 0.0
    %4371 = vmatpush1.xpose.msra.mxu0 0.0
    %4372 = vmatprep.subr.mxu0 0.0
    %4373 = vmatpush1.xpose.msra.mxu0 0.0
    %4374 = vmatprep.subr.mxu0 0.0
    %4375 = vmatpush1.xpose.msra.mxu0 0.0
    %4376 = vmatprep.subr.mxu0 0.0
    %4377 = vmatpush1.xpose.msra.mxu0 0.0
    %4378 = vmatprep.subr.mxu0 0.0
    %4379 = vmatpush1.xpose.msra.mxu0 0.0
    %4380 = vmatprep.subr.mxu0 0.0
    %4381 = vmatpush1.xpose.msra.mxu0 0.0
    %4382 = vmatprep.subr.mxu0 0.0
    %4383 = vmatpush1.xpose.msra.mxu0 0.0
    %4384 = vmatprep.subr.mxu0 0.0
    %4385 = vmatpush1.xpose.msra.mxu0 0.0
    %4386 = vmatprep.subr.mxu0 0.0
    %4387 = vmatpush1.xpose.msra.mxu0 0.0
    %4388 = vmatprep.subr.mxu0 0.0
    %4389 = vmatpush1.xpose.msra.mxu0 0.0
    %4390 = vmatprep.subr.mxu0 0.0
    %4391 = vmatpush1.xpose.msra.mxu0 0.0
    %4392 = vmatprep.subr.mxu0 0.0
    %4393 = vmatpush1.xpose.msra.mxu0 0.0
    %4394 = vmatprep.subr.mxu0 0.0
    %4395 = vmatpush1.xpose.msra.mxu0 0.0
    %4396 = vmatprep.subr.mxu0 0.0
    %4397 = vmatpush1.xpose.msra.mxu0 0.0
    %4398 = vmatprep.subr.mxu0 0.0
    %4399 = vmatpush1.xpose.msra.mxu0 0.0
    %4400 = vmatprep.subr.mxu0 0.0
    %4401 = vmatpush1.xpose.msra.mxu0 0.0
    %4402 = vmatprep.subr.mxu0 0.0
    %4403 = vmatpush1.xpose.msra.mxu0 0.0
    %4404 = vmatprep.subr.mxu0 0.0
    %4405 = vmatpush1.xpose.msra.mxu0 0.0
    %4406 = vmatprep.subr.mxu0 0.0
    %4407 = vmatpush1.xpose.msra.mxu0 0.0
    %4408 = vmatprep.subr.mxu0 0.0
    %4409 = vmatpush1.xpose.msra.mxu0 0.0
    %4410 = vmatprep.subr.mxu0 0.0
    %4411 = vmatpush1.xpose.msra.mxu0 0.0
    %4412 = vmatprep.subr.mxu0 0.0
    %4413 = vmatpush1.xpose.msra.mxu0 0.0
    %4414 = vmatprep.subr.mxu0 0.0
    %4415 = vmatpush1.xpose.msra.mxu0 0.0
    %4416 = vmatprep.subr.mxu0 0.0
    %4417 = vmatpush1.xpose.msra.mxu0 0.0
    %4418 = vmatprep.mubr.f32.mxu0 %v4334
    %4419 = vmatmul.mubr.f32.gmra.mrb[0].mxu0 %v4333
    %v4420 = vpop.f32.mrb[0].mxu0
    %v4421 = vadd.f32 0.0, %v4420
    %v4422 = vpop.f32.mrb[0].mxu0
    %4423 = vdwg.mxu0
    %4424 = vmatprep.subr.mxu0 %v4343
    %4425 = vmatpush1.xpose.msra.mxu0 %v4342
    %4426 = vmatprep.subr.mxu0 %v4350
    %4427 = vmatpush1.xpose.msra.mxu0 %v4349
    %4428 = vmatprep.subr.mxu0 0.0
    %4429 = vmatpush1.xpose.msra.mxu0 0.0
    %4430 = vmatprep.subr.mxu0 0.0
    %4431 = vmatpush1.xpose.msra.mxu0 0.0
    %4432 = vmatprep.subr.mxu0 0.0
    %4433 = vmatpush1.xpose.msra.mxu0 0.0
    %4434 = vmatprep.subr.mxu0 0.0
    %4435 = vmatpush1.xpose.msra.mxu0 0.0
    %4436 = vmatprep.subr.mxu0 0.0
    %4437 = vmatpush1.xpose.msra.mxu0 0.0
    %4438 = vmatprep.subr.mxu0 0.0
    %4439 = vmatpush1.xpose.msra.mxu0 0.0
    %4440 = vmatprep.subr.mxu0 0.0
    %4441 = vmatpush1.xpose.msra.mxu0 0.0
    %4442 = vmatprep.subr.mxu0 0.0
    %4443 = vmatpush1.xpose.msra.mxu0 0.0
    %4444 = vmatprep.subr.mxu0 0.0
    %4445 = vmatpush1.xpose.msra.mxu0 0.0
    %4446 = vmatprep.subr.mxu0 0.0
    %4447 = vmatpush1.xpose.msra.mxu0 0.0
    %4448 = vmatprep.subr.mxu0 0.0
    %4449 = vmatpush1.xpose.msra.mxu0 0.0
    %4450 = vmatprep.subr.mxu0 0.0
    %4451 = vmatpush1.xpose.msra.mxu0 0.0
    %4452 = vmatprep.subr.mxu0 0.0
    %4453 = vmatpush1.xpose.msra.mxu0 0.0
    %4454 = vmatprep.subr.mxu0 0.0
    %4455 = vmatpush1.xpose.msra.mxu0 0.0
    %4456 = vmatprep.subr.mxu0 0.0
    %4457 = vmatpush1.xpose.msra.mxu0 0.0
    %4458 = vmatprep.subr.mxu0 0.0
    %4459 = vmatpush1.xpose.msra.mxu0 0.0
    %4460 = vmatprep.subr.mxu0 0.0
    %4461 = vmatpush1.xpose.msra.mxu0 0.0
    %4462 = vmatprep.subr.mxu0 0.0
    %4463 = vmatpush1.xpose.msra.mxu0 0.0
    %4464 = vmatprep.subr.mxu0 0.0
    %4465 = vmatpush1.xpose.msra.mxu0 0.0
    %4466 = vmatprep.subr.mxu0 0.0
    %4467 = vmatpush1.xpose.msra.mxu0 0.0
    %4468 = vmatprep.subr.mxu0 0.0
    %4469 = vmatpush1.xpose.msra.mxu0 0.0
    %4470 = vmatprep.subr.mxu0 0.0
    %4471 = vmatpush1.xpose.msra.mxu0 0.0
    %4472 = vmatprep.subr.mxu0 0.0
    %4473 = vmatpush1.xpose.msra.mxu0 0.0
    %4474 = vmatprep.subr.mxu0 0.0
    %4475 = vmatpush1.xpose.msra.mxu0 0.0
    %4476 = vmatprep.subr.mxu0 0.0
    %4477 = vmatpush1.xpose.msra.mxu0 0.0
    %4478 = vmatprep.subr.mxu0 0.0
    %4479 = vmatpush1.xpose.msra.mxu0 0.0
    %4480 = vmatprep.subr.mxu0 0.0
    %4481 = vmatpush1.xpose.msra.mxu0 0.0
    %4482 = vmatprep.subr.mxu0 0.0
    %4483 = vmatpush1.xpose.msra.mxu0 0.0
    %4484 = vmatprep.subr.mxu0 0.0
    %4485 = vmatpush1.xpose.msra.mxu0 0.0
    %4486 = vmatprep.subr.mxu0 0.0
    %4487 = vmatpush1.xpose.msra.mxu0 0.0
    %4488 = vmatprep.mubr.f32.mxu0 %v4336
    %4489 = vmatmul.mubr.f32.gmra.mrb[0].mxu0 %v4335
    %v4490 = vpop.f32.mrb[0].mxu0
    %v4491 = vadd.f32 %v4421, %v4490
    %v4492 = vpop.f32.mrb[0].mxu0
    %4493 = vdwg.mxu0
    %4494 = vmatprep.subr.mxu0 %v4345
    %4495 = vmatpush1.xpose.msra.mxu0 %v4344
    %4496 = vmatprep.subr.mxu0 %v4352
    %4497 = vmatpush1.xpose.msra.mxu0 %v4351
    %4498 = vmatprep.subr.mxu0 0.0
    %4499 = vmatpush1.xpose.msra.mxu0 0.0
    %4500 = vmatprep.subr.mxu0 0.0
    %4501 = vmatpush1.xpose.msra.mxu0 0.0
    %4502 = vmatprep.subr.mxu0 0.0
    %4503 = vmatpush1.xpose.msra.mxu0 0.0
    %4504 = vmatprep.subr.mxu0 0.0
    %4505 = vmatpush1.xpose.msra.mxu0 0.0
    %4506 = vmatprep.subr.mxu0 0.0
    %4507 = vmatpush1.xpose.msra.mxu0 0.0
    %4508 = vmatprep.subr.mxu0 0.0
    %4509 = vmatpush1.xpose.msra.mxu0 0.0
    %4510 = vmatprep.subr.mxu0 0.0
    %4511 = vmatpush1.xpose.msra.mxu0 0.0
    %4512 = vmatprep.subr.mxu0 0.0
    %4513 = vmatpush1.xpose.msra.mxu0 0.0
    %4514 = vmatprep.subr.mxu0 0.0
    %4515 = vmatpush1.xpose.msra.mxu0 0.0
    %4516 = vmatprep.subr.mxu0 0.0
    %4517 = vmatpush1.xpose.msra.mxu0 0.0
    %4518 = vmatprep.subr.mxu0 0.0
    %4519 = vmatpush1.xpose.msra.mxu0 0.0
    %4520 = vmatprep.subr.mxu0 0.0
    %4521 = vmatpush1.xpose.msra.mxu0 0.0
    %4522 = vmatprep.subr.mxu0 0.0
    %4523 = vmatpush1.xpose.msra.mxu0 0.0
    %4524 = vmatprep.subr.mxu0 0.0
    %4525 = vmatpush1.xpose.msra.mxu0 0.0
    %4526 = vmatprep.subr.mxu0 0.0
    %4527 = vmatpush1.xpose.msra.mxu0 0.0
    %4528 = vmatprep.subr.mxu0 0.0
    %4529 = vmatpush1.xpose.msra.mxu0 0.0
    %4530 = vmatprep.subr.mxu0 0.0
    %4531 = vmatpush1.xpose.msra.mxu0 0.0
    %4532 = vmatprep.subr.mxu0 0.0
    %4533 = vmatpush1.xpose.msra.mxu0 0.0
    %4534 = vmatprep.subr.mxu0 0.0
    %4535 = vmatpush1.xpose.msra.mxu0 0.0
    %4536 = vmatprep.subr.mxu0 0.0
    %4537 = vmatpush1.xpose.msra.mxu0 0.0
    %4538 = vmatprep.subr.mxu0 0.0
    %4539 = vmatpush1.xpose.msra.mxu0 0.0
    %4540 = vmatprep.subr.mxu0 0.0
    %4541 = vmatpush1.xpose.msra.mxu0 0.0
    %4542 = vmatprep.subr.mxu0 0.0
    %4543 = vmatpush1.xpose.msra.mxu0 0.0
    %4544 = vmatprep.subr.mxu0 0.0
    %4545 = vmatpush1.xpose.msra.mxu0 0.0
    %4546 = vmatprep.subr.mxu0 0.0
    %4547 = vmatpush1.xpose.msra.mxu0 0.0
    %4548 = vmatprep.subr.mxu0 0.0
    %4549 = vmatpush1.xpose.msra.mxu0 0.0
    %4550 = vmatprep.subr.mxu0 0.0
    %4551 = vmatpush1.xpose.msra.mxu0 0.0
    %4552 = vmatprep.subr.mxu0 0.0
    %4553 = vmatpush1.xpose.msra.mxu0 0.0
    %4554 = vmatprep.subr.mxu0 0.0
    %4555 = vmatpush1.xpose.msra.mxu0 0.0
    %4556 = vmatprep.subr.mxu0 0.0
    %4557 = vmatpush1.xpose.msra.mxu0 0.0
    %4558 = vmatprep.mubr.f32.mxu0 %v4338
    %4559 = vmatmul.mubr.f32.gmra.mrb[0].mxu0 %v4337
    %v4560 = vpop.f32.mrb[0].mxu0
    %v4561 = vadd.f32 %v4491, %v4560
    %v4562 = vpop.f32.mrb[0].mxu0
    %4563 = vdwg.mxu0
    %4564 = vmatprep.subr.mxu0 0.0
    %4565 = vmatpush1.xpose.msra.mxu0 %v4346
    %4566 = vmatprep.subr.mxu0 0.0
    %4567 = vmatpush1.xpose.msra.mxu0 %v4353
    %4568 = vmatprep.subr.mxu0 0.0
    %4569 = vmatpush1.xpose.msra.mxu0 0.0
    %4570 = vmatprep.subr.mxu0 0.0
    %4571 = vmatpush1.xpose.msra.mxu0 0.0
    %4572 = vmatprep.subr.mxu0 0.0
    %4573 = vmatpush1.xpose.msra.mxu0 0.0
    %4574 = vmatprep.subr.mxu0 0.0
    %4575 = vmatpush1.xpose.msra.mxu0 0.0
    %4576 = vmatprep.subr.mxu0 0.0
    %4577 = vmatpush1.xpose.msra.mxu0 0.0
    %4578 = vmatprep.subr.mxu0 0.0
    %4579 = vmatpush1.xpose.msra.mxu0 0.0
    %4580 = vmatprep.subr.mxu0 0.0
    %4581 = vmatpush1.xpose.msra.mxu0 0.0
    %4582 = vmatprep.subr.mxu0 0.0
    %4583 = vmatpush1.xpose.msra.mxu0 0.0
    %4584 = vmatprep.subr.mxu0 0.0
    %4585 = vmatpush1.xpose.msra.mxu0 0.0
    %4586 = vmatprep.subr.mxu0 0.0
    %4587 = vmatpush1.xpose.msra.mxu0 0.0
    %4588 = vmatprep.subr.mxu0 0.0
    %4589 = vmatpush1.xpose.msra.mxu0 0.0
    %4590 = vmatprep.subr.mxu0 0.0
    %4591 = vmatpush1.xpose.msra.mxu0 0.0
    %4592 = vmatprep.subr.mxu0 0.0
    %4593 = vmatpush1.xpose.msra.mxu0 0.0
    %4594 = vmatprep.subr.mxu0 0.0
    %4595 = vmatpush1.xpose.msra.mxu0 0.0
    %4596 = vmatprep.subr.mxu0 0.0
    %4597 = vmatpush1.xpose.msra.mxu0 0.0
    %4598 = vmatprep.subr.mxu0 0.0
    %4599 = vmatpush1.xpose.msra.mxu0 0.0
    %4600 = vmatprep.subr.mxu0 0.0
    %4601 = vmatpush1.xpose.msra.mxu0 0.0
    %4602 = vmatprep.subr.mxu0 0.0
    %4603 = vmatpush1.xpose.msra.mxu0 0.0
    %4604 = vmatprep.subr.mxu0 0.0
    %4605 = vmatpush1.xpose.msra.mxu0 0.0
    %4606 = vmatprep.subr.mxu0 0.0
    %4607 = vmatpush1.xpose.msra.mxu0 0.0
    %4608 = vmatprep.subr.mxu0 0.0
    %4609 = vmatpush1.xpose.msra.mxu0 0.0
    %4610 = vmatprep.subr.mxu0 0.0
    %4611 = vmatpush1.xpose.msra.mxu0 0.0
    %4612 = vmatprep.subr.mxu0 0.0
    %4613 = vmatpush1.xpose.msra.mxu0 0.0
    %4614 = vmatprep.subr.mxu0 0.0
    %4615 = vmatpush1.xpose.msra.mxu0 0.0
    %4616 = vmatprep.subr.mxu0 0.0
    %4617 = vmatpush1.xpose.msra.mxu0 0.0
    %4618 = vmatprep.subr.mxu0 0.0
    %4619 = vmatpush1.xpose.msra.mxu0 0.0
    %4620 = vmatprep.subr.mxu0 0.0
    %4621 = vmatpush1.xpose.msra.mxu0 0.0
    %4622 = vmatprep.subr.mxu0 0.0
    %4623 = vmatpush1.xpose.msra.mxu0 0.0
    %4624 = vmatprep.subr.mxu0 0.0
    %4625 = vmatpush1.xpose.msra.mxu0 0.0
    %4626 = vmatprep.subr.mxu0 0.0
    %4627 = vmatpush1.xpose.msra.mxu0 0.0
    %4628 = vmatprep.mubr.f32.mxu0 0.0
    %4629 = vmatmul.mubr.f32.gmra.mrb[0].mxu0 %v4339
    %v4630 = vpop.f32.mrb[0].mxu0
    %v4631 = vadd.f32 %v4561, %v4630
    %v4632 = vpop.f32.mrb[0].mxu0
    %4633 = vdwg.mxu0
    %v4634 = vadd.f32 %v3874, %v4631
    %s4635 = sld [smem:[#allocation2 + $0x300]]
    %v4636 = vstv %s4635
    %v4637 = vmul.f32 %v61, %v4636
    %v4638 = vmul.f32 %v62, %v4636
    %v4639 = vmul.f32 %v63, %v4636
    %v4640 = vmul.f32 %v64, %v4636
    %v4641 = vmul.f32 %v65, %v4636
    %v4642 = vmul.f32 %v66, %v4636
    %v4643 = vmul.f32 %v67, %v4636
    %s4644 = sld [smem:[#allocation2 + $0x301]]
    %v4645 = vstv %s4644
    %v4646 = vmul.f32 %v61, %v4645
    %v4647 = vmul.f32 %v62, %v4645
    %v4648 = vmul.f32 %v63, %v4645
    %v4649 = vmul.f32 %v64, %v4645
    %v4650 = vmul.f32 %v65, %v4645
    %v4651 = vmul.f32 %v66, %v4645
    %v4652 = vmul.f32 %v67, %v4645
    %v4653 = vmul.f32 %v68, %v4645
    %4662 = vrot.lane.b32.xlu0 %v4646, 127
    %v4663 = vpop.permute.xlu0 %4662
    %4664 = vrot.lane.b32.xlu0 %v4647, 127
    %v4665 = vpop.permute.xlu0 %4664
    %4666 = vrot.lane.b32.xlu0 %v4648, 127
    %v4667 = vpop.permute.xlu0 %4666
    %4668 = vrot.lane.b32.xlu0 %v4649, 127
    %v4669 = vpop.permute.xlu0 %4668
    %4670 = vrot.lane.b32.xlu0 %v4650, 127
    %v4671 = vpop.permute.xlu0 %4670
    %4672 = vrot.lane.b32.xlu0 %v4651, 127
    %v4673 = vpop.permute.xlu0 %4672
    %4674 = vrot.lane.b32.xlu0 %v4652, 127
    %v4675 = vpop.permute.xlu0 %4674
    %4676 = vrot.lane.b32.xlu0 %v4653, 127
    %v4677 = vpop.permute.xlu0 %4676
    %v4678 = vsel %vm112, %v4663, %v4665
    %v4679 = vsel %vm112, %v4665, %v4667
    %v4680 = vsel %vm112, %v4667, %v4669
    %v4681 = vsel %vm112, %v4669, %v4671
    %v4682 = vsel %vm112, %v4671, %v4673
    %v4683 = vsel %vm112, %v4673, %v4675
    %v4684 = vsel %vm112, %v4675, %v4677
    %v4692 = vadd.f32 %v4637, %v4678
    %v4693 = vadd.f32 %v4638, %v4679
    %v4694 = vadd.f32 %v4639, %v4680
    %v4695 = vadd.f32 %v4640, %v4681
    %v4696 = vadd.f32 %v4641, %v4682
    %v4697 = vadd.f32 %v4642, %v4683
    %v4698 = vadd.f32 %v4643, %v4684
    %s4699 = sld [smem:[#allocation2 + $0x302]]
    %v4700 = vstv %s4699
    %v4701 = vmul.f32 %v61, %v4700
    %v4702 = vmul.f32 %v62, %v4700
    %v4703 = vmul.f32 %v63, %v4700
    %v4704 = vmul.f32 %v64, %v4700
    %v4705 = vmul.f32 %v65, %v4700
    %v4706 = vmul.f32 %v66, %v4700
    %v4707 = vmul.f32 %v67, %v4700
    %v4708 = vmul.f32 %v68, %v4700
    %4717 = vrot.lane.b32.xlu0 %v4701, 126
    %v4718 = vpop.permute.xlu0 %4717
    %4719 = vrot.lane.b32.xlu0 %v4702, 126
    %v4720 = vpop.permute.xlu0 %4719
    %4721 = vrot.lane.b32.xlu0 %v4703, 126
    %v4722 = vpop.permute.xlu0 %4721
    %4723 = vrot.lane.b32.xlu0 %v4704, 126
    %v4724 = vpop.permute.xlu0 %4723
    %4725 = vrot.lane.b32.xlu0 %v4705, 126
    %v4726 = vpop.permute.xlu0 %4725
    %4727 = vrot.lane.b32.xlu0 %v4706, 126
    %v4728 = vpop.permute.xlu0 %4727
    %4729 = vrot.lane.b32.xlu0 %v4707, 126
    %v4730 = vpop.permute.xlu0 %4729
    %4731 = vrot.lane.b32.xlu0 %v4708, 126
    %v4732 = vpop.permute.xlu0 %4731
    %v4733 = vsel %vm168, %v4718, %v4720
    %v4734 = vsel %vm168, %v4720, %v4722
    %v4735 = vsel %vm168, %v4722, %v4724
    %v4736 = vsel %vm168, %v4724, %v4726
    %v4737 = vsel %vm168, %v4726, %v4728
    %v4738 = vsel %vm168, %v4728, %v4730
    %v4739 = vsel %vm168, %v4730, %v4732
    %v4747 = vadd.f32 %v4692, %v4733
    %v4748 = vadd.f32 %v4693, %v4734
    %v4749 = vadd.f32 %v4694, %v4735
    %v4750 = vadd.f32 %v4695, %v4736
    %v4751 = vadd.f32 %v4696, %v4737
    %v4752 = vadd.f32 %v4697, %v4738
    %v4753 = vadd.f32 %v4698, %v4739
    %s4754 = sld [smem:[#allocation2 + $0x303]]
    %v4755 = vstv %s4754
    %v4756 = vmul.f32 %v61, %v4755
    %v4757 = vmul.f32 %v62, %v4755
    %v4758 = vmul.f32 %v63, %v4755
    %v4759 = vmul.f32 %v64, %v4755
    %v4760 = vmul.f32 %v65, %v4755
    %v4761 = vmul.f32 %v66, %v4755
    %v4762 = vmul.f32 %v67, %v4755
    %v4763 = vmul.f32 %v68, %v4755
    %4772 = vrot.lane.b32.xlu0 %v4756, 100
    %v4773 = vpop.permute.xlu0 %4772
    %4774 = vrot.lane.b32.xlu0 %v4757, 100
    %v4775 = vpop.permute.xlu0 %4774
    %4776 = vrot.lane.b32.xlu0 %v4758, 100
    %v4777 = vpop.permute.xlu0 %4776
    %4778 = vrot.lane.b32.xlu0 %v4759, 100
    %v4779 = vpop.permute.xlu0 %4778
    %4780 = vrot.lane.b32.xlu0 %v4760, 100
    %v4781 = vpop.permute.xlu0 %4780
    %4782 = vrot.lane.b32.xlu0 %v4761, 100
    %v4783 = vpop.permute.xlu0 %4782
    %4784 = vrot.lane.b32.xlu0 %v4762, 100
    %v4785 = vpop.permute.xlu0 %4784
    %4786 = vrot.lane.b32.xlu0 %v4763, 100
    %v4787 = vpop.permute.xlu0 %4786
    %v4788 = vsel %vm224, %v4773, %v4775
    %v4789 = vsel %vm224, %v4775, %v4777
    %v4790 = vsel %vm224, %v4777, %v4779
    %v4791 = vsel %vm224, %v4779, %v4781
    %v4792 = vsel %vm224, %v4781, %v4783
    %v4793 = vsel %vm224, %v4783, %v4785
    %v4794 = vsel %vm224, %v4785, %v4787
    %v4802 = vadd.f32 %v4747, %v4788
    %v4803 = vadd.f32 %v4748, %v4789
    %v4804 = vadd.f32 %v4749, %v4790
    %v4805 = vadd.f32 %v4750, %v4791
    %v4806 = vadd.f32 %v4751, %v4792
    %v4807 = vadd.f32 %v4752, %v4793
    %v4808 = vadd.f32 %v4753, %v4794
    %s4809 = sld [smem:[#allocation2 + $0x304]]
    %v4810 = vstv %s4809
    %v4811 = vmul.f32 %v61, %v4810
    %v4812 = vmul.f32 %v62, %v4810
    %v4813 = vmul.f32 %v63, %v4810
    %v4814 = vmul.f32 %v64, %v4810
    %v4815 = vmul.f32 %v65, %v4810
    %v4816 = vmul.f32 %v66, %v4810
    %v4817 = vmul.f32 %v67, %v4810
    %v4818 = vmul.f32 %v68, %v4810
    %4827 = vrot.lane.b32.xlu0 %v4811, 99
    %v4828 = vpop.permute.xlu0 %4827
    %4829 = vrot.lane.b32.xlu0 %v4812, 99
    %v4830 = vpop.permute.xlu0 %4829
    %4831 = vrot.lane.b32.xlu0 %v4813, 99
    %v4832 = vpop.permute.xlu0 %4831
    %4833 = vrot.lane.b32.xlu0 %v4814, 99
    %v4834 = vpop.permute.xlu0 %4833
    %4835 = vrot.lane.b32.xlu0 %v4815, 99
    %v4836 = vpop.permute.xlu0 %4835
    %4837 = vrot.lane.b32.xlu0 %v4816, 99
    %v4838 = vpop.permute.xlu0 %4837
    %4839 = vrot.lane.b32.xlu0 %v4817, 99
    %v4840 = vpop.permute.xlu0 %4839
    %4841 = vrot.lane.b32.xlu0 %v4818, 99
    %v4842 = vpop.permute.xlu0 %4841
    %v4843 = vsel %vm280, %v4828, %v4830
    %v4844 = vsel %vm280, %v4830, %v4832
    %v4845 = vsel %vm280, %v4832, %v4834
    %v4846 = vsel %vm280, %v4834, %v4836
    %v4847 = vsel %vm280, %v4836, %v4838
    %v4848 = vsel %vm280, %v4838, %v4840
    %v4849 = vsel %vm280, %v4840, %v4842
    %v4857 = vadd.f32 %v4802, %v4843
    %v4858 = vadd.f32 %v4803, %v4844
    %v4859 = vadd.f32 %v4804, %v4845
    %v4860 = vadd.f32 %v4805, %v4846
    %v4861 = vadd.f32 %v4806, %v4847
    %v4862 = vadd.f32 %v4807, %v4848
    %v4863 = vadd.f32 %v4808, %v4849
    %s4864 = sld [smem:[#allocation2 + $0x305]]
    %v4865 = vstv %s4864
    %v4866 = vmul.f32 %v61, %v4865
    %v4867 = vmul.f32 %v62, %v4865
    %v4868 = vmul.f32 %v63, %v4865
    %v4869 = vmul.f32 %v64, %v4865
    %v4870 = vmul.f32 %v65, %v4865
    %v4871 = vmul.f32 %v66, %v4865
    %v4872 = vmul.f32 %v67, %v4865
    %v4873 = vmul.f32 %v68, %v4865
    %4882 = vrot.lane.b32.xlu0 %v4866, 98
    %v4883 = vpop.permute.xlu0 %4882
    %4884 = vrot.lane.b32.xlu0 %v4867, 98
    %v4885 = vpop.permute.xlu0 %4884
    %4886 = vrot.lane.b32.xlu0 %v4868, 98
    %v4887 = vpop.permute.xlu0 %4886
    %4888 = vrot.lane.b32.xlu0 %v4869, 98
    %v4889 = vpop.permute.xlu0 %4888
    %4890 = vrot.lane.b32.xlu0 %v4870, 98
    %v4891 = vpop.permute.xlu0 %4890
    %4892 = vrot.lane.b32.xlu0 %v4871, 98
    %v4893 = vpop.permute.xlu0 %4892
    %4894 = vrot.lane.b32.xlu0 %v4872, 98
    %v4895 = vpop.permute.xlu0 %4894
    %4896 = vrot.lane.b32.xlu0 %v4873, 98
    %v4897 = vpop.permute.xlu0 %4896
    %v4898 = vsel %vm336, %v4883, %v4885
    %v4899 = vsel %vm336, %v4885, %v4887
    %v4900 = vsel %vm336, %v4887, %v4889
    %v4901 = vsel %vm336, %v4889, %v4891
    %v4902 = vsel %vm336, %v4891, %v4893
    %v4903 = vsel %vm336, %v4893, %v4895
    %v4904 = vsel %vm336, %v4895, %v4897
    %v4912 = vadd.f32 %v4857, %v4898
    %v4913 = vadd.f32 %v4858, %v4899
    %v4914 = vadd.f32 %v4859, %v4900
    %v4915 = vadd.f32 %v4860, %v4901
    %v4916 = vadd.f32 %v4861, %v4902
    %v4917 = vadd.f32 %v4862, %v4903
    %v4918 = vadd.f32 %v4863, %v4904
    %s4919 = sld [smem:[#allocation2 + $0x306]]
    %v4920 = vstv %s4919
    %v4921 = vmul.f32 %v61, %v4920
    %v4922 = vmul.f32 %v62, %v4920
    %v4923 = vmul.f32 %v63, %v4920
    %v4924 = vmul.f32 %v64, %v4920
    %v4925 = vmul.f32 %v65, %v4920
    %v4926 = vmul.f32 %v66, %v4920
    %v4927 = vmul.f32 %v67, %v4920
    %v4928 = vmul.f32 %v68, %v4920
    %4937 = vrot.lane.b32.xlu0 %v4921, 72
    %v4938 = vpop.permute.xlu0 %4937
    %4939 = vrot.lane.b32.xlu0 %v4922, 72
    %v4940 = vpop.permute.xlu0 %4939
    %4941 = vrot.lane.b32.xlu0 %v4923, 72
    %v4942 = vpop.permute.xlu0 %4941
    %4943 = vrot.lane.b32.xlu0 %v4924, 72
    %v4944 = vpop.permute.xlu0 %4943
    %4945 = vrot.lane.b32.xlu0 %v4925, 72
    %v4946 = vpop.permute.xlu0 %4945
    %4947 = vrot.lane.b32.xlu0 %v4926, 72
    %v4948 = vpop.permute.xlu0 %4947
    %4949 = vrot.lane.b32.xlu0 %v4927, 72
    %v4950 = vpop.permute.xlu0 %4949
    %4951 = vrot.lane.b32.xlu0 %v4928, 72
    %v4952 = vpop.permute.xlu0 %4951
    %v4953 = vsel %vm392, %v4938, %v4940
    %v4954 = vsel %vm392, %v4940, %v4942
    %v4955 = vsel %vm392, %v4942, %v4944
    %v4956 = vsel %vm392, %v4944, %v4946
    %v4957 = vsel %vm392, %v4946, %v4948
    %v4958 = vsel %vm392, %v4948, %v4950
    %v4959 = vsel %vm392, %v4950, %v4952
    %v4967 = vadd.f32 %v4912, %v4953
    %v4968 = vadd.f32 %v4913, %v4954
    %v4969 = vadd.f32 %v4914, %v4955
    %v4970 = vadd.f32 %v4915, %v4956
    %v4971 = vadd.f32 %v4916, %v4957
    %v4972 = vadd.f32 %v4917, %v4958
    %v4973 = vadd.f32 %v4918, %v4959
    %s4974 = sld [smem:[#allocation2 + $0x307]]
    %v4975 = vstv %s4974
    %v4976 = vmul.f32 %v61, %v4975
    %v4977 = vmul.f32 %v62, %v4975
    %v4978 = vmul.f32 %v63, %v4975
    %v4979 = vmul.f32 %v64, %v4975
    %v4980 = vmul.f32 %v65, %v4975
    %v4981 = vmul.f32 %v66, %v4975
    %v4982 = vmul.f32 %v67, %v4975
    %v4983 = vmul.f32 %v68, %v4975
    %4992 = vrot.lane.b32.xlu0 %v4976, 71
    %v4993 = vpop.permute.xlu0 %4992
    %4994 = vrot.lane.b32.xlu0 %v4977, 71
    %v4995 = vpop.permute.xlu0 %4994
    %4996 = vrot.lane.b32.xlu0 %v4978, 71
    %v4997 = vpop.permute.xlu0 %4996
    %4998 = vrot.lane.b32.xlu0 %v4979, 71
    %v4999 = vpop.permute.xlu0 %4998
    %5000 = vrot.lane.b32.xlu0 %v4980, 71
    %v5001 = vpop.permute.xlu0 %5000
    %5002 = vrot.lane.b32.xlu0 %v4981, 71
    %v5003 = vpop.permute.xlu0 %5002
    %5004 = vrot.lane.b32.xlu0 %v4982, 71
    %v5005 = vpop.permute.xlu0 %5004
    %5006 = vrot.lane.b32.xlu0 %v4983, 71
    %v5007 = vpop.permute.xlu0 %5006
    %v5008 = vsel %vm448, %v4993, %v4995
    %v5009 = vsel %vm448, %v4995, %v4997
    %v5010 = vsel %vm448, %v4997, %v4999
    %v5011 = vsel %vm448, %v4999, %v5001
    %v5012 = vsel %vm448, %v5001, %v5003
    %v5013 = vsel %vm448, %v5003, %v5005
    %v5014 = vsel %vm448, %v5005, %v5007
    %v5022 = vadd.f32 %v4967, %v5008
    %v5023 = vadd.f32 %v4968, %v5009
    %v5024 = vadd.f32 %v4969, %v5010
    %v5025 = vadd.f32 %v4970, %v5011
    %v5026 = vadd.f32 %v4971, %v5012
    %v5027 = vadd.f32 %v4972, %v5013
    %v5028 = vadd.f32 %v4973, %v5014
    %s5029 = sld [smem:[#allocation2 + $0x308]]
    %v5030 = vstv %s5029
    %v5031 = vmul.f32 %v61, %v5030
    %v5032 = vmul.f32 %v62, %v5030
    %v5033 = vmul.f32 %v63, %v5030
    %v5034 = vmul.f32 %v64, %v5030
    %v5035 = vmul.f32 %v65, %v5030
    %v5036 = vmul.f32 %v66, %v5030
    %v5037 = vmul.f32 %v67, %v5030
    %v5038 = vmul.f32 %v68, %v5030
    %5047 = vrot.lane.b32.xlu0 %v5031, 70
    %v5048 = vpop.permute.xlu0 %5047
    %5049 = vrot.lane.b32.xlu0 %v5032, 70
    %v5050 = vpop.permute.xlu0 %5049
    %5051 = vrot.lane.b32.xlu0 %v5033, 70
    %v5052 = vpop.permute.xlu0 %5051
    %5053 = vrot.lane.b32.xlu0 %v5034, 70
    %v5054 = vpop.permute.xlu0 %5053
    %5055 = vrot.lane.b32.xlu0 %v5035, 70
    %v5056 = vpop.permute.xlu0 %5055
    %5057 = vrot.lane.b32.xlu0 %v5036, 70
    %v5058 = vpop.permute.xlu0 %5057
    %5059 = vrot.lane.b32.xlu0 %v5037, 70
    %v5060 = vpop.permute.xlu0 %5059
    %5061 = vrot.lane.b32.xlu0 %v5038, 70
    %v5062 = vpop.permute.xlu0 %5061
    %v5063 = vsel %vm504, %v5048, %v5050
    %v5064 = vsel %vm504, %v5050, %v5052
    %v5065 = vsel %vm504, %v5052, %v5054
    %v5066 = vsel %vm504, %v5054, %v5056
    %v5067 = vsel %vm504, %v5056, %v5058
    %v5068 = vsel %vm504, %v5058, %v5060
    %v5069 = vsel %vm504, %v5060, %v5062
    %v5077 = vadd.f32 %v5022, %v5063
    %v5078 = vadd.f32 %v5023, %v5064
    %v5079 = vadd.f32 %v5024, %v5065
    %v5080 = vadd.f32 %v5025, %v5066
    %v5081 = vadd.f32 %v5026, %v5067
    %v5082 = vadd.f32 %v5027, %v5068
    %v5083 = vadd.f32 %v5028, %v5069
    %s5084 = sld [smem:[#allocation5 + $0x6]]
    %v5085 = vstv %s5084
    %v5086 = vadd.f32 %v5077, %v5085
    %v5087 = vadd.f32 %v5078, %v5085
    %v5088 = vadd.f32 %v5079, %v5085
    %v5089 = vadd.f32 %v5080, %v5085
    %v5090 = vadd.f32 %v5081, %v5085
    %v5091 = vadd.f32 %v5082, %v5085
    %v5092 = vadd.f32 %v5083, %v5085
    %v5093 = vmax.f32 %v5086, 0.0
    %v5094 = vmax.f32 %v5087, 0.0
    %v5095 = vmax.f32 %v5088, 0.0
    %v5096 = vmax.f32 %v5089, 0.0
    %v5097 = vmax.f32 %v5090, 0.0
    %v5098 = vmax.f32 %v5091, 0.0
    %v5099 = vmax.f32 %v5092, 0.0
    %v5100 = vld [vmem:[#allocation7 + $0x150] sm:$0xff]
    %v5101 = vld [vmem:[#allocation7 + $0x158] sm:$0xff]
    %v5102 = vld [vmem:[#allocation7 + $0x160] sm:$0xff]
    %v5103 = vld [vmem:[#allocation7 + $0x168] sm:$0xff]
    %v5104 = vld [vmem:[#allocation7 + $0x170] sm:$0xff]
    %v5105 = vld [vmem:[#allocation7 + $0x178] sm:$0xff]
    %v5106 = vld [vmem:[#allocation7 + $0x180] sm:$0xff]
    %v5107 = vld [vmem:[#allocation7 + $0x4d0] sm:$0x3]
    %v5108 = vld [vmem:[#allocation7 + $0x4d8] sm:$0x3]
    %v5109 = vld [vmem:[#allocation7 + $0x4e0] sm:$0x3]
    %v5110 = vld [vmem:[#allocation7 + $0x4e8] sm:$0x3]
    %v5111 = vld [vmem:[#allocation7 + $0x4f0] sm:$0x3]
    %v5112 = vld [vmem:[#allocation7 + $0x4f8] sm:$0x3]
    %v5113 = vld [vmem:[#allocation7 + $0x500] sm:$0x3]
    %5114 = vmatprep.subr.mxu0 %v5101
    %5115 = vmatpush1.xpose.msra.mxu0 %v5100
    %5116 = vmatprep.subr.mxu0 %v5108
    %5117 = vmatpush1.xpose.msra.mxu0 %v5107
    %5118 = vmatprep.subr.mxu0 0.0
    %5119 = vmatpush1.xpose.msra.mxu0 0.0
    %5120 = vmatprep.subr.mxu0 0.0
    %5121 = vmatpush1.xpose.msra.mxu0 0.0
    %5122 = vmatprep.subr.mxu0 0.0
    %5123 = vmatpush1.xpose.msra.mxu0 0.0
    %5124 = vmatprep.subr.mxu0 0.0
    %5125 = vmatpush1.xpose.msra.mxu0 0.0
    %5126 = vmatprep.subr.mxu0 0.0
    %5127 = vmatpush1.xpose.msra.mxu0 0.0
    %5128 = vmatprep.subr.mxu0 0.0
    %5129 = vmatpush1.xpose.msra.mxu0 0.0
    %5130 = vmatprep.subr.mxu0 0.0
    %5131 = vmatpush1.xpose.msra.mxu0 0.0
    %5132 = vmatprep.subr.mxu0 0.0
    %5133 = vmatpush1.xpose.msra.mxu0 0.0
    %5134 = vmatprep.subr.mxu0 0.0
    %5135 = vmatpush1.xpose.msra.mxu0 0.0
    %5136 = vmatprep.subr.mxu0 0.0
    %5137 = vmatpush1.xpose.msra.mxu0 0.0
    %5138 = vmatprep.subr.mxu0 0.0
    %5139 = vmatpush1.xpose.msra.mxu0 0.0
    %5140 = vmatprep.subr.mxu0 0.0
    %5141 = vmatpush1.xpose.msra.mxu0 0.0
    %5142 = vmatprep.subr.mxu0 0.0
    %5143 = vmatpush1.xpose.msra.mxu0 0.0
    %5144 = vmatprep.subr.mxu0 0.0
    %5145 = vmatpush1.xpose.msra.mxu0 0.0
    %5146 = vmatprep.subr.mxu0 0.0
    %5147 = vmatpush1.xpose.msra.mxu0 0.0
    %5148 = vmatprep.subr.mxu0 0.0
    %5149 = vmatpush1.xpose.msra.mxu0 0.0
    %5150 = vmatprep.subr.mxu0 0.0
    %5151 = vmatpush1.xpose.msra.mxu0 0.0
    %5152 = vmatprep.subr.mxu0 0.0
    %5153 = vmatpush1.xpose.msra.mxu0 0.0
    %5154 = vmatprep.subr.mxu0 0.0
    %5155 = vmatpush1.xpose.msra.mxu0 0.0
    %5156 = vmatprep.subr.mxu0 0.0
    %5157 = vmatpush1.xpose.msra.mxu0 0.0
    %5158 = vmatprep.subr.mxu0 0.0
    %5159 = vmatpush1.xpose.msra.mxu0 0.0
    %5160 = vmatprep.subr.mxu0 0.0
    %5161 = vmatpush1.xpose.msra.mxu0 0.0
    %5162 = vmatprep.subr.mxu0 0.0
    %5163 = vmatpush1.xpose.msra.mxu0 0.0
    %5164 = vmatprep.subr.mxu0 0.0
    %5165 = vmatpush1.xpose.msra.mxu0 0.0
    %5166 = vmatprep.subr.mxu0 0.0
    %5167 = vmatpush1.xpose.msra.mxu0 0.0
    %5168 = vmatprep.subr.mxu0 0.0
    %5169 = vmatpush1.xpose.msra.mxu0 0.0
    %5170 = vmatprep.subr.mxu0 0.0
    %5171 = vmatpush1.xpose.msra.mxu0 0.0
    %5172 = vmatprep.subr.mxu0 0.0
    %5173 = vmatpush1.xpose.msra.mxu0 0.0
    %5174 = vmatprep.subr.mxu0 0.0
    %5175 = vmatpush1.xpose.msra.mxu0 0.0
    %5176 = vmatprep.subr.mxu0 0.0
    %5177 = vmatpush1.xpose.msra.mxu0 0.0
    %5178 = vmatprep.mubr.f32.mxu0 %v5094
    %5179 = vmatmul.mubr.f32.gmra.mrb[0].mxu0 %v5093
    %v5180 = vpop.f32.mrb[0].mxu0
    %v5181 = vadd.f32 0.0, %v5180
    %v5182 = vpop.f32.mrb[0].mxu0
    %5183 = vdwg.mxu0
    %5184 = vmatprep.subr.mxu0 %v5103
    %5185 = vmatpush1.xpose.msra.mxu0 %v5102
    %5186 = vmatprep.subr.mxu0 %v5110
    %5187 = vmatpush1.xpose.msra.mxu0 %v5109
    %5188 = vmatprep.subr.mxu0 0.0
    %5189 = vmatpush1.xpose.msra.mxu0 0.0
    %5190 = vmatprep.subr.mxu0 0.0
    %5191 = vmatpush1.xpose.msra.mxu0 0.0
    %5192 = vmatprep.subr.mxu0 0.0
    %5193 = vmatpush1.xpose.msra.mxu0 0.0
    %5194 = vmatprep.subr.mxu0 0.0
    %5195 = vmatpush1.xpose.msra.mxu0 0.0
    %5196 = vmatprep.subr.mxu0 0.0
    %5197 = vmatpush1.xpose.msra.mxu0 0.0
    %5198 = vmatprep.subr.mxu0 0.0
    %5199 = vmatpush1.xpose.msra.mxu0 0.0
    %5200 = vmatprep.subr.mxu0 0.0
    %5201 = vmatpush1.xpose.msra.mxu0 0.0
    %5202 = vmatprep.subr.mxu0 0.0
    %5203 = vmatpush1.xpose.msra.mxu0 0.0
    %5204 = vmatprep.subr.mxu0 0.0
    %5205 = vmatpush1.xpose.msra.mxu0 0.0
    %5206 = vmatprep.subr.mxu0 0.0
    %5207 = vmatpush1.xpose.msra.mxu0 0.0
    %5208 = vmatprep.subr.mxu0 0.0
    %5209 = vmatpush1.xpose.msra.mxu0 0.0
    %5210 = vmatprep.subr.mxu0 0.0
    %5211 = vmatpush1.xpose.msra.mxu0 0.0
    %5212 = vmatprep.subr.mxu0 0.0
    %5213 = vmatpush1.xpose.msra.mxu0 0.0
    %5214 = vmatprep.subr.mxu0 0.0
    %5215 = vmatpush1.xpose.msra.mxu0 0.0
    %5216 = vmatprep.subr.mxu0 0.0
    %5217 = vmatpush1.xpose.msra.mxu0 0.0
    %5218 = vmatprep.subr.mxu0 0.0
    %5219 = vmatpush1.xpose.msra.mxu0 0.0
    %5220 = vmatprep.subr.mxu0 0.0
    %5221 = vmatpush1.xpose.msra.mxu0 0.0
    %5222 = vmatprep.subr.mxu0 0.0
    %5223 = vmatpush1.xpose.msra.mxu0 0.0
    %5224 = vmatprep.subr.mxu0 0.0
    %5225 = vmatpush1.xpose.msra.mxu0 0.0
    %5226 = vmatprep.subr.mxu0 0.0
    %5227 = vmatpush1.xpose.msra.mxu0 0.0
    %5228 = vmatprep.subr.mxu0 0.0
    %5229 = vmatpush1.xpose.msra.mxu0 0.0
    %5230 = vmatprep.subr.mxu0 0.0
    %5231 = vmatpush1.xpose.msra.mxu0 0.0
    %5232 = vmatprep.subr.mxu0 0.0
    %5233 = vmatpush1.xpose.msra.mxu0 0.0
    %5234 = vmatprep.subr.mxu0 0.0
    %5235 = vmatpush1.xpose.msra.mxu0 0.0
    %5236 = vmatprep.subr.mxu0 0.0
    %5237 = vmatpush1.xpose.msra.mxu0 0.0
    %5238 = vmatprep.subr.mxu0 0.0
    %5239 = vmatpush1.xpose.msra.mxu0 0.0
    %5240 = vmatprep.subr.mxu0 0.0
    %5241 = vmatpush1.xpose.msra.mxu0 0.0
    %5242 = vmatprep.subr.mxu0 0.0
    %5243 = vmatpush1.xpose.msra.mxu0 0.0
    %5244 = vmatprep.subr.mxu0 0.0
    %5245 = vmatpush1.xpose.msra.mxu0 0.0
    %5246 = vmatprep.subr.mxu0 0.0
    %5247 = vmatpush1.xpose.msra.mxu0 0.0
    %5248 = vmatprep.mubr.f32.mxu0 %v5096
    %5249 = vmatmul.mubr.f32.gmra.mrb[0].mxu0 %v5095
    %v5250 = vpop.f32.mrb[0].mxu0
    %v5251 = vadd.f32 %v5181, %v5250
    %v5252 = vpop.f32.mrb[0].mxu0
    %5253 = vdwg.mxu0
    %5254 = vmatprep.subr.mxu0 %v5105
    %5255 = vmatpush1.xpose.msra.mxu0 %v5104
    %5256 = vmatprep.subr.mxu0 %v5112
    %5257 = vmatpush1.xpose.msra.mxu0 %v5111
    %5258 = vmatprep.subr.mxu0 0.0
    %5259 = vmatpush1.xpose.msra.mxu0 0.0
    %5260 = vmatprep.subr.mxu0 0.0
    %5261 = vmatpush1.xpose.msra.mxu0 0.0
    %5262 = vmatprep.subr.mxu0 0.0
    %5263 = vmatpush1.xpose.msra.mxu0 0.0
    %5264 = vmatprep.subr.mxu0 0.0
    %5265 = vmatpush1.xpose.msra.mxu0 0.0
    %5266 = vmatprep.subr.mxu0 0.0
    %5267 = vmatpush1.xpose.msra.mxu0 0.0
    %5268 = vmatprep.subr.mxu0 0.0
    %5269 = vmatpush1.xpose.msra.mxu0 0.0
    %5270 = vmatprep.subr.mxu0 0.0
    %5271 = vmatpush1.xpose.msra.mxu0 0.0
    %5272 = vmatprep.subr.mxu0 0.0
    %5273 = vmatpush1.xpose.msra.mxu0 0.0
    %5274 = vmatprep.subr.mxu0 0.0
    %5275 = vmatpush1.xpose.msra.mxu0 0.0
    %5276 = vmatprep.subr.mxu0 0.0
    %5277 = vmatpush1.xpose.msra.mxu0 0.0
    %5278 = vmatprep.subr.mxu0 0.0
    %5279 = vmatpush1.xpose.msra.mxu0 0.0
    %5280 = vmatprep.subr.mxu0 0.0
    %5281 = vmatpush1.xpose.msra.mxu0 0.0
    %5282 = vmatprep.subr.mxu0 0.0
    %5283 = vmatpush1.xpose.msra.mxu0 0.0
    %5284 = vmatprep.subr.mxu0 0.0
    %5285 = vmatpush1.xpose.msra.mxu0 0.0
    %5286 = vmatprep.subr.mxu0 0.0
    %5287 = vmatpush1.xpose.msra.mxu0 0.0
    %5288 = vmatprep.subr.mxu0 0.0
    %5289 = vmatpush1.xpose.msra.mxu0 0.0
    %5290 = vmatprep.subr.mxu0 0.0
    %5291 = vmatpush1.xpose.msra.mxu0 0.0
    %5292 = vmatprep.subr.mxu0 0.0
    %5293 = vmatpush1.xpose.msra.mxu0 0.0
    %5294 = vmatprep.subr.mxu0 0.0
    %5295 = vmatpush1.xpose.msra.mxu0 0.0
    %5296 = vmatprep.subr.mxu0 0.0
    %5297 = vmatpush1.xpose.msra.mxu0 0.0
    %5298 = vmatprep.subr.mxu0 0.0
    %5299 = vmatpush1.xpose.msra.mxu0 0.0
    %5300 = vmatprep.subr.mxu0 0.0
    %5301 = vmatpush1.xpose.msra.mxu0 0.0
    %5302 = vmatprep.subr.mxu0 0.0
    %5303 = vmatpush1.xpose.msra.mxu0 0.0
    %5304 = vmatprep.subr.mxu0 0.0
    %5305 = vmatpush1.xpose.msra.mxu0 0.0
    %5306 = vmatprep.subr.mxu0 0.0
    %5307 = vmatpush1.xpose.msra.mxu0 0.0
    %5308 = vmatprep.subr.mxu0 0.0
    %5309 = vmatpush1.xpose.msra.mxu0 0.0
    %5310 = vmatprep.subr.mxu0 0.0
    %5311 = vmatpush1.xpose.msra.mxu0 0.0
    %5312 = vmatprep.subr.mxu0 0.0
    %5313 = vmatpush1.xpose.msra.mxu0 0.0
    %5314 = vmatprep.subr.mxu0 0.0
    %5315 = vmatpush1.xpose.msra.mxu0 0.0
    %5316 = vmatprep.subr.mxu0 0.0
    %5317 = vmatpush1.xpose.msra.mxu0 0.0
    %5318 = vmatprep.mubr.f32.mxu0 %v5098
    %5319 = vmatmul.mubr.f32.gmra.mrb[0].mxu0 %v5097
    %v5320 = vpop.f32.mrb[0].mxu0
    %v5321 = vadd.f32 %v5251, %v5320
    %v5322 = vpop.f32.mrb[0].mxu0
    %5323 = vdwg.mxu0
    %5324 = vmatprep.subr.mxu0 0.0
    %5325 = vmatpush1.xpose.msra.mxu0 %v5106
    %5326 = vmatprep.subr.mxu0 0.0
    %5327 = vmatpush1.xpose.msra.mxu0 %v5113
    %5328 = vmatprep.subr.mxu0 0.0
    %5329 = vmatpush1.xpose.msra.mxu0 0.0
    %5330 = vmatprep.subr.mxu0 0.0
    %5331 = vmatpush1.xpose.msra.mxu0 0.0
    %5332 = vmatprep.subr.mxu0 0.0
    %5333 = vmatpush1.xpose.msra.mxu0 0.0
    %5334 = vmatprep.subr.mxu0 0.0
    %5335 = vmatpush1.xpose.msra.mxu0 0.0
    %5336 = vmatprep.subr.mxu0 0.0
    %5337 = vmatpush1.xpose.msra.mxu0 0.0
    %5338 = vmatprep.subr.mxu0 0.0
    %5339 = vmatpush1.xpose.msra.mxu0 0.0
    %5340 = vmatprep.subr.mxu0 0.0
    %5341 = vmatpush1.xpose.msra.mxu0 0.0
    %5342 = vmatprep.subr.mxu0 0.0
    %5343 = vmatpush1.xpose.msra.mxu0 0.0
    %5344 = vmatprep.subr.mxu0 0.0
    %5345 = vmatpush1.xpose.msra.mxu0 0.0
    %5346 = vmatprep.subr.mxu0 0.0
    %5347 = vmatpush1.xpose.msra.mxu0 0.0
    %5348 = vmatprep.subr.mxu0 0.0
    %5349 = vmatpush1.xpose.msra.mxu0 0.0
    %5350 = vmatprep.subr.mxu0 0.0
    %5351 = vmatpush1.xpose.msra.mxu0 0.0
    %5352 = vmatprep.subr.mxu0 0.0
    %5353 = vmatpush1.xpose.msra.mxu0 0.0
    %5354 = vmatprep.subr.mxu0 0.0
    %5355 = vmatpush1.xpose.msra.mxu0 0.0
    %5356 = vmatprep.subr.mxu0 0.0
    %5357 = vmatpush1.xpose.msra.mxu0 0.0
    %5358 = vmatprep.subr.mxu0 0.0
    %5359 = vmatpush1.xpose.msra.mxu0 0.0
    %5360 = vmatprep.subr.mxu0 0.0
    %5361 = vmatpush1.xpose.msra.mxu0 0.0
    %5362 = vmatprep.subr.mxu0 0.0
    %5363 = vmatpush1.xpose.msra.mxu0 0.0
    %5364 = vmatprep.subr.mxu0 0.0
    %5365 = vmatpush1.xpose.msra.mxu0 0.0
    %5366 = vmatprep.subr.mxu0 0.0
    %5367 = vmatpush1.xpose.msra.mxu0 0.0
    %5368 = vmatprep.subr.mxu0 0.0
    %5369 = vmatpush1.xpose.msra.mxu0 0.0
    %5370 = vmatprep.subr.mxu0 0.0
    %5371 = vmatpush1.xpose.msra.mxu0 0.0
    %5372 = vmatprep.subr.mxu0 0.0
    %5373 = vmatpush1.xpose.msra.mxu0 0.0
    %5374 = vmatprep.subr.mxu0 0.0
    %5375 = vmatpush1.xpose.msra.mxu0 0.0
    %5376 = vmatprep.subr.mxu0 0.0
    %5377 = vmatpush1.xpose.msra.mxu0 0.0
    %5378 = vmatprep.subr.mxu0 0.0
    %5379 = vmatpush1.xpose.msra.mxu0 0.0
    %5380 = vmatprep.subr.mxu0 0.0
    %5381 = vmatpush1.xpose.msra.mxu0 0.0
    %5382 = vmatprep.subr.mxu0 0.0
    %5383 = vmatpush1.xpose.msra.mxu0 0.0
    %5384 = vmatprep.subr.mxu0 0.0
    %5385 = vmatpush1.xpose.msra.mxu0 0.0
    %5386 = vmatprep.subr.mxu0 0.0
    %5387 = vmatpush1.xpose.msra.mxu0 0.0
    %5388 = vmatprep.mubr.f32.mxu0 0.0
    %5389 = vmatmul.mubr.f32.gmra.mrb[0].mxu0 %v5099
    %v5390 = vpop.f32.mrb[0].mxu0
    %v5391 = vadd.f32 %v5321, %v5390
    %v5392 = vpop.f32.mrb[0].mxu0
    %5393 = vdwg.mxu0
    %v5394 = vadd.f32 %v4634, %v5391
    %s5395 = sld [smem:[#allocation2 + $0x380]]
    %v5396 = vstv %s5395
    %v5397 = vmul.f32 %v61, %v5396
    %v5398 = vmul.f32 %v62, %v5396
    %v5399 = vmul.f32 %v63, %v5396
    %v5400 = vmul.f32 %v64, %v5396
    %v5401 = vmul.f32 %v65, %v5396
    %v5402 = vmul.f32 %v66, %v5396
    %v5403 = vmul.f32 %v67, %v5396
    %s5404 = sld [smem:[#allocation2 + $0x381]]
    %v5405 = vstv %s5404
    %v5406 = vmul.f32 %v61, %v5405
    %v5407 = vmul.f32 %v62, %v5405
    %v5408 = vmul.f32 %v63, %v5405
    %v5409 = vmul.f32 %v64, %v5405
    %v5410 = vmul.f32 %v65, %v5405
    %v5411 = vmul.f32 %v66, %v5405
    %v5412 = vmul.f32 %v67, %v5405
    %v5413 = vmul.f32 %v68, %v5405
    %5422 = vrot.lane.b32.xlu0 %v5406, 127
    %v5423 = vpop.permute.xlu0 %5422
    %5424 = vrot.lane.b32.xlu0 %v5407, 127
    %v5425 = vpop.permute.xlu0 %5424
    %5426 = vrot.lane.b32.xlu0 %v5408, 127
    %v5427 = vpop.permute.xlu0 %5426
    %5428 = vrot.lane.b32.xlu0 %v5409, 127
    %v5429 = vpop.permute.xlu0 %5428
    %5430 = vrot.lane.b32.xlu0 %v5410, 127
    %v5431 = vpop.permute.xlu0 %5430
    %5432 = vrot.lane.b32.xlu0 %v5411, 127
    %v5433 = vpop.permute.xlu0 %5432
    %5434 = vrot.lane.b32.xlu0 %v5412, 127
    %v5435 = vpop.permute.xlu0 %5434
    %5436 = vrot.lane.b32.xlu0 %v5413, 127
    %v5437 = vpop.permute.xlu0 %5436
    %v5438 = vsel %vm112, %v5423, %v5425
    %v5439 = vsel %vm112, %v5425, %v5427
    %v5440 = vsel %vm112, %v5427, %v5429
    %v5441 = vsel %vm112, %v5429, %v5431
    %v5442 = vsel %vm112, %v5431, %v5433
    %v5443 = vsel %vm112, %v5433, %v5435
    %v5444 = vsel %vm112, %v5435, %v5437
    %v5452 = vadd.f32 %v5397, %v5438
    %v5453 = vadd.f32 %v5398, %v5439
    %v5454 = vadd.f32 %v5399, %v5440
    %v5455 = vadd.f32 %v5400, %v5441
    %v5456 = vadd.f32 %v5401, %v5442
    %v5457 = vadd.f32 %v5402, %v5443
    %v5458 = vadd.f32 %v5403, %v5444
    %s5459 = sld [smem:[#allocation2 + $0x382]]
    %v5460 = vstv %s5459
    %v5461 = vmul.f32 %v61, %v5460
    %v5462 = vmul.f32 %v62, %v5460
    %v5463 = vmul.f32 %v63, %v5460
    %v5464 = vmul.f32 %v64, %v5460
    %v5465 = vmul.f32 %v65, %v5460
    %v5466 = vmul.f32 %v66, %v5460
    %v5467 = vmul.f32 %v67, %v5460
    %v5468 = vmul.f32 %v68, %v5460
    %5477 = vrot.lane.b32.xlu0 %v5461, 126
    %v5478 = vpop.permute.xlu0 %5477
    %5479 = vrot.lane.b32.xlu0 %v5462, 126
    %v5480 = vpop.permute.xlu0 %5479
    %5481 = vrot.lane.b32.xlu0 %v5463, 126
    %v5482 = vpop.permute.xlu0 %5481
    %5483 = vrot.lane.b32.xlu0 %v5464, 126
    %v5484 = vpop.permute.xlu0 %5483
    %5485 = vrot.lane.b32.xlu0 %v5465, 126
    %v5486 = vpop.permute.xlu0 %5485
    %5487 = vrot.lane.b32.xlu0 %v5466, 126
    %v5488 = vpop.permute.xlu0 %5487
    %5489 = vrot.lane.b32.xlu0 %v5467, 126
    %v5490 = vpop.permute.xlu0 %5489
    %5491 = vrot.lane.b32.xlu0 %v5468, 126
    %v5492 = vpop.permute.xlu0 %5491
    %v5493 = vsel %vm168, %v5478, %v5480
    %v5494 = vsel %vm168, %v5480, %v5482
    %v5495 = vsel %vm168, %v5482, %v5484
    %v5496 = vsel %vm168, %v5484, %v5486
    %v5497 = vsel %vm168, %v5486, %v5488
    %v5498 = vsel %vm168, %v5488, %v5490
    %v5499 = vsel %vm168, %v5490, %v5492
    %v5507 = vadd.f32 %v5452, %v5493
    %v5508 = vadd.f32 %v5453, %v5494
    %v5509 = vadd.f32 %v5454, %v5495
    %v5510 = vadd.f32 %v5455, %v5496
    %v5511 = vadd.f32 %v5456, %v5497
    %v5512 = vadd.f32 %v5457, %v5498
    %v5513 = vadd.f32 %v5458, %v5499
    %s5514 = sld [smem:[#allocation2 + $0x383]]
    %v5515 = vstv %s5514
    %v5516 = vmul.f32 %v61, %v5515
    %v5517 = vmul.f32 %v62, %v5515
    %v5518 = vmul.f32 %v63, %v5515
    %v5519 = vmul.f32 %v64, %v5515
    %v5520 = vmul.f32 %v65, %v5515
    %v5521 = vmul.f32 %v66, %v5515
    %v5522 = vmul.f32 %v67, %v5515
    %v5523 = vmul.f32 %v68, %v5515
    %5532 = vrot.lane.b32.xlu0 %v5516, 100
    %v5533 = vpop.permute.xlu0 %5532
    %5534 = vrot.lane.b32.xlu0 %v5517, 100
    %v5535 = vpop.permute.xlu0 %5534
    %5536 = vrot.lane.b32.xlu0 %v5518, 100
    %v5537 = vpop.permute.xlu0 %5536
    %5538 = vrot.lane.b32.xlu0 %v5519, 100
    %v5539 = vpop.permute.xlu0 %5538
    %5540 = vrot.lane.b32.xlu0 %v5520, 100
    %v5541 = vpop.permute.xlu0 %5540
    %5542 = vrot.lane.b32.xlu0 %v5521, 100
    %v5543 = vpop.permute.xlu0 %5542
    %5544 = vrot.lane.b32.xlu0 %v5522, 100
    %v5545 = vpop.permute.xlu0 %5544
    %5546 = vrot.lane.b32.xlu0 %v5523, 100
    %v5547 = vpop.permute.xlu0 %5546
    %v5548 = vsel %vm224, %v5533, %v5535
    %v5549 = vsel %vm224, %v5535, %v5537
    %v5550 = vsel %vm224, %v5537, %v5539
    %v5551 = vsel %vm224, %v5539, %v5541
    %v5552 = vsel %vm224, %v5541, %v5543
    %v5553 = vsel %vm224, %v5543, %v5545
    %v5554 = vsel %vm224, %v5545, %v5547
    %v5562 = vadd.f32 %v5507, %v5548
    %v5563 = vadd.f32 %v5508, %v5549
    %v5564 = vadd.f32 %v5509, %v5550
    %v5565 = vadd.f32 %v5510, %v5551
    %v5566 = vadd.f32 %v5511, %v5552
    %v5567 = vadd.f32 %v5512, %v5553
    %v5568 = vadd.f32 %v5513, %v5554
    %s5569 = sld [smem:[#allocation2 + $0x384]]
    %v5570 = vstv %s5569
    %v5571 = vmul.f32 %v61, %v5570
    %v5572 = vmul.f32 %v62, %v5570
    %v5573 = vmul.f32 %v63, %v5570
    %v5574 = vmul.f32 %v64, %v5570
    %v5575 = vmul.f32 %v65, %v5570
    %v5576 = vmul.f32 %v66, %v5570
    %v5577 = vmul.f32 %v67, %v5570
    %v5578 = vmul.f32 %v68, %v5570
    %5587 = vrot.lane.b32.xlu0 %v5571, 99
    %v5588 = vpop.permute.xlu0 %5587
    %5589 = vrot.lane.b32.xlu0 %v5572, 99
    %v5590 = vpop.permute.xlu0 %5589
    %5591 = vrot.lane.b32.xlu0 %v5573, 99
    %v5592 = vpop.permute.xlu0 %5591
    %5593 = vrot.lane.b32.xlu0 %v5574, 99
    %v5594 = vpop.permute.xlu0 %5593
    %5595 = vrot.lane.b32.xlu0 %v5575, 99
    %v5596 = vpop.permute.xlu0 %5595
    %5597 = vrot.lane.b32.xlu0 %v5576, 99
    %v5598 = vpop.permute.xlu0 %5597
    %5599 = vrot.lane.b32.xlu0 %v5577, 99
    %v5600 = vpop.permute.xlu0 %5599
    %5601 = vrot.lane.b32.xlu0 %v5578, 99
    %v5602 = vpop.permute.xlu0 %5601
    %v5603 = vsel %vm280, %v5588, %v5590
    %v5604 = vsel %vm280, %v5590, %v5592
    %v5605 = vsel %vm280, %v5592, %v5594
    %v5606 = vsel %vm280, %v5594, %v5596
    %v5607 = vsel %vm280, %v5596, %v5598
    %v5608 = vsel %vm280, %v5598, %v5600
    %v5609 = vsel %vm280, %v5600, %v5602
    %v5617 = vadd.f32 %v5562, %v5603
    %v5618 = vadd.f32 %v5563, %v5604
    %v5619 = vadd.f32 %v5564, %v5605
    %v5620 = vadd.f32 %v5565, %v5606
    %v5621 = vadd.f32 %v5566, %v5607
    %v5622 = vadd.f32 %v5567, %v5608
    %v5623 = vadd.f32 %v5568, %v5609
    %s5624 = sld [smem:[#allocation2 + $0x385]]
    %v5625 = vstv %s5624
    %v5626 = vmul.f32 %v61, %v5625
    %v5627 = vmul.f32 %v62, %v5625
    %v5628 = vmul.f32 %v63, %v5625
    %v5629 = vmul.f32 %v64, %v5625
    %v5630 = vmul.f32 %v65, %v5625
    %v5631 = vmul.f32 %v66, %v5625
    %v5632 = vmul.f32 %v67, %v5625
    %v5633 = vmul.f32 %v68, %v5625
    %5642 = vrot.lane.b32.xlu0 %v5626, 98
    %v5643 = vpop.permute.xlu0 %5642
    %5644 = vrot.lane.b32.xlu0 %v5627, 98
    %v5645 = vpop.permute.xlu0 %5644
    %5646 = vrot.lane.b32.xlu0 %v5628, 98
    %v5647 = vpop.permute.xlu0 %5646
    %5648 = vrot.lane.b32.xlu0 %v5629, 98
    %v5649 = vpop.permute.xlu0 %5648
    %5650 = vrot.lane.b32.xlu0 %v5630, 98
    %v5651 = vpop.permute.xlu0 %5650
    %5652 = vrot.lane.b32.xlu0 %v5631, 98
    %v5653 = vpop.permute.xlu0 %5652
    %5654 = vrot.lane.b32.xlu0 %v5632, 98
    %v5655 = vpop.permute.xlu0 %5654
    %5656 = vrot.lane.b32.xlu0 %v5633, 98
    %v5657 = vpop.permute.xlu0 %5656
    %v5658 = vsel %vm336, %v5643, %v5645
    %v5659 = vsel %vm336, %v5645, %v5647
    %v5660 = vsel %vm336, %v5647, %v5649
    %v5661 = vsel %vm336, %v5649, %v5651
    %v5662 = vsel %vm336, %v5651, %v5653
    %v5663 = vsel %vm336, %v5653, %v5655
    %v5664 = vsel %vm336, %v5655, %v5657
    %v5672 = vadd.f32 %v5617, %v5658
    %v5673 = vadd.f32 %v5618, %v5659
    %v5674 = vadd.f32 %v5619, %v5660
    %v5675 = vadd.f32 %v5620, %v5661
    %v5676 = vadd.f32 %v5621, %v5662
    %v5677 = vadd.f32 %v5622, %v5663
    %v5678 = vadd.f32 %v5623, %v5664
    %s5679 = sld [smem:[#allocation2 + $0x386]]
    %v5680 = vstv %s5679
    %v5681 = vmul.f32 %v61, %v5680
    %v5682 = vmul.f32 %v62, %v5680
    %v5683 = vmul.f32 %v63, %v5680
    %v5684 = vmul.f32 %v64, %v5680
    %v5685 = vmul.f32 %v65, %v5680
    %v5686 = vmul.f32 %v66, %v5680
    %v5687 = vmul.f32 %v67, %v5680
    %v5688 = vmul.f32 %v68, %v5680
    %5697 = vrot.lane.b32.xlu0 %v5681, 72
    %v5698 = vpop.permute.xlu0 %5697
    %5699 = vrot.lane.b32.xlu0 %v5682, 72
    %v5700 = vpop.permute.xlu0 %5699
    %5701 = vrot.lane.b32.xlu0 %v5683, 72
    %v5702 = vpop.permute.xlu0 %5701
    %5703 = vrot.lane.b32.xlu0 %v5684, 72
    %v5704 = vpop.permute.xlu0 %5703
    %5705 = vrot.lane.b32.xlu0 %v5685, 72
    %v5706 = vpop.permute.xlu0 %5705
    %5707 = vrot.lane.b32.xlu0 %v5686, 72
    %v5708 = vpop.permute.xlu0 %5707
    %5709 = vrot.lane.b32.xlu0 %v5687, 72
    %v5710 = vpop.permute.xlu0 %5709
    %5711 = vrot.lane.b32.xlu0 %v5688, 72
    %v5712 = vpop.permute.xlu0 %5711
    %v5713 = vsel %vm392, %v5698, %v5700
    %v5714 = vsel %vm392, %v5700, %v5702
    %v5715 = vsel %vm392, %v5702, %v5704
    %v5716 = vsel %vm392, %v5704, %v5706
    %v5717 = vsel %vm392, %v5706, %v5708
    %v5718 = vsel %vm392, %v5708, %v5710
    %v5719 = vsel %vm392, %v5710, %v5712
    %v5727 = vadd.f32 %v5672, %v5713
    %v5728 = vadd.f32 %v5673, %v5714
    %v5729 = vadd.f32 %v5674, %v5715
    %v5730 = vadd.f32 %v5675, %v5716
    %v5731 = vadd.f32 %v5676, %v5717
    %v5732 = vadd.f32 %v5677, %v5718
    %v5733 = vadd.f32 %v5678, %v5719
    %s5734 = sld [smem:[#allocation2 + $0x387]]
    %v5735 = vstv %s5734
    %v5736 = vmul.f32 %v61, %v5735
    %v5737 = vmul.f32 %v62, %v5735
    %v5738 = vmul.f32 %v63, %v5735
    %v5739 = vmul.f32 %v64, %v5735
    %v5740 = vmul.f32 %v65, %v5735
    %v5741 = vmul.f32 %v66, %v5735
    %v5742 = vmul.f32 %v67, %v5735
    %v5743 = vmul.f32 %v68, %v5735
    %5752 = vrot.lane.b32.xlu0 %v5736, 71
    %v5753 = vpop.permute.xlu0 %5752
    %5754 = vrot.lane.b32.xlu0 %v5737, 71
    %v5755 = vpop.permute.xlu0 %5754
    %5756 = vrot.lane.b32.xlu0 %v5738, 71
    %v5757 = vpop.permute.xlu0 %5756
    %5758 = vrot.lane.b32.xlu0 %v5739, 71
    %v5759 = vpop.permute.xlu0 %5758
    %5760 = vrot.lane.b32.xlu0 %v5740, 71
    %v5761 = vpop.permute.xlu0 %5760
    %5762 = vrot.lane.b32.xlu0 %v5741, 71
    %v5763 = vpop.permute.xlu0 %5762
    %5764 = vrot.lane.b32.xlu0 %v5742, 71
    %v5765 = vpop.permute.xlu0 %5764
    %5766 = vrot.lane.b32.xlu0 %v5743, 71
    %v5767 = vpop.permute.xlu0 %5766
    %v5768 = vsel %vm448, %v5753, %v5755
    %v5769 = vsel %vm448, %v5755, %v5757
    %v5770 = vsel %vm448, %v5757, %v5759
    %v5771 = vsel %vm448, %v5759, %v5761
    %v5772 = vsel %vm448, %v5761, %v5763
    %v5773 = vsel %vm448, %v5763, %v5765
    %v5774 = vsel %vm448, %v5765, %v5767
    %v5782 = vadd.f32 %v5727, %v5768
    %v5783 = vadd.f32 %v5728, %v5769
    %v5784 = vadd.f32 %v5729, %v5770
    %v5785 = vadd.f32 %v5730, %v5771
    %v5786 = vadd.f32 %v5731, %v5772
    %v5787 = vadd.f32 %v5732, %v5773
    %v5788 = vadd.f32 %v5733, %v5774
    %s5789 = sld [smem:[#allocation2 + $0x388]]
    %v5790 = vstv %s5789
    %v5791 = vmul.f32 %v61, %v5790
    %v5792 = vmul.f32 %v62, %v5790
    %v5793 = vmul.f32 %v63, %v5790
    %v5794 = vmul.f32 %v64, %v5790
    %v5795 = vmul.f32 %v65, %v5790
    %v5796 = vmul.f32 %v66, %v5790
    %v5797 = vmul.f32 %v67, %v5790
    %v5798 = vmul.f32 %v68, %v5790
    %5807 = vrot.lane.b32.xlu0 %v5791, 70
    %v5808 = vpop.permute.xlu0 %5807
    %5809 = vrot.lane.b32.xlu0 %v5792, 70
    %v5810 = vpop.permute.xlu0 %5809
    %5811 = vrot.lane.b32.xlu0 %v5793, 70
    %v5812 = vpop.permute.xlu0 %5811
    %5813 = vrot.lane.b32.xlu0 %v5794, 70
    %v5814 = vpop.permute.xlu0 %5813
    %5815 = vrot.lane.b32.xlu0 %v5795, 70
    %v5816 = vpop.permute.xlu0 %5815
    %5817 = vrot.lane.b32.xlu0 %v5796, 70
    %v5818 = vpop.permute.xlu0 %5817
    %5819 = vrot.lane.b32.xlu0 %v5797, 70
    %v5820 = vpop.permute.xlu0 %5819
    %5821 = vrot.lane.b32.xlu0 %v5798, 70
    %v5822 = vpop.permute.xlu0 %5821
    %v5823 = vsel %vm504, %v5808, %v5810
    %v5824 = vsel %vm504, %v5810, %v5812
    %v5825 = vsel %vm504, %v5812, %v5814
    %v5826 = vsel %vm504, %v5814, %v5816
    %v5827 = vsel %vm504, %v5816, %v5818
    %v5828 = vsel %vm504, %v5818, %v5820
    %v5829 = vsel %vm504, %v5820, %v5822
    %v5837 = vadd.f32 %v5782, %v5823
    %v5838 = vadd.f32 %v5783, %v5824
    %v5839 = vadd.f32 %v5784, %v5825
    %v5840 = vadd.f32 %v5785, %v5826
    %v5841 = vadd.f32 %v5786, %v5827
    %v5842 = vadd.f32 %v5787, %v5828
    %v5843 = vadd.f32 %v5788, %v5829
    %s5844 = sld [smem:[#allocation5 + $0x7]]
    %v5845 = vstv %s5844
    %v5846 = vadd.f32 %v5837, %v5845
    %v5847 = vadd.f32 %v5838, %v5845
    %v5848 = vadd.f32 %v5839, %v5845
    %v5849 = vadd.f32 %v5840, %v5845
    %v5850 = vadd.f32 %v5841, %v5845
    %v5851 = vadd.f32 %v5842, %v5845
    %v5852 = vadd.f32 %v5843, %v5845
    %v5853 = vmax.f32 %v5846, 0.0
    %v5854 = vmax.f32 %v5847, 0.0
    %v5855 = vmax.f32 %v5848, 0.0
    %v5856 = vmax.f32 %v5849, 0.0
    %v5857 = vmax.f32 %v5850, 0.0
    %v5858 = vmax.f32 %v5851, 0.0
    %v5859 = vmax.f32 %v5852, 0.0
    %v5860 = vld [vmem:[#allocation7 + $0x188] sm:$0xff]
    %v5861 = vld [vmem:[#allocation7 + $0x190] sm:$0xff]
    %v5862 = vld [vmem:[#allocation7 + $0x198] sm:$0xff]
    %v5863 = vld [vmem:[#allocation7 + $0x1a0] sm:$0xff]
    %v5864 = vld [vmem:[#allocation7 + $0x1a8] sm:$0xff]
    %v5865 = vld [vmem:[#allocation7 + $0x1b0] sm:$0xff]
    %v5866 = vld [vmem:[#allocation7 + $0x1b8] sm:$0xff]
    %v5867 = vld [vmem:[#allocation7 + $0x508] sm:$0x3]
    %v5868 = vld [vmem:[#allocation7 + $0x510] sm:$0x3]
    %v5869 = vld [vmem:[#allocation7 + $0x518] sm:$0x3]
    %v5870 = vld [vmem:[#allocation7 + $0x520] sm:$0x3]
    %v5871 = vld [vmem:[#allocation7 + $0x528] sm:$0x3]
    %v5872 = vld [vmem:[#allocation7 + $0x530] sm:$0x3]
    %v5873 = vld [vmem:[#allocation7 + $0x538] sm:$0x3]
    %5874 = vmatprep.subr.mxu0 %v5861
    %5875 = vmatpush1.xpose.msra.mxu0 %v5860
    %5876 = vmatprep.subr.mxu0 %v5868
    %5877 = vmatpush1.xpose.msra.mxu0 %v5867
    %5878 = vmatprep.subr.mxu0 0.0
    %5879 = vmatpush1.xpose.msra.mxu0 0.0
    %5880 = vmatprep.subr.mxu0 0.0
    %5881 = vmatpush1.xpose.msra.mxu0 0.0
    %5882 = vmatprep.subr.mxu0 0.0
    %5883 = vmatpush1.xpose.msra.mxu0 0.0
    %5884 = vmatprep.subr.mxu0 0.0
    %5885 = vmatpush1.xpose.msra.mxu0 0.0
    %5886 = vmatprep.subr.mxu0 0.0
    %5887 = vmatpush1.xpose.msra.mxu0 0.0
    %5888 = vmatprep.subr.mxu0 0.0
    %5889 = vmatpush1.xpose.msra.mxu0 0.0
    %5890 = vmatprep.subr.mxu0 0.0
    %5891 = vmatpush1.xpose.msra.mxu0 0.0
    %5892 = vmatprep.subr.mxu0 0.0
    %5893 = vmatpush1.xpose.msra.mxu0 0.0
    %5894 = vmatprep.subr.mxu0 0.0
    %5895 = vmatpush1.xpose.msra.mxu0 0.0
    %5896 = vmatprep.subr.mxu0 0.0
    %5897 = vmatpush1.xpose.msra.mxu0 0.0
    %5898 = vmatprep.subr.mxu0 0.0
    %5899 = vmatpush1.xpose.msra.mxu0 0.0
    %5900 = vmatprep.subr.mxu0 0.0
    %5901 = vmatpush1.xpose.msra.mxu0 0.0
    %5902 = vmatprep.subr.mxu0 0.0
    %5903 = vmatpush1.xpose.msra.mxu0 0.0
    %5904 = vmatprep.subr.mxu0 0.0
    %5905 = vmatpush1.xpose.msra.mxu0 0.0
    %5906 = vmatprep.subr.mxu0 0.0
    %5907 = vmatpush1.xpose.msra.mxu0 0.0
    %5908 = vmatprep.subr.mxu0 0.0
    %5909 = vmatpush1.xpose.msra.mxu0 0.0
    %5910 = vmatprep.subr.mxu0 0.0
    %5911 = vmatpush1.xpose.msra.mxu0 0.0
    %5912 = vmatprep.subr.mxu0 0.0
    %5913 = vmatpush1.xpose.msra.mxu0 0.0
    %5914 = vmatprep.subr.mxu0 0.0
    %5915 = vmatpush1.xpose.msra.mxu0 0.0
    %5916 = vmatprep.subr.mxu0 0.0
    %5917 = vmatpush1.xpose.msra.mxu0 0.0
    %5918 = vmatprep.subr.mxu0 0.0
    %5919 = vmatpush1.xpose.msra.mxu0 0.0
    %5920 = vmatprep.subr.mxu0 0.0
    %5921 = vmatpush1.xpose.msra.mxu0 0.0
    %5922 = vmatprep.subr.mxu0 0.0
    %5923 = vmatpush1.xpose.msra.mxu0 0.0
    %5924 = vmatprep.subr.mxu0 0.0
    %5925 = vmatpush1.xpose.msra.mxu0 0.0
    %5926 = vmatprep.subr.mxu0 0.0
    %5927 = vmatpush1.xpose.msra.mxu0 0.0
    %5928 = vmatprep.subr.mxu0 0.0
    %5929 = vmatpush1.xpose.msra.mxu0 0.0
    %5930 = vmatprep.subr.mxu0 0.0
    %5931 = vmatpush1.xpose.msra.mxu0 0.0
    %5932 = vmatprep.subr.mxu0 0.0
    %5933 = vmatpush1.xpose.msra.mxu0 0.0
    %5934 = vmatprep.subr.mxu0 0.0
    %5935 = vmatpush1.xpose.msra.mxu0 0.0
    %5936 = vmatprep.subr.mxu0 0.0
    %5937 = vmatpush1.xpose.msra.mxu0 0.0
    %5938 = vmatprep.mubr.f32.mxu0 %v5854
    %5939 = vmatmul.mubr.f32.gmra.mrb[0].mxu0 %v5853
    %v5940 = vpop.f32.mrb[0].mxu0
    %v5941 = vadd.f32 0.0, %v5940
    %v5942 = vpop.f32.mrb[0].mxu0
    %5943 = vdwg.mxu0
    %5944 = vmatprep.subr.mxu0 %v5863
    %5945 = vmatpush1.xpose.msra.mxu0 %v5862
    %5946 = vmatprep.subr.mxu0 %v5870
    %5947 = vmatpush1.xpose.msra.mxu0 %v5869
    %5948 = vmatprep.subr.mxu0 0.0
    %5949 = vmatpush1.xpose.msra.mxu0 0.0
    %5950 = vmatprep.subr.mxu0 0.0
    %5951 = vmatpush1.xpose.msra.mxu0 0.0
    %5952 = vmatprep.subr.mxu0 0.0
    %5953 = vmatpush1.xpose.msra.mxu0 0.0
    %5954 = vmatprep.subr.mxu0 0.0
    %5955 = vmatpush1.xpose.msra.mxu0 0.0
    %5956 = vmatprep.subr.mxu0 0.0
    %5957 = vmatpush1.xpose.msra.mxu0 0.0
    %5958 = vmatprep.subr.mxu0 0.0
    %5959 = vmatpush1.xpose.msra.mxu0 0.0
    %5960 = vmatprep.subr.mxu0 0.0
    %5961 = vmatpush1.xpose.msra.mxu0 0.0
    %5962 = vmatprep.subr.mxu0 0.0
    %5963 = vmatpush1.xpose.msra.mxu0 0.0
    %5964 = vmatprep.subr.mxu0 0.0
    %5965 = vmatpush1.xpose.msra.mxu0 0.0
    %5966 = vmatprep.subr.mxu0 0.0
    %5967 = vmatpush1.xpose.msra.mxu0 0.0
    %5968 = vmatprep.subr.mxu0 0.0
    %5969 = vmatpush1.xpose.msra.mxu0 0.0
    %5970 = vmatprep.subr.mxu0 0.0
    %5971 = vmatpush1.xpose.msra.mxu0 0.0
    %5972 = vmatprep.subr.mxu0 0.0
    %5973 = vmatpush1.xpose.msra.mxu0 0.0
    %5974 = vmatprep.subr.mxu0 0.0
    %5975 = vmatpush1.xpose.msra.mxu0 0.0
    %5976 = vmatprep.subr.mxu0 0.0
    %5977 = vmatpush1.xpose.msra.mxu0 0.0
    %5978 = vmatprep.subr.mxu0 0.0
    %5979 = vmatpush1.xpose.msra.mxu0 0.0
    %5980 = vmatprep.subr.mxu0 0.0
    %5981 = vmatpush1.xpose.msra.mxu0 0.0
    %5982 = vmatprep.subr.mxu0 0.0
    %5983 = vmatpush1.xpose.msra.mxu0 0.0
    %5984 = vmatprep.subr.mxu0 0.0
    %5985 = vmatpush1.xpose.msra.mxu0 0.0
    %5986 = vmatprep.subr.mxu0 0.0
    %5987 = vmatpush1.xpose.msra.mxu0 0.0
    %5988 = vmatprep.subr.mxu0 0.0
    %5989 = vmatpush1.xpose.msra.mxu0 0.0
    %5990 = vmatprep.subr.mxu0 0.0
    %5991 = vmatpush1.xpose.msra.mxu0 0.0
    %5992 = vmatprep.subr.mxu0 0.0
    %5993 = vmatpush1.xpose.msra.mxu0 0.0
    %5994 = vmatprep.subr.mxu0 0.0
    %5995 = vmatpush1.xpose.msra.mxu0 0.0
    %5996 = vmatprep.subr.mxu0 0.0
    %5997 = vmatpush1.xpose.msra.mxu0 0.0
    %5998 = vmatprep.subr.mxu0 0.0
    %5999 = vmatpush1.xpose.msra.mxu0 0.0
    %6000 = vmatprep.subr.mxu0 0.0
    %6001 = vmatpush1.xpose.msra.mxu0 0.0
    %6002 = vmatprep.subr.mxu0 0.0
    %6003 = vmatpush1.xpose.msra.mxu0 0.0
    %6004 = vmatprep.subr.mxu0 0.0
    %6005 = vmatpush1.xpose.msra.mxu0 0.0
    %6006 = vmatprep.subr.mxu0 0.0
    %6007 = vmatpush1.xpose.msra.mxu0 0.0
    %6008 = vmatprep.mubr.f32.mxu0 %v5856
    %6009 = vmatmul.mubr.f32.gmra.mrb[0].mxu0 %v5855
    %v6010 = vpop.f32.mrb[0].mxu0
    %v6011 = vadd.f32 %v5941, %v6010
    %v6012 = vpop.f32.mrb[0].mxu0
    %6013 = vdwg.mxu0
    %6014 = vmatprep.subr.mxu0 %v5865
    %6015 = vmatpush1.xpose.msra.mxu0 %v5864
    %6016 = vmatprep.subr.mxu0 %v5872
    %6017 = vmatpush1.xpose.msra.mxu0 %v5871
    %6018 = vmatprep.subr.mxu0 0.0
    %6019 = vmatpush1.xpose.msra.mxu0 0.0
    %6020 = vmatprep.subr.mxu0 0.0
    %6021 = vmatpush1.xpose.msra.mxu0 0.0
    %6022 = vmatprep.subr.mxu0 0.0
    %6023 = vmatpush1.xpose.msra.mxu0 0.0
    %6024 = vmatprep.subr.mxu0 0.0
    %6025 = vmatpush1.xpose.msra.mxu0 0.0
    %6026 = vmatprep.subr.mxu0 0.0
    %6027 = vmatpush1.xpose.msra.mxu0 0.0
    %6028 = vmatprep.subr.mxu0 0.0
    %6029 = vmatpush1.xpose.msra.mxu0 0.0
    %6030 = vmatprep.subr.mxu0 0.0
    %6031 = vmatpush1.xpose.msra.mxu0 0.0
    %6032 = vmatprep.subr.mxu0 0.0
    %6033 = vmatpush1.xpose.msra.mxu0 0.0
    %6034 = vmatprep.subr.mxu0 0.0
    %6035 = vmatpush1.xpose.msra.mxu0 0.0
    %6036 = vmatprep.subr.mxu0 0.0
    %6037 = vmatpush1.xpose.msra.mxu0 0.0
    %6038 = vmatprep.subr.mxu0 0.0
    %6039 = vmatpush1.xpose.msra.mxu0 0.0
    %6040 = vmatprep.subr.mxu0 0.0
    %6041 = vmatpush1.xpose.msra.mxu0 0.0
    %6042 = vmatprep.subr.mxu0 0.0
    %6043 = vmatpush1.xpose.msra.mxu0 0.0
    %6044 = vmatprep.subr.mxu0 0.0
    %6045 = vmatpush1.xpose.msra.mxu0 0.0
    %6046 = vmatprep.subr.mxu0 0.0
    %6047 = vmatpush1.xpose.msra.mxu0 0.0
    %6048 = vmatprep.subr.mxu0 0.0
    %6049 = vmatpush1.xpose.msra.mxu0 0.0
    %6050 = vmatprep.subr.mxu0 0.0
    %6051 = vmatpush1.xpose.msra.mxu0 0.0
    %6052 = vmatprep.subr.mxu0 0.0
    %6053 = vmatpush1.xpose.msra.mxu0 0.0
    %6054 = vmatprep.subr.mxu0 0.0
    %6055 = vmatpush1.xpose.msra.mxu0 0.0
    %6056 = vmatprep.subr.mxu0 0.0
    %6057 = vmatpush1.xpose.msra.mxu0 0.0
    %6058 = vmatprep.subr.mxu0 0.0
    %6059 = vmatpush1.xpose.msra.mxu0 0.0
    %6060 = vmatprep.subr.mxu0 0.0
    %6061 = vmatpush1.xpose.msra.mxu0 0.0
    %6062 = vmatprep.subr.mxu0 0.0
    %6063 = vmatpush1.xpose.msra.mxu0 0.0
    %6064 = vmatprep.subr.mxu0 0.0
    %6065 = vmatpush1.xpose.msra.mxu0 0.0
    %6066 = vmatprep.subr.mxu0 0.0
    %6067 = vmatpush1.xpose.msra.mxu0 0.0
    %6068 = vmatprep.subr.mxu0 0.0
    %6069 = vmatpush1.xpose.msra.mxu0 0.0
    %6070 = vmatprep.subr.mxu0 0.0
    %6071 = vmatpush1.xpose.msra.mxu0 0.0
    %6072 = vmatprep.subr.mxu0 0.0
    %6073 = vmatpush1.xpose.msra.mxu0 0.0
    %6074 = vmatprep.subr.mxu0 0.0
    %6075 = vmatpush1.xpose.msra.mxu0 0.0
    %6076 = vmatprep.subr.mxu0 0.0
    %6077 = vmatpush1.xpose.msra.mxu0 0.0
    %6078 = vmatprep.mubr.f32.mxu0 %v5858
    %6079 = vmatmul.mubr.f32.gmra.mrb[0].mxu0 %v5857
    %v6080 = vpop.f32.mrb[0].mxu0
    %v6081 = vadd.f32 %v6011, %v6080
    %v6082 = vpop.f32.mrb[0].mxu0
    %6083 = vdwg.mxu0
    %6084 = vmatprep.subr.mxu0 0.0
    %6085 = vmatpush1.xpose.msra.mxu0 %v5866
    %6086 = vmatprep.subr.mxu0 0.0
    %6087 = vmatpush1.xpose.msra.mxu0 %v5873
    %6088 = vmatprep.subr.mxu0 0.0
    %6089 = vmatpush1.xpose.msra.mxu0 0.0
    %6090 = vmatprep.subr.mxu0 0.0
    %6091 = vmatpush1.xpose.msra.mxu0 0.0
    %6092 = vmatprep.subr.mxu0 0.0
    %6093 = vmatpush1.xpose.msra.mxu0 0.0
    %6094 = vmatprep.subr.mxu0 0.0
    %6095 = vmatpush1.xpose.msra.mxu0 0.0
    %6096 = vmatprep.subr.mxu0 0.0
    %6097 = vmatpush1.xpose.msra.mxu0 0.0
    %6098 = vmatprep.subr.mxu0 0.0
    %6099 = vmatpush1.xpose.msra.mxu0 0.0
    %6100 = vmatprep.subr.mxu0 0.0
    %6101 = vmatpush1.xpose.msra.mxu0 0.0
    %6102 = vmatprep.subr.mxu0 0.0
    %6103 = vmatpush1.xpose.msra.mxu0 0.0
    %6104 = vmatprep.subr.mxu0 0.0
    %6105 = vmatpush1.xpose.msra.mxu0 0.0
    %6106 = vmatprep.subr.mxu0 0.0
    %6107 = vmatpush1.xpose.msra.mxu0 0.0
    %6108 = vmatprep.subr.mxu0 0.0
    %6109 = vmatpush1.xpose.msra.mxu0 0.0
    %6110 = vmatprep.subr.mxu0 0.0
    %6111 = vmatpush1.xpose.msra.mxu0 0.0
    %6112 = vmatprep.subr.mxu0 0.0
    %6113 = vmatpush1.xpose.msra.mxu0 0.0
    %6114 = vmatprep.subr.mxu0 0.0
    %6115 = vmatpush1.xpose.msra.mxu0 0.0
    %6116 = vmatprep.subr.mxu0 0.0
    %6117 = vmatpush1.xpose.msra.mxu0 0.0
    %6118 = vmatprep.subr.mxu0 0.0
    %6119 = vmatpush1.xpose.msra.mxu0 0.0
    %6120 = vmatprep.subr.mxu0 0.0
    %6121 = vmatpush1.xpose.msra.mxu0 0.0
    %6122 = vmatprep.subr.mxu0 0.0
    %6123 = vmatpush1.xpose.msra.mxu0 0.0
    %6124 = vmatprep.subr.mxu0 0.0
    %6125 = vmatpush1.xpose.msra.mxu0 0.0
    %6126 = vmatprep.subr.mxu0 0.0
    %6127 = vmatpush1.xpose.msra.mxu0 0.0
    %6128 = vmatprep.subr.mxu0 0.0
    %6129 = vmatpush1.xpose.msra.mxu0 0.0
    %6130 = vmatprep.subr.mxu0 0.0
    %6131 = vmatpush1.xpose.msra.mxu0 0.0
    %6132 = vmatprep.subr.mxu0 0.0
    %6133 = vmatpush1.xpose.msra.mxu0 0.0
    %6134 = vmatprep.subr.mxu0 0.0
    %6135 = vmatpush1.xpose.msra.mxu0 0.0
    %6136 = vmatprep.subr.mxu0 0.0
    %6137 = vmatpush1.xpose.msra.mxu0 0.0
    %6138 = vmatprep.subr.mxu0 0.0
    %6139 = vmatpush1.xpose.msra.mxu0 0.0
    %6140 = vmatprep.subr.mxu0 0.0
    %6141 = vmatpush1.xpose.msra.mxu0 0.0
    %6142 = vmatprep.subr.mxu0 0.0
    %6143 = vmatpush1.xpose.msra.mxu0 0.0
    %6144 = vmatprep.subr.mxu0 0.0
    %6145 = vmatpush1.xpose.msra.mxu0 0.0
    %6146 = vmatprep.subr.mxu0 0.0
    %6147 = vmatpush1.xpose.msra.mxu0 0.0
    %6148 = vmatprep.mubr.f32.mxu0 0.0
    %6149 = vmatmul.mubr.f32.gmra.mrb[0].mxu0 %v5859
    %v6150 = vpop.f32.mrb[0].mxu0
    %v6151 = vadd.f32 %v6081, %v6150
    %v6152 = vpop.f32.mrb[0].mxu0
    %6153 = vdwg.mxu0
    %v6154 = vadd.f32 %v5394, %v6151
    %s6155 = sld [smem:[#allocation2 + $0x400]]
    %v6156 = vstv %s6155
    %v6157 = vmul.f32 %v61, %v6156
    %v6158 = vmul.f32 %v62, %v6156
    %v6159 = vmul.f32 %v63, %v6156
    %v6160 = vmul.f32 %v64, %v6156
    %v6161 = vmul.f32 %v65, %v6156
    %v6162 = vmul.f32 %v66, %v6156
    %v6163 = vmul.f32 %v67, %v6156
    %s6164 = sld [smem:[#allocation2 + $0x401]]
    %v6165 = vstv %s6164
    %v6166 = vmul.f32 %v61, %v6165
    %v6167 = vmul.f32 %v62, %v6165
    %v6168 = vmul.f32 %v63, %v6165
    %v6169 = vmul.f32 %v64, %v6165
    %v6170 = vmul.f32 %v65, %v6165
    %v6171 = vmul.f32 %v66, %v6165
    %v6172 = vmul.f32 %v67, %v6165
    %v6173 = vmul.f32 %v68, %v6165
    %6182 = vrot.lane.b32.xlu0 %v6166, 127
    %v6183 = vpop.permute.xlu0 %6182
    %6184 = vrot.lane.b32.xlu0 %v6167, 127
    %v6185 = vpop.permute.xlu0 %6184
    %6186 = vrot.lane.b32.xlu0 %v6168, 127
    %v6187 = vpop.permute.xlu0 %6186
    %6188 = vrot.lane.b32.xlu0 %v6169, 127
    %v6189 = vpop.permute.xlu0 %6188
    %6190 = vrot.lane.b32.xlu0 %v6170, 127
    %v6191 = vpop.permute.xlu0 %6190
    %6192 = vrot.lane.b32.xlu0 %v6171, 127
    %v6193 = vpop.permute.xlu0 %6192
    %6194 = vrot.lane.b32.xlu0 %v6172, 127
    %v6195 = vpop.permute.xlu0 %6194
    %6196 = vrot.lane.b32.xlu0 %v6173, 127
    %v6197 = vpop.permute.xlu0 %6196
    %v6198 = vsel %vm112, %v6183, %v6185
    %v6199 = vsel %vm112, %v6185, %v6187
    %v6200 = vsel %vm112, %v6187, %v6189
    %v6201 = vsel %vm112, %v6189, %v6191
    %v6202 = vsel %vm112, %v6191, %v6193
    %v6203 = vsel %vm112, %v6193, %v6195
    %v6204 = vsel %vm112, %v6195, %v6197
    %v6212 = vadd.f32 %v6157, %v6198
    %v6213 = vadd.f32 %v6158, %v6199
    %v6214 = vadd.f32 %v6159, %v6200
    %v6215 = vadd.f32 %v6160, %v6201
    %v6216 = vadd.f32 %v6161, %v6202
    %v6217 = vadd.f32 %v6162, %v6203
    %v6218 = vadd.f32 %v6163, %v6204
    %s6219 = sld [smem:[#allocation2 + $0x402]]
    %v6220 = vstv %s6219
    %v6221 = vmul.f32 %v61, %v6220
    %v6222 = vmul.f32 %v62, %v6220
    %v6223 = vmul.f32 %v63, %v6220
    %v6224 = vmul.f32 %v64, %v6220
    %v6225 = vmul.f32 %v65, %v6220
    %v6226 = vmul.f32 %v66, %v6220
    %v6227 = vmul.f32 %v67, %v6220
    %v6228 = vmul.f32 %v68, %v6220
    %6237 = vrot.lane.b32.xlu0 %v6221, 126
    %v6238 = vpop.permute.xlu0 %6237
    %6239 = vrot.lane.b32.xlu0 %v6222, 126
    %v6240 = vpop.permute.xlu0 %6239
    %6241 = vrot.lane.b32.xlu0 %v6223, 126
    %v6242 = vpop.permute.xlu0 %6241
    %6243 = vrot.lane.b32.xlu0 %v6224, 126
    %v6244 = vpop.permute.xlu0 %6243
    %6245 = vrot.lane.b32.xlu0 %v6225, 126
    %v6246 = vpop.permute.xlu0 %6245
    %6247 = vrot.lane.b32.xlu0 %v6226, 126
    %v6248 = vpop.permute.xlu0 %6247
    %6249 = vrot.lane.b32.xlu0 %v6227, 126
    %v6250 = vpop.permute.xlu0 %6249
    %6251 = vrot.lane.b32.xlu0 %v6228, 126
    %v6252 = vpop.permute.xlu0 %6251
    %v6253 = vsel %vm168, %v6238, %v6240
    %v6254 = vsel %vm168, %v6240, %v6242
    %v6255 = vsel %vm168, %v6242, %v6244
    %v6256 = vsel %vm168, %v6244, %v6246
    %v6257 = vsel %vm168, %v6246, %v6248
    %v6258 = vsel %vm168, %v6248, %v6250
    %v6259 = vsel %vm168, %v6250, %v6252
    %v6267 = vadd.f32 %v6212, %v6253
    %v6268 = vadd.f32 %v6213, %v6254
    %v6269 = vadd.f32 %v6214, %v6255
    %v6270 = vadd.f32 %v6215, %v6256
    %v6271 = vadd.f32 %v6216, %v6257
    %v6272 = vadd.f32 %v6217, %v6258
    %v6273 = vadd.f32 %v6218, %v6259
    %s6274 = sld [smem:[#allocation2 + $0x403]]
    %v6275 = vstv %s6274
    %v6276 = vmul.f32 %v61, %v6275
    %v6277 = vmul.f32 %v62, %v6275
    %v6278 = vmul.f32 %v63, %v6275
    %v6279 = vmul.f32 %v64, %v6275
    %v6280 = vmul.f32 %v65, %v6275
    %v6281 = vmul.f32 %v66, %v6275
    %v6282 = vmul.f32 %v67, %v6275
    %v6283 = vmul.f32 %v68, %v6275
    %6292 = vrot.lane.b32.xlu0 %v6276, 100
    %v6293 = vpop.permute.xlu0 %6292
    %6294 = vrot.lane.b32.xlu0 %v6277, 100
    %v6295 = vpop.permute.xlu0 %6294
    %6296 = vrot.lane.b32.xlu0 %v6278, 100
    %v6297 = vpop.permute.xlu0 %6296
    %6298 = vrot.lane.b32.xlu0 %v6279, 100
    %v6299 = vpop.permute.xlu0 %6298
    %6300 = vrot.lane.b32.xlu0 %v6280, 100
    %v6301 = vpop.permute.xlu0 %6300
    %6302 = vrot.lane.b32.xlu0 %v6281, 100
    %v6303 = vpop.permute.xlu0 %6302
    %6304 = vrot.lane.b32.xlu0 %v6282, 100
    %v6305 = vpop.permute.xlu0 %6304
    %6306 = vrot.lane.b32.xlu0 %v6283, 100
    %v6307 = vpop.permute.xlu0 %6306
    %v6308 = vsel %vm224, %v6293, %v6295
    %v6309 = vsel %vm224, %v6295, %v6297
    %v6310 = vsel %vm224, %v6297, %v6299
    %v6311 = vsel %vm224, %v6299, %v6301
    %v6312 = vsel %vm224, %v6301, %v6303
    %v6313 = vsel %vm224, %v6303, %v6305
    %v6314 = vsel %vm224, %v6305, %v6307
    %v6322 = vadd.f32 %v6267, %v6308
    %v6323 = vadd.f32 %v6268, %v6309
    %v6324 = vadd.f32 %v6269, %v6310
    %v6325 = vadd.f32 %v6270, %v6311
    %v6326 = vadd.f32 %v6271, %v6312
    %v6327 = vadd.f32 %v6272, %v6313
    %v6328 = vadd.f32 %v6273, %v6314
    %s6329 = sld [smem:[#allocation2 + $0x404]]
    %v6330 = vstv %s6329
    %v6331 = vmul.f32 %v61, %v6330
    %v6332 = vmul.f32 %v62, %v6330
    %v6333 = vmul.f32 %v63, %v6330
    %v6334 = vmul.f32 %v64, %v6330
    %v6335 = vmul.f32 %v65, %v6330
    %v6336 = vmul.f32 %v66, %v6330
    %v6337 = vmul.f32 %v67, %v6330
    %v6338 = vmul.f32 %v68, %v6330
    %6347 = vrot.lane.b32.xlu0 %v6331, 99
    %v6348 = vpop.permute.xlu0 %6347
    %6349 = vrot.lane.b32.xlu0 %v6332, 99
    %v6350 = vpop.permute.xlu0 %6349
    %6351 = vrot.lane.b32.xlu0 %v6333, 99
    %v6352 = vpop.permute.xlu0 %6351
    %6353 = vrot.lane.b32.xlu0 %v6334, 99
    %v6354 = vpop.permute.xlu0 %6353
    %6355 = vrot.lane.b32.xlu0 %v6335, 99
    %v6356 = vpop.permute.xlu0 %6355
    %6357 = vrot.lane.b32.xlu0 %v6336, 99
    %v6358 = vpop.permute.xlu0 %6357
    %6359 = vrot.lane.b32.xlu0 %v6337, 99
    %v6360 = vpop.permute.xlu0 %6359
    %6361 = vrot.lane.b32.xlu0 %v6338, 99
    %v6362 = vpop.permute.xlu0 %6361
    %v6363 = vsel %vm280, %v6348, %v6350
    %v6364 = vsel %vm280, %v6350, %v6352
    %v6365 = vsel %vm280, %v6352, %v6354
    %v6366 = vsel %vm280, %v6354, %v6356
    %v6367 = vsel %vm280, %v6356, %v6358
    %v6368 = vsel %vm280, %v6358, %v6360
    %v6369 = vsel %vm280, %v6360, %v6362
    %v6377 = vadd.f32 %v6322, %v6363
    %v6378 = vadd.f32 %v6323, %v6364
    %v6379 = vadd.f32 %v6324, %v6365
    %v6380 = vadd.f32 %v6325, %v6366
    %v6381 = vadd.f32 %v6326, %v6367
    %v6382 = vadd.f32 %v6327, %v6368
    %v6383 = vadd.f32 %v6328, %v6369
    %s6384 = sld [smem:[#allocation2 + $0x405]]
    %v6385 = vstv %s6384
    %v6386 = vmul.f32 %v61, %v6385
    %v6387 = vmul.f32 %v62, %v6385
    %v6388 = vmul.f32 %v63, %v6385
    %v6389 = vmul.f32 %v64, %v6385
    %v6390 = vmul.f32 %v65, %v6385
    %v6391 = vmul.f32 %v66, %v6385
    %v6392 = vmul.f32 %v67, %v6385
    %v6393 = vmul.f32 %v68, %v6385
    %6402 = vrot.lane.b32.xlu0 %v6386, 98
    %v6403 = vpop.permute.xlu0 %6402
    %6404 = vrot.lane.b32.xlu0 %v6387, 98
    %v6405 = vpop.permute.xlu0 %6404
    %6406 = vrot.lane.b32.xlu0 %v6388, 98
    %v6407 = vpop.permute.xlu0 %6406
    %6408 = vrot.lane.b32.xlu0 %v6389, 98
    %v6409 = vpop.permute.xlu0 %6408
    %6410 = vrot.lane.b32.xlu0 %v6390, 98
    %v6411 = vpop.permute.xlu0 %6410
    %6412 = vrot.lane.b32.xlu0 %v6391, 98
    %v6413 = vpop.permute.xlu0 %6412
    %6414 = vrot.lane.b32.xlu0 %v6392, 98
    %v6415 = vpop.permute.xlu0 %6414
    %6416 = vrot.lane.b32.xlu0 %v6393, 98
    %v6417 = vpop.permute.xlu0 %6416
    %v6418 = vsel %vm336, %v6403, %v6405
    %v6419 = vsel %vm336, %v6405, %v6407
    %v6420 = vsel %vm336, %v6407, %v6409
    %v6421 = vsel %vm336, %v6409, %v6411
    %v6422 = vsel %vm336, %v6411, %v6413
    %v6423 = vsel %vm336, %v6413, %v6415
    %v6424 = vsel %vm336, %v6415, %v6417
    %v6432 = vadd.f32 %v6377, %v6418
    %v6433 = vadd.f32 %v6378, %v6419
    %v6434 = vadd.f32 %v6379, %v6420
    %v6435 = vadd.f32 %v6380, %v6421
    %v6436 = vadd.f32 %v6381, %v6422
    %v6437 = vadd.f32 %v6382, %v6423
    %v6438 = vadd.f32 %v6383, %v6424
    %s6439 = sld [smem:[#allocation2 + $0x406]]
    %v6440 = vstv %s6439
    %v6441 = vmul.f32 %v61, %v6440
    %v6442 = vmul.f32 %v62, %v6440
    %v6443 = vmul.f32 %v63, %v6440
    %v6444 = vmul.f32 %v64, %v6440
    %v6445 = vmul.f32 %v65, %v6440
    %v6446 = vmul.f32 %v66, %v6440
    %v6447 = vmul.f32 %v67, %v6440
    %v6448 = vmul.f32 %v68, %v6440
    %6457 = vrot.lane.b32.xlu0 %v6441, 72
    %v6458 = vpop.permute.xlu0 %6457
    %6459 = vrot.lane.b32.xlu0 %v6442, 72
    %v6460 = vpop.permute.xlu0 %6459
    %6461 = vrot.lane.b32.xlu0 %v6443, 72
    %v6462 = vpop.permute.xlu0 %6461
    %6463 = vrot.lane.b32.xlu0 %v6444, 72
    %v6464 = vpop.permute.xlu0 %6463
    %6465 = vrot.lane.b32.xlu0 %v6445, 72
    %v6466 = vpop.permute.xlu0 %6465
    %6467 = vrot.lane.b32.xlu0 %v6446, 72
    %v6468 = vpop.permute.xlu0 %6467
    %6469 = vrot.lane.b32.xlu0 %v6447, 72
    %v6470 = vpop.permute.xlu0 %6469
    %6471 = vrot.lane.b32.xlu0 %v6448, 72
    %v6472 = vpop.permute.xlu0 %6471
    %v6473 = vsel %vm392, %v6458, %v6460
    %v6474 = vsel %vm392, %v6460, %v6462
    %v6475 = vsel %vm392, %v6462, %v6464
    %v6476 = vsel %vm392, %v6464, %v6466
    %v6477 = vsel %vm392, %v6466, %v6468
    %v6478 = vsel %vm392, %v6468, %v6470
    %v6479 = vsel %vm392, %v6470, %v6472
    %v6487 = vadd.f32 %v6432, %v6473
    %v6488 = vadd.f32 %v6433, %v6474
    %v6489 = vadd.f32 %v6434, %v6475
    %v6490 = vadd.f32 %v6435, %v6476
    %v6491 = vadd.f32 %v6436, %v6477
    %v6492 = vadd.f32 %v6437, %v6478
    %v6493 = vadd.f32 %v6438, %v6479
    %s6494 = sld [smem:[#allocation2 + $0x407]]
    %v6495 = vstv %s6494
    %v6496 = vmul.f32 %v61, %v6495
    %v6497 = vmul.f32 %v62, %v6495
    %v6498 = vmul.f32 %v63, %v6495
    %v6499 = vmul.f32 %v64, %v6495
    %v6500 = vmul.f32 %v65, %v6495
    %v6501 = vmul.f32 %v66, %v6495
    %v6502 = vmul.f32 %v67, %v6495
    %v6503 = vmul.f32 %v68, %v6495
    %6512 = vrot.lane.b32.xlu0 %v6496, 71
    %v6513 = vpop.permute.xlu0 %6512
    %6514 = vrot.lane.b32.xlu0 %v6497, 71
    %v6515 = vpop.permute.xlu0 %6514
    %6516 = vrot.lane.b32.xlu0 %v6498, 71
    %v6517 = vpop.permute.xlu0 %6516
    %6518 = vrot.lane.b32.xlu0 %v6499, 71
    %v6519 = vpop.permute.xlu0 %6518
    %6520 = vrot.lane.b32.xlu0 %v6500, 71
    %v6521 = vpop.permute.xlu0 %6520
    %6522 = vrot.lane.b32.xlu0 %v6501, 71
    %v6523 = vpop.permute.xlu0 %6522
    %6524 = vrot.lane.b32.xlu0 %v6502, 71
    %v6525 = vpop.permute.xlu0 %6524
    %6526 = vrot.lane.b32.xlu0 %v6503, 71
    %v6527 = vpop.permute.xlu0 %6526
    %v6528 = vsel %vm448, %v6513, %v6515
    %v6529 = vsel %vm448, %v6515, %v6517
    %v6530 = vsel %vm448, %v6517, %v6519
    %v6531 = vsel %vm448, %v6519, %v6521
    %v6532 = vsel %vm448, %v6521, %v6523
    %v6533 = vsel %vm448, %v6523, %v6525
    %v6534 = vsel %vm448, %v6525, %v6527
    %v6542 = vadd.f32 %v6487, %v6528
    %v6543 = vadd.f32 %v6488, %v6529
    %v6544 = vadd.f32 %v6489, %v6530
    %v6545 = vadd.f32 %v6490, %v6531
    %v6546 = vadd.f32 %v6491, %v6532
    %v6547 = vadd.f32 %v6492, %v6533
    %v6548 = vadd.f32 %v6493, %v6534
    %s6549 = sld [smem:[#allocation2 + $0x408]]
    %v6550 = vstv %s6549
    %v6551 = vmul.f32 %v61, %v6550
    %v6552 = vmul.f32 %v62, %v6550
    %v6553 = vmul.f32 %v63, %v6550
    %v6554 = vmul.f32 %v64, %v6550
    %v6555 = vmul.f32 %v65, %v6550
    %v6556 = vmul.f32 %v66, %v6550
    %v6557 = vmul.f32 %v67, %v6550
    %v6558 = vmul.f32 %v68, %v6550
    %6567 = vrot.lane.b32.xlu0 %v6551, 70
    %v6568 = vpop.permute.xlu0 %6567
    %6569 = vrot.lane.b32.xlu0 %v6552, 70
    %v6570 = vpop.permute.xlu0 %6569
    %6571 = vrot.lane.b32.xlu0 %v6553, 70
    %v6572 = vpop.permute.xlu0 %6571
    %6573 = vrot.lane.b32.xlu0 %v6554, 70
    %v6574 = vpop.permute.xlu0 %6573
    %6575 = vrot.lane.b32.xlu0 %v6555, 70
    %v6576 = vpop.permute.xlu0 %6575
    %6577 = vrot.lane.b32.xlu0 %v6556, 70
    %v6578 = vpop.permute.xlu0 %6577
    %6579 = vrot.lane.b32.xlu0 %v6557, 70
    %v6580 = vpop.permute.xlu0 %6579
    %6581 = vrot.lane.b32.xlu0 %v6558, 70
    %v6582 = vpop.permute.xlu0 %6581
    %v6583 = vsel %vm504, %v6568, %v6570
    %v6584 = vsel %vm504, %v6570, %v6572
    %v6585 = vsel %vm504, %v6572, %v6574
    %v6586 = vsel %vm504, %v6574, %v6576
    %v6587 = vsel %vm504, %v6576, %v6578
    %v6588 = vsel %vm504, %v6578, %v6580
    %v6589 = vsel %vm504, %v6580, %v6582
    %v6597 = vadd.f32 %v6542, %v6583
    %v6598 = vadd.f32 %v6543, %v6584
    %v6599 = vadd.f32 %v6544, %v6585
    %v6600 = vadd.f32 %v6545, %v6586
    %v6601 = vadd.f32 %v6546, %v6587
    %v6602 = vadd.f32 %v6547, %v6588
    %v6603 = vadd.f32 %v6548, %v6589
    %s6604 = sld [smem:[#allocation5 + $0x8]]
    %v6605 = vstv %s6604
    %v6606 = vadd.f32 %v6597, %v6605
    %v6607 = vadd.f32 %v6598, %v6605
    %v6608 = vadd.f32 %v6599, %v6605
    %v6609 = vadd.f32 %v6600, %v6605
    %v6610 = vadd.f32 %v6601, %v6605
    %v6611 = vadd.f32 %v6602, %v6605
    %v6612 = vadd.f32 %v6603, %v6605
    %v6613 = vmax.f32 %v6606, 0.0
    %v6614 = vmax.f32 %v6607, 0.0
    %v6615 = vmax.f32 %v6608, 0.0
    %v6616 = vmax.f32 %v6609, 0.0
    %v6617 = vmax.f32 %v6610, 0.0
    %v6618 = vmax.f32 %v6611, 0.0
    %v6619 = vmax.f32 %v6612, 0.0
    %v6620 = vld [vmem:[#allocation7 + $0x1c0] sm:$0xff]
    %v6621 = vld [vmem:[#allocation7 + $0x1c8] sm:$0xff]
    %v6622 = vld [vmem:[#allocation7 + $0x1d0] sm:$0xff]
    %v6623 = vld [vmem:[#allocation7 + $0x1d8] sm:$0xff]
    %v6624 = vld [vmem:[#allocation7 + $0x1e0] sm:$0xff]
    %v6625 = vld [vmem:[#allocation7 + $0x1e8] sm:$0xff]
    %v6626 = vld [vmem:[#allocation7 + $0x1f0] sm:$0xff]
    %v6627 = vld [vmem:[#allocation7 + $0x540] sm:$0x3]
    %v6628 = vld [vmem:[#allocation7 + $0x548] sm:$0x3]
    %v6629 = vld [vmem:[#allocation7 + $0x550] sm:$0x3]
    %v6630 = vld [vmem:[#allocation7 + $0x558] sm:$0x3]
    %v6631 = vld [vmem:[#allocation7 + $0x560] sm:$0x3]
    %v6632 = vld [vmem:[#allocation7 + $0x568] sm:$0x3]
    %v6633 = vld [vmem:[#allocation7 + $0x570] sm:$0x3]
    %6634 = vmatprep.subr.mxu0 %v6621
    %6635 = vmatpush1.xpose.msra.mxu0 %v6620
    %6636 = vmatprep.subr.mxu0 %v6628
    %6637 = vmatpush1.xpose.msra.mxu0 %v6627
    %6638 = vmatprep.subr.mxu0 0.0
    %6639 = vmatpush1.xpose.msra.mxu0 0.0
    %6640 = vmatprep.subr.mxu0 0.0
    %6641 = vmatpush1.xpose.msra.mxu0 0.0
    %6642 = vmatprep.subr.mxu0 0.0
    %6643 = vmatpush1.xpose.msra.mxu0 0.0
    %6644 = vmatprep.subr.mxu0 0.0
    %6645 = vmatpush1.xpose.msra.mxu0 0.0
    %6646 = vmatprep.subr.mxu0 0.0
    %6647 = vmatpush1.xpose.msra.mxu0 0.0
    %6648 = vmatprep.subr.mxu0 0.0
    %6649 = vmatpush1.xpose.msra.mxu0 0.0
    %6650 = vmatprep.subr.mxu0 0.0
    %6651 = vmatpush1.xpose.msra.mxu0 0.0
    %6652 = vmatprep.subr.mxu0 0.0
    %6653 = vmatpush1.xpose.msra.mxu0 0.0
    %6654 = vmatprep.subr.mxu0 0.0
    %6655 = vmatpush1.xpose.msra.mxu0 0.0
    %6656 = vmatprep.subr.mxu0 0.0
    %6657 = vmatpush1.xpose.msra.mxu0 0.0
    %6658 = vmatprep.subr.mxu0 0.0
    %6659 = vmatpush1.xpose.msra.mxu0 0.0
    %6660 = vmatprep.subr.mxu0 0.0
    %6661 = vmatpush1.xpose.msra.mxu0 0.0
    %6662 = vmatprep.subr.mxu0 0.0
    %6663 = vmatpush1.xpose.msra.mxu0 0.0
    %6664 = vmatprep.subr.mxu0 0.0
    %6665 = vmatpush1.xpose.msra.mxu0 0.0
    %6666 = vmatprep.subr.mxu0 0.0
    %6667 = vmatpush1.xpose.msra.mxu0 0.0
    %6668 = vmatprep.subr.mxu0 0.0
    %6669 = vmatpush1.xpose.msra.mxu0 0.0
    %6670 = vmatprep.subr.mxu0 0.0
    %6671 = vmatpush1.xpose.msra.mxu0 0.0
    %6672 = vmatprep.subr.mxu0 0.0
    %6673 = vmatpush1.xpose.msra.mxu0 0.0
    %6674 = vmatprep.subr.mxu0 0.0
    %6675 = vmatpush1.xpose.msra.mxu0 0.0
    %6676 = vmatprep.subr.mxu0 0.0
    %6677 = vmatpush1.xpose.msra.mxu0 0.0
    %6678 = vmatprep.subr.mxu0 0.0
    %6679 = vmatpush1.xpose.msra.mxu0 0.0
    %6680 = vmatprep.subr.mxu0 0.0
    %6681 = vmatpush1.xpose.msra.mxu0 0.0
    %6682 = vmatprep.subr.mxu0 0.0
    %6683 = vmatpush1.xpose.msra.mxu0 0.0
    %6684 = vmatprep.subr.mxu0 0.0
    %6685 = vmatpush1.xpose.msra.mxu0 0.0
    %6686 = vmatprep.subr.mxu0 0.0
    %6687 = vmatpush1.xpose.msra.mxu0 0.0
    %6688 = vmatprep.subr.mxu0 0.0
    %6689 = vmatpush1.xpose.msra.mxu0 0.0
    %6690 = vmatprep.subr.mxu0 0.0
    %6691 = vmatpush1.xpose.msra.mxu0 0.0
    %6692 = vmatprep.subr.mxu0 0.0
    %6693 = vmatpush1.xpose.msra.mxu0 0.0
    %6694 = vmatprep.subr.mxu0 0.0
    %6695 = vmatpush1.xpose.msra.mxu0 0.0
    %6696 = vmatprep.subr.mxu0 0.0
    %6697 = vmatpush1.xpose.msra.mxu0 0.0
    %6698 = vmatprep.mubr.f32.mxu0 %v6614
    %6699 = vmatmul.mubr.f32.gmra.mrb[0].mxu0 %v6613
    %v6700 = vpop.f32.mrb[0].mxu0
    %v6701 = vadd.f32 0.0, %v6700
    %v6702 = vpop.f32.mrb[0].mxu0
    %6703 = vdwg.mxu0
    %6704 = vmatprep.subr.mxu0 %v6623
    %6705 = vmatpush1.xpose.msra.mxu0 %v6622
    %6706 = vmatprep.subr.mxu0 %v6630
    %6707 = vmatpush1.xpose.msra.mxu0 %v6629
    %6708 = vmatprep.subr.mxu0 0.0
    %6709 = vmatpush1.xpose.msra.mxu0 0.0
    %6710 = vmatprep.subr.mxu0 0.0
    %6711 = vmatpush1.xpose.msra.mxu0 0.0
    %6712 = vmatprep.subr.mxu0 0.0
    %6713 = vmatpush1.xpose.msra.mxu0 0.0
    %6714 = vmatprep.subr.mxu0 0.0
    %6715 = vmatpush1.xpose.msra.mxu0 0.0
    %6716 = vmatprep.subr.mxu0 0.0
    %6717 = vmatpush1.xpose.msra.mxu0 0.0
    %6718 = vmatprep.subr.mxu0 0.0
    %6719 = vmatpush1.xpose.msra.mxu0 0.0
    %6720 = vmatprep.subr.mxu0 0.0
    %6721 = vmatpush1.xpose.msra.mxu0 0.0
    %6722 = vmatprep.subr.mxu0 0.0
    %6723 = vmatpush1.xpose.msra.mxu0 0.0
    %6724 = vmatprep.subr.mxu0 0.0
    %6725 = vmatpush1.xpose.msra.mxu0 0.0
    %6726 = vmatprep.subr.mxu0 0.0
    %6727 = vmatpush1.xpose.msra.mxu0 0.0
    %6728 = vmatprep.subr.mxu0 0.0
    %6729 = vmatpush1.xpose.msra.mxu0 0.0
    %6730 = vmatprep.subr.mxu0 0.0
    %6731 = vmatpush1.xpose.msra.mxu0 0.0
    %6732 = vmatprep.subr.mxu0 0.0
    %6733 = vmatpush1.xpose.msra.mxu0 0.0
    %6734 = vmatprep.subr.mxu0 0.0
    %6735 = vmatpush1.xpose.msra.mxu0 0.0
    %6736 = vmatprep.subr.mxu0 0.0
    %6737 = vmatpush1.xpose.msra.mxu0 0.0
    %6738 = vmatprep.subr.mxu0 0.0
    %6739 = vmatpush1.xpose.msra.mxu0 0.0
    %6740 = vmatprep.subr.mxu0 0.0
    %6741 = vmatpush1.xpose.msra.mxu0 0.0
    %6742 = vmatprep.subr.mxu0 0.0
    %6743 = vmatpush1.xpose.msra.mxu0 0.0
    %6744 = vmatprep.subr.mxu0 0.0
    %6745 = vmatpush1.xpose.msra.mxu0 0.0
    %6746 = vmatprep.subr.mxu0 0.0
    %6747 = vmatpush1.xpose.msra.mxu0 0.0
    %6748 = vmatprep.subr.mxu0 0.0
    %6749 = vmatpush1.xpose.msra.mxu0 0.0
    %6750 = vmatprep.subr.mxu0 0.0
    %6751 = vmatpush1.xpose.msra.mxu0 0.0
    %6752 = vmatprep.subr.mxu0 0.0
    %6753 = vmatpush1.xpose.msra.mxu0 0.0
    %6754 = vmatprep.subr.mxu0 0.0
    %6755 = vmatpush1.xpose.msra.mxu0 0.0
    %6756 = vmatprep.subr.mxu0 0.0
    %6757 = vmatpush1.xpose.msra.mxu0 0.0
    %6758 = vmatprep.subr.mxu0 0.0
    %6759 = vmatpush1.xpose.msra.mxu0 0.0
    %6760 = vmatprep.subr.mxu0 0.0
    %6761 = vmatpush1.xpose.msra.mxu0 0.0
    %6762 = vmatprep.subr.mxu0 0.0
    %6763 = vmatpush1.xpose.msra.mxu0 0.0
    %6764 = vmatprep.subr.mxu0 0.0
    %6765 = vmatpush1.xpose.msra.mxu0 0.0
    %6766 = vmatprep.subr.mxu0 0.0
    %6767 = vmatpush1.xpose.msra.mxu0 0.0
    %6768 = vmatprep.mubr.f32.mxu0 %v6616
    %6769 = vmatmul.mubr.f32.gmra.mrb[0].mxu0 %v6615
    %v6770 = vpop.f32.mrb[0].mxu0
    %v6771 = vadd.f32 %v6701, %v6770
    %v6772 = vpop.f32.mrb[0].mxu0
    %6773 = vdwg.mxu0
    %6774 = vmatprep.subr.mxu0 %v6625
    %6775 = vmatpush1.xpose.msra.mxu0 %v6624
    %6776 = vmatprep.subr.mxu0 %v6632
    %6777 = vmatpush1.xpose.msra.mxu0 %v6631
    %6778 = vmatprep.subr.mxu0 0.0
    %6779 = vmatpush1.xpose.msra.mxu0 0.0
    %6780 = vmatprep.subr.mxu0 0.0
    %6781 = vmatpush1.xpose.msra.mxu0 0.0
    %6782 = vmatprep.subr.mxu0 0.0
    %6783 = vmatpush1.xpose.msra.mxu0 0.0
    %6784 = vmatprep.subr.mxu0 0.0
    %6785 = vmatpush1.xpose.msra.mxu0 0.0
    %6786 = vmatprep.subr.mxu0 0.0
    %6787 = vmatpush1.xpose.msra.mxu0 0.0
    %6788 = vmatprep.subr.mxu0 0.0
    %6789 = vmatpush1.xpose.msra.mxu0 0.0
    %6790 = vmatprep.subr.mxu0 0.0
    %6791 = vmatpush1.xpose.msra.mxu0 0.0
    %6792 = vmatprep.subr.mxu0 0.0
    %6793 = vmatpush1.xpose.msra.mxu0 0.0
    %6794 = vmatprep.subr.mxu0 0.0
    %6795 = vmatpush1.xpose.msra.mxu0 0.0
    %6796 = vmatprep.subr.mxu0 0.0
    %6797 = vmatpush1.xpose.msra.mxu0 0.0
    %6798 = vmatprep.subr.mxu0 0.0
    %6799 = vmatpush1.xpose.msra.mxu0 0.0
    %6800 = vmatprep.subr.mxu0 0.0
    %6801 = vmatpush1.xpose.msra.mxu0 0.0
    %6802 = vmatprep.subr.mxu0 0.0
    %6803 = vmatpush1.xpose.msra.mxu0 0.0
    %6804 = vmatprep.subr.mxu0 0.0
    %6805 = vmatpush1.xpose.msra.mxu0 0.0
    %6806 = vmatprep.subr.mxu0 0.0
    %6807 = vmatpush1.xpose.msra.mxu0 0.0
    %6808 = vmatprep.subr.mxu0 0.0
    %6809 = vmatpush1.xpose.msra.mxu0 0.0
    %6810 = vmatprep.subr.mxu0 0.0
    %6811 = vmatpush1.xpose.msra.mxu0 0.0
    %6812 = vmatprep.subr.mxu0 0.0
    %6813 = vmatpush1.xpose.msra.mxu0 0.0
    %6814 = vmatprep.subr.mxu0 0.0
    %6815 = vmatpush1.xpose.msra.mxu0 0.0
    %6816 = vmatprep.subr.mxu0 0.0
    %6817 = vmatpush1.xpose.msra.mxu0 0.0
    %6818 = vmatprep.subr.mxu0 0.0
    %6819 = vmatpush1.xpose.msra.mxu0 0.0
    %6820 = vmatprep.subr.mxu0 0.0
    %6821 = vmatpush1.xpose.msra.mxu0 0.0
    %6822 = vmatprep.subr.mxu0 0.0
    %6823 = vmatpush1.xpose.msra.mxu0 0.0
    %6824 = vmatprep.subr.mxu0 0.0
    %6825 = vmatpush1.xpose.msra.mxu0 0.0
    %6826 = vmatprep.subr.mxu0 0.0
    %6827 = vmatpush1.xpose.msra.mxu0 0.0
    %6828 = vmatprep.subr.mxu0 0.0
    %6829 = vmatpush1.xpose.msra.mxu0 0.0
    %6830 = vmatprep.subr.mxu0 0.0
    %6831 = vmatpush1.xpose.msra.mxu0 0.0
    %6832 = vmatprep.subr.mxu0 0.0
    %6833 = vmatpush1.xpose.msra.mxu0 0.0
    %6834 = vmatprep.subr.mxu0 0.0
    %6835 = vmatpush1.xpose.msra.mxu0 0.0
    %6836 = vmatprep.subr.mxu0 0.0
    %6837 = vmatpush1.xpose.msra.mxu0 0.0
    %6838 = vmatprep.mubr.f32.mxu0 %v6618
    %6839 = vmatmul.mubr.f32.gmra.mrb[0].mxu0 %v6617
    %v6840 = vpop.f32.mrb[0].mxu0
    %v6841 = vadd.f32 %v6771, %v6840
    %v6842 = vpop.f32.mrb[0].mxu0
    %6843 = vdwg.mxu0
    %6844 = vmatprep.subr.mxu0 0.0
    %6845 = vmatpush1.xpose.msra.mxu0 %v6626
    %6846 = vmatprep.subr.mxu0 0.0
    %6847 = vmatpush1.xpose.msra.mxu0 %v6633
    %6848 = vmatprep.subr.mxu0 0.0
    %6849 = vmatpush1.xpose.msra.mxu0 0.0
    %6850 = vmatprep.subr.mxu0 0.0
    %6851 = vmatpush1.xpose.msra.mxu0 0.0
    %6852 = vmatprep.subr.mxu0 0.0
    %6853 = vmatpush1.xpose.msra.mxu0 0.0
    %6854 = vmatprep.subr.mxu0 0.0
    %6855 = vmatpush1.xpose.msra.mxu0 0.0
    %6856 = vmatprep.subr.mxu0 0.0
    %6857 = vmatpush1.xpose.msra.mxu0 0.0
    %6858 = vmatprep.subr.mxu0 0.0
    %6859 = vmatpush1.xpose.msra.mxu0 0.0
    %6860 = vmatprep.subr.mxu0 0.0
    %6861 = vmatpush1.xpose.msra.mxu0 0.0
    %6862 = vmatprep.subr.mxu0 0.0
    %6863 = vmatpush1.xpose.msra.mxu0 0.0
    %6864 = vmatprep.subr.mxu0 0.0
    %6865 = vmatpush1.xpose.msra.mxu0 0.0
    %6866 = vmatprep.subr.mxu0 0.0
    %6867 = vmatpush1.xpose.msra.mxu0 0.0
    %6868 = vmatprep.subr.mxu0 0.0
    %6869 = vmatpush1.xpose.msra.mxu0 0.0
    %6870 = vmatprep.subr.mxu0 0.0
    %6871 = vmatpush1.xpose.msra.mxu0 0.0
    %6872 = vmatprep.subr.mxu0 0.0
    %6873 = vmatpush1.xpose.msra.mxu0 0.0
    %6874 = vmatprep.subr.mxu0 0.0
    %6875 = vmatpush1.xpose.msra.mxu0 0.0
    %6876 = vmatprep.subr.mxu0 0.0
    %6877 = vmatpush1.xpose.msra.mxu0 0.0
    %6878 = vmatprep.subr.mxu0 0.0
    %6879 = vmatpush1.xpose.msra.mxu0 0.0
    %6880 = vmatprep.subr.mxu0 0.0
    %6881 = vmatpush1.xpose.msra.mxu0 0.0
    %6882 = vmatprep.subr.mxu0 0.0
    %6883 = vmatpush1.xpose.msra.mxu0 0.0
    %6884 = vmatprep.subr.mxu0 0.0
    %6885 = vmatpush1.xpose.msra.mxu0 0.0
    %6886 = vmatprep.subr.mxu0 0.0
    %6887 = vmatpush1.xpose.msra.mxu0 0.0
    %6888 = vmatprep.subr.mxu0 0.0
    %6889 = vmatpush1.xpose.msra.mxu0 0.0
    %6890 = vmatprep.subr.mxu0 0.0
    %6891 = vmatpush1.xpose.msra.mxu0 0.0
    %6892 = vmatprep.subr.mxu0 0.0
    %6893 = vmatpush1.xpose.msra.mxu0 0.0
    %6894 = vmatprep.subr.mxu0 0.0
    %6895 = vmatpush1.xpose.msra.mxu0 0.0
    %6896 = vmatprep.subr.mxu0 0.0
    %6897 = vmatpush1.xpose.msra.mxu0 0.0
    %6898 = vmatprep.subr.mxu0 0.0
    %6899 = vmatpush1.xpose.msra.mxu0 0.0
    %6900 = vmatprep.subr.mxu0 0.0
    %6901 = vmatpush1.xpose.msra.mxu0 0.0
    %6902 = vmatprep.subr.mxu0 0.0
    %6903 = vmatpush1.xpose.msra.mxu0 0.0
    %6904 = vmatprep.subr.mxu0 0.0
    %6905 = vmatpush1.xpose.msra.mxu0 0.0
    %6906 = vmatprep.subr.mxu0 0.0
    %6907 = vmatpush1.xpose.msra.mxu0 0.0
    %6908 = vmatprep.mubr.f32.mxu0 0.0
    %6909 = vmatmul.mubr.f32.gmra.mrb[0].mxu0 %v6619
    %v6910 = vpop.f32.mrb[0].mxu0
    %v6911 = vadd.f32 %v6841, %v6910
    %v6912 = vpop.f32.mrb[0].mxu0
    %6913 = vdwg.mxu0
    %v6914 = vadd.f32 %v6154, %v6911
    %s6915 = sld [smem:[#allocation2 + $0x480]]
    %v6916 = vstv %s6915
    %v6917 = vmul.f32 %v61, %v6916
    %v6918 = vmul.f32 %v62, %v6916
    %v6919 = vmul.f32 %v63, %v6916
    %v6920 = vmul.f32 %v64, %v6916
    %v6921 = vmul.f32 %v65, %v6916
    %v6922 = vmul.f32 %v66, %v6916
    %v6923 = vmul.f32 %v67, %v6916
    %s6924 = sld [smem:[#allocation2 + $0x481]]
    %v6925 = vstv %s6924
    %v6926 = vmul.f32 %v61, %v6925
    %v6927 = vmul.f32 %v62, %v6925
    %v6928 = vmul.f32 %v63, %v6925
    %v6929 = vmul.f32 %v64, %v6925
    %v6930 = vmul.f32 %v65, %v6925
    %v6931 = vmul.f32 %v66, %v6925
    %v6932 = vmul.f32 %v67, %v6925
    %v6933 = vmul.f32 %v68, %v6925
    %6942 = vrot.lane.b32.xlu0 %v6926, 127
    %v6943 = vpop.permute.xlu0 %6942
    %6944 = vrot.lane.b32.xlu0 %v6927, 127
    %v6945 = vpop.permute.xlu0 %6944
    %6946 = vrot.lane.b32.xlu0 %v6928, 127
    %v6947 = vpop.permute.xlu0 %6946
    %6948 = vrot.lane.b32.xlu0 %v6929, 127
    %v6949 = vpop.permute.xlu0 %6948
    %6950 = vrot.lane.b32.xlu0 %v6930, 127
    %v6951 = vpop.permute.xlu0 %6950
    %6952 = vrot.lane.b32.xlu0 %v6931, 127
    %v6953 = vpop.permute.xlu0 %6952
    %6954 = vrot.lane.b32.xlu0 %v6932, 127
    %v6955 = vpop.permute.xlu0 %6954
    %6956 = vrot.lane.b32.xlu0 %v6933, 127
    %v6957 = vpop.permute.xlu0 %6956
    %v6958 = vsel %vm112, %v6943, %v6945
    %v6959 = vsel %vm112, %v6945, %v6947
    %v6960 = vsel %vm112, %v6947, %v6949
    %v6961 = vsel %vm112, %v6949, %v6951
    %v6962 = vsel %vm112, %v6951, %v6953
    %v6963 = vsel %vm112, %v6953, %v6955
    %v6964 = vsel %vm112, %v6955, %v6957
    %v6972 = vadd.f32 %v6917, %v6958
    %v6973 = vadd.f32 %v6918, %v6959
    %v6974 = vadd.f32 %v6919, %v6960
    %v6975 = vadd.f32 %v6920, %v6961
    %v6976 = vadd.f32 %v6921, %v6962
    %v6977 = vadd.f32 %v6922, %v6963
    %v6978 = vadd.f32 %v6923, %v6964
    %s6979 = sld [smem:[#allocation2 + $0x482]]
    %v6980 = vstv %s6979
    %v6981 = vmul.f32 %v61, %v6980
    %v6982 = vmul.f32 %v62, %v6980
    %v6983 = vmul.f32 %v63, %v6980
    %v6984 = vmul.f32 %v64, %v6980
    %v6985 = vmul.f32 %v65, %v6980
    %v6986 = vmul.f32 %v66, %v6980
    %v6987 = vmul.f32 %v67, %v6980
    %v6988 = vmul.f32 %v68, %v6980
    %6997 = vrot.lane.b32.xlu0 %v6981, 126
    %v6998 = vpop.permute.xlu0 %6997
    %6999 = vrot.lane.b32.xlu0 %v6982, 126
    %v7000 = vpop.permute.xlu0 %6999
    %7001 = vrot.lane.b32.xlu0 %v6983, 126
    %v7002 = vpop.permute.xlu0 %7001
    %7003 = vrot.lane.b32.xlu0 %v6984, 126
    %v7004 = vpop.permute.xlu0 %7003
    %7005 = vrot.lane.b32.xlu0 %v6985, 126
    %v7006 = vpop.permute.xlu0 %7005
    %7007 = vrot.lane.b32.xlu0 %v6986, 126
    %v7008 = vpop.permute.xlu0 %7007
    %7009 = vrot.lane.b32.xlu0 %v6987, 126
    %v7010 = vpop.permute.xlu0 %7009
    %7011 = vrot.lane.b32.xlu0 %v6988, 126
    %v7012 = vpop.permute.xlu0 %7011
    %v7013 = vsel %vm168, %v6998, %v7000
    %v7014 = vsel %vm168, %v7000, %v7002
    %v7015 = vsel %vm168, %v7002, %v7004
    %v7016 = vsel %vm168, %v7004, %v7006
    %v7017 = vsel %vm168, %v7006, %v7008
    %v7018 = vsel %vm168, %v7008, %v7010
    %v7019 = vsel %vm168, %v7010, %v7012
    %v7027 = vadd.f32 %v6972, %v7013
    %v7028 = vadd.f32 %v6973, %v7014
    %v7029 = vadd.f32 %v6974, %v7015
    %v7030 = vadd.f32 %v6975, %v7016
    %v7031 = vadd.f32 %v6976, %v7017
    %v7032 = vadd.f32 %v6977, %v7018
    %v7033 = vadd.f32 %v6978, %v7019
    %s7034 = sld [smem:[#allocation2 + $0x483]]
    %v7035 = vstv %s7034
    %v7036 = vmul.f32 %v61, %v7035
    %v7037 = vmul.f32 %v62, %v7035
    %v7038 = vmul.f32 %v63, %v7035
    %v7039 = vmul.f32 %v64, %v7035
    %v7040 = vmul.f32 %v65, %v7035
    %v7041 = vmul.f32 %v66, %v7035
    %v7042 = vmul.f32 %v67, %v7035
    %v7043 = vmul.f32 %v68, %v7035
    %7052 = vrot.lane.b32.xlu0 %v7036, 100
    %v7053 = vpop.permute.xlu0 %7052
    %7054 = vrot.lane.b32.xlu0 %v7037, 100
    %v7055 = vpop.permute.xlu0 %7054
    %7056 = vrot.lane.b32.xlu0 %v7038, 100
    %v7057 = vpop.permute.xlu0 %7056
    %7058 = vrot.lane.b32.xlu0 %v7039, 100
    %v7059 = vpop.permute.xlu0 %7058
    %7060 = vrot.lane.b32.xlu0 %v7040, 100
    %v7061 = vpop.permute.xlu0 %7060
    %7062 = vrot.lane.b32.xlu0 %v7041, 100
    %v7063 = vpop.permute.xlu0 %7062
    %7064 = vrot.lane.b32.xlu0 %v7042, 100
    %v7065 = vpop.permute.xlu0 %7064
    %7066 = vrot.lane.b32.xlu0 %v7043, 100
    %v7067 = vpop.permute.xlu0 %7066
    %v7068 = vsel %vm224, %v7053, %v7055
    %v7069 = vsel %vm224, %v7055, %v7057
    %v7070 = vsel %vm224, %v7057, %v7059
    %v7071 = vsel %vm224, %v7059, %v7061
    %v7072 = vsel %vm224, %v7061, %v7063
    %v7073 = vsel %vm224, %v7063, %v7065
    %v7074 = vsel %vm224, %v7065, %v7067
    %v7082 = vadd.f32 %v7027, %v7068
    %v7083 = vadd.f32 %v7028, %v7069
    %v7084 = vadd.f32 %v7029, %v7070
    %v7085 = vadd.f32 %v7030, %v7071
    %v7086 = vadd.f32 %v7031, %v7072
    %v7087 = vadd.f32 %v7032, %v7073
    %v7088 = vadd.f32 %v7033, %v7074
    %s7089 = sld [smem:[#allocation2 + $0x484]]
    %v7090 = vstv %s7089
    %v7091 = vmul.f32 %v61, %v7090
    %v7092 = vmul.f32 %v62, %v7090
    %v7093 = vmul.f32 %v63, %v7090
    %v7094 = vmul.f32 %v64, %v7090
    %v7095 = vmul.f32 %v65, %v7090
    %v7096 = vmul.f32 %v66, %v7090
    %v7097 = vmul.f32 %v67, %v7090
    %v7098 = vmul.f32 %v68, %v7090
    %7107 = vrot.lane.b32.xlu0 %v7091, 99
    %v7108 = vpop.permute.xlu0 %7107
    %7109 = vrot.lane.b32.xlu0 %v7092, 99
    %v7110 = vpop.permute.xlu0 %7109
    %7111 = vrot.lane.b32.xlu0 %v7093, 99
    %v7112 = vpop.permute.xlu0 %7111
    %7113 = vrot.lane.b32.xlu0 %v7094, 99
    %v7114 = vpop.permute.xlu0 %7113
    %7115 = vrot.lane.b32.xlu0 %v7095, 99
    %v7116 = vpop.permute.xlu0 %7115
    %7117 = vrot.lane.b32.xlu0 %v7096, 99
    %v7118 = vpop.permute.xlu0 %7117
    %7119 = vrot.lane.b32.xlu0 %v7097, 99
    %v7120 = vpop.permute.xlu0 %7119
    %7121 = vrot.lane.b32.xlu0 %v7098, 99
    %v7122 = vpop.permute.xlu0 %7121
    %v7123 = vsel %vm280, %v7108, %v7110
    %v7124 = vsel %vm280, %v7110, %v7112
    %v7125 = vsel %vm280, %v7112, %v7114
    %v7126 = vsel %vm280, %v7114, %v7116
    %v7127 = vsel %vm280, %v7116, %v7118
    %v7128 = vsel %vm280, %v7118, %v7120
    %v7129 = vsel %vm280, %v7120, %v7122
    %v7137 = vadd.f32 %v7082, %v7123
    %v7138 = vadd.f32 %v7083, %v7124
    %v7139 = vadd.f32 %v7084, %v7125
    %v7140 = vadd.f32 %v7085, %v7126
    %v7141 = vadd.f32 %v7086, %v7127
    %v7142 = vadd.f32 %v7087, %v7128
    %v7143 = vadd.f32 %v7088, %v7129
    %s7144 = sld [smem:[#allocation2 + $0x485]]
    %v7145 = vstv %s7144
    %v7146 = vmul.f32 %v61, %v7145
    %v7147 = vmul.f32 %v62, %v7145
    %v7148 = vmul.f32 %v63, %v7145
    %v7149 = vmul.f32 %v64, %v7145
    %v7150 = vmul.f32 %v65, %v7145
    %v7151 = vmul.f32 %v66, %v7145
    %v7152 = vmul.f32 %v67, %v7145
    %v7153 = vmul.f32 %v68, %v7145
    %7162 = vrot.lane.b32.xlu0 %v7146, 98
    %v7163 = vpop.permute.xlu0 %7162
    %7164 = vrot.lane.b32.xlu0 %v7147, 98
    %v7165 = vpop.permute.xlu0 %7164
    %7166 = vrot.lane.b32.xlu0 %v7148, 98
    %v7167 = vpop.permute.xlu0 %7166
    %7168 = vrot.lane.b32.xlu0 %v7149, 98
    %v7169 = vpop.permute.xlu0 %7168
    %7170 = vrot.lane.b32.xlu0 %v7150, 98
    %v7171 = vpop.permute.xlu0 %7170
    %7172 = vrot.lane.b32.xlu0 %v7151, 98
    %v7173 = vpop.permute.xlu0 %7172
    %7174 = vrot.lane.b32.xlu0 %v7152, 98
    %v7175 = vpop.permute.xlu0 %7174
    %7176 = vrot.lane.b32.xlu0 %v7153, 98
    %v7177 = vpop.permute.xlu0 %7176
    %v7178 = vsel %vm336, %v7163, %v7165
    %v7179 = vsel %vm336, %v7165, %v7167
    %v7180 = vsel %vm336, %v7167, %v7169
    %v7181 = vsel %vm336, %v7169, %v7171
    %v7182 = vsel %vm336, %v7171, %v7173
    %v7183 = vsel %vm336, %v7173, %v7175
    %v7184 = vsel %vm336, %v7175, %v7177
    %v7192 = vadd.f32 %v7137, %v7178
    %v7193 = vadd.f32 %v7138, %v7179
    %v7194 = vadd.f32 %v7139, %v7180
    %v7195 = vadd.f32 %v7140, %v7181
    %v7196 = vadd.f32 %v7141, %v7182
    %v7197 = vadd.f32 %v7142, %v7183
    %v7198 = vadd.f32 %v7143, %v7184
    %s7199 = sld [smem:[#allocation2 + $0x486]]
    %v7200 = vstv %s7199
    %v7201 = vmul.f32 %v61, %v7200
    %v7202 = vmul.f32 %v62, %v7200
    %v7203 = vmul.f32 %v63, %v7200
    %v7204 = vmul.f32 %v64, %v7200
    %v7205 = vmul.f32 %v65, %v7200
    %v7206 = vmul.f32 %v66, %v7200
    %v7207 = vmul.f32 %v67, %v7200
    %v7208 = vmul.f32 %v68, %v7200
    %7217 = vrot.lane.b32.xlu0 %v7201, 72
    %v7218 = vpop.permute.xlu0 %7217
    %7219 = vrot.lane.b32.xlu0 %v7202, 72
    %v7220 = vpop.permute.xlu0 %7219
    %7221 = vrot.lane.b32.xlu0 %v7203, 72
    %v7222 = vpop.permute.xlu0 %7221
    %7223 = vrot.lane.b32.xlu0 %v7204, 72
    %v7224 = vpop.permute.xlu0 %7223
    %7225 = vrot.lane.b32.xlu0 %v7205, 72
    %v7226 = vpop.permute.xlu0 %7225
    %7227 = vrot.lane.b32.xlu0 %v7206, 72
    %v7228 = vpop.permute.xlu0 %7227
    %7229 = vrot.lane.b32.xlu0 %v7207, 72
    %v7230 = vpop.permute.xlu0 %7229
    %7231 = vrot.lane.b32.xlu0 %v7208, 72
    %v7232 = vpop.permute.xlu0 %7231
    %v7233 = vsel %vm392, %v7218, %v7220
    %v7234 = vsel %vm392, %v7220, %v7222
    %v7235 = vsel %vm392, %v7222, %v7224
    %v7236 = vsel %vm392, %v7224, %v7226
    %v7237 = vsel %vm392, %v7226, %v7228
    %v7238 = vsel %vm392, %v7228, %v7230
    %v7239 = vsel %vm392, %v7230, %v7232
    %v7247 = vadd.f32 %v7192, %v7233
    %v7248 = vadd.f32 %v7193, %v7234
    %v7249 = vadd.f32 %v7194, %v7235
    %v7250 = vadd.f32 %v7195, %v7236
    %v7251 = vadd.f32 %v7196, %v7237
    %v7252 = vadd.f32 %v7197, %v7238
    %v7253 = vadd.f32 %v7198, %v7239
    %s7254 = sld [smem:[#allocation2 + $0x487]]
    %v7255 = vstv %s7254
    %v7256 = vmul.f32 %v61, %v7255
    %v7257 = vmul.f32 %v62, %v7255
    %v7258 = vmul.f32 %v63, %v7255
    %v7259 = vmul.f32 %v64, %v7255
    %v7260 = vmul.f32 %v65, %v7255
    %v7261 = vmul.f32 %v66, %v7255
    %v7262 = vmul.f32 %v67, %v7255
    %v7263 = vmul.f32 %v68, %v7255
    %7272 = vrot.lane.b32.xlu0 %v7256, 71
    %v7273 = vpop.permute.xlu0 %7272
    %7274 = vrot.lane.b32.xlu0 %v7257, 71
    %v7275 = vpop.permute.xlu0 %7274
    %7276 = vrot.lane.b32.xlu0 %v7258, 71
    %v7277 = vpop.permute.xlu0 %7276
    %7278 = vrot.lane.b32.xlu0 %v7259, 71
    %v7279 = vpop.permute.xlu0 %7278
    %7280 = vrot.lane.b32.xlu0 %v7260, 71
    %v7281 = vpop.permute.xlu0 %7280
    %7282 = vrot.lane.b32.xlu0 %v7261, 71
    %v7283 = vpop.permute.xlu0 %7282
    %7284 = vrot.lane.b32.xlu0 %v7262, 71
    %v7285 = vpop.permute.xlu0 %7284
    %7286 = vrot.lane.b32.xlu0 %v7263, 71
    %v7287 = vpop.permute.xlu0 %7286
    %v7288 = vsel %vm448, %v7273, %v7275
    %v7289 = vsel %vm448, %v7275, %v7277
    %v7290 = vsel %vm448, %v7277, %v7279
    %v7291 = vsel %vm448, %v7279, %v7281
    %v7292 = vsel %vm448, %v7281, %v7283
    %v7293 = vsel %vm448, %v7283, %v7285
    %v7294 = vsel %vm448, %v7285, %v7287
    %v7302 = vadd.f32 %v7247, %v7288
    %v7303 = vadd.f32 %v7248, %v7289
    %v7304 = vadd.f32 %v7249, %v7290
    %v7305 = vadd.f32 %v7250, %v7291
    %v7306 = vadd.f32 %v7251, %v7292
    %v7307 = vadd.f32 %v7252, %v7293
    %v7308 = vadd.f32 %v7253, %v7294
    %s7309 = sld [smem:[#allocation2 + $0x488]]
    %v7310 = vstv %s7309
    %v7311 = vmul.f32 %v61, %v7310
    %v7312 = vmul.f32 %v62, %v7310
    %v7313 = vmul.f32 %v63, %v7310
    %v7314 = vmul.f32 %v64, %v7310
    %v7315 = vmul.f32 %v65, %v7310
    %v7316 = vmul.f32 %v66, %v7310
    %v7317 = vmul.f32 %v67, %v7310
    %v7318 = vmul.f32 %v68, %v7310
    %7327 = vrot.lane.b32.xlu0 %v7311, 70
    %v7328 = vpop.permute.xlu0 %7327
    %7329 = vrot.lane.b32.xlu0 %v7312, 70
    %v7330 = vpop.permute.xlu0 %7329
    %7331 = vrot.lane.b32.xlu0 %v7313, 70
    %v7332 = vpop.permute.xlu0 %7331
    %7333 = vrot.lane.b32.xlu0 %v7314, 70
    %v7334 = vpop.permute.xlu0 %7333
    %7335 = vrot.lane.b32.xlu0 %v7315, 70
    %v7336 = vpop.permute.xlu0 %7335
    %7337 = vrot.lane.b32.xlu0 %v7316, 70
    %v7338 = vpop.permute.xlu0 %7337
    %7339 = vrot.lane.b32.xlu0 %v7317, 70
    %v7340 = vpop.permute.xlu0 %7339
    %7341 = vrot.lane.b32.xlu0 %v7318, 70
    %v7342 = vpop.permute.xlu0 %7341
    %v7343 = vsel %vm504, %v7328, %v7330
    %v7344 = vsel %vm504, %v7330, %v7332
    %v7345 = vsel %vm504, %v7332, %v7334
    %v7346 = vsel %vm504, %v7334, %v7336
    %v7347 = vsel %vm504, %v7336, %v7338
    %v7348 = vsel %vm504, %v7338, %v7340
    %v7349 = vsel %vm504, %v7340, %v7342
    %v7357 = vadd.f32 %v7302, %v7343
    %v7358 = vadd.f32 %v7303, %v7344
    %v7359 = vadd.f32 %v7304, %v7345
    %v7360 = vadd.f32 %v7305, %v7346
    %v7361 = vadd.f32 %v7306, %v7347
    %v7362 = vadd.f32 %v7307, %v7348
    %v7363 = vadd.f32 %v7308, %v7349
    %s7364 = sld [smem:[#allocation5 + $0x9]]
    %v7365 = vstv %s7364
    %v7366 = vadd.f32 %v7357, %v7365
    %v7367 = vadd.f32 %v7358, %v7365
    %v7368 = vadd.f32 %v7359, %v7365
    %v7369 = vadd.f32 %v7360, %v7365
    %v7370 = vadd.f32 %v7361, %v7365
    %v7371 = vadd.f32 %v7362, %v7365
    %v7372 = vadd.f32 %v7363, %v7365
    %v7373 = vmax.f32 %v7366, 0.0
    %v7374 = vmax.f32 %v7367, 0.0
    %v7375 = vmax.f32 %v7368, 0.0
    %v7376 = vmax.f32 %v7369, 0.0
    %v7377 = vmax.f32 %v7370, 0.0
    %v7378 = vmax.f32 %v7371, 0.0
    %v7379 = vmax.f32 %v7372, 0.0
    %v7380 = vld [vmem:[#allocation7 + $0x1f8] sm:$0xff]
    %v7381 = vld [vmem:[#allocation7 + $0x200] sm:$0xff]
    %v7382 = vld [vmem:[#allocation7 + $0x208] sm:$0xff]
    %v7383 = vld [vmem:[#allocation7 + $0x210] sm:$0xff]
    %v7384 = vld [vmem:[#allocation7 + $0x218] sm:$0xff]
    %v7385 = vld [vmem:[#allocation7 + $0x220] sm:$0xff]
    %v7386 = vld [vmem:[#allocation7 + $0x228] sm:$0xff]
    %v7387 = vld [vmem:[#allocation7 + $0x578] sm:$0x3]
    %v7388 = vld [vmem:[#allocation7 + $0x580] sm:$0x3]
    %v7389 = vld [vmem:[#allocation7 + $0x588] sm:$0x3]
    %v7390 = vld [vmem:[#allocation7 + $0x590] sm:$0x3]
    %v7391 = vld [vmem:[#allocation7 + $0x598] sm:$0x3]
    %v7392 = vld [vmem:[#allocation7 + $0x5a0] sm:$0x3]
    %v7393 = vld [vmem:[#allocation7 + $0x5a8] sm:$0x3]
    %7394 = vmatprep.subr.mxu0 %v7381
    %7395 = vmatpush1.xpose.msra.mxu0 %v7380
    %7396 = vmatprep.subr.mxu0 %v7388
    %7397 = vmatpush1.xpose.msra.mxu0 %v7387
    %7398 = vmatprep.subr.mxu0 0.0
    %7399 = vmatpush1.xpose.msra.mxu0 0.0
    %7400 = vmatprep.subr.mxu0 0.0
    %7401 = vmatpush1.xpose.msra.mxu0 0.0
    %7402 = vmatprep.subr.mxu0 0.0
    %7403 = vmatpush1.xpose.msra.mxu0 0.0
    %7404 = vmatprep.subr.mxu0 0.0
    %7405 = vmatpush1.xpose.msra.mxu0 0.0
    %7406 = vmatprep.subr.mxu0 0.0
    %7407 = vmatpush1.xpose.msra.mxu0 0.0
    %7408 = vmatprep.subr.mxu0 0.0
    %7409 = vmatpush1.xpose.msra.mxu0 0.0
    %7410 = vmatprep.subr.mxu0 0.0
    %7411 = vmatpush1.xpose.msra.mxu0 0.0
    %7412 = vmatprep.subr.mxu0 0.0
    %7413 = vmatpush1.xpose.msra.mxu0 0.0
    %7414 = vmatprep.subr.mxu0 0.0
    %7415 = vmatpush1.xpose.msra.mxu0 0.0
    %7416 = vmatprep.subr.mxu0 0.0
    %7417 = vmatpush1.xpose.msra.mxu0 0.0
    %7418 = vmatprep.subr.mxu0 0.0
    %7419 = vmatpush1.xpose.msra.mxu0 0.0
    %7420 = vmatprep.subr.mxu0 0.0
    %7421 = vmatpush1.xpose.msra.mxu0 0.0
    %7422 = vmatprep.subr.mxu0 0.0
    %7423 = vmatpush1.xpose.msra.mxu0 0.0
    %7424 = vmatprep.subr.mxu0 0.0
    %7425 = vmatpush1.xpose.msra.mxu0 0.0
    %7426 = vmatprep.subr.mxu0 0.0
    %7427 = vmatpush1.xpose.msra.mxu0 0.0
    %7428 = vmatprep.subr.mxu0 0.0
    %7429 = vmatpush1.xpose.msra.mxu0 0.0
    %7430 = vmatprep.subr.mxu0 0.0
    %7431 = vmatpush1.xpose.msra.mxu0 0.0
    %7432 = vmatprep.subr.mxu0 0.0
    %7433 = vmatpush1.xpose.msra.mxu0 0.0
    %7434 = vmatprep.subr.mxu0 0.0
    %7435 = vmatpush1.xpose.msra.mxu0 0.0
    %7436 = vmatprep.subr.mxu0 0.0
    %7437 = vmatpush1.xpose.msra.mxu0 0.0
    %7438 = vmatprep.subr.mxu0 0.0
    %7439 = vmatpush1.xpose.msra.mxu0 0.0
    %7440 = vmatprep.subr.mxu0 0.0
    %7441 = vmatpush1.xpose.msra.mxu0 0.0
    %7442 = vmatprep.subr.mxu0 0.0
    %7443 = vmatpush1.xpose.msra.mxu0 0.0
    %7444 = vmatprep.subr.mxu0 0.0
    %7445 = vmatpush1.xpose.msra.mxu0 0.0
    %7446 = vmatprep.subr.mxu0 0.0
    %7447 = vmatpush1.xpose.msra.mxu0 0.0
    %7448 = vmatprep.subr.mxu0 0.0
    %7449 = vmatpush1.xpose.msra.mxu0 0.0
    %7450 = vmatprep.subr.mxu0 0.0
    %7451 = vmatpush1.xpose.msra.mxu0 0.0
    %7452 = vmatprep.subr.mxu0 0.0
    %7453 = vmatpush1.xpose.msra.mxu0 0.0
    %7454 = vmatprep.subr.mxu0 0.0
    %7455 = vmatpush1.xpose.msra.mxu0 0.0
    %7456 = vmatprep.subr.mxu0 0.0
    %7457 = vmatpush1.xpose.msra.mxu0 0.0
    %7458 = vmatprep.mubr.f32.mxu0 %v7374
    %7459 = vmatmul.mubr.f32.gmra.mrb[0].mxu0 %v7373
    %v7460 = vpop.f32.mrb[0].mxu0
    %v7461 = vadd.f32 0.0, %v7460
    %v7462 = vpop.f32.mrb[0].mxu0
    %7463 = vdwg.mxu0
    %7464 = vmatprep.subr.mxu0 %v7383
    %7465 = vmatpush1.xpose.msra.mxu0 %v7382
    %7466 = vmatprep.subr.mxu0 %v7390
    %7467 = vmatpush1.xpose.msra.mxu0 %v7389
    %7468 = vmatprep.subr.mxu0 0.0
    %7469 = vmatpush1.xpose.msra.mxu0 0.0
    %7470 = vmatprep.subr.mxu0 0.0
    %7471 = vmatpush1.xpose.msra.mxu0 0.0
    %7472 = vmatprep.subr.mxu0 0.0
    %7473 = vmatpush1.xpose.msra.mxu0 0.0
    %7474 = vmatprep.subr.mxu0 0.0
    %7475 = vmatpush1.xpose.msra.mxu0 0.0
    %7476 = vmatprep.subr.mxu0 0.0
    %7477 = vmatpush1.xpose.msra.mxu0 0.0
    %7478 = vmatprep.subr.mxu0 0.0
    %7479 = vmatpush1.xpose.msra.mxu0 0.0
    %7480 = vmatprep.subr.mxu0 0.0
    %7481 = vmatpush1.xpose.msra.mxu0 0.0
    %7482 = vmatprep.subr.mxu0 0.0
    %7483 = vmatpush1.xpose.msra.mxu0 0.0
    %7484 = vmatprep.subr.mxu0 0.0
    %7485 = vmatpush1.xpose.msra.mxu0 0.0
    %7486 = vmatprep.subr.mxu0 0.0
    %7487 = vmatpush1.xpose.msra.mxu0 0.0
    %7488 = vmatprep.subr.mxu0 0.0
    %7489 = vmatpush1.xpose.msra.mxu0 0.0
    %7490 = vmatprep.subr.mxu0 0.0
    %7491 = vmatpush1.xpose.msra.mxu0 0.0
    %7492 = vmatprep.subr.mxu0 0.0
    %7493 = vmatpush1.xpose.msra.mxu0 0.0
    %7494 = vmatprep.subr.mxu0 0.0
    %7495 = vmatpush1.xpose.msra.mxu0 0.0
    %7496 = vmatprep.subr.mxu0 0.0
    %7497 = vmatpush1.xpose.msra.mxu0 0.0
    %7498 = vmatprep.subr.mxu0 0.0
    %7499 = vmatpush1.xpose.msra.mxu0 0.0
    %7500 = vmatprep.subr.mxu0 0.0
    %7501 = vmatpush1.xpose.msra.mxu0 0.0
    %7502 = vmatprep.subr.mxu0 0.0
    %7503 = vmatpush1.xpose.msra.mxu0 0.0
    %7504 = vmatprep.subr.mxu0 0.0
    %7505 = vmatpush1.xpose.msra.mxu0 0.0
    %7506 = vmatprep.subr.mxu0 0.0
    %7507 = vmatpush1.xpose.msra.mxu0 0.0
    %7508 = vmatprep.subr.mxu0 0.0
    %7509 = vmatpush1.xpose.msra.mxu0 0.0
    %7510 = vmatprep.subr.mxu0 0.0
    %7511 = vmatpush1.xpose.msra.mxu0 0.0
    %7512 = vmatprep.subr.mxu0 0.0
    %7513 = vmatpush1.xpose.msra.mxu0 0.0
    %7514 = vmatprep.subr.mxu0 0.0
    %7515 = vmatpush1.xpose.msra.mxu0 0.0
    %7516 = vmatprep.subr.mxu0 0.0
    %7517 = vmatpush1.xpose.msra.mxu0 0.0
    %7518 = vmatprep.subr.mxu0 0.0
    %7519 = vmatpush1.xpose.msra.mxu0 0.0
    %7520 = vmatprep.subr.mxu0 0.0
    %7521 = vmatpush1.xpose.msra.mxu0 0.0
    %7522 = vmatprep.subr.mxu0 0.0
    %7523 = vmatpush1.xpose.msra.mxu0 0.0
    %7524 = vmatprep.subr.mxu0 0.0
    %7525 = vmatpush1.xpose.msra.mxu0 0.0
    %7526 = vmatprep.subr.mxu0 0.0
    %7527 = vmatpush1.xpose.msra.mxu0 0.0
    %7528 = vmatprep.mubr.f32.mxu0 %v7376
    %7529 = vmatmul.mubr.f32.gmra.mrb[0].mxu0 %v7375
    %v7530 = vpop.f32.mrb[0].mxu0
    %v7531 = vadd.f32 %v7461, %v7530
    %v7532 = vpop.f32.mrb[0].mxu0
    %7533 = vdwg.mxu0
    %7534 = vmatprep.subr.mxu0 %v7385
    %7535 = vmatpush1.xpose.msra.mxu0 %v7384
    %7536 = vmatprep.subr.mxu0 %v7392
    %7537 = vmatpush1.xpose.msra.mxu0 %v7391
    %7538 = vmatprep.subr.mxu0 0.0
    %7539 = vmatpush1.xpose.msra.mxu0 0.0
    %7540 = vmatprep.subr.mxu0 0.0
    %7541 = vmatpush1.xpose.msra.mxu0 0.0
    %7542 = vmatprep.subr.mxu0 0.0
    %7543 = vmatpush1.xpose.msra.mxu0 0.0
    %7544 = vmatprep.subr.mxu0 0.0
    %7545 = vmatpush1.xpose.msra.mxu0 0.0
    %7546 = vmatprep.subr.mxu0 0.0
    %7547 = vmatpush1.xpose.msra.mxu0 0.0
    %7548 = vmatprep.subr.mxu0 0.0
    %7549 = vmatpush1.xpose.msra.mxu0 0.0
    %7550 = vmatprep.subr.mxu0 0.0
    %7551 = vmatpush1.xpose.msra.mxu0 0.0
    %7552 = vmatprep.subr.mxu0 0.0
    %7553 = vmatpush1.xpose.msra.mxu0 0.0
    %7554 = vmatprep.subr.mxu0 0.0
    %7555 = vmatpush1.xpose.msra.mxu0 0.0
    %7556 = vmatprep.subr.mxu0 0.0
    %7557 = vmatpush1.xpose.msra.mxu0 0.0
    %7558 = vmatprep.subr.mxu0 0.0
    %7559 = vmatpush1.xpose.msra.mxu0 0.0
    %7560 = vmatprep.subr.mxu0 0.0
    %7561 = vmatpush1.xpose.msra.mxu0 0.0
    %7562 = vmatprep.subr.mxu0 0.0
    %7563 = vmatpush1.xpose.msra.mxu0 0.0
    %7564 = vmatprep.subr.mxu0 0.0
    %7565 = vmatpush1.xpose.msra.mxu0 0.0
    %7566 = vmatprep.subr.mxu0 0.0
    %7567 = vmatpush1.xpose.msra.mxu0 0.0
    %7568 = vmatprep.subr.mxu0 0.0
    %7569 = vmatpush1.xpose.msra.mxu0 0.0
    %7570 = vmatprep.subr.mxu0 0.0
    %7571 = vmatpush1.xpose.msra.mxu0 0.0
    %7572 = vmatprep.subr.mxu0 0.0
    %7573 = vmatpush1.xpose.msra.mxu0 0.0
    %7574 = vmatprep.subr.mxu0 0.0
    %7575 = vmatpush1.xpose.msra.mxu0 0.0
    %7576 = vmatprep.subr.mxu0 0.0
    %7577 = vmatpush1.xpose.msra.mxu0 0.0
    %7578 = vmatprep.subr.mxu0 0.0
    %7579 = vmatpush1.xpose.msra.mxu0 0.0
    %7580 = vmatprep.subr.mxu0 0.0
    %7581 = vmatpush1.xpose.msra.mxu0 0.0
    %7582 = vmatprep.subr.mxu0 0.0
    %7583 = vmatpush1.xpose.msra.mxu0 0.0
    %7584 = vmatprep.subr.mxu0 0.0
    %7585 = vmatpush1.xpose.msra.mxu0 0.0
    %7586 = vmatprep.subr.mxu0 0.0
    %7587 = vmatpush1.xpose.msra.mxu0 0.0
    %7588 = vmatprep.subr.mxu0 0.0
    %7589 = vmatpush1.xpose.msra.mxu0 0.0
    %7590 = vmatprep.subr.mxu0 0.0
    %7591 = vmatpush1.xpose.msra.mxu0 0.0
    %7592 = vmatprep.subr.mxu0 0.0
    %7593 = vmatpush1.xpose.msra.mxu0 0.0
    %7594 = vmatprep.subr.mxu0 0.0
    %7595 = vmatpush1.xpose.msra.mxu0 0.0
    %7596 = vmatprep.subr.mxu0 0.0
    %7597 = vmatpush1.xpose.msra.mxu0 0.0
    %7598 = vmatprep.mubr.f32.mxu0 %v7378
    %7599 = vmatmul.mubr.f32.gmra.mrb[0].mxu0 %v7377
    %v7600 = vpop.f32.mrb[0].mxu0
    %v7601 = vadd.f32 %v7531, %v7600
    %v7602 = vpop.f32.mrb[0].mxu0
    %7603 = vdwg.mxu0
    %7604 = vmatprep.subr.mxu0 0.0
    %7605 = vmatpush1.xpose.msra.mxu0 %v7386
    %7606 = vmatprep.subr.mxu0 0.0
    %7607 = vmatpush1.xpose.msra.mxu0 %v7393
    %7608 = vmatprep.subr.mxu0 0.0
    %7609 = vmatpush1.xpose.msra.mxu0 0.0
    %7610 = vmatprep.subr.mxu0 0.0
    %7611 = vmatpush1.xpose.msra.mxu0 0.0
    %7612 = vmatprep.subr.mxu0 0.0
    %7613 = vmatpush1.xpose.msra.mxu0 0.0
    %7614 = vmatprep.subr.mxu0 0.0
    %7615 = vmatpush1.xpose.msra.mxu0 0.0
    %7616 = vmatprep.subr.mxu0 0.0
    %7617 = vmatpush1.xpose.msra.mxu0 0.0
    %7618 = vmatprep.subr.mxu0 0.0
    %7619 = vmatpush1.xpose.msra.mxu0 0.0
    %7620 = vmatprep.subr.mxu0 0.0
    %7621 = vmatpush1.xpose.msra.mxu0 0.0
    %7622 = vmatprep.subr.mxu0 0.0
    %7623 = vmatpush1.xpose.msra.mxu0 0.0
    %7624 = vmatprep.subr.mxu0 0.0
    %7625 = vmatpush1.xpose.msra.mxu0 0.0
    %7626 = vmatprep.subr.mxu0 0.0
    %7627 = vmatpush1.xpose.msra.mxu0 0.0
    %7628 = vmatprep.subr.mxu0 0.0
    %7629 = vmatpush1.xpose.msra.mxu0 0.0
    %7630 = vmatprep.subr.mxu0 0.0
    %7631 = vmatpush1.xpose.msra.mxu0 0.0
    %7632 = vmatprep.subr.mxu0 0.0
    %7633 = vmatpush1.xpose.msra.mxu0 0.0
    %7634 = vmatprep.subr.mxu0 0.0
    %7635 = vmatpush1.xpose.msra.mxu0 0.0
    %7636 = vmatprep.subr.mxu0 0.0
    %7637 = vmatpush1.xpose.msra.mxu0 0.0
    %7638 = vmatprep.subr.mxu0 0.0
    %7639 = vmatpush1.xpose.msra.mxu0 0.0
    %7640 = vmatprep.subr.mxu0 0.0
    %7641 = vmatpush1.xpose.msra.mxu0 0.0
    %7642 = vmatprep.subr.mxu0 0.0
    %7643 = vmatpush1.xpose.msra.mxu0 0.0
    %7644 = vmatprep.subr.mxu0 0.0
    %7645 = vmatpush1.xpose.msra.mxu0 0.0
    %7646 = vmatprep.subr.mxu0 0.0
    %7647 = vmatpush1.xpose.msra.mxu0 0.0
    %7648 = vmatprep.subr.mxu0 0.0
    %7649 = vmatpush1.xpose.msra.mxu0 0.0
    %7650 = vmatprep.subr.mxu0 0.0
    %7651 = vmatpush1.xpose.msra.mxu0 0.0
    %7652 = vmatprep.subr.mxu0 0.0
    %7653 = vmatpush1.xpose.msra.mxu0 0.0
    %7654 = vmatprep.subr.mxu0 0.0
    %7655 = vmatpush1.xpose.msra.mxu0 0.0
    %7656 = vmatprep.subr.mxu0 0.0
    %7657 = vmatpush1.xpose.msra.mxu0 0.0
    %7658 = vmatprep.subr.mxu0 0.0
    %7659 = vmatpush1.xpose.msra.mxu0 0.0
    %7660 = vmatprep.subr.mxu0 0.0
    %7661 = vmatpush1.xpose.msra.mxu0 0.0
    %7662 = vmatprep.subr.mxu0 0.0
    %7663 = vmatpush1.xpose.msra.mxu0 0.0
    %7664 = vmatprep.subr.mxu0 0.0
    %7665 = vmatpush1.xpose.msra.mxu0 0.0
    %7666 = vmatprep.subr.mxu0 0.0
    %7667 = vmatpush1.xpose.msra.mxu0 0.0
    %7668 = vmatprep.mubr.f32.mxu0 0.0
    %7669 = vmatmul.mubr.f32.gmra.mrb[0].mxu0 %v7379
    %v7670 = vpop.f32.mrb[0].mxu0
    %v7671 = vadd.f32 %v7601, %v7670
    %v7672 = vpop.f32.mrb[0].mxu0
    %7673 = vdwg.mxu0
    %v7674 = vadd.f32 %v6914, %v7671
    %s7675 = sld [smem:[#allocation2 + $0x500]]
    %v7676 = vstv %s7675
    %v7677 = vmul.f32 %v61, %v7676
    %v7678 = vmul.f32 %v62, %v7676
    %v7679 = vmul.f32 %v63, %v7676
    %v7680 = vmul.f32 %v64, %v7676
    %v7681 = vmul.f32 %v65, %v7676
    %v7682 = vmul.f32 %v66, %v7676
    %v7683 = vmul.f32 %v67, %v7676
    %s7684 = sld [smem:[#allocation2 + $0x501]]
    %v7685 = vstv %s7684
    %v7686 = vmul.f32 %v61, %v7685
    %v7687 = vmul.f32 %v62, %v7685
    %v7688 = vmul.f32 %v63, %v7685
    %v7689 = vmul.f32 %v64, %v7685
    %v7690 = vmul.f32 %v65, %v7685
    %v7691 = vmul.f32 %v66, %v7685
    %v7692 = vmul.f32 %v67, %v7685
    %v7693 = vmul.f32 %v68, %v7685
    %7702 = vrot.lane.b32.xlu0 %v7686, 127
    %v7703 = vpop.permute.xlu0 %7702
    %7704 = vrot.lane.b32.xlu0 %v7687, 127
    %v7705 = vpop.permute.xlu0 %7704
    %7706 = vrot.lane.b32.xlu0 %v7688, 127
    %v7707 = vpop.permute.xlu0 %7706
    %7708 = vrot.lane.b32.xlu0 %v7689, 127
    %v7709 = vpop.permute.xlu0 %7708
    %7710 = vrot.lane.b32.xlu0 %v7690, 127
    %v7711 = vpop.permute.xlu0 %7710
    %7712 = vrot.lane.b32.xlu0 %v7691, 127
    %v7713 = vpop.permute.xlu0 %7712
    %7714 = vrot.lane.b32.xlu0 %v7692, 127
    %v7715 = vpop.permute.xlu0 %7714
    %7716 = vrot.lane.b32.xlu0 %v7693, 127
    %v7717 = vpop.permute.xlu0 %7716
    %v7718 = vsel %vm112, %v7703, %v7705
    %v7719 = vsel %vm112, %v7705, %v7707
    %v7720 = vsel %vm112, %v7707, %v7709
    %v7721 = vsel %vm112, %v7709, %v7711
    %v7722 = vsel %vm112, %v7711, %v7713
    %v7723 = vsel %vm112, %v7713, %v7715
    %v7724 = vsel %vm112, %v7715, %v7717
    %v7732 = vadd.f32 %v7677, %v7718
    %v7733 = vadd.f32 %v7678, %v7719
    %v7734 = vadd.f32 %v7679, %v7720
    %v7735 = vadd.f32 %v7680, %v7721
    %v7736 = vadd.f32 %v7681, %v7722
    %v7737 = vadd.f32 %v7682, %v7723
    %v7738 = vadd.f32 %v7683, %v7724
    %s7739 = sld [smem:[#allocation2 + $0x502]]
    %v7740 = vstv %s7739
    %v7741 = vmul.f32 %v61, %v7740
    %v7742 = vmul.f32 %v62, %v7740
    %v7743 = vmul.f32 %v63, %v7740
    %v7744 = vmul.f32 %v64, %v7740
    %v7745 = vmul.f32 %v65, %v7740
    %v7746 = vmul.f32 %v66, %v7740
    %v7747 = vmul.f32 %v67, %v7740
    %v7748 = vmul.f32 %v68, %v7740
    %7757 = vrot.lane.b32.xlu0 %v7741, 126
    %v7758 = vpop.permute.xlu0 %7757
    %7759 = vrot.lane.b32.xlu0 %v7742, 126
    %v7760 = vpop.permute.xlu0 %7759
    %7761 = vrot.lane.b32.xlu0 %v7743, 126
    %v7762 = vpop.permute.xlu0 %7761
    %7763 = vrot.lane.b32.xlu0 %v7744, 126
    %v7764 = vpop.permute.xlu0 %7763
    %7765 = vrot.lane.b32.xlu0 %v7745, 126
    %v7766 = vpop.permute.xlu0 %7765
    %7767 = vrot.lane.b32.xlu0 %v7746, 126
    %v7768 = vpop.permute.xlu0 %7767
    %7769 = vrot.lane.b32.xlu0 %v7747, 126
    %v7770 = vpop.permute.xlu0 %7769
    %7771 = vrot.lane.b32.xlu0 %v7748, 126
    %v7772 = vpop.permute.xlu0 %7771
    %v7773 = vsel %vm168, %v7758, %v7760
    %v7774 = vsel %vm168, %v7760, %v7762
    %v7775 = vsel %vm168, %v7762, %v7764
    %v7776 = vsel %vm168, %v7764, %v7766
    %v7777 = vsel %vm168, %v7766, %v7768
    %v7778 = vsel %vm168, %v7768, %v7770
    %v7779 = vsel %vm168, %v7770, %v7772
    %v7787 = vadd.f32 %v7732, %v7773
    %v7788 = vadd.f32 %v7733, %v7774
    %v7789 = vadd.f32 %v7734, %v7775
    %v7790 = vadd.f32 %v7735, %v7776
    %v7791 = vadd.f32 %v7736, %v7777
    %v7792 = vadd.f32 %v7737, %v7778
    %v7793 = vadd.f32 %v7738, %v7779
    %s7794 = sld [smem:[#allocation2 + $0x503]]
    %v7795 = vstv %s7794
    %v7796 = vmul.f32 %v61, %v7795
    %v7797 = vmul.f32 %v62, %v7795
    %v7798 = vmul.f32 %v63, %v7795
    %v7799 = vmul.f32 %v64, %v7795
    %v7800 = vmul.f32 %v65, %v7795
    %v7801 = vmul.f32 %v66, %v7795
    %v7802 = vmul.f32 %v67, %v7795
    %v7803 = vmul.f32 %v68, %v7795
    %7812 = vrot.lane.b32.xlu0 %v7796, 100
    %v7813 = vpop.permute.xlu0 %7812
    %7814 = vrot.lane.b32.xlu0 %v7797, 100
    %v7815 = vpop.permute.xlu0 %7814
    %7816 = vrot.lane.b32.xlu0 %v7798, 100
    %v7817 = vpop.permute.xlu0 %7816
    %7818 = vrot.lane.b32.xlu0 %v7799, 100
    %v7819 = vpop.permute.xlu0 %7818
    %7820 = vrot.lane.b32.xlu0 %v7800, 100
    %v7821 = vpop.permute.xlu0 %7820
    %7822 = vrot.lane.b32.xlu0 %v7801, 100
    %v7823 = vpop.permute.xlu0 %7822
    %7824 = vrot.lane.b32.xlu0 %v7802, 100
    %v7825 = vpop.permute.xlu0 %7824
    %7826 = vrot.lane.b32.xlu0 %v7803, 100
    %v7827 = vpop.permute.xlu0 %7826
    %v7828 = vsel %vm224, %v7813, %v7815
    %v7829 = vsel %vm224, %v7815, %v7817
    %v7830 = vsel %vm224, %v7817, %v7819
    %v7831 = vsel %vm224, %v7819, %v7821
    %v7832 = vsel %vm224, %v7821, %v7823
    %v7833 = vsel %vm224, %v7823, %v7825
    %v7834 = vsel %vm224, %v7825, %v7827
    %v7842 = vadd.f32 %v7787, %v7828
    %v7843 = vadd.f32 %v7788, %v7829
    %v7844 = vadd.f32 %v7789, %v7830
    %v7845 = vadd.f32 %v7790, %v7831
    %v7846 = vadd.f32 %v7791, %v7832
    %v7847 = vadd.f32 %v7792, %v7833
    %v7848 = vadd.f32 %v7793, %v7834
    %s7849 = sld [smem:[#allocation2 + $0x504]]
    %v7850 = vstv %s7849
    %v7851 = vmul.f32 %v61, %v7850
    %v7852 = vmul.f32 %v62, %v7850
    %v7853 = vmul.f32 %v63, %v7850
    %v7854 = vmul.f32 %v64, %v7850
    %v7855 = vmul.f32 %v65, %v7850
    %v7856 = vmul.f32 %v66, %v7850
    %v7857 = vmul.f32 %v67, %v7850
    %v7858 = vmul.f32 %v68, %v7850
    %7867 = vrot.lane.b32.xlu0 %v7851, 99
    %v7868 = vpop.permute.xlu0 %7867
    %7869 = vrot.lane.b32.xlu0 %v7852, 99
    %v7870 = vpop.permute.xlu0 %7869
    %7871 = vrot.lane.b32.xlu0 %v7853, 99
    %v7872 = vpop.permute.xlu0 %7871
    %7873 = vrot.lane.b32.xlu0 %v7854, 99
    %v7874 = vpop.permute.xlu0 %7873
    %7875 = vrot.lane.b32.xlu0 %v7855, 99
    %v7876 = vpop.permute.xlu0 %7875
    %7877 = vrot.lane.b32.xlu0 %v7856, 99
    %v7878 = vpop.permute.xlu0 %7877
    %7879 = vrot.lane.b32.xlu0 %v7857, 99
    %v7880 = vpop.permute.xlu0 %7879
    %7881 = vrot.lane.b32.xlu0 %v7858, 99
    %v7882 = vpop.permute.xlu0 %7881
    %v7883 = vsel %vm280, %v7868, %v7870
    %v7884 = vsel %vm280, %v7870, %v7872
    %v7885 = vsel %vm280, %v7872, %v7874
    %v7886 = vsel %vm280, %v7874, %v7876
    %v7887 = vsel %vm280, %v7876, %v7878
    %v7888 = vsel %vm280, %v7878, %v7880
    %v7889 = vsel %vm280, %v7880, %v7882
    %v7897 = vadd.f32 %v7842, %v7883
    %v7898 = vadd.f32 %v7843, %v7884
    %v7899 = vadd.f32 %v7844, %v7885
    %v7900 = vadd.f32 %v7845, %v7886
    %v7901 = vadd.f32 %v7846, %v7887
    %v7902 = vadd.f32 %v7847, %v7888
    %v7903 = vadd.f32 %v7848, %v7889
    %s7904 = sld [smem:[#allocation2 + $0x505]]
    %v7905 = vstv %s7904
    %v7906 = vmul.f32 %v61, %v7905
    %v7907 = vmul.f32 %v62, %v7905
    %v7908 = vmul.f32 %v63, %v7905
    %v7909 = vmul.f32 %v64, %v7905
    %v7910 = vmul.f32 %v65, %v7905
    %v7911 = vmul.f32 %v66, %v7905
    %v7912 = vmul.f32 %v67, %v7905
    %v7913 = vmul.f32 %v68, %v7905
    %7922 = vrot.lane.b32.xlu0 %v7906, 98
    %v7923 = vpop.permute.xlu0 %7922
    %7924 = vrot.lane.b32.xlu0 %v7907, 98
    %v7925 = vpop.permute.xlu0 %7924
    %7926 = vrot.lane.b32.xlu0 %v7908, 98
    %v7927 = vpop.permute.xlu0 %7926
    %7928 = vrot.lane.b32.xlu0 %v7909, 98
    %v7929 = vpop.permute.xlu0 %7928
    %7930 = vrot.lane.b32.xlu0 %v7910, 98
    %v7931 = vpop.permute.xlu0 %7930
    %7932 = vrot.lane.b32.xlu0 %v7911, 98
    %v7933 = vpop.permute.xlu0 %7932
    %7934 = vrot.lane.b32.xlu0 %v7912, 98
    %v7935 = vpop.permute.xlu0 %7934
    %7936 = vrot.lane.b32.xlu0 %v7913, 98
    %v7937 = vpop.permute.xlu0 %7936
    %v7938 = vsel %vm336, %v7923, %v7925
    %v7939 = vsel %vm336, %v7925, %v7927
    %v7940 = vsel %vm336, %v7927, %v7929
    %v7941 = vsel %vm336, %v7929, %v7931
    %v7942 = vsel %vm336, %v7931, %v7933
    %v7943 = vsel %vm336, %v7933, %v7935
    %v7944 = vsel %vm336, %v7935, %v7937
    %v7952 = vadd.f32 %v7897, %v7938
    %v7953 = vadd.f32 %v7898, %v7939
    %v7954 = vadd.f32 %v7899, %v7940
    %v7955 = vadd.f32 %v7900, %v7941
    %v7956 = vadd.f32 %v7901, %v7942
    %v7957 = vadd.f32 %v7902, %v7943
    %v7958 = vadd.f32 %v7903, %v7944
    %s7959 = sld [smem:[#allocation2 + $0x506]]
    %v7960 = vstv %s7959
    %v7961 = vmul.f32 %v61, %v7960
    %v7962 = vmul.f32 %v62, %v7960
    %v7963 = vmul.f32 %v63, %v7960
    %v7964 = vmul.f32 %v64, %v7960
    %v7965 = vmul.f32 %v65, %v7960
    %v7966 = vmul.f32 %v66, %v7960
    %v7967 = vmul.f32 %v67, %v7960
    %v7968 = vmul.f32 %v68, %v7960
    %7977 = vrot.lane.b32.xlu0 %v7961, 72
    %v7978 = vpop.permute.xlu0 %7977
    %7979 = vrot.lane.b32.xlu0 %v7962, 72
    %v7980 = vpop.permute.xlu0 %7979
    %7981 = vrot.lane.b32.xlu0 %v7963, 72
    %v7982 = vpop.permute.xlu0 %7981
    %7983 = vrot.lane.b32.xlu0 %v7964, 72
    %v7984 = vpop.permute.xlu0 %7983
    %7985 = vrot.lane.b32.xlu0 %v7965, 72
    %v7986 = vpop.permute.xlu0 %7985
    %7987 = vrot.lane.b32.xlu0 %v7966, 72
    %v7988 = vpop.permute.xlu0 %7987
    %7989 = vrot.lane.b32.xlu0 %v7967, 72
    %v7990 = vpop.permute.xlu0 %7989
    %7991 = vrot.lane.b32.xlu0 %v7968, 72
    %v7992 = vpop.permute.xlu0 %7991
    %v7993 = vsel %vm392, %v7978, %v7980
    %v7994 = vsel %vm392, %v7980, %v7982
    %v7995 = vsel %vm392, %v7982, %v7984
    %v7996 = vsel %vm392, %v7984, %v7986
    %v7997 = vsel %vm392, %v7986, %v7988
    %v7998 = vsel %vm392, %v7988, %v7990
    %v7999 = vsel %vm392, %v7990, %v7992
    %v8007 = vadd.f32 %v7952, %v7993
    %v8008 = vadd.f32 %v7953, %v7994
    %v8009 = vadd.f32 %v7954, %v7995
    %v8010 = vadd.f32 %v7955, %v7996
    %v8011 = vadd.f32 %v7956, %v7997
    %v8012 = vadd.f32 %v7957, %v7998
    %v8013 = vadd.f32 %v7958, %v7999
    %s8014 = sld [smem:[#allocation2 + $0x507]]
    %v8015 = vstv %s8014
    %v8016 = vmul.f32 %v61, %v8015
    %v8017 = vmul.f32 %v62, %v8015
    %v8018 = vmul.f32 %v63, %v8015
    %v8019 = vmul.f32 %v64, %v8015
    %v8020 = vmul.f32 %v65, %v8015
    %v8021 = vmul.f32 %v66, %v8015
    %v8022 = vmul.f32 %v67, %v8015
    %v8023 = vmul.f32 %v68, %v8015
    %8032 = vrot.lane.b32.xlu0 %v8016, 71
    %v8033 = vpop.permute.xlu0 %8032
    %8034 = vrot.lane.b32.xlu0 %v8017, 71
    %v8035 = vpop.permute.xlu0 %8034
    %8036 = vrot.lane.b32.xlu0 %v8018, 71
    %v8037 = vpop.permute.xlu0 %8036
    %8038 = vrot.lane.b32.xlu0 %v8019, 71
    %v8039 = vpop.permute.xlu0 %8038
    %8040 = vrot.lane.b32.xlu0 %v8020, 71
    %v8041 = vpop.permute.xlu0 %8040
    %8042 = vrot.lane.b32.xlu0 %v8021, 71
    %v8043 = vpop.permute.xlu0 %8042
    %8044 = vrot.lane.b32.xlu0 %v8022, 71
    %v8045 = vpop.permute.xlu0 %8044
    %8046 = vrot.lane.b32.xlu0 %v8023, 71
    %v8047 = vpop.permute.xlu0 %8046
    %v8048 = vsel %vm448, %v8033, %v8035
    %v8049 = vsel %vm448, %v8035, %v8037
    %v8050 = vsel %vm448, %v8037, %v8039
    %v8051 = vsel %vm448, %v8039, %v8041
    %v8052 = vsel %vm448, %v8041, %v8043
    %v8053 = vsel %vm448, %v8043, %v8045
    %v8054 = vsel %vm448, %v8045, %v8047
    %v8062 = vadd.f32 %v8007, %v8048
    %v8063 = vadd.f32 %v8008, %v8049
    %v8064 = vadd.f32 %v8009, %v8050
    %v8065 = vadd.f32 %v8010, %v8051
    %v8066 = vadd.f32 %v8011, %v8052
    %v8067 = vadd.f32 %v8012, %v8053
    %v8068 = vadd.f32 %v8013, %v8054
    %s8069 = sld [smem:[#allocation2 + $0x508]]
    %v8070 = vstv %s8069
    %v8071 = vmul.f32 %v61, %v8070
    %v8072 = vmul.f32 %v62, %v8070
    %v8073 = vmul.f32 %v63, %v8070
    %v8074 = vmul.f32 %v64, %v8070
    %v8075 = vmul.f32 %v65, %v8070
    %v8076 = vmul.f32 %v66, %v8070
    %v8077 = vmul.f32 %v67, %v8070
    %v8078 = vmul.f32 %v68, %v8070
    %8087 = vrot.lane.b32.xlu0 %v8071, 70
    %v8088 = vpop.permute.xlu0 %8087
    %8089 = vrot.lane.b32.xlu0 %v8072, 70
    %v8090 = vpop.permute.xlu0 %8089
    %8091 = vrot.lane.b32.xlu0 %v8073, 70
    %v8092 = vpop.permute.xlu0 %8091
    %8093 = vrot.lane.b32.xlu0 %v8074, 70
    %v8094 = vpop.permute.xlu0 %8093
    %8095 = vrot.lane.b32.xlu0 %v8075, 70
    %v8096 = vpop.permute.xlu0 %8095
    %8097 = vrot.lane.b32.xlu0 %v8076, 70
    %v8098 = vpop.permute.xlu0 %8097
    %8099 = vrot.lane.b32.xlu0 %v8077, 70
    %v8100 = vpop.permute.xlu0 %8099
    %8101 = vrot.lane.b32.xlu0 %v8078, 70
    %v8102 = vpop.permute.xlu0 %8101
    %v8103 = vsel %vm504, %v8088, %v8090
    %v8104 = vsel %vm504, %v8090, %v8092
    %v8105 = vsel %vm504, %v8092, %v8094
    %v8106 = vsel %vm504, %v8094, %v8096
    %v8107 = vsel %vm504, %v8096, %v8098
    %v8108 = vsel %vm504, %v8098, %v8100
    %v8109 = vsel %vm504, %v8100, %v8102
    %v8117 = vadd.f32 %v8062, %v8103
    %v8118 = vadd.f32 %v8063, %v8104
    %v8119 = vadd.f32 %v8064, %v8105
    %v8120 = vadd.f32 %v8065, %v8106
    %v8121 = vadd.f32 %v8066, %v8107
    %v8122 = vadd.f32 %v8067, %v8108
    %v8123 = vadd.f32 %v8068, %v8109
    %s8124 = sld [smem:[#allocation5 + $0xa]]
    %v8125 = vstv %s8124
    %v8126 = vadd.f32 %v8117, %v8125
    %v8127 = vadd.f32 %v8118, %v8125
    %v8128 = vadd.f32 %v8119, %v8125
    %v8129 = vadd.f32 %v8120, %v8125
    %v8130 = vadd.f32 %v8121, %v8125
    %v8131 = vadd.f32 %v8122, %v8125
    %v8132 = vadd.f32 %v8123, %v8125
    %v8133 = vmax.f32 %v8126, 0.0
    %v8134 = vmax.f32 %v8127, 0.0
    %v8135 = vmax.f32 %v8128, 0.0
    %v8136 = vmax.f32 %v8129, 0.0
    %v8137 = vmax.f32 %v8130, 0.0
    %v8138 = vmax.f32 %v8131, 0.0
    %v8139 = vmax.f32 %v8132, 0.0
    %v8140 = vld [vmem:[#allocation7 + $0x230] sm:$0xff]
    %v8141 = vld [vmem:[#allocation7 + $0x238] sm:$0xff]
    %v8142 = vld [vmem:[#allocation7 + $0x240] sm:$0xff]
    %v8143 = vld [vmem:[#allocation7 + $0x248] sm:$0xff]
    %v8144 = vld [vmem:[#allocation7 + $0x250] sm:$0xff]
    %v8145 = vld [vmem:[#allocation7 + $0x258] sm:$0xff]
    %v8146 = vld [vmem:[#allocation7 + $0x260] sm:$0xff]
    %v8147 = vld [vmem:[#allocation7 + $0x5b0] sm:$0x3]
    %v8148 = vld [vmem:[#allocation7 + $0x5b8] sm:$0x3]
    %v8149 = vld [vmem:[#allocation7 + $0x5c0] sm:$0x3]
    %v8150 = vld [vmem:[#allocation7 + $0x5c8] sm:$0x3]
    %v8151 = vld [vmem:[#allocation7 + $0x5d0] sm:$0x3]
    %v8152 = vld [vmem:[#allocation7 + $0x5d8] sm:$0x3]
    %v8153 = vld [vmem:[#allocation7 + $0x5e0] sm:$0x3]
    %8154 = vmatprep.subr.mxu0 %v8141
    %8155 = vmatpush1.xpose.msra.mxu0 %v8140
    %8156 = vmatprep.subr.mxu0 %v8148
    %8157 = vmatpush1.xpose.msra.mxu0 %v8147
    %8158 = vmatprep.subr.mxu0 0.0
    %8159 = vmatpush1.xpose.msra.mxu0 0.0
    %8160 = vmatprep.subr.mxu0 0.0
    %8161 = vmatpush1.xpose.msra.mxu0 0.0
    %8162 = vmatprep.subr.mxu0 0.0
    %8163 = vmatpush1.xpose.msra.mxu0 0.0
    %8164 = vmatprep.subr.mxu0 0.0
    %8165 = vmatpush1.xpose.msra.mxu0 0.0
    %8166 = vmatprep.subr.mxu0 0.0
    %8167 = vmatpush1.xpose.msra.mxu0 0.0
    %8168 = vmatprep.subr.mxu0 0.0
    %8169 = vmatpush1.xpose.msra.mxu0 0.0
    %8170 = vmatprep.subr.mxu0 0.0
    %8171 = vmatpush1.xpose.msra.mxu0 0.0
    %8172 = vmatprep.subr.mxu0 0.0
    %8173 = vmatpush1.xpose.msra.mxu0 0.0
    %8174 = vmatprep.subr.mxu0 0.0
    %8175 = vmatpush1.xpose.msra.mxu0 0.0
    %8176 = vmatprep.subr.mxu0 0.0
    %8177 = vmatpush1.xpose.msra.mxu0 0.0
    %8178 = vmatprep.subr.mxu0 0.0
    %8179 = vmatpush1.xpose.msra.mxu0 0.0
    %8180 = vmatprep.subr.mxu0 0.0
    %8181 = vmatpush1.xpose.msra.mxu0 0.0
    %8182 = vmatprep.subr.mxu0 0.0
    %8183 = vmatpush1.xpose.msra.mxu0 0.0
    %8184 = vmatprep.subr.mxu0 0.0
    %8185 = vmatpush1.xpose.msra.mxu0 0.0
    %8186 = vmatprep.subr.mxu0 0.0
    %8187 = vmatpush1.xpose.msra.mxu0 0.0
    %8188 = vmatprep.subr.mxu0 0.0
    %8189 = vmatpush1.xpose.msra.mxu0 0.0
    %8190 = vmatprep.subr.mxu0 0.0
    %8191 = vmatpush1.xpose.msra.mxu0 0.0
    %8192 = vmatprep.subr.mxu0 0.0
    %8193 = vmatpush1.xpose.msra.mxu0 0.0
    %8194 = vmatprep.subr.mxu0 0.0
    %8195 = vmatpush1.xpose.msra.mxu0 0.0
    %8196 = vmatprep.subr.mxu0 0.0
    %8197 = vmatpush1.xpose.msra.mxu0 0.0
    %8198 = vmatprep.subr.mxu0 0.0
    %8199 = vmatpush1.xpose.msra.mxu0 0.0
    %8200 = vmatprep.subr.mxu0 0.0
    %8201 = vmatpush1.xpose.msra.mxu0 0.0
    %8202 = vmatprep.subr.mxu0 0.0
    %8203 = vmatpush1.xpose.msra.mxu0 0.0
    %8204 = vmatprep.subr.mxu0 0.0
    %8205 = vmatpush1.xpose.msra.mxu0 0.0
    %8206 = vmatprep.subr.mxu0 0.0
    %8207 = vmatpush1.xpose.msra.mxu0 0.0
    %8208 = vmatprep.subr.mxu0 0.0
    %8209 = vmatpush1.xpose.msra.mxu0 0.0
    %8210 = vmatprep.subr.mxu0 0.0
    %8211 = vmatpush1.xpose.msra.mxu0 0.0
    %8212 = vmatprep.subr.mxu0 0.0
    %8213 = vmatpush1.xpose.msra.mxu0 0.0
    %8214 = vmatprep.subr.mxu0 0.0
    %8215 = vmatpush1.xpose.msra.mxu0 0.0
    %8216 = vmatprep.subr.mxu0 0.0
    %8217 = vmatpush1.xpose.msra.mxu0 0.0
    %8218 = vmatprep.mubr.f32.mxu0 %v8134
    %8219 = vmatmul.mubr.f32.gmra.mrb[0].mxu0 %v8133
    %v8220 = vpop.f32.mrb[0].mxu0
    %v8221 = vadd.f32 0.0, %v8220
    %v8222 = vpop.f32.mrb[0].mxu0
    %8223 = vdwg.mxu0
    %8224 = vmatprep.subr.mxu0 %v8143
    %8225 = vmatpush1.xpose.msra.mxu0 %v8142
    %8226 = vmatprep.subr.mxu0 %v8150
    %8227 = vmatpush1.xpose.msra.mxu0 %v8149
    %8228 = vmatprep.subr.mxu0 0.0
    %8229 = vmatpush1.xpose.msra.mxu0 0.0
    %8230 = vmatprep.subr.mxu0 0.0
    %8231 = vmatpush1.xpose.msra.mxu0 0.0
    %8232 = vmatprep.subr.mxu0 0.0
    %8233 = vmatpush1.xpose.msra.mxu0 0.0
    %8234 = vmatprep.subr.mxu0 0.0
    %8235 = vmatpush1.xpose.msra.mxu0 0.0
    %8236 = vmatprep.subr.mxu0 0.0
    %8237 = vmatpush1.xpose.msra.mxu0 0.0
    %8238 = vmatprep.subr.mxu0 0.0
    %8239 = vmatpush1.xpose.msra.mxu0 0.0
    %8240 = vmatprep.subr.mxu0 0.0
    %8241 = vmatpush1.xpose.msra.mxu0 0.0
    %8242 = vmatprep.subr.mxu0 0.0
    %8243 = vmatpush1.xpose.msra.mxu0 0.0
    %8244 = vmatprep.subr.mxu0 0.0
    %8245 = vmatpush1.xpose.msra.mxu0 0.0
    %8246 = vmatprep.subr.mxu0 0.0
    %8247 = vmatpush1.xpose.msra.mxu0 0.0
    %8248 = vmatprep.subr.mxu0 0.0
    %8249 = vmatpush1.xpose.msra.mxu0 0.0
    %8250 = vmatprep.subr.mxu0 0.0
    %8251 = vmatpush1.xpose.msra.mxu0 0.0
    %8252 = vmatprep.subr.mxu0 0.0
    %8253 = vmatpush1.xpose.msra.mxu0 0.0
    %8254 = vmatprep.subr.mxu0 0.0
    %8255 = vmatpush1.xpose.msra.mxu0 0.0
    %8256 = vmatprep.subr.mxu0 0.0
    %8257 = vmatpush1.xpose.msra.mxu0 0.0
    %8258 = vmatprep.subr.mxu0 0.0
    %8259 = vmatpush1.xpose.msra.mxu0 0.0
    %8260 = vmatprep.subr.mxu0 0.0
    %8261 = vmatpush1.xpose.msra.mxu0 0.0
    %8262 = vmatprep.subr.mxu0 0.0
    %8263 = vmatpush1.xpose.msra.mxu0 0.0
    %8264 = vmatprep.subr.mxu0 0.0
    %8265 = vmatpush1.xpose.msra.mxu0 0.0
    %8266 = vmatprep.subr.mxu0 0.0
    %8267 = vmatpush1.xpose.msra.mxu0 0.0
    %8268 = vmatprep.subr.mxu0 0.0
    %8269 = vmatpush1.xpose.msra.mxu0 0.0
    %8270 = vmatprep.subr.mxu0 0.0
    %8271 = vmatpush1.xpose.msra.mxu0 0.0
    %8272 = vmatprep.subr.mxu0 0.0
    %8273 = vmatpush1.xpose.msra.mxu0 0.0
    %8274 = vmatprep.subr.mxu0 0.0
    %8275 = vmatpush1.xpose.msra.mxu0 0.0
    %8276 = vmatprep.subr.mxu0 0.0
    %8277 = vmatpush1.xpose.msra.mxu0 0.0
    %8278 = vmatprep.subr.mxu0 0.0
    %8279 = vmatpush1.xpose.msra.mxu0 0.0
    %8280 = vmatprep.subr.mxu0 0.0
    %8281 = vmatpush1.xpose.msra.mxu0 0.0
    %8282 = vmatprep.subr.mxu0 0.0
    %8283 = vmatpush1.xpose.msra.mxu0 0.0
    %8284 = vmatprep.subr.mxu0 0.0
    %8285 = vmatpush1.xpose.msra.mxu0 0.0
    %8286 = vmatprep.subr.mxu0 0.0
    %8287 = vmatpush1.xpose.msra.mxu0 0.0
    %8288 = vmatprep.mubr.f32.mxu0 %v8136
    %8289 = vmatmul.mubr.f32.gmra.mrb[0].mxu0 %v8135
    %v8290 = vpop.f32.mrb[0].mxu0
    %v8291 = vadd.f32 %v8221, %v8290
    %v8292 = vpop.f32.mrb[0].mxu0
    %8293 = vdwg.mxu0
    %8294 = vmatprep.subr.mxu0 %v8145
    %8295 = vmatpush1.xpose.msra.mxu0 %v8144
    %8296 = vmatprep.subr.mxu0 %v8152
    %8297 = vmatpush1.xpose.msra.mxu0 %v8151
    %8298 = vmatprep.subr.mxu0 0.0
    %8299 = vmatpush1.xpose.msra.mxu0 0.0
    %8300 = vmatprep.subr.mxu0 0.0
    %8301 = vmatpush1.xpose.msra.mxu0 0.0
    %8302 = vmatprep.subr.mxu0 0.0
    %8303 = vmatpush1.xpose.msra.mxu0 0.0
    %8304 = vmatprep.subr.mxu0 0.0
    %8305 = vmatpush1.xpose.msra.mxu0 0.0
    %8306 = vmatprep.subr.mxu0 0.0
    %8307 = vmatpush1.xpose.msra.mxu0 0.0
    %8308 = vmatprep.subr.mxu0 0.0
    %8309 = vmatpush1.xpose.msra.mxu0 0.0
    %8310 = vmatprep.subr.mxu0 0.0
    %8311 = vmatpush1.xpose.msra.mxu0 0.0
    %8312 = vmatprep.subr.mxu0 0.0
    %8313 = vmatpush1.xpose.msra.mxu0 0.0
    %8314 = vmatprep.subr.mxu0 0.0
    %8315 = vmatpush1.xpose.msra.mxu0 0.0
    %8316 = vmatprep.subr.mxu0 0.0
    %8317 = vmatpush1.xpose.msra.mxu0 0.0
    %8318 = vmatprep.subr.mxu0 0.0
    %8319 = vmatpush1.xpose.msra.mxu0 0.0
    %8320 = vmatprep.subr.mxu0 0.0
    %8321 = vmatpush1.xpose.msra.mxu0 0.0
    %8322 = vmatprep.subr.mxu0 0.0
    %8323 = vmatpush1.xpose.msra.mxu0 0.0
    %8324 = vmatprep.subr.mxu0 0.0
    %8325 = vmatpush1.xpose.msra.mxu0 0.0
    %8326 = vmatprep.subr.mxu0 0.0
    %8327 = vmatpush1.xpose.msra.mxu0 0.0
    %8328 = vmatprep.subr.mxu0 0.0
    %8329 = vmatpush1.xpose.msra.mxu0 0.0
    %8330 = vmatprep.subr.mxu0 0.0
    %8331 = vmatpush1.xpose.msra.mxu0 0.0
    %8332 = vmatprep.subr.mxu0 0.0
    %8333 = vmatpush1.xpose.msra.mxu0 0.0
    %8334 = vmatprep.subr.mxu0 0.0
    %8335 = vmatpush1.xpose.msra.mxu0 0.0
    %8336 = vmatprep.subr.mxu0 0.0
    %8337 = vmatpush1.xpose.msra.mxu0 0.0
    %8338 = vmatprep.subr.mxu0 0.0
    %8339 = vmatpush1.xpose.msra.mxu0 0.0
    %8340 = vmatprep.subr.mxu0 0.0
    %8341 = vmatpush1.xpose.msra.mxu0 0.0
    %8342 = vmatprep.subr.mxu0 0.0
    %8343 = vmatpush1.xpose.msra.mxu0 0.0
    %8344 = vmatprep.subr.mxu0 0.0
    %8345 = vmatpush1.xpose.msra.mxu0 0.0
    %8346 = vmatprep.subr.mxu0 0.0
    %8347 = vmatpush1.xpose.msra.mxu0 0.0
    %8348 = vmatprep.subr.mxu0 0.0
    %8349 = vmatpush1.xpose.msra.mxu0 0.0
    %8350 = vmatprep.subr.mxu0 0.0
    %8351 = vmatpush1.xpose.msra.mxu0 0.0
    %8352 = vmatprep.subr.mxu0 0.0
    %8353 = vmatpush1.xpose.msra.mxu0 0.0
    %8354 = vmatprep.subr.mxu0 0.0
    %8355 = vmatpush1.xpose.msra.mxu0 0.0
    %8356 = vmatprep.subr.mxu0 0.0
    %8357 = vmatpush1.xpose.msra.mxu0 0.0
    %8358 = vmatprep.mubr.f32.mxu0 %v8138
    %8359 = vmatmul.mubr.f32.gmra.mrb[0].mxu0 %v8137
    %v8360 = vpop.f32.mrb[0].mxu0
    %v8361 = vadd.f32 %v8291, %v8360
    %v8362 = vpop.f32.mrb[0].mxu0
    %8363 = vdwg.mxu0
    %8364 = vmatprep.subr.mxu0 0.0
    %8365 = vmatpush1.xpose.msra.mxu0 %v8146
    %8366 = vmatprep.subr.mxu0 0.0
    %8367 = vmatpush1.xpose.msra.mxu0 %v8153
    %8368 = vmatprep.subr.mxu0 0.0
    %8369 = vmatpush1.xpose.msra.mxu0 0.0
    %8370 = vmatprep.subr.mxu0 0.0
    %8371 = vmatpush1.xpose.msra.mxu0 0.0
    %8372 = vmatprep.subr.mxu0 0.0
    %8373 = vmatpush1.xpose.msra.mxu0 0.0
    %8374 = vmatprep.subr.mxu0 0.0
    %8375 = vmatpush1.xpose.msra.mxu0 0.0
    %8376 = vmatprep.subr.mxu0 0.0
    %8377 = vmatpush1.xpose.msra.mxu0 0.0
    %8378 = vmatprep.subr.mxu0 0.0
    %8379 = vmatpush1.xpose.msra.mxu0 0.0
    %8380 = vmatprep.subr.mxu0 0.0
    %8381 = vmatpush1.xpose.msra.mxu0 0.0
    %8382 = vmatprep.subr.mxu0 0.0
    %8383 = vmatpush1.xpose.msra.mxu0 0.0
    %8384 = vmatprep.subr.mxu0 0.0
    %8385 = vmatpush1.xpose.msra.mxu0 0.0
    %8386 = vmatprep.subr.mxu0 0.0
    %8387 = vmatpush1.xpose.msra.mxu0 0.0
    %8388 = vmatprep.subr.mxu0 0.0
    %8389 = vmatpush1.xpose.msra.mxu0 0.0
    %8390 = vmatprep.subr.mxu0 0.0
    %8391 = vmatpush1.xpose.msra.mxu0 0.0
    %8392 = vmatprep.subr.mxu0 0.0
    %8393 = vmatpush1.xpose.msra.mxu0 0.0
    %8394 = vmatprep.subr.mxu0 0.0
    %8395 = vmatpush1.xpose.msra.mxu0 0.0
    %8396 = vmatprep.subr.mxu0 0.0
    %8397 = vmatpush1.xpose.msra.mxu0 0.0
    %8398 = vmatprep.subr.mxu0 0.0
    %8399 = vmatpush1.xpose.msra.mxu0 0.0
    %8400 = vmatprep.subr.mxu0 0.0
    %8401 = vmatpush1.xpose.msra.mxu0 0.0
    %8402 = vmatprep.subr.mxu0 0.0
    %8403 = vmatpush1.xpose.msra.mxu0 0.0
    %8404 = vmatprep.subr.mxu0 0.0
    %8405 = vmatpush1.xpose.msra.mxu0 0.0
    %8406 = vmatprep.subr.mxu0 0.0
    %8407 = vmatpush1.xpose.msra.mxu0 0.0
    %8408 = vmatprep.subr.mxu0 0.0
    %8409 = vmatpush1.xpose.msra.mxu0 0.0
    %8410 = vmatprep.subr.mxu0 0.0
    %8411 = vmatpush1.xpose.msra.mxu0 0.0
    %8412 = vmatprep.subr.mxu0 0.0
    %8413 = vmatpush1.xpose.msra.mxu0 0.0
    %8414 = vmatprep.subr.mxu0 0.0
    %8415 = vmatpush1.xpose.msra.mxu0 0.0
    %8416 = vmatprep.subr.mxu0 0.0
    %8417 = vmatpush1.xpose.msra.mxu0 0.0
    %8418 = vmatprep.subr.mxu0 0.0
    %8419 = vmatpush1.xpose.msra.mxu0 0.0
    %8420 = vmatprep.subr.mxu0 0.0
    %8421 = vmatpush1.xpose.msra.mxu0 0.0
    %8422 = vmatprep.subr.mxu0 0.0
    %8423 = vmatpush1.xpose.msra.mxu0 0.0
    %8424 = vmatprep.subr.mxu0 0.0
    %8425 = vmatpush1.xpose.msra.mxu0 0.0
    %8426 = vmatprep.subr.mxu0 0.0
    %8427 = vmatpush1.xpose.msra.mxu0 0.0
    %8428 = vmatprep.mubr.f32.mxu0 0.0
    %8429 = vmatmul.mubr.f32.gmra.mrb[0].mxu0 %v8139
    %v8430 = vpop.f32.mrb[0].mxu0
    %v8431 = vadd.f32 %v8361, %v8430
    %v8432 = vpop.f32.mrb[0].mxu0
    %8433 = vdwg.mxu0
    %v8434 = vadd.f32 %v7674, %v8431
    %s8435 = sld [smem:[#allocation2 + $0x580]]
    %v8436 = vstv %s8435
    %v8437 = vmul.f32 %v61, %v8436
    %v8438 = vmul.f32 %v62, %v8436
    %v8439 = vmul.f32 %v63, %v8436
    %v8440 = vmul.f32 %v64, %v8436
    %v8441 = vmul.f32 %v65, %v8436
    %v8442 = vmul.f32 %v66, %v8436
    %v8443 = vmul.f32 %v67, %v8436
    %s8444 = sld [smem:[#allocation2 + $0x581]]
    %v8445 = vstv %s8444
    %v8446 = vmul.f32 %v61, %v8445
    %v8447 = vmul.f32 %v62, %v8445
    %v8448 = vmul.f32 %v63, %v8445
    %v8449 = vmul.f32 %v64, %v8445
    %v8450 = vmul.f32 %v65, %v8445
    %v8451 = vmul.f32 %v66, %v8445
    %v8452 = vmul.f32 %v67, %v8445
    %v8453 = vmul.f32 %v68, %v8445
    %8462 = vrot.lane.b32.xlu0 %v8446, 127
    %v8463 = vpop.permute.xlu0 %8462
    %8464 = vrot.lane.b32.xlu0 %v8447, 127
    %v8465 = vpop.permute.xlu0 %8464
    %8466 = vrot.lane.b32.xlu0 %v8448, 127
    %v8467 = vpop.permute.xlu0 %8466
    %8468 = vrot.lane.b32.xlu0 %v8449, 127
    %v8469 = vpop.permute.xlu0 %8468
    %8470 = vrot.lane.b32.xlu0 %v8450, 127
    %v8471 = vpop.permute.xlu0 %8470
    %8472 = vrot.lane.b32.xlu0 %v8451, 127
    %v8473 = vpop.permute.xlu0 %8472
    %8474 = vrot.lane.b32.xlu0 %v8452, 127
    %v8475 = vpop.permute.xlu0 %8474
    %8476 = vrot.lane.b32.xlu0 %v8453, 127
    %v8477 = vpop.permute.xlu0 %8476
    %v8478 = vsel %vm112, %v8463, %v8465
    %v8479 = vsel %vm112, %v8465, %v8467
    %v8480 = vsel %vm112, %v8467, %v8469
    %v8481 = vsel %vm112, %v8469, %v8471
    %v8482 = vsel %vm112, %v8471, %v8473
    %v8483 = vsel %vm112, %v8473, %v8475
    %v8484 = vsel %vm112, %v8475, %v8477
    %v8492 = vadd.f32 %v8437, %v8478
    %v8493 = vadd.f32 %v8438, %v8479
    %v8494 = vadd.f32 %v8439, %v8480
    %v8495 = vadd.f32 %v8440, %v8481
    %v8496 = vadd.f32 %v8441, %v8482
    %v8497 = vadd.f32 %v8442, %v8483
    %v8498 = vadd.f32 %v8443, %v8484
    %s8499 = sld [smem:[#allocation2 + $0x582]]
    %v8500 = vstv %s8499
    %v8501 = vmul.f32 %v61, %v8500
    %v8502 = vmul.f32 %v62, %v8500
    %v8503 = vmul.f32 %v63, %v8500
    %v8504 = vmul.f32 %v64, %v8500
    %v8505 = vmul.f32 %v65, %v8500
    %v8506 = vmul.f32 %v66, %v8500
    %v8507 = vmul.f32 %v67, %v8500
    %v8508 = vmul.f32 %v68, %v8500
    %8517 = vrot.lane.b32.xlu0 %v8501, 126
    %v8518 = vpop.permute.xlu0 %8517
    %8519 = vrot.lane.b32.xlu0 %v8502, 126
    %v8520 = vpop.permute.xlu0 %8519
    %8521 = vrot.lane.b32.xlu0 %v8503, 126
    %v8522 = vpop.permute.xlu0 %8521
    %8523 = vrot.lane.b32.xlu0 %v8504, 126
    %v8524 = vpop.permute.xlu0 %8523
    %8525 = vrot.lane.b32.xlu0 %v8505, 126
    %v8526 = vpop.permute.xlu0 %8525
    %8527 = vrot.lane.b32.xlu0 %v8506, 126
    %v8528 = vpop.permute.xlu0 %8527
    %8529 = vrot.lane.b32.xlu0 %v8507, 126
    %v8530 = vpop.permute.xlu0 %8529
    %8531 = vrot.lane.b32.xlu0 %v8508, 126
    %v8532 = vpop.permute.xlu0 %8531
    %v8533 = vsel %vm168, %v8518, %v8520
    %v8534 = vsel %vm168, %v8520, %v8522
    %v8535 = vsel %vm168, %v8522, %v8524
    %v8536 = vsel %vm168, %v8524, %v8526
    %v8537 = vsel %vm168, %v8526, %v8528
    %v8538 = vsel %vm168, %v8528, %v8530
    %v8539 = vsel %vm168, %v8530, %v8532
    %v8547 = vadd.f32 %v8492, %v8533
    %v8548 = vadd.f32 %v8493, %v8534
    %v8549 = vadd.f32 %v8494, %v8535
    %v8550 = vadd.f32 %v8495, %v8536
    %v8551 = vadd.f32 %v8496, %v8537
    %v8552 = vadd.f32 %v8497, %v8538
    %v8553 = vadd.f32 %v8498, %v8539
    %s8554 = sld [smem:[#allocation2 + $0x583]]
    %v8555 = vstv %s8554
    %v8556 = vmul.f32 %v61, %v8555
    %v8557 = vmul.f32 %v62, %v8555
    %v8558 = vmul.f32 %v63, %v8555
    %v8559 = vmul.f32 %v64, %v8555
    %v8560 = vmul.f32 %v65, %v8555
    %v8561 = vmul.f32 %v66, %v8555
    %v8562 = vmul.f32 %v67, %v8555
    %v8563 = vmul.f32 %v68, %v8555
    %8572 = vrot.lane.b32.xlu0 %v8556, 100
    %v8573 = vpop.permute.xlu0 %8572
    %8574 = vrot.lane.b32.xlu0 %v8557, 100
    %v8575 = vpop.permute.xlu0 %8574
    %8576 = vrot.lane.b32.xlu0 %v8558, 100
    %v8577 = vpop.permute.xlu0 %8576
    %8578 = vrot.lane.b32.xlu0 %v8559, 100
    %v8579 = vpop.permute.xlu0 %8578
    %8580 = vrot.lane.b32.xlu0 %v8560, 100
    %v8581 = vpop.permute.xlu0 %8580
    %8582 = vrot.lane.b32.xlu0 %v8561, 100
    %v8583 = vpop.permute.xlu0 %8582
    %8584 = vrot.lane.b32.xlu0 %v8562, 100
    %v8585 = vpop.permute.xlu0 %8584
    %8586 = vrot.lane.b32.xlu0 %v8563, 100
    %v8587 = vpop.permute.xlu0 %8586
    %v8588 = vsel %vm224, %v8573, %v8575
    %v8589 = vsel %vm224, %v8575, %v8577
    %v8590 = vsel %vm224, %v8577, %v8579
    %v8591 = vsel %vm224, %v8579, %v8581
    %v8592 = vsel %vm224, %v8581, %v8583
    %v8593 = vsel %vm224, %v8583, %v8585
    %v8594 = vsel %vm224, %v8585, %v8587
    %v8602 = vadd.f32 %v8547, %v8588
    %v8603 = vadd.f32 %v8548, %v8589
    %v8604 = vadd.f32 %v8549, %v8590
    %v8605 = vadd.f32 %v8550, %v8591
    %v8606 = vadd.f32 %v8551, %v8592
    %v8607 = vadd.f32 %v8552, %v8593
    %v8608 = vadd.f32 %v8553, %v8594
    %s8609 = sld [smem:[#allocation2 + $0x584]]
    %v8610 = vstv %s8609
    %v8611 = vmul.f32 %v61, %v8610
    %v8612 = vmul.f32 %v62, %v8610
    %v8613 = vmul.f32 %v63, %v8610
    %v8614 = vmul.f32 %v64, %v8610
    %v8615 = vmul.f32 %v65, %v8610
    %v8616 = vmul.f32 %v66, %v8610
    %v8617 = vmul.f32 %v67, %v8610
    %v8618 = vmul.f32 %v68, %v8610
    %8627 = vrot.lane.b32.xlu0 %v8611, 99
    %v8628 = vpop.permute.xlu0 %8627
    %8629 = vrot.lane.b32.xlu0 %v8612, 99
    %v8630 = vpop.permute.xlu0 %8629
    %8631 = vrot.lane.b32.xlu0 %v8613, 99
    %v8632 = vpop.permute.xlu0 %8631
    %8633 = vrot.lane.b32.xlu0 %v8614, 99
    %v8634 = vpop.permute.xlu0 %8633
    %8635 = vrot.lane.b32.xlu0 %v8615, 99
    %v8636 = vpop.permute.xlu0 %8635
    %8637 = vrot.lane.b32.xlu0 %v8616, 99
    %v8638 = vpop.permute.xlu0 %8637
    %8639 = vrot.lane.b32.xlu0 %v8617, 99
    %v8640 = vpop.permute.xlu0 %8639
    %8641 = vrot.lane.b32.xlu0 %v8618, 99
    %v8642 = vpop.permute.xlu0 %8641
    %v8643 = vsel %vm280, %v8628, %v8630
    %v8644 = vsel %vm280, %v8630, %v8632
    %v8645 = vsel %vm280, %v8632, %v8634
    %v8646 = vsel %vm280, %v8634, %v8636
    %v8647 = vsel %vm280, %v8636, %v8638
    %v8648 = vsel %vm280, %v8638, %v8640
    %v8649 = vsel %vm280, %v8640, %v8642
    %v8657 = vadd.f32 %v8602, %v8643
    %v8658 = vadd.f32 %v8603, %v8644
    %v8659 = vadd.f32 %v8604, %v8645
    %v8660 = vadd.f32 %v8605, %v8646
    %v8661 = vadd.f32 %v8606, %v8647
    %v8662 = vadd.f32 %v8607, %v8648
    %v8663 = vadd.f32 %v8608, %v8649
    %s8664 = sld [smem:[#allocation2 + $0x585]]
    %v8665 = vstv %s8664
    %v8666 = vmul.f32 %v61, %v8665
    %v8667 = vmul.f32 %v62, %v8665
    %v8668 = vmul.f32 %v63, %v8665
    %v8669 = vmul.f32 %v64, %v8665
    %v8670 = vmul.f32 %v65, %v8665
    %v8671 = vmul.f32 %v66, %v8665
    %v8672 = vmul.f32 %v67, %v8665
    %v8673 = vmul.f32 %v68, %v8665
    %8682 = vrot.lane.b32.xlu0 %v8666, 98
    %v8683 = vpop.permute.xlu0 %8682
    %8684 = vrot.lane.b32.xlu0 %v8667, 98
    %v8685 = vpop.permute.xlu0 %8684
    %8686 = vrot.lane.b32.xlu0 %v8668, 98
    %v8687 = vpop.permute.xlu0 %8686
    %8688 = vrot.lane.b32.xlu0 %v8669, 98
    %v8689 = vpop.permute.xlu0 %8688
    %8690 = vrot.lane.b32.xlu0 %v8670, 98
    %v8691 = vpop.permute.xlu0 %8690
    %8692 = vrot.lane.b32.xlu0 %v8671, 98
    %v8693 = vpop.permute.xlu0 %8692
    %8694 = vrot.lane.b32.xlu0 %v8672, 98
    %v8695 = vpop.permute.xlu0 %8694
    %8696 = vrot.lane.b32.xlu0 %v8673, 98
    %v8697 = vpop.permute.xlu0 %8696
    %v8698 = vsel %vm336, %v8683, %v8685
    %v8699 = vsel %vm336, %v8685, %v8687
    %v8700 = vsel %vm336, %v8687, %v8689
    %v8701 = vsel %vm336, %v8689, %v8691
    %v8702 = vsel %vm336, %v8691, %v8693
    %v8703 = vsel %vm336, %v8693, %v8695
    %v8704 = vsel %vm336, %v8695, %v8697
    %v8712 = vadd.f32 %v8657, %v8698
    %v8713 = vadd.f32 %v8658, %v8699
    %v8714 = vadd.f32 %v8659, %v8700
    %v8715 = vadd.f32 %v8660, %v8701
    %v8716 = vadd.f32 %v8661, %v8702
    %v8717 = vadd.f32 %v8662, %v8703
    %v8718 = vadd.f32 %v8663, %v8704
    %s8719 = sld [smem:[#allocation2 + $0x586]]
    %v8720 = vstv %s8719
    %v8721 = vmul.f32 %v61, %v8720
    %v8722 = vmul.f32 %v62, %v8720
    %v8723 = vmul.f32 %v63, %v8720
    %v8724 = vmul.f32 %v64, %v8720
    %v8725 = vmul.f32 %v65, %v8720
    %v8726 = vmul.f32 %v66, %v8720
    %v8727 = vmul.f32 %v67, %v8720
    %v8728 = vmul.f32 %v68, %v8720
    %8737 = vrot.lane.b32.xlu0 %v8721, 72
    %v8738 = vpop.permute.xlu0 %8737
    %8739 = vrot.lane.b32.xlu0 %v8722, 72
    %v8740 = vpop.permute.xlu0 %8739
    %8741 = vrot.lane.b32.xlu0 %v8723, 72
    %v8742 = vpop.permute.xlu0 %8741
    %8743 = vrot.lane.b32.xlu0 %v8724, 72
    %v8744 = vpop.permute.xlu0 %8743
    %8745 = vrot.lane.b32.xlu0 %v8725, 72
    %v8746 = vpop.permute.xlu0 %8745
    %8747 = vrot.lane.b32.xlu0 %v8726, 72
    %v8748 = vpop.permute.xlu0 %8747
    %8749 = vrot.lane.b32.xlu0 %v8727, 72
    %v8750 = vpop.permute.xlu0 %8749
    %8751 = vrot.lane.b32.xlu0 %v8728, 72
    %v8752 = vpop.permute.xlu0 %8751
    %v8753 = vsel %vm392, %v8738, %v8740
    %v8754 = vsel %vm392, %v8740, %v8742
    %v8755 = vsel %vm392, %v8742, %v8744
    %v8756 = vsel %vm392, %v8744, %v8746
    %v8757 = vsel %vm392, %v8746, %v8748
    %v8758 = vsel %vm392, %v8748, %v8750
    %v8759 = vsel %vm392, %v8750, %v8752
    %v8767 = vadd.f32 %v8712, %v8753
    %v8768 = vadd.f32 %v8713, %v8754
    %v8769 = vadd.f32 %v8714, %v8755
    %v8770 = vadd.f32 %v8715, %v8756
    %v8771 = vadd.f32 %v8716, %v8757
    %v8772 = vadd.f32 %v8717, %v8758
    %v8773 = vadd.f32 %v8718, %v8759
    %s8774 = sld [smem:[#allocation2 + $0x587]]
    %v8775 = vstv %s8774
    %v8776 = vmul.f32 %v61, %v8775
    %v8777 = vmul.f32 %v62, %v8775
    %v8778 = vmul.f32 %v63, %v8775
    %v8779 = vmul.f32 %v64, %v8775
    %v8780 = vmul.f32 %v65, %v8775
    %v8781 = vmul.f32 %v66, %v8775
    %v8782 = vmul.f32 %v67, %v8775
    %v8783 = vmul.f32 %v68, %v8775
    %8792 = vrot.lane.b32.xlu0 %v8776, 71
    %v8793 = vpop.permute.xlu0 %8792
    %8794 = vrot.lane.b32.xlu0 %v8777, 71
    %v8795 = vpop.permute.xlu0 %8794
    %8796 = vrot.lane.b32.xlu0 %v8778, 71
    %v8797 = vpop.permute.xlu0 %8796
    %8798 = vrot.lane.b32.xlu0 %v8779, 71
    %v8799 = vpop.permute.xlu0 %8798
    %8800 = vrot.lane.b32.xlu0 %v8780, 71
    %v8801 = vpop.permute.xlu0 %8800
    %8802 = vrot.lane.b32.xlu0 %v8781, 71
    %v8803 = vpop.permute.xlu0 %8802
    %8804 = vrot.lane.b32.xlu0 %v8782, 71
    %v8805 = vpop.permute.xlu0 %8804
    %8806 = vrot.lane.b32.xlu0 %v8783, 71
    %v8807 = vpop.permute.xlu0 %8806
    %v8808 = vsel %vm448, %v8793, %v8795
    %v8809 = vsel %vm448, %v8795, %v8797
    %v8810 = vsel %vm448, %v8797, %v8799
    %v8811 = vsel %vm448, %v8799, %v8801
    %v8812 = vsel %vm448, %v8801, %v8803
    %v8813 = vsel %vm448, %v8803, %v8805
    %v8814 = vsel %vm448, %v8805, %v8807
    %v8822 = vadd.f32 %v8767, %v8808
    %v8823 = vadd.f32 %v8768, %v8809
    %v8824 = vadd.f32 %v8769, %v8810
    %v8825 = vadd.f32 %v8770, %v8811
    %v8826 = vadd.f32 %v8771, %v8812
    %v8827 = vadd.f32 %v8772, %v8813
    %v8828 = vadd.f32 %v8773, %v8814
    %s8829 = sld [smem:[#allocation2 + $0x588]]
    %v8830 = vstv %s8829
    %v8831 = vmul.f32 %v61, %v8830
    %v8832 = vmul.f32 %v62, %v8830
    %v8833 = vmul.f32 %v63, %v8830
    %v8834 = vmul.f32 %v64, %v8830
    %v8835 = vmul.f32 %v65, %v8830
    %v8836 = vmul.f32 %v66, %v8830
    %v8837 = vmul.f32 %v67, %v8830
    %v8838 = vmul.f32 %v68, %v8830
    %8847 = vrot.lane.b32.xlu0 %v8831, 70
    %v8848 = vpop.permute.xlu0 %8847
    %8849 = vrot.lane.b32.xlu0 %v8832, 70
    %v8850 = vpop.permute.xlu0 %8849
    %8851 = vrot.lane.b32.xlu0 %v8833, 70
    %v8852 = vpop.permute.xlu0 %8851
    %8853 = vrot.lane.b32.xlu0 %v8834, 70
    %v8854 = vpop.permute.xlu0 %8853
    %8855 = vrot.lane.b32.xlu0 %v8835, 70
    %v8856 = vpop.permute.xlu0 %8855
    %8857 = vrot.lane.b32.xlu0 %v8836, 70
    %v8858 = vpop.permute.xlu0 %8857
    %8859 = vrot.lane.b32.xlu0 %v8837, 70
    %v8860 = vpop.permute.xlu0 %8859
    %8861 = vrot.lane.b32.xlu0 %v8838, 70
    %v8862 = vpop.permute.xlu0 %8861
    %v8863 = vsel %vm504, %v8848, %v8850
    %v8864 = vsel %vm504, %v8850, %v8852
    %v8865 = vsel %vm504, %v8852, %v8854
    %v8866 = vsel %vm504, %v8854, %v8856
    %v8867 = vsel %vm504, %v8856, %v8858
    %v8868 = vsel %vm504, %v8858, %v8860
    %v8869 = vsel %vm504, %v8860, %v8862
    %v8877 = vadd.f32 %v8822, %v8863
    %v8878 = vadd.f32 %v8823, %v8864
    %v8879 = vadd.f32 %v8824, %v8865
    %v8880 = vadd.f32 %v8825, %v8866
    %v8881 = vadd.f32 %v8826, %v8867
    %v8882 = vadd.f32 %v8827, %v8868
    %v8883 = vadd.f32 %v8828, %v8869
    %s8884 = sld [smem:[#allocation5 + $0xb]]
    %v8885 = vstv %s8884
    %v8886 = vadd.f32 %v8877, %v8885
    %v8887 = vadd.f32 %v8878, %v8885
    %v8888 = vadd.f32 %v8879, %v8885
    %v8889 = vadd.f32 %v8880, %v8885
    %v8890 = vadd.f32 %v8881, %v8885
    %v8891 = vadd.f32 %v8882, %v8885
    %v8892 = vadd.f32 %v8883, %v8885
    %v8893 = vmax.f32 %v8886, 0.0
    %v8894 = vmax.f32 %v8887, 0.0
    %v8895 = vmax.f32 %v8888, 0.0
    %v8896 = vmax.f32 %v8889, 0.0
    %v8897 = vmax.f32 %v8890, 0.0
    %v8898 = vmax.f32 %v8891, 0.0
    %v8899 = vmax.f32 %v8892, 0.0
    %v8900 = vld [vmem:[#allocation7 + $0x268] sm:$0xff]
    %v8901 = vld [vmem:[#allocation7 + $0x270] sm:$0xff]
    %v8902 = vld [vmem:[#allocation7 + $0x278] sm:$0xff]
    %v8903 = vld [vmem:[#allocation7 + $0x280] sm:$0xff]
    %v8904 = vld [vmem:[#allocation7 + $0x288] sm:$0xff]
    %v8905 = vld [vmem:[#allocation7 + $0x290] sm:$0xff]
    %v8906 = vld [vmem:[#allocation7 + $0x298] sm:$0xff]
    %v8907 = vld [vmem:[#allocation7 + $0x5e8] sm:$0x3]
    %v8908 = vld [vmem:[#allocation7 + $0x5f0] sm:$0x3]
    %v8909 = vld [vmem:[#allocation7 + $0x5f8] sm:$0x3]
    %v8910 = vld [vmem:[#allocation7 + $0x600] sm:$0x3]
    %v8911 = vld [vmem:[#allocation7 + $0x608] sm:$0x3]
    %v8912 = vld [vmem:[#allocation7 + $0x610] sm:$0x3]
    %v8913 = vld [vmem:[#allocation7 + $0x618] sm:$0x3]
    %8914 = vmatprep.subr.mxu0 %v8901
    %8915 = vmatpush1.xpose.msra.mxu0 %v8900
    %8916 = vmatprep.subr.mxu0 %v8908
    %8917 = vmatpush1.xpose.msra.mxu0 %v8907
    %8918 = vmatprep.subr.mxu0 0.0
    %8919 = vmatpush1.xpose.msra.mxu0 0.0
    %8920 = vmatprep.subr.mxu0 0.0
    %8921 = vmatpush1.xpose.msra.mxu0 0.0
    %8922 = vmatprep.subr.mxu0 0.0
    %8923 = vmatpush1.xpose.msra.mxu0 0.0
    %8924 = vmatprep.subr.mxu0 0.0
    %8925 = vmatpush1.xpose.msra.mxu0 0.0
    %8926 = vmatprep.subr.mxu0 0.0
    %8927 = vmatpush1.xpose.msra.mxu0 0.0
    %8928 = vmatprep.subr.mxu0 0.0
    %8929 = vmatpush1.xpose.msra.mxu0 0.0
    %8930 = vmatprep.subr.mxu0 0.0
    %8931 = vmatpush1.xpose.msra.mxu0 0.0
    %8932 = vmatprep.subr.mxu0 0.0
    %8933 = vmatpush1.xpose.msra.mxu0 0.0
    %8934 = vmatprep.subr.mxu0 0.0
    %8935 = vmatpush1.xpose.msra.mxu0 0.0
    %8936 = vmatprep.subr.mxu0 0.0
    %8937 = vmatpush1.xpose.msra.mxu0 0.0
    %8938 = vmatprep.subr.mxu0 0.0
    %8939 = vmatpush1.xpose.msra.mxu0 0.0
    %8940 = vmatprep.subr.mxu0 0.0
    %8941 = vmatpush1.xpose.msra.mxu0 0.0
    %8942 = vmatprep.subr.mxu0 0.0
    %8943 = vmatpush1.xpose.msra.mxu0 0.0
    %8944 = vmatprep.subr.mxu0 0.0
    %8945 = vmatpush1.xpose.msra.mxu0 0.0
    %8946 = vmatprep.subr.mxu0 0.0
    %8947 = vmatpush1.xpose.msra.mxu0 0.0
    %8948 = vmatprep.subr.mxu0 0.0
    %8949 = vmatpush1.xpose.msra.mxu0 0.0
    %8950 = vmatprep.subr.mxu0 0.0
    %8951 = vmatpush1.xpose.msra.mxu0 0.0
    %8952 = vmatprep.subr.mxu0 0.0
    %8953 = vmatpush1.xpose.msra.mxu0 0.0
    %8954 = vmatprep.subr.mxu0 0.0
    %8955 = vmatpush1.xpose.msra.mxu0 0.0
    %8956 = vmatprep.subr.mxu0 0.0
    %8957 = vmatpush1.xpose.msra.mxu0 0.0
    %8958 = vmatprep.subr.mxu0 0.0
    %8959 = vmatpush1.xpose.msra.mxu0 0.0
    %8960 = vmatprep.subr.mxu0 0.0
    %8961 = vmatpush1.xpose.msra.mxu0 0.0
    %8962 = vmatprep.subr.mxu0 0.0
    %8963 = vmatpush1.xpose.msra.mxu0 0.0
    %8964 = vmatprep.subr.mxu0 0.0
    %8965 = vmatpush1.xpose.msra.mxu0 0.0
    %8966 = vmatprep.subr.mxu0 0.0
    %8967 = vmatpush1.xpose.msra.mxu0 0.0
    %8968 = vmatprep.subr.mxu0 0.0
    %8969 = vmatpush1.xpose.msra.mxu0 0.0
    %8970 = vmatprep.subr.mxu0 0.0
    %8971 = vmatpush1.xpose.msra.mxu0 0.0
    %8972 = vmatprep.subr.mxu0 0.0
    %8973 = vmatpush1.xpose.msra.mxu0 0.0
    %8974 = vmatprep.subr.mxu0 0.0
    %8975 = vmatpush1.xpose.msra.mxu0 0.0
    %8976 = vmatprep.subr.mxu0 0.0
    %8977 = vmatpush1.xpose.msra.mxu0 0.0
    %8978 = vmatprep.mubr.f32.mxu0 %v8894
    %8979 = vmatmul.mubr.f32.gmra.mrb[0].mxu0 %v8893
    %v8980 = vpop.f32.mrb[0].mxu0
    %v8981 = vadd.f32 0.0, %v8980
    %v8982 = vpop.f32.mrb[0].mxu0
    %8983 = vdwg.mxu0
    %8984 = vmatprep.subr.mxu0 %v8903
    %8985 = vmatpush1.xpose.msra.mxu0 %v8902
    %8986 = vmatprep.subr.mxu0 %v8910
    %8987 = vmatpush1.xpose.msra.mxu0 %v8909
    %8988 = vmatprep.subr.mxu0 0.0
    %8989 = vmatpush1.xpose.msra.mxu0 0.0
    %8990 = vmatprep.subr.mxu0 0.0
    %8991 = vmatpush1.xpose.msra.mxu0 0.0
    %8992 = vmatprep.subr.mxu0 0.0
    %8993 = vmatpush1.xpose.msra.mxu0 0.0
    %8994 = vmatprep.subr.mxu0 0.0
    %8995 = vmatpush1.xpose.msra.mxu0 0.0
    %8996 = vmatprep.subr.mxu0 0.0
    %8997 = vmatpush1.xpose.msra.mxu0 0.0
    %8998 = vmatprep.subr.mxu0 0.0
    %8999 = vmatpush1.xpose.msra.mxu0 0.0
    %9000 = vmatprep.subr.mxu0 0.0
    %9001 = vmatpush1.xpose.msra.mxu0 0.0
    %9002 = vmatprep.subr.mxu0 0.0
    %9003 = vmatpush1.xpose.msra.mxu0 0.0
    %9004 = vmatprep.subr.mxu0 0.0
    %9005 = vmatpush1.xpose.msra.mxu0 0.0
    %9006 = vmatprep.subr.mxu0 0.0
    %9007 = vmatpush1.xpose.msra.mxu0 0.0
    %9008 = vmatprep.subr.mxu0 0.0
    %9009 = vmatpush1.xpose.msra.mxu0 0.0
    %9010 = vmatprep.subr.mxu0 0.0
    %9011 = vmatpush1.xpose.msra.mxu0 0.0
    %9012 = vmatprep.subr.mxu0 0.0
    %9013 = vmatpush1.xpose.msra.mxu0 0.0
    %9014 = vmatprep.subr.mxu0 0.0
    %9015 = vmatpush1.xpose.msra.mxu0 0.0
    %9016 = vmatprep.subr.mxu0 0.0
    %9017 = vmatpush1.xpose.msra.mxu0 0.0
    %9018 = vmatprep.subr.mxu0 0.0
    %9019 = vmatpush1.xpose.msra.mxu0 0.0
    %9020 = vmatprep.subr.mxu0 0.0
    %9021 = vmatpush1.xpose.msra.mxu0 0.0
    %9022 = vmatprep.subr.mxu0 0.0
    %9023 = vmatpush1.xpose.msra.mxu0 0.0
    %9024 = vmatprep.subr.mxu0 0.0
    %9025 = vmatpush1.xpose.msra.mxu0 0.0
    %9026 = vmatprep.subr.mxu0 0.0
    %9027 = vmatpush1.xpose.msra.mxu0 0.0
    %9028 = vmatprep.subr.mxu0 0.0
    %9029 = vmatpush1.xpose.msra.mxu0 0.0
    %9030 = vmatprep.subr.mxu0 0.0
    %9031 = vmatpush1.xpose.msra.mxu0 0.0
    %9032 = vmatprep.subr.mxu0 0.0
    %9033 = vmatpush1.xpose.msra.mxu0 0.0
    %9034 = vmatprep.subr.mxu0 0.0
    %9035 = vmatpush1.xpose.msra.mxu0 0.0
    %9036 = vmatprep.subr.mxu0 0.0
    %9037 = vmatpush1.xpose.msra.mxu0 0.0
    %9038 = vmatprep.subr.mxu0 0.0
    %9039 = vmatpush1.xpose.msra.mxu0 0.0
    %9040 = vmatprep.subr.mxu0 0.0
    %9041 = vmatpush1.xpose.msra.mxu0 0.0
    %9042 = vmatprep.subr.mxu0 0.0
    %9043 = vmatpush1.xpose.msra.mxu0 0.0
    %9044 = vmatprep.subr.mxu0 0.0
    %9045 = vmatpush1.xpose.msra.mxu0 0.0
    %9046 = vmatprep.subr.mxu0 0.0
    %9047 = vmatpush1.xpose.msra.mxu0 0.0
    %9048 = vmatprep.mubr.f32.mxu0 %v8896
    %9049 = vmatmul.mubr.f32.gmra.mrb[0].mxu0 %v8895
    %v9050 = vpop.f32.mrb[0].mxu0
    %v9051 = vadd.f32 %v8981, %v9050
    %v9052 = vpop.f32.mrb[0].mxu0
    %9053 = vdwg.mxu0
    %9054 = vmatprep.subr.mxu0 %v8905
    %9055 = vmatpush1.xpose.msra.mxu0 %v8904
    %9056 = vmatprep.subr.mxu0 %v8912
    %9057 = vmatpush1.xpose.msra.mxu0 %v8911
    %9058 = vmatprep.subr.mxu0 0.0
    %9059 = vmatpush1.xpose.msra.mxu0 0.0
    %9060 = vmatprep.subr.mxu0 0.0
    %9061 = vmatpush1.xpose.msra.mxu0 0.0
    %9062 = vmatprep.subr.mxu0 0.0
    %9063 = vmatpush1.xpose.msra.mxu0 0.0
    %9064 = vmatprep.subr.mxu0 0.0
    %9065 = vmatpush1.xpose.msra.mxu0 0.0
    %9066 = vmatprep.subr.mxu0 0.0
    %9067 = vmatpush1.xpose.msra.mxu0 0.0
    %9068 = vmatprep.subr.mxu0 0.0
    %9069 = vmatpush1.xpose.msra.mxu0 0.0
    %9070 = vmatprep.subr.mxu0 0.0
    %9071 = vmatpush1.xpose.msra.mxu0 0.0
    %9072 = vmatprep.subr.mxu0 0.0
    %9073 = vmatpush1.xpose.msra.mxu0 0.0
    %9074 = vmatprep.subr.mxu0 0.0
    %9075 = vmatpush1.xpose.msra.mxu0 0.0
    %9076 = vmatprep.subr.mxu0 0.0
    %9077 = vmatpush1.xpose.msra.mxu0 0.0
    %9078 = vmatprep.subr.mxu0 0.0
    %9079 = vmatpush1.xpose.msra.mxu0 0.0
    %9080 = vmatprep.subr.mxu0 0.0
    %9081 = vmatpush1.xpose.msra.mxu0 0.0
    %9082 = vmatprep.subr.mxu0 0.0
    %9083 = vmatpush1.xpose.msra.mxu0 0.0
    %9084 = vmatprep.subr.mxu0 0.0
    %9085 = vmatpush1.xpose.msra.mxu0 0.0
    %9086 = vmatprep.subr.mxu0 0.0
    %9087 = vmatpush1.xpose.msra.mxu0 0.0
    %9088 = vmatprep.subr.mxu0 0.0
    %9089 = vmatpush1.xpose.msra.mxu0 0.0
    %9090 = vmatprep.subr.mxu0 0.0
    %9091 = vmatpush1.xpose.msra.mxu0 0.0
    %9092 = vmatprep.subr.mxu0 0.0
    %9093 = vmatpush1.xpose.msra.mxu0 0.0
    %9094 = vmatprep.subr.mxu0 0.0
    %9095 = vmatpush1.xpose.msra.mxu0 0.0
    %9096 = vmatprep.subr.mxu0 0.0
    %9097 = vmatpush1.xpose.msra.mxu0 0.0
    %9098 = vmatprep.subr.mxu0 0.0
    %9099 = vmatpush1.xpose.msra.mxu0 0.0
    %9100 = vmatprep.subr.mxu0 0.0
    %9101 = vmatpush1.xpose.msra.mxu0 0.0
    %9102 = vmatprep.subr.mxu0 0.0
    %9103 = vmatpush1.xpose.msra.mxu0 0.0
    %9104 = vmatprep.subr.mxu0 0.0
    %9105 = vmatpush1.xpose.msra.mxu0 0.0
    %9106 = vmatprep.subr.mxu0 0.0
    %9107 = vmatpush1.xpose.msra.mxu0 0.0
    %9108 = vmatprep.subr.mxu0 0.0
    %9109 = vmatpush1.xpose.msra.mxu0 0.0
    %9110 = vmatprep.subr.mxu0 0.0
    %9111 = vmatpush1.xpose.msra.mxu0 0.0
    %9112 = vmatprep.subr.mxu0 0.0
    %9113 = vmatpush1.xpose.msra.mxu0 0.0
    %9114 = vmatprep.subr.mxu0 0.0
    %9115 = vmatpush1.xpose.msra.mxu0 0.0
    %9116 = vmatprep.subr.mxu0 0.0
    %9117 = vmatpush1.xpose.msra.mxu0 0.0
    %9118 = vmatprep.mubr.f32.mxu0 %v8898
    %9119 = vmatmul.mubr.f32.gmra.mrb[0].mxu0 %v8897
    %v9120 = vpop.f32.mrb[0].mxu0
    %v9121 = vadd.f32 %v9051, %v9120
    %v9122 = vpop.f32.mrb[0].mxu0
    %9123 = vdwg.mxu0
    %9124 = vmatprep.subr.mxu0 0.0
    %9125 = vmatpush1.xpose.msra.mxu0 %v8906
    %9126 = vmatprep.subr.mxu0 0.0
    %9127 = vmatpush1.xpose.msra.mxu0 %v8913
    %9128 = vmatprep.subr.mxu0 0.0
    %9129 = vmatpush1.xpose.msra.mxu0 0.0
    %9130 = vmatprep.subr.mxu0 0.0
    %9131 = vmatpush1.xpose.msra.mxu0 0.0
    %9132 = vmatprep.subr.mxu0 0.0
    %9133 = vmatpush1.xpose.msra.mxu0 0.0
    %9134 = vmatprep.subr.mxu0 0.0
    %9135 = vmatpush1.xpose.msra.mxu0 0.0
    %9136 = vmatprep.subr.mxu0 0.0
    %9137 = vmatpush1.xpose.msra.mxu0 0.0
    %9138 = vmatprep.subr.mxu0 0.0
    %9139 = vmatpush1.xpose.msra.mxu0 0.0
    %9140 = vmatprep.subr.mxu0 0.0
    %9141 = vmatpush1.xpose.msra.mxu0 0.0
    %9142 = vmatprep.subr.mxu0 0.0
    %9143 = vmatpush1.xpose.msra.mxu0 0.0
    %9144 = vmatprep.subr.mxu0 0.0
    %9145 = vmatpush1.xpose.msra.mxu0 0.0
    %9146 = vmatprep.subr.mxu0 0.0
    %9147 = vmatpush1.xpose.msra.mxu0 0.0
    %9148 = vmatprep.subr.mxu0 0.0
    %9149 = vmatpush1.xpose.msra.mxu0 0.0
    %9150 = vmatprep.subr.mxu0 0.0
    %9151 = vmatpush1.xpose.msra.mxu0 0.0
    %9152 = vmatprep.subr.mxu0 0.0
    %9153 = vmatpush1.xpose.msra.mxu0 0.0
    %9154 = vmatprep.subr.mxu0 0.0
    %9155 = vmatpush1.xpose.msra.mxu0 0.0
    %9156 = vmatprep.subr.mxu0 0.0
    %9157 = vmatpush1.xpose.msra.mxu0 0.0
    %9158 = vmatprep.subr.mxu0 0.0
    %9159 = vmatpush1.xpose.msra.mxu0 0.0
    %9160 = vmatprep.subr.mxu0 0.0
    %9161 = vmatpush1.xpose.msra.mxu0 0.0
    %9162 = vmatprep.subr.mxu0 0.0
    %9163 = vmatpush1.xpose.msra.mxu0 0.0
    %9164 = vmatprep.subr.mxu0 0.0
    %9165 = vmatpush1.xpose.msra.mxu0 0.0
    %9166 = vmatprep.subr.mxu0 0.0
    %9167 = vmatpush1.xpose.msra.mxu0 0.0
    %9168 = vmatprep.subr.mxu0 0.0
    %9169 = vmatpush1.xpose.msra.mxu0 0.0
    %9170 = vmatprep.subr.mxu0 0.0
    %9171 = vmatpush1.xpose.msra.mxu0 0.0
    %9172 = vmatprep.subr.mxu0 0.0
    %9173 = vmatpush1.xpose.msra.mxu0 0.0
    %9174 = vmatprep.subr.mxu0 0.0
    %9175 = vmatpush1.xpose.msra.mxu0 0.0
    %9176 = vmatprep.subr.mxu0 0.0
    %9177 = vmatpush1.xpose.msra.mxu0 0.0
    %9178 = vmatprep.subr.mxu0 0.0
    %9179 = vmatpush1.xpose.msra.mxu0 0.0
    %9180 = vmatprep.subr.mxu0 0.0
    %9181 = vmatpush1.xpose.msra.mxu0 0.0
    %9182 = vmatprep.subr.mxu0 0.0
    %9183 = vmatpush1.xpose.msra.mxu0 0.0
    %9184 = vmatprep.subr.mxu0 0.0
    %9185 = vmatpush1.xpose.msra.mxu0 0.0
    %9186 = vmatprep.subr.mxu0 0.0
    %9187 = vmatpush1.xpose.msra.mxu0 0.0
    %9188 = vmatprep.mubr.f32.mxu0 0.0
    %9189 = vmatmul.mubr.f32.gmra.mrb[0].mxu0 %v8899
    %v9190 = vpop.f32.mrb[0].mxu0
    %v9191 = vadd.f32 %v9121, %v9190
    %v9192 = vpop.f32.mrb[0].mxu0
    %9193 = vdwg.mxu0
    %v9194 = vadd.f32 %v8434, %v9191
    %s9195 = sld [smem:[#allocation2 + $0x600]]
    %v9196 = vstv %s9195
    %v9197 = vmul.f32 %v61, %v9196
    %v9198 = vmul.f32 %v62, %v9196
    %v9199 = vmul.f32 %v63, %v9196
    %v9200 = vmul.f32 %v64, %v9196
    %v9201 = vmul.f32 %v65, %v9196
    %v9202 = vmul.f32 %v66, %v9196
    %v9203 = vmul.f32 %v67, %v9196
    %s9204 = sld [smem:[#allocation2 + $0x601]]
    %v9205 = vstv %s9204
    %v9206 = vmul.f32 %v61, %v9205
    %v9207 = vmul.f32 %v62, %v9205
    %v9208 = vmul.f32 %v63, %v9205
    %v9209 = vmul.f32 %v64, %v9205
    %v9210 = vmul.f32 %v65, %v9205
    %v9211 = vmul.f32 %v66, %v9205
    %v9212 = vmul.f32 %v67, %v9205
    %v9213 = vmul.f32 %v68, %v9205
    %9222 = vrot.lane.b32.xlu0 %v9206, 127
    %v9223 = vpop.permute.xlu0 %9222
    %9224 = vrot.lane.b32.xlu0 %v9207, 127
    %v9225 = vpop.permute.xlu0 %9224
    %9226 = vrot.lane.b32.xlu0 %v9208, 127
    %v9227 = vpop.permute.xlu0 %9226
    %9228 = vrot.lane.b32.xlu0 %v9209, 127
    %v9229 = vpop.permute.xlu0 %9228
    %9230 = vrot.lane.b32.xlu0 %v9210, 127
    %v9231 = vpop.permute.xlu0 %9230
    %9232 = vrot.lane.b32.xlu0 %v9211, 127
    %v9233 = vpop.permute.xlu0 %9232
    %9234 = vrot.lane.b32.xlu0 %v9212, 127
    %v9235 = vpop.permute.xlu0 %9234
    %9236 = vrot.lane.b32.xlu0 %v9213, 127
    %v9237 = vpop.permute.xlu0 %9236
    %v9238 = vsel %vm112, %v9223, %v9225
    %v9239 = vsel %vm112, %v9225, %v9227
    %v9240 = vsel %vm112, %v9227, %v9229
    %v9241 = vsel %vm112, %v9229, %v9231
    %v9242 = vsel %vm112, %v9231, %v9233
    %v9243 = vsel %vm112, %v9233, %v9235
    %v9244 = vsel %vm112, %v9235, %v9237
    %v9252 = vadd.f32 %v9197, %v9238
    %v9253 = vadd.f32 %v9198, %v9239
    %v9254 = vadd.f32 %v9199, %v9240
    %v9255 = vadd.f32 %v9200, %v9241
    %v9256 = vadd.f32 %v9201, %v9242
    %v9257 = vadd.f32 %v9202, %v9243
    %v9258 = vadd.f32 %v9203, %v9244
    %s9259 = sld [smem:[#allocation2 + $0x602]]
    %v9260 = vstv %s9259
    %v9261 = vmul.f32 %v61, %v9260
    %v9262 = vmul.f32 %v62, %v9260
    %v9263 = vmul.f32 %v63, %v9260
    %v9264 = vmul.f32 %v64, %v9260
    %v9265 = vmul.f32 %v65, %v9260
    %v9266 = vmul.f32 %v66, %v9260
    %v9267 = vmul.f32 %v67, %v9260
    %v9268 = vmul.f32 %v68, %v9260
    %9277 = vrot.lane.b32.xlu0 %v9261, 126
    %v9278 = vpop.permute.xlu0 %9277
    %9279 = vrot.lane.b32.xlu0 %v9262, 126
    %v9280 = vpop.permute.xlu0 %9279
    %9281 = vrot.lane.b32.xlu0 %v9263, 126
    %v9282 = vpop.permute.xlu0 %9281
    %9283 = vrot.lane.b32.xlu0 %v9264, 126
    %v9284 = vpop.permute.xlu0 %9283
    %9285 = vrot.lane.b32.xlu0 %v9265, 126
    %v9286 = vpop.permute.xlu0 %9285
    %9287 = vrot.lane.b32.xlu0 %v9266, 126
    %v9288 = vpop.permute.xlu0 %9287
    %9289 = vrot.lane.b32.xlu0 %v9267, 126
    %v9290 = vpop.permute.xlu0 %9289
    %9291 = vrot.lane.b32.xlu0 %v9268, 126
    %v9292 = vpop.permute.xlu0 %9291
    %v9293 = vsel %vm168, %v9278, %v9280
    %v9294 = vsel %vm168, %v9280, %v9282
    %v9295 = vsel %vm168, %v9282, %v9284
    %v9296 = vsel %vm168, %v9284, %v9286
    %v9297 = vsel %vm168, %v9286, %v9288
    %v9298 = vsel %vm168, %v9288, %v9290
    %v9299 = vsel %vm168, %v9290, %v9292
    %v9307 = vadd.f32 %v9252, %v9293
    %v9308 = vadd.f32 %v9253, %v9294
    %v9309 = vadd.f32 %v9254, %v9295
    %v9310 = vadd.f32 %v9255, %v9296
    %v9311 = vadd.f32 %v9256, %v9297
    %v9312 = vadd.f32 %v9257, %v9298
    %v9313 = vadd.f32 %v9258, %v9299
    %s9314 = sld [smem:[#allocation2 + $0x603]]
    %v9315 = vstv %s9314
    %v9316 = vmul.f32 %v61, %v9315
    %v9317 = vmul.f32 %v62, %v9315
    %v9318 = vmul.f32 %v63, %v9315
    %v9319 = vmul.f32 %v64, %v9315
    %v9320 = vmul.f32 %v65, %v9315
    %v9321 = vmul.f32 %v66, %v9315
    %v9322 = vmul.f32 %v67, %v9315
    %v9323 = vmul.f32 %v68, %v9315
    %9332 = vrot.lane.b32.xlu0 %v9316, 100
    %v9333 = vpop.permute.xlu0 %9332
    %9334 = vrot.lane.b32.xlu0 %v9317, 100
    %v9335 = vpop.permute.xlu0 %9334
    %9336 = vrot.lane.b32.xlu0 %v9318, 100
    %v9337 = vpop.permute.xlu0 %9336
    %9338 = vrot.lane.b32.xlu0 %v9319, 100
    %v9339 = vpop.permute.xlu0 %9338
    %9340 = vrot.lane.b32.xlu0 %v9320, 100
    %v9341 = vpop.permute.xlu0 %9340
    %9342 = vrot.lane.b32.xlu0 %v9321, 100
    %v9343 = vpop.permute.xlu0 %9342
    %9344 = vrot.lane.b32.xlu0 %v9322, 100
    %v9345 = vpop.permute.xlu0 %9344
    %9346 = vrot.lane.b32.xlu0 %v9323, 100
    %v9347 = vpop.permute.xlu0 %9346
    %v9348 = vsel %vm224, %v9333, %v9335
    %v9349 = vsel %vm224, %v9335, %v9337
    %v9350 = vsel %vm224, %v9337, %v9339
    %v9351 = vsel %vm224, %v9339, %v9341
    %v9352 = vsel %vm224, %v9341, %v9343
    %v9353 = vsel %vm224, %v9343, %v9345
    %v9354 = vsel %vm224, %v9345, %v9347
    %v9362 = vadd.f32 %v9307, %v9348
    %v9363 = vadd.f32 %v9308, %v9349
    %v9364 = vadd.f32 %v9309, %v9350
    %v9365 = vadd.f32 %v9310, %v9351
    %v9366 = vadd.f32 %v9311, %v9352
    %v9367 = vadd.f32 %v9312, %v9353
    %v9368 = vadd.f32 %v9313, %v9354
    %s9369 = sld [smem:[#allocation2 + $0x604]]
    %v9370 = vstv %s9369
    %v9371 = vmul.f32 %v61, %v9370
    %v9372 = vmul.f32 %v62, %v9370
    %v9373 = vmul.f32 %v63, %v9370
    %v9374 = vmul.f32 %v64, %v9370
    %v9375 = vmul.f32 %v65, %v9370
    %v9376 = vmul.f32 %v66, %v9370
    %v9377 = vmul.f32 %v67, %v9370
    %v9378 = vmul.f32 %v68, %v9370
    %9387 = vrot.lane.b32.xlu0 %v9371, 99
    %v9388 = vpop.permute.xlu0 %9387
    %9389 = vrot.lane.b32.xlu0 %v9372, 99
    %v9390 = vpop.permute.xlu0 %9389
    %9391 = vrot.lane.b32.xlu0 %v9373, 99
    %v9392 = vpop.permute.xlu0 %9391
    %9393 = vrot.lane.b32.xlu0 %v9374, 99
    %v9394 = vpop.permute.xlu0 %9393
    %9395 = vrot.lane.b32.xlu0 %v9375, 99
    %v9396 = vpop.permute.xlu0 %9395
    %9397 = vrot.lane.b32.xlu0 %v9376, 99
    %v9398 = vpop.permute.xlu0 %9397
    %9399 = vrot.lane.b32.xlu0 %v9377, 99
    %v9400 = vpop.permute.xlu0 %9399
    %9401 = vrot.lane.b32.xlu0 %v9378, 99
    %v9402 = vpop.permute.xlu0 %9401
    %v9403 = vsel %vm280, %v9388, %v9390
    %v9404 = vsel %vm280, %v9390, %v9392
    %v9405 = vsel %vm280, %v9392, %v9394
    %v9406 = vsel %vm280, %v9394, %v9396
    %v9407 = vsel %vm280, %v9396, %v9398
    %v9408 = vsel %vm280, %v9398, %v9400
    %v9409 = vsel %vm280, %v9400, %v9402
    %v9417 = vadd.f32 %v9362, %v9403
    %v9418 = vadd.f32 %v9363, %v9404
    %v9419 = vadd.f32 %v9364, %v9405
    %v9420 = vadd.f32 %v9365, %v9406
    %v9421 = vadd.f32 %v9366, %v9407
    %v9422 = vadd.f32 %v9367, %v9408
    %v9423 = vadd.f32 %v9368, %v9409
    %s9424 = sld [smem:[#allocation2 + $0x605]]
    %v9425 = vstv %s9424
    %v9426 = vmul.f32 %v61, %v9425
    %v9427 = vmul.f32 %v62, %v9425
    %v9428 = vmul.f32 %v63, %v9425
    %v9429 = vmul.f32 %v64, %v9425
    %v9430 = vmul.f32 %v65, %v9425
    %v9431 = vmul.f32 %v66, %v9425
    %v9432 = vmul.f32 %v67, %v9425
    %v9433 = vmul.f32 %v68, %v9425
    %9442 = vrot.lane.b32.xlu0 %v9426, 98
    %v9443 = vpop.permute.xlu0 %9442
    %9444 = vrot.lane.b32.xlu0 %v9427, 98
    %v9445 = vpop.permute.xlu0 %9444
    %9446 = vrot.lane.b32.xlu0 %v9428, 98
    %v9447 = vpop.permute.xlu0 %9446
    %9448 = vrot.lane.b32.xlu0 %v9429, 98
    %v9449 = vpop.permute.xlu0 %9448
    %9450 = vrot.lane.b32.xlu0 %v9430, 98
    %v9451 = vpop.permute.xlu0 %9450
    %9452 = vrot.lane.b32.xlu0 %v9431, 98
    %v9453 = vpop.permute.xlu0 %9452
    %9454 = vrot.lane.b32.xlu0 %v9432, 98
    %v9455 = vpop.permute.xlu0 %9454
    %9456 = vrot.lane.b32.xlu0 %v9433, 98
    %v9457 = vpop.permute.xlu0 %9456
    %v9458 = vsel %vm336, %v9443, %v9445
    %v9459 = vsel %vm336, %v9445, %v9447
    %v9460 = vsel %vm336, %v9447, %v9449
    %v9461 = vsel %vm336, %v9449, %v9451
    %v9462 = vsel %vm336, %v9451, %v9453
    %v9463 = vsel %vm336, %v9453, %v9455
    %v9464 = vsel %vm336, %v9455, %v9457
    %v9472 = vadd.f32 %v9417, %v9458
    %v9473 = vadd.f32 %v9418, %v9459
    %v9474 = vadd.f32 %v9419, %v9460
    %v9475 = vadd.f32 %v9420, %v9461
    %v9476 = vadd.f32 %v9421, %v9462
    %v9477 = vadd.f32 %v9422, %v9463
    %v9478 = vadd.f32 %v9423, %v9464
    %s9479 = sld [smem:[#allocation2 + $0x606]]
    %v9480 = vstv %s9479
    %v9481 = vmul.f32 %v61, %v9480
    %v9482 = vmul.f32 %v62, %v9480
    %v9483 = vmul.f32 %v63, %v9480
    %v9484 = vmul.f32 %v64, %v9480
    %v9485 = vmul.f32 %v65, %v9480
    %v9486 = vmul.f32 %v66, %v9480
    %v9487 = vmul.f32 %v67, %v9480
    %v9488 = vmul.f32 %v68, %v9480
    %9497 = vrot.lane.b32.xlu0 %v9481, 72
    %v9498 = vpop.permute.xlu0 %9497
    %9499 = vrot.lane.b32.xlu0 %v9482, 72
    %v9500 = vpop.permute.xlu0 %9499
    %9501 = vrot.lane.b32.xlu0 %v9483, 72
    %v9502 = vpop.permute.xlu0 %9501
    %9503 = vrot.lane.b32.xlu0 %v9484, 72
    %v9504 = vpop.permute.xlu0 %9503
    %9505 = vrot.lane.b32.xlu0 %v9485, 72
    %v9506 = vpop.permute.xlu0 %9505
    %9507 = vrot.lane.b32.xlu0 %v9486, 72
    %v9508 = vpop.permute.xlu0 %9507
    %9509 = vrot.lane.b32.xlu0 %v9487, 72
    %v9510 = vpop.permute.xlu0 %9509
    %9511 = vrot.lane.b32.xlu0 %v9488, 72
    %v9512 = vpop.permute.xlu0 %9511
    %v9513 = vsel %vm392, %v9498, %v9500
    %v9514 = vsel %vm392, %v9500, %v9502
    %v9515 = vsel %vm392, %v9502, %v9504
    %v9516 = vsel %vm392, %v9504, %v9506
    %v9517 = vsel %vm392, %v9506, %v9508
    %v9518 = vsel %vm392, %v9508, %v9510
    %v9519 = vsel %vm392, %v9510, %v9512
    %v9527 = vadd.f32 %v9472, %v9513
    %v9528 = vadd.f32 %v9473, %v9514
    %v9529 = vadd.f32 %v9474, %v9515
    %v9530 = vadd.f32 %v9475, %v9516
    %v9531 = vadd.f32 %v9476, %v9517
    %v9532 = vadd.f32 %v9477, %v9518
    %v9533 = vadd.f32 %v9478, %v9519
    %s9534 = sld [smem:[#allocation2 + $0x607]]
    %v9535 = vstv %s9534
    %v9536 = vmul.f32 %v61, %v9535
    %v9537 = vmul.f32 %v62, %v9535
    %v9538 = vmul.f32 %v63, %v9535
    %v9539 = vmul.f32 %v64, %v9535
    %v9540 = vmul.f32 %v65, %v9535
    %v9541 = vmul.f32 %v66, %v9535
    %v9542 = vmul.f32 %v67, %v9535
    %v9543 = vmul.f32 %v68, %v9535
    %9552 = vrot.lane.b32.xlu0 %v9536, 71
    %v9553 = vpop.permute.xlu0 %9552
    %9554 = vrot.lane.b32.xlu0 %v9537, 71
    %v9555 = vpop.permute.xlu0 %9554
    %9556 = vrot.lane.b32.xlu0 %v9538, 71
    %v9557 = vpop.permute.xlu0 %9556
    %9558 = vrot.lane.b32.xlu0 %v9539, 71
    %v9559 = vpop.permute.xlu0 %9558
    %9560 = vrot.lane.b32.xlu0 %v9540, 71
    %v9561 = vpop.permute.xlu0 %9560
    %9562 = vrot.lane.b32.xlu0 %v9541, 71
    %v9563 = vpop.permute.xlu0 %9562
    %9564 = vrot.lane.b32.xlu0 %v9542, 71
    %v9565 = vpop.permute.xlu0 %9564
    %9566 = vrot.lane.b32.xlu0 %v9543, 71
    %v9567 = vpop.permute.xlu0 %9566
    %v9568 = vsel %vm448, %v9553, %v9555
    %v9569 = vsel %vm448, %v9555, %v9557
    %v9570 = vsel %vm448, %v9557, %v9559
    %v9571 = vsel %vm448, %v9559, %v9561
    %v9572 = vsel %vm448, %v9561, %v9563
    %v9573 = vsel %vm448, %v9563, %v9565
    %v9574 = vsel %vm448, %v9565, %v9567
    %v9582 = vadd.f32 %v9527, %v9568
    %v9583 = vadd.f32 %v9528, %v9569
    %v9584 = vadd.f32 %v9529, %v9570
    %v9585 = vadd.f32 %v9530, %v9571
    %v9586 = vadd.f32 %v9531, %v9572
    %v9587 = vadd.f32 %v9532, %v9573
    %v9588 = vadd.f32 %v9533, %v9574
    %s9589 = sld [smem:[#allocation2 + $0x608]]
    %v9590 = vstv %s9589
    %v9591 = vmul.f32 %v61, %v9590
    %v9592 = vmul.f32 %v62, %v9590
    %v9593 = vmul.f32 %v63, %v9590
    %v9594 = vmul.f32 %v64, %v9590
    %v9595 = vmul.f32 %v65, %v9590
    %v9596 = vmul.f32 %v66, %v9590
    %v9597 = vmul.f32 %v67, %v9590
    %v9598 = vmul.f32 %v68, %v9590
    %9607 = vrot.lane.b32.xlu0 %v9591, 70
    %v9608 = vpop.permute.xlu0 %9607
    %9609 = vrot.lane.b32.xlu0 %v9592, 70
    %v9610 = vpop.permute.xlu0 %9609
    %9611 = vrot.lane.b32.xlu0 %v9593, 70
    %v9612 = vpop.permute.xlu0 %9611
    %9613 = vrot.lane.b32.xlu0 %v9594, 70
    %v9614 = vpop.permute.xlu0 %9613
    %9615 = vrot.lane.b32.xlu0 %v9595, 70
    %v9616 = vpop.permute.xlu0 %9615
    %9617 = vrot.lane.b32.xlu0 %v9596, 70
    %v9618 = vpop.permute.xlu0 %9617
    %9619 = vrot.lane.b32.xlu0 %v9597, 70
    %v9620 = vpop.permute.xlu0 %9619
    %9621 = vrot.lane.b32.xlu0 %v9598, 70
    %v9622 = vpop.permute.xlu0 %9621
    %v9623 = vsel %vm504, %v9608, %v9610
    %v9624 = vsel %vm504, %v9610, %v9612
    %v9625 = vsel %vm504, %v9612, %v9614
    %v9626 = vsel %vm504, %v9614, %v9616
    %v9627 = vsel %vm504, %v9616, %v9618
    %v9628 = vsel %vm504, %v9618, %v9620
    %v9629 = vsel %vm504, %v9620, %v9622
    %v9637 = vadd.f32 %v9582, %v9623
    %v9638 = vadd.f32 %v9583, %v9624
    %v9639 = vadd.f32 %v9584, %v9625
    %v9640 = vadd.f32 %v9585, %v9626
    %v9641 = vadd.f32 %v9586, %v9627
    %v9642 = vadd.f32 %v9587, %v9628
    %v9643 = vadd.f32 %v9588, %v9629
    %s9644 = sld [smem:[#allocation5 + $0xc]]
    %v9645 = vstv %s9644
    %v9646 = vadd.f32 %v9637, %v9645
    %v9647 = vadd.f32 %v9638, %v9645
    %v9648 = vadd.f32 %v9639, %v9645
    %v9649 = vadd.f32 %v9640, %v9645
    %v9650 = vadd.f32 %v9641, %v9645
    %v9651 = vadd.f32 %v9642, %v9645
    %v9652 = vadd.f32 %v9643, %v9645
    %v9653 = vmax.f32 %v9646, 0.0
    %v9654 = vmax.f32 %v9647, 0.0
    %v9655 = vmax.f32 %v9648, 0.0
    %v9656 = vmax.f32 %v9649, 0.0
    %v9657 = vmax.f32 %v9650, 0.0
    %v9658 = vmax.f32 %v9651, 0.0
    %v9659 = vmax.f32 %v9652, 0.0
    %v9660 = vld [vmem:[#allocation7 + $0x2a0] sm:$0xff]
    %v9661 = vld [vmem:[#allocation7 + $0x2a8] sm:$0xff]
    %v9662 = vld [vmem:[#allocation7 + $0x2b0] sm:$0xff]
    %v9663 = vld [vmem:[#allocation7 + $0x2b8] sm:$0xff]
    %v9664 = vld [vmem:[#allocation7 + $0x2c0] sm:$0xff]
    %v9665 = vld [vmem:[#allocation7 + $0x2c8] sm:$0xff]
    %v9666 = vld [vmem:[#allocation7 + $0x2d0] sm:$0xff]
    %v9667 = vld [vmem:[#allocation7 + $0x620] sm:$0x3]
    %v9668 = vld [vmem:[#allocation7 + $0x628] sm:$0x3]
    %v9669 = vld [vmem:[#allocation7 + $0x630] sm:$0x3]
    %v9670 = vld [vmem:[#allocation7 + $0x638] sm:$0x3]
    %v9671 = vld [vmem:[#allocation7 + $0x640] sm:$0x3]
    %v9672 = vld [vmem:[#allocation7 + $0x648] sm:$0x3]
    %v9673 = vld [vmem:[#allocation7 + $0x650] sm:$0x3]
    %9674 = vmatprep.subr.mxu0 %v9661
    %9675 = vmatpush1.xpose.msra.mxu0 %v9660
    %9676 = vmatprep.subr.mxu0 %v9668
    %9677 = vmatpush1.xpose.msra.mxu0 %v9667
    %9678 = vmatprep.subr.mxu0 0.0
    %9679 = vmatpush1.xpose.msra.mxu0 0.0
    %9680 = vmatprep.subr.mxu0 0.0
    %9681 = vmatpush1.xpose.msra.mxu0 0.0
    %9682 = vmatprep.subr.mxu0 0.0
    %9683 = vmatpush1.xpose.msra.mxu0 0.0
    %9684 = vmatprep.subr.mxu0 0.0
    %9685 = vmatpush1.xpose.msra.mxu0 0.0
    %9686 = vmatprep.subr.mxu0 0.0
    %9687 = vmatpush1.xpose.msra.mxu0 0.0
    %9688 = vmatprep.subr.mxu0 0.0
    %9689 = vmatpush1.xpose.msra.mxu0 0.0
    %9690 = vmatprep.subr.mxu0 0.0
    %9691 = vmatpush1.xpose.msra.mxu0 0.0
    %9692 = vmatprep.subr.mxu0 0.0
    %9693 = vmatpush1.xpose.msra.mxu0 0.0
    %9694 = vmatprep.subr.mxu0 0.0
    %9695 = vmatpush1.xpose.msra.mxu0 0.0
    %9696 = vmatprep.subr.mxu0 0.0
    %9697 = vmatpush1.xpose.msra.mxu0 0.0
    %9698 = vmatprep.subr.mxu0 0.0
    %9699 = vmatpush1.xpose.msra.mxu0 0.0
    %9700 = vmatprep.subr.mxu0 0.0
    %9701 = vmatpush1.xpose.msra.mxu0 0.0
    %9702 = vmatprep.subr.mxu0 0.0
    %9703 = vmatpush1.xpose.msra.mxu0 0.0
    %9704 = vmatprep.subr.mxu0 0.0
    %9705 = vmatpush1.xpose.msra.mxu0 0.0
    %9706 = vmatprep.subr.mxu0 0.0
    %9707 = vmatpush1.xpose.msra.mxu0 0.0
    %9708 = vmatprep.subr.mxu0 0.0
    %9709 = vmatpush1.xpose.msra.mxu0 0.0
    %9710 = vmatprep.subr.mxu0 0.0
    %9711 = vmatpush1.xpose.msra.mxu0 0.0
    %9712 = vmatprep.subr.mxu0 0.0
    %9713 = vmatpush1.xpose.msra.mxu0 0.0
    %9714 = vmatprep.subr.mxu0 0.0
    %9715 = vmatpush1.xpose.msra.mxu0 0.0
    %9716 = vmatprep.subr.mxu0 0.0
    %9717 = vmatpush1.xpose.msra.mxu0 0.0
    %9718 = vmatprep.subr.mxu0 0.0
    %9719 = vmatpush1.xpose.msra.mxu0 0.0
    %9720 = vmatprep.subr.mxu0 0.0
    %9721 = vmatpush1.xpose.msra.mxu0 0.0
    %9722 = vmatprep.subr.mxu0 0.0
    %9723 = vmatpush1.xpose.msra.mxu0 0.0
    %9724 = vmatprep.subr.mxu0 0.0
    %9725 = vmatpush1.xpose.msra.mxu0 0.0
    %9726 = vmatprep.subr.mxu0 0.0
    %9727 = vmatpush1.xpose.msra.mxu0 0.0
    %9728 = vmatprep.subr.mxu0 0.0
    %9729 = vmatpush1.xpose.msra.mxu0 0.0
    %9730 = vmatprep.subr.mxu0 0.0
    %9731 = vmatpush1.xpose.msra.mxu0 0.0
    %9732 = vmatprep.subr.mxu0 0.0
    %9733 = vmatpush1.xpose.msra.mxu0 0.0
    %9734 = vmatprep.subr.mxu0 0.0
    %9735 = vmatpush1.xpose.msra.mxu0 0.0
    %9736 = vmatprep.subr.mxu0 0.0
    %9737 = vmatpush1.xpose.msra.mxu0 0.0
    %9738 = vmatprep.mubr.f32.mxu0 %v9654
    %9739 = vmatmul.mubr.f32.gmra.mrb[0].mxu0 %v9653
    %v9740 = vpop.f32.mrb[0].mxu0
    %v9741 = vadd.f32 0.0, %v9740
    %v9742 = vpop.f32.mrb[0].mxu0
    %9743 = vdwg.mxu0
    %9744 = vmatprep.subr.mxu0 %v9663
    %9745 = vmatpush1.xpose.msra.mxu0 %v9662
    %9746 = vmatprep.subr.mxu0 %v9670
    %9747 = vmatpush1.xpose.msra.mxu0 %v9669
    %9748 = vmatprep.subr.mxu0 0.0
    %9749 = vmatpush1.xpose.msra.mxu0 0.0
    %9750 = vmatprep.subr.mxu0 0.0
    %9751 = vmatpush1.xpose.msra.mxu0 0.0
    %9752 = vmatprep.subr.mxu0 0.0
    %9753 = vmatpush1.xpose.msra.mxu0 0.0
    %9754 = vmatprep.subr.mxu0 0.0
    %9755 = vmatpush1.xpose.msra.mxu0 0.0
    %9756 = vmatprep.subr.mxu0 0.0
    %9757 = vmatpush1.xpose.msra.mxu0 0.0
    %9758 = vmatprep.subr.mxu0 0.0
    %9759 = vmatpush1.xpose.msra.mxu0 0.0
    %9760 = vmatprep.subr.mxu0 0.0
    %9761 = vmatpush1.xpose.msra.mxu0 0.0
    %9762 = vmatprep.subr.mxu0 0.0
    %9763 = vmatpush1.xpose.msra.mxu0 0.0
    %9764 = vmatprep.subr.mxu0 0.0
    %9765 = vmatpush1.xpose.msra.mxu0 0.0
    %9766 = vmatprep.subr.mxu0 0.0
    %9767 = vmatpush1.xpose.msra.mxu0 0.0
    %9768 = vmatprep.subr.mxu0 0.0
    %9769 = vmatpush1.xpose.msra.mxu0 0.0
    %9770 = vmatprep.subr.mxu0 0.0
    %9771 = vmatpush1.xpose.msra.mxu0 0.0
    %9772 = vmatprep.subr.mxu0 0.0
    %9773 = vmatpush1.xpose.msra.mxu0 0.0
    %9774 = vmatprep.subr.mxu0 0.0
    %9775 = vmatpush1.xpose.msra.mxu0 0.0
    %9776 = vmatprep.subr.mxu0 0.0
    %9777 = vmatpush1.xpose.msra.mxu0 0.0
    %9778 = vmatprep.subr.mxu0 0.0
    %9779 = vmatpush1.xpose.msra.mxu0 0.0
    %9780 = vmatprep.subr.mxu0 0.0
    %9781 = vmatpush1.xpose.msra.mxu0 0.0
    %9782 = vmatprep.subr.mxu0 0.0
    %9783 = vmatpush1.xpose.msra.mxu0 0.0
    %9784 = vmatprep.subr.mxu0 0.0
    %9785 = vmatpush1.xpose.msra.mxu0 0.0
    %9786 = vmatprep.subr.mxu0 0.0
    %9787 = vmatpush1.xpose.msra.mxu0 0.0
    %9788 = vmatprep.subr.mxu0 0.0
    %9789 = vmatpush1.xpose.msra.mxu0 0.0
    %9790 = vmatprep.subr.mxu0 0.0
    %9791 = vmatpush1.xpose.msra.mxu0 0.0
    %9792 = vmatprep.subr.mxu0 0.0
    %9793 = vmatpush1.xpose.msra.mxu0 0.0
    %9794 = vmatprep.subr.mxu0 0.0
    %9795 = vmatpush1.xpose.msra.mxu0 0.0
    %9796 = vmatprep.subr.mxu0 0.0
    %9797 = vmatpush1.xpose.msra.mxu0 0.0
    %9798 = vmatprep.subr.mxu0 0.0
    %9799 = vmatpush1.xpose.msra.mxu0 0.0
    %9800 = vmatprep.subr.mxu0 0.0
    %9801 = vmatpush1.xpose.msra.mxu0 0.0
    %9802 = vmatprep.subr.mxu0 0.0
    %9803 = vmatpush1.xpose.msra.mxu0 0.0
    %9804 = vmatprep.subr.mxu0 0.0
    %9805 = vmatpush1.xpose.msra.mxu0 0.0
    %9806 = vmatprep.subr.mxu0 0.0
    %9807 = vmatpush1.xpose.msra.mxu0 0.0
    %9808 = vmatprep.mubr.f32.mxu0 %v9656
    %9809 = vmatmul.mubr.f32.gmra.mrb[0].mxu0 %v9655
    %v9810 = vpop.f32.mrb[0].mxu0
    %v9811 = vadd.f32 %v9741, %v9810
    %v9812 = vpop.f32.mrb[0].mxu0
    %9813 = vdwg.mxu0
    %9814 = vmatprep.subr.mxu0 %v9665
    %9815 = vmatpush1.xpose.msra.mxu0 %v9664
    %9816 = vmatprep.subr.mxu0 %v9672
    %9817 = vmatpush1.xpose.msra.mxu0 %v9671
    %9818 = vmatprep.subr.mxu0 0.0
    %9819 = vmatpush1.xpose.msra.mxu0 0.0
    %9820 = vmatprep.subr.mxu0 0.0
    %9821 = vmatpush1.xpose.msra.mxu0 0.0
    %9822 = vmatprep.subr.mxu0 0.0
    %9823 = vmatpush1.xpose.msra.mxu0 0.0
    %9824 = vmatprep.subr.mxu0 0.0
    %9825 = vmatpush1.xpose.msra.mxu0 0.0
    %9826 = vmatprep.subr.mxu0 0.0
    %9827 = vmatpush1.xpose.msra.mxu0 0.0
    %9828 = vmatprep.subr.mxu0 0.0
    %9829 = vmatpush1.xpose.msra.mxu0 0.0
    %9830 = vmatprep.subr.mxu0 0.0
    %9831 = vmatpush1.xpose.msra.mxu0 0.0
    %9832 = vmatprep.subr.mxu0 0.0
    %9833 = vmatpush1.xpose.msra.mxu0 0.0
    %9834 = vmatprep.subr.mxu0 0.0
    %9835 = vmatpush1.xpose.msra.mxu0 0.0
    %9836 = vmatprep.subr.mxu0 0.0
    %9837 = vmatpush1.xpose.msra.mxu0 0.0
    %9838 = vmatprep.subr.mxu0 0.0
    %9839 = vmatpush1.xpose.msra.mxu0 0.0
    %9840 = vmatprep.subr.mxu0 0.0
    %9841 = vmatpush1.xpose.msra.mxu0 0.0
    %9842 = vmatprep.subr.mxu0 0.0
    %9843 = vmatpush1.xpose.msra.mxu0 0.0
    %9844 = vmatprep.subr.mxu0 0.0
    %9845 = vmatpush1.xpose.msra.mxu0 0.0
    %9846 = vmatprep.subr.mxu0 0.0
    %9847 = vmatpush1.xpose.msra.mxu0 0.0
    %9848 = vmatprep.subr.mxu0 0.0
    %9849 = vmatpush1.xpose.msra.mxu0 0.0
    %9850 = vmatprep.subr.mxu0 0.0
    %9851 = vmatpush1.xpose.msra.mxu0 0.0
    %9852 = vmatprep.subr.mxu0 0.0
    %9853 = vmatpush1.xpose.msra.mxu0 0.0
    %9854 = vmatprep.subr.mxu0 0.0
    %9855 = vmatpush1.xpose.msra.mxu0 0.0
    %9856 = vmatprep.subr.mxu0 0.0
    %9857 = vmatpush1.xpose.msra.mxu0 0.0
    %9858 = vmatprep.subr.mxu0 0.0
    %9859 = vmatpush1.xpose.msra.mxu0 0.0
    %9860 = vmatprep.subr.mxu0 0.0
    %9861 = vmatpush1.xpose.msra.mxu0 0.0
    %9862 = vmatprep.subr.mxu0 0.0
    %9863 = vmatpush1.xpose.msra.mxu0 0.0
    %9864 = vmatprep.subr.mxu0 0.0
    %9865 = vmatpush1.xpose.msra.mxu0 0.0
    %9866 = vmatprep.subr.mxu0 0.0
    %9867 = vmatpush1.xpose.msra.mxu0 0.0
    %9868 = vmatprep.subr.mxu0 0.0
    %9869 = vmatpush1.xpose.msra.mxu0 0.0
    %9870 = vmatprep.subr.mxu0 0.0
    %9871 = vmatpush1.xpose.msra.mxu0 0.0
    %9872 = vmatprep.subr.mxu0 0.0
    %9873 = vmatpush1.xpose.msra.mxu0 0.0
    %9874 = vmatprep.subr.mxu0 0.0
    %9875 = vmatpush1.xpose.msra.mxu0 0.0
    %9876 = vmatprep.subr.mxu0 0.0
    %9877 = vmatpush1.xpose.msra.mxu0 0.0
    %9878 = vmatprep.mubr.f32.mxu0 %v9658
    %9879 = vmatmul.mubr.f32.gmra.mrb[0].mxu0 %v9657
    %v9880 = vpop.f32.mrb[0].mxu0
    %v9881 = vadd.f32 %v9811, %v9880
    %v9882 = vpop.f32.mrb[0].mxu0
    %9883 = vdwg.mxu0
    %9884 = vmatprep.subr.mxu0 0.0
    %9885 = vmatpush1.xpose.msra.mxu0 %v9666
    %9886 = vmatprep.subr.mxu0 0.0
    %9887 = vmatpush1.xpose.msra.mxu0 %v9673
    %9888 = vmatprep.subr.mxu0 0.0
    %9889 = vmatpush1.xpose.msra.mxu0 0.0
    %9890 = vmatprep.subr.mxu0 0.0
    %9891 = vmatpush1.xpose.msra.mxu0 0.0
    %9892 = vmatprep.subr.mxu0 0.0
    %9893 = vmatpush1.xpose.msra.mxu0 0.0
    %9894 = vmatprep.subr.mxu0 0.0
    %9895 = vmatpush1.xpose.msra.mxu0 0.0
    %9896 = vmatprep.subr.mxu0 0.0
    %9897 = vmatpush1.xpose.msra.mxu0 0.0
    %9898 = vmatprep.subr.mxu0 0.0
    %9899 = vmatpush1.xpose.msra.mxu0 0.0
    %9900 = vmatprep.subr.mxu0 0.0
    %9901 = vmatpush1.xpose.msra.mxu0 0.0
    %9902 = vmatprep.subr.mxu0 0.0
    %9903 = vmatpush1.xpose.msra.mxu0 0.0
    %9904 = vmatprep.subr.mxu0 0.0
    %9905 = vmatpush1.xpose.msra.mxu0 0.0
    %9906 = vmatprep.subr.mxu0 0.0
    %9907 = vmatpush1.xpose.msra.mxu0 0.0
    %9908 = vmatprep.subr.mxu0 0.0
    %9909 = vmatpush1.xpose.msra.mxu0 0.0
    %9910 = vmatprep.subr.mxu0 0.0
    %9911 = vmatpush1.xpose.msra.mxu0 0.0
    %9912 = vmatprep.subr.mxu0 0.0
    %9913 = vmatpush1.xpose.msra.mxu0 0.0
    %9914 = vmatprep.subr.mxu0 0.0
    %9915 = vmatpush1.xpose.msra.mxu0 0.0
    %9916 = vmatprep.subr.mxu0 0.0
    %9917 = vmatpush1.xpose.msra.mxu0 0.0
    %9918 = vmatprep.subr.mxu0 0.0
    %9919 = vmatpush1.xpose.msra.mxu0 0.0
    %9920 = vmatprep.subr.mxu0 0.0
    %9921 = vmatpush1.xpose.msra.mxu0 0.0
    %9922 = vmatprep.subr.mxu0 0.0
    %9923 = vmatpush1.xpose.msra.mxu0 0.0
    %9924 = vmatprep.subr.mxu0 0.0
    %9925 = vmatpush1.xpose.msra.mxu0 0.0
    %9926 = vmatprep.subr.mxu0 0.0
    %9927 = vmatpush1.xpose.msra.mxu0 0.0
    %9928 = vmatprep.subr.mxu0 0.0
    %9929 = vmatpush1.xpose.msra.mxu0 0.0
    %9930 = vmatprep.subr.mxu0 0.0
    %9931 = vmatpush1.xpose.msra.mxu0 0.0
    %9932 = vmatprep.subr.mxu0 0.0
    %9933 = vmatpush1.xpose.msra.mxu0 0.0
    %9934 = vmatprep.subr.mxu0 0.0
    %9935 = vmatpush1.xpose.msra.mxu0 0.0
    %9936 = vmatprep.subr.mxu0 0.0
    %9937 = vmatpush1.xpose.msra.mxu0 0.0
    %9938 = vmatprep.subr.mxu0 0.0
    %9939 = vmatpush1.xpose.msra.mxu0 0.0
    %9940 = vmatprep.subr.mxu0 0.0
    %9941 = vmatpush1.xpose.msra.mxu0 0.0
    %9942 = vmatprep.subr.mxu0 0.0
    %9943 = vmatpush1.xpose.msra.mxu0 0.0
    %9944 = vmatprep.subr.mxu0 0.0
    %9945 = vmatpush1.xpose.msra.mxu0 0.0
    %9946 = vmatprep.subr.mxu0 0.0
    %9947 = vmatpush1.xpose.msra.mxu0 0.0
    %9948 = vmatprep.mubr.f32.mxu0 0.0
    %9949 = vmatmul.mubr.f32.gmra.mrb[0].mxu0 %v9659
    %v9950 = vpop.f32.mrb[0].mxu0
    %v9951 = vadd.f32 %v9881, %v9950
    %v9952 = vpop.f32.mrb[0].mxu0
    %9953 = vdwg.mxu0
    %v9954 = vadd.f32 %v9194, %v9951
    %s9955 = sld [smem:[#allocation2 + $0x680]]
    %v9956 = vstv %s9955
    %v9957 = vmul.f32 %v61, %v9956
    %v9958 = vmul.f32 %v62, %v9956
    %v9959 = vmul.f32 %v63, %v9956
    %v9960 = vmul.f32 %v64, %v9956
    %v9961 = vmul.f32 %v65, %v9956
    %v9962 = vmul.f32 %v66, %v9956
    %v9963 = vmul.f32 %v67, %v9956
    %s9964 = sld [smem:[#allocation2 + $0x681]]
    %v9965 = vstv %s9964
    %v9966 = vmul.f32 %v61, %v9965
    %v9967 = vmul.f32 %v62, %v9965
    %v9968 = vmul.f32 %v63, %v9965
    %v9969 = vmul.f32 %v64, %v9965
    %v9970 = vmul.f32 %v65, %v9965
    %v9971 = vmul.f32 %v66, %v9965
    %v9972 = vmul.f32 %v67, %v9965
    %v9973 = vmul.f32 %v68, %v9965
    %9982 = vrot.lane.b32.xlu0 %v9966, 127
    %v9983 = vpop.permute.xlu0 %9982
    %9984 = vrot.lane.b32.xlu0 %v9967, 127
    %v9985 = vpop.permute.xlu0 %9984
    %9986 = vrot.lane.b32.xlu0 %v9968, 127
    %v9987 = vpop.permute.xlu0 %9986
    %9988 = vrot.lane.b32.xlu0 %v9969, 127
    %v9989 = vpop.permute.xlu0 %9988
    %9990 = vrot.lane.b32.xlu0 %v9970, 127
    %v9991 = vpop.permute.xlu0 %9990
    %9992 = vrot.lane.b32.xlu0 %v9971, 127
    %v9993 = vpop.permute.xlu0 %9992
    %9994 = vrot.lane.b32.xlu0 %v9972, 127
    %v9995 = vpop.permute.xlu0 %9994
    %9996 = vrot.lane.b32.xlu0 %v9973, 127
    %v9997 = vpop.permute.xlu0 %9996
    %v9998 = vsel %vm112, %v9983, %v9985
    %v9999 = vsel %vm112, %v9985, %v9987
    %v10000 = vsel %vm112, %v9987, %v9989
    %v10001 = vsel %vm112, %v9989, %v9991
    %v10002 = vsel %vm112, %v9991, %v9993
    %v10003 = vsel %vm112, %v9993, %v9995
    %v10004 = vsel %vm112, %v9995, %v9997
    %v10012 = vadd.f32 %v9957, %v9998
    %v10013 = vadd.f32 %v9958, %v9999
    %v10014 = vadd.f32 %v9959, %v10000
    %v10015 = vadd.f32 %v9960, %v10001
    %v10016 = vadd.f32 %v9961, %v10002
    %v10017 = vadd.f32 %v9962, %v10003
    %v10018 = vadd.f32 %v9963, %v10004
    %s10019 = sld [smem:[#allocation2 + $0x682]]
    %v10020 = vstv %s10019
    %v10021 = vmul.f32 %v61, %v10020
    %v10022 = vmul.f32 %v62, %v10020
    %v10023 = vmul.f32 %v63, %v10020
    %v10024 = vmul.f32 %v64, %v10020
    %v10025 = vmul.f32 %v65, %v10020
    %v10026 = vmul.f32 %v66, %v10020
    %v10027 = vmul.f32 %v67, %v10020
    %v10028 = vmul.f32 %v68, %v10020
    %10037 = vrot.lane.b32.xlu0 %v10021, 126
    %v10038 = vpop.permute.xlu0 %10037
    %10039 = vrot.lane.b32.xlu0 %v10022, 126
    %v10040 = vpop.permute.xlu0 %10039
    %10041 = vrot.lane.b32.xlu0 %v10023, 126
    %v10042 = vpop.permute.xlu0 %10041
    %10043 = vrot.lane.b32.xlu0 %v10024, 126
    %v10044 = vpop.permute.xlu0 %10043
    %10045 = vrot.lane.b32.xlu0 %v10025, 126
    %v10046 = vpop.permute.xlu0 %10045
    %10047 = vrot.lane.b32.xlu0 %v10026, 126
    %v10048 = vpop.permute.xlu0 %10047
    %10049 = vrot.lane.b32.xlu0 %v10027, 126
    %v10050 = vpop.permute.xlu0 %10049
    %10051 = vrot.lane.b32.xlu0 %v10028, 126
    %v10052 = vpop.permute.xlu0 %10051
    %v10053 = vsel %vm168, %v10038, %v10040
    %v10054 = vsel %vm168, %v10040, %v10042
    %v10055 = vsel %vm168, %v10042, %v10044
    %v10056 = vsel %vm168, %v10044, %v10046
    %v10057 = vsel %vm168, %v10046, %v10048
    %v10058 = vsel %vm168, %v10048, %v10050
    %v10059 = vsel %vm168, %v10050, %v10052
    %v10067 = vadd.f32 %v10012, %v10053
    %v10068 = vadd.f32 %v10013, %v10054
    %v10069 = vadd.f32 %v10014, %v10055
    %v10070 = vadd.f32 %v10015, %v10056
    %v10071 = vadd.f32 %v10016, %v10057
    %v10072 = vadd.f32 %v10017, %v10058
    %v10073 = vadd.f32 %v10018, %v10059
    %s10074 = sld [smem:[#allocation2 + $0x683]]
    %v10075 = vstv %s10074
    %v10076 = vmul.f32 %v61, %v10075
    %v10077 = vmul.f32 %v62, %v10075
    %v10078 = vmul.f32 %v63, %v10075
    %v10079 = vmul.f32 %v64, %v10075
    %v10080 = vmul.f32 %v65, %v10075
    %v10081 = vmul.f32 %v66, %v10075
    %v10082 = vmul.f32 %v67, %v10075
    %v10083 = vmul.f32 %v68, %v10075
    %10092 = vrot.lane.b32.xlu0 %v10076, 100
    %v10093 = vpop.permute.xlu0 %10092
    %10094 = vrot.lane.b32.xlu0 %v10077, 100
    %v10095 = vpop.permute.xlu0 %10094
    %10096 = vrot.lane.b32.xlu0 %v10078, 100
    %v10097 = vpop.permute.xlu0 %10096
    %10098 = vrot.lane.b32.xlu0 %v10079, 100
    %v10099 = vpop.permute.xlu0 %10098
    %10100 = vrot.lane.b32.xlu0 %v10080, 100
    %v10101 = vpop.permute.xlu0 %10100
    %10102 = vrot.lane.b32.xlu0 %v10081, 100
    %v10103 = vpop.permute.xlu0 %10102
    %10104 = vrot.lane.b32.xlu0 %v10082, 100
    %v10105 = vpop.permute.xlu0 %10104
    %10106 = vrot.lane.b32.xlu0 %v10083, 100
    %v10107 = vpop.permute.xlu0 %10106
    %v10108 = vsel %vm224, %v10093, %v10095
    %v10109 = vsel %vm224, %v10095, %v10097
    %v10110 = vsel %vm224, %v10097, %v10099
    %v10111 = vsel %vm224, %v10099, %v10101
    %v10112 = vsel %vm224, %v10101, %v10103
    %v10113 = vsel %vm224, %v10103, %v10105
    %v10114 = vsel %vm224, %v10105, %v10107
    %v10122 = vadd.f32 %v10067, %v10108
    %v10123 = vadd.f32 %v10068, %v10109
    %v10124 = vadd.f32 %v10069, %v10110
    %v10125 = vadd.f32 %v10070, %v10111
    %v10126 = vadd.f32 %v10071, %v10112
    %v10127 = vadd.f32 %v10072, %v10113
    %v10128 = vadd.f32 %v10073, %v10114
    %s10129 = sld [smem:[#allocation2 + $0x684]]
    %v10130 = vstv %s10129
    %v10131 = vmul.f32 %v61, %v10130
    %v10132 = vmul.f32 %v62, %v10130
    %v10133 = vmul.f32 %v63, %v10130
    %v10134 = vmul.f32 %v64, %v10130
    %v10135 = vmul.f32 %v65, %v10130
    %v10136 = vmul.f32 %v66, %v10130
    %v10137 = vmul.f32 %v67, %v10130
    %v10138 = vmul.f32 %v68, %v10130
    %10147 = vrot.lane.b32.xlu0 %v10131, 99
    %v10148 = vpop.permute.xlu0 %10147
    %10149 = vrot.lane.b32.xlu0 %v10132, 99
    %v10150 = vpop.permute.xlu0 %10149
    %10151 = vrot.lane.b32.xlu0 %v10133, 99
    %v10152 = vpop.permute.xlu0 %10151
    %10153 = vrot.lane.b32.xlu0 %v10134, 99
    %v10154 = vpop.permute.xlu0 %10153
    %10155 = vrot.lane.b32.xlu0 %v10135, 99
    %v10156 = vpop.permute.xlu0 %10155
    %10157 = vrot.lane.b32.xlu0 %v10136, 99
    %v10158 = vpop.permute.xlu0 %10157
    %10159 = vrot.lane.b32.xlu0 %v10137, 99
    %v10160 = vpop.permute.xlu0 %10159
    %10161 = vrot.lane.b32.xlu0 %v10138, 99
    %v10162 = vpop.permute.xlu0 %10161
    %v10163 = vsel %vm280, %v10148, %v10150
    %v10164 = vsel %vm280, %v10150, %v10152
    %v10165 = vsel %vm280, %v10152, %v10154
    %v10166 = vsel %vm280, %v10154, %v10156
    %v10167 = vsel %vm280, %v10156, %v10158
    %v10168 = vsel %vm280, %v10158, %v10160
    %v10169 = vsel %vm280, %v10160, %v10162
    %v10177 = vadd.f32 %v10122, %v10163
    %v10178 = vadd.f32 %v10123, %v10164
    %v10179 = vadd.f32 %v10124, %v10165
    %v10180 = vadd.f32 %v10125, %v10166
    %v10181 = vadd.f32 %v10126, %v10167
    %v10182 = vadd.f32 %v10127, %v10168
    %v10183 = vadd.f32 %v10128, %v10169
    %s10184 = sld [smem:[#allocation2 + $0x685]]
    %v10185 = vstv %s10184
    %v10186 = vmul.f32 %v61, %v10185
    %v10187 = vmul.f32 %v62, %v10185
    %v10188 = vmul.f32 %v63, %v10185
    %v10189 = vmul.f32 %v64, %v10185
    %v10190 = vmul.f32 %v65, %v10185
    %v10191 = vmul.f32 %v66, %v10185
    %v10192 = vmul.f32 %v67, %v10185
    %v10193 = vmul.f32 %v68, %v10185
    %10202 = vrot.lane.b32.xlu0 %v10186, 98
    %v10203 = vpop.permute.xlu0 %10202
    %10204 = vrot.lane.b32.xlu0 %v10187, 98
    %v10205 = vpop.permute.xlu0 %10204
    %10206 = vrot.lane.b32.xlu0 %v10188, 98
    %v10207 = vpop.permute.xlu0 %10206
    %10208 = vrot.lane.b32.xlu0 %v10189, 98
    %v10209 = vpop.permute.xlu0 %10208
    %10210 = vrot.lane.b32.xlu0 %v10190, 98
    %v10211 = vpop.permute.xlu0 %10210
    %10212 = vrot.lane.b32.xlu0 %v10191, 98
    %v10213 = vpop.permute.xlu0 %10212
    %10214 = vrot.lane.b32.xlu0 %v10192, 98
    %v10215 = vpop.permute.xlu0 %10214
    %10216 = vrot.lane.b32.xlu0 %v10193, 98
    %v10217 = vpop.permute.xlu0 %10216
    %v10218 = vsel %vm336, %v10203, %v10205
    %v10219 = vsel %vm336, %v10205, %v10207
    %v10220 = vsel %vm336, %v10207, %v10209
    %v10221 = vsel %vm336, %v10209, %v10211
    %v10222 = vsel %vm336, %v10211, %v10213
    %v10223 = vsel %vm336, %v10213, %v10215
    %v10224 = vsel %vm336, %v10215, %v10217
    %v10232 = vadd.f32 %v10177, %v10218
    %v10233 = vadd.f32 %v10178, %v10219
    %v10234 = vadd.f32 %v10179, %v10220
    %v10235 = vadd.f32 %v10180, %v10221
    %v10236 = vadd.f32 %v10181, %v10222
    %v10237 = vadd.f32 %v10182, %v10223
    %v10238 = vadd.f32 %v10183, %v10224
    %s10239 = sld [smem:[#allocation2 + $0x686]]
    %v10240 = vstv %s10239
    %v10241 = vmul.f32 %v61, %v10240
    %v10242 = vmul.f32 %v62, %v10240
    %v10243 = vmul.f32 %v63, %v10240
    %v10244 = vmul.f32 %v64, %v10240
    %v10245 = vmul.f32 %v65, %v10240
    %v10246 = vmul.f32 %v66, %v10240
    %v10247 = vmul.f32 %v67, %v10240
    %v10248 = vmul.f32 %v68, %v10240
    %10257 = vrot.lane.b32.xlu0 %v10241, 72
    %v10258 = vpop.permute.xlu0 %10257
    %10259 = vrot.lane.b32.xlu0 %v10242, 72
    %v10260 = vpop.permute.xlu0 %10259
    %10261 = vrot.lane.b32.xlu0 %v10243, 72
    %v10262 = vpop.permute.xlu0 %10261
    %10263 = vrot.lane.b32.xlu0 %v10244, 72
    %v10264 = vpop.permute.xlu0 %10263
    %10265 = vrot.lane.b32.xlu0 %v10245, 72
    %v10266 = vpop.permute.xlu0 %10265
    %10267 = vrot.lane.b32.xlu0 %v10246, 72
    %v10268 = vpop.permute.xlu0 %10267
    %10269 = vrot.lane.b32.xlu0 %v10247, 72
    %v10270 = vpop.permute.xlu0 %10269
    %10271 = vrot.lane.b32.xlu0 %v10248, 72
    %v10272 = vpop.permute.xlu0 %10271
    %v10273 = vsel %vm392, %v10258, %v10260
    %v10274 = vsel %vm392, %v10260, %v10262
    %v10275 = vsel %vm392, %v10262, %v10264
    %v10276 = vsel %vm392, %v10264, %v10266
    %v10277 = vsel %vm392, %v10266, %v10268
    %v10278 = vsel %vm392, %v10268, %v10270
    %v10279 = vsel %vm392, %v10270, %v10272
    %v10287 = vadd.f32 %v10232, %v10273
    %v10288 = vadd.f32 %v10233, %v10274
    %v10289 = vadd.f32 %v10234, %v10275
    %v10290 = vadd.f32 %v10235, %v10276
    %v10291 = vadd.f32 %v10236, %v10277
    %v10292 = vadd.f32 %v10237, %v10278
    %v10293 = vadd.f32 %v10238, %v10279
    %s10294 = sld [smem:[#allocation2 + $0x687]]
    %v10295 = vstv %s10294
    %v10296 = vmul.f32 %v61, %v10295
    %v10297 = vmul.f32 %v62, %v10295
    %v10298 = vmul.f32 %v63, %v10295
    %v10299 = vmul.f32 %v64, %v10295
    %v10300 = vmul.f32 %v65, %v10295
    %v10301 = vmul.f32 %v66, %v10295
    %v10302 = vmul.f32 %v67, %v10295
    %v10303 = vmul.f32 %v68, %v10295
    %10312 = vrot.lane.b32.xlu0 %v10296, 71
    %v10313 = vpop.permute.xlu0 %10312
    %10314 = vrot.lane.b32.xlu0 %v10297, 71
    %v10315 = vpop.permute.xlu0 %10314
    %10316 = vrot.lane.b32.xlu0 %v10298, 71
    %v10317 = vpop.permute.xlu0 %10316
    %10318 = vrot.lane.b32.xlu0 %v10299, 71
    %v10319 = vpop.permute.xlu0 %10318
    %10320 = vrot.lane.b32.xlu0 %v10300, 71
    %v10321 = vpop.permute.xlu0 %10320
    %10322 = vrot.lane.b32.xlu0 %v10301, 71
    %v10323 = vpop.permute.xlu0 %10322
    %10324 = vrot.lane.b32.xlu0 %v10302, 71
    %v10325 = vpop.permute.xlu0 %10324
    %10326 = vrot.lane.b32.xlu0 %v10303, 71
    %v10327 = vpop.permute.xlu0 %10326
    %v10328 = vsel %vm448, %v10313, %v10315
    %v10329 = vsel %vm448, %v10315, %v10317
    %v10330 = vsel %vm448, %v10317, %v10319
    %v10331 = vsel %vm448, %v10319, %v10321
    %v10332 = vsel %vm448, %v10321, %v10323
    %v10333 = vsel %vm448, %v10323, %v10325
    %v10334 = vsel %vm448, %v10325, %v10327
    %v10342 = vadd.f32 %v10287, %v10328
    %v10343 = vadd.f32 %v10288, %v10329
    %v10344 = vadd.f32 %v10289, %v10330
    %v10345 = vadd.f32 %v10290, %v10331
    %v10346 = vadd.f32 %v10291, %v10332
    %v10347 = vadd.f32 %v10292, %v10333
    %v10348 = vadd.f32 %v10293, %v10334
    %s10349 = sld [smem:[#allocation2 + $0x688]]
    %v10350 = vstv %s10349
    %v10351 = vmul.f32 %v61, %v10350
    %v10352 = vmul.f32 %v62, %v10350
    %v10353 = vmul.f32 %v63, %v10350
    %v10354 = vmul.f32 %v64, %v10350
    %v10355 = vmul.f32 %v65, %v10350
    %v10356 = vmul.f32 %v66, %v10350
    %v10357 = vmul.f32 %v67, %v10350
    %v10358 = vmul.f32 %v68, %v10350
    %10367 = vrot.lane.b32.xlu0 %v10351, 70
    %v10368 = vpop.permute.xlu0 %10367
    %10369 = vrot.lane.b32.xlu0 %v10352, 70
    %v10370 = vpop.permute.xlu0 %10369
    %10371 = vrot.lane.b32.xlu0 %v10353, 70
    %v10372 = vpop.permute.xlu0 %10371
    %10373 = vrot.lane.b32.xlu0 %v10354, 70
    %v10374 = vpop.permute.xlu0 %10373
    %10375 = vrot.lane.b32.xlu0 %v10355, 70
    %v10376 = vpop.permute.xlu0 %10375
    %10377 = vrot.lane.b32.xlu0 %v10356, 70
    %v10378 = vpop.permute.xlu0 %10377
    %10379 = vrot.lane.b32.xlu0 %v10357, 70
    %v10380 = vpop.permute.xlu0 %10379
    %10381 = vrot.lane.b32.xlu0 %v10358, 70
    %v10382 = vpop.permute.xlu0 %10381
    %v10383 = vsel %vm504, %v10368, %v10370
    %v10384 = vsel %vm504, %v10370, %v10372
    %v10385 = vsel %vm504, %v10372, %v10374
    %v10386 = vsel %vm504, %v10374, %v10376
    %v10387 = vsel %vm504, %v10376, %v10378
    %v10388 = vsel %vm504, %v10378, %v10380
    %v10389 = vsel %vm504, %v10380, %v10382
    %v10397 = vadd.f32 %v10342, %v10383
    %v10398 = vadd.f32 %v10343, %v10384
    %v10399 = vadd.f32 %v10344, %v10385
    %v10400 = vadd.f32 %v10345, %v10386
    %v10401 = vadd.f32 %v10346, %v10387
    %v10402 = vadd.f32 %v10347, %v10388
    %v10403 = vadd.f32 %v10348, %v10389
    %s10404 = sld [smem:[#allocation5 + $0xd]]
    %v10405 = vstv %s10404
    %v10406 = vadd.f32 %v10397, %v10405
    %v10407 = vadd.f32 %v10398, %v10405
    %v10408 = vadd.f32 %v10399, %v10405
    %v10409 = vadd.f32 %v10400, %v10405
    %v10410 = vadd.f32 %v10401, %v10405
    %v10411 = vadd.f32 %v10402, %v10405
    %v10412 = vadd.f32 %v10403, %v10405
    %v10413 = vmax.f32 %v10406, 0.0
    %v10414 = vmax.f32 %v10407, 0.0
    %v10415 = vmax.f32 %v10408, 0.0
    %v10416 = vmax.f32 %v10409, 0.0
    %v10417 = vmax.f32 %v10410, 0.0
    %v10418 = vmax.f32 %v10411, 0.0
    %v10419 = vmax.f32 %v10412, 0.0
    %v10420 = vld [vmem:[#allocation7 + $0x2d8] sm:$0xff]
    %v10421 = vld [vmem:[#allocation7 + $0x2e0] sm:$0xff]
    %v10422 = vld [vmem:[#allocation7 + $0x2e8] sm:$0xff]
    %v10423 = vld [vmem:[#allocation7 + $0x2f0] sm:$0xff]
    %v10424 = vld [vmem:[#allocation7 + $0x2f8] sm:$0xff]
    %v10425 = vld [vmem:[#allocation7 + $0x300] sm:$0xff]
    %v10426 = vld [vmem:[#allocation7 + $0x308] sm:$0xff]
    %v10427 = vld [vmem:[#allocation7 + $0x658] sm:$0x3]
    %v10428 = vld [vmem:[#allocation7 + $0x660] sm:$0x3]
    %v10429 = vld [vmem:[#allocation7 + $0x668] sm:$0x3]
    %v10430 = vld [vmem:[#allocation7 + $0x670] sm:$0x3]
    %v10431 = vld [vmem:[#allocation7 + $0x678] sm:$0x3]
    %v10432 = vld [vmem:[#allocation7 + $0x680] sm:$0x3]
    %v10433 = vld [vmem:[#allocation7 + $0x688] sm:$0x3]
    %10434 = vmatprep.subr.mxu0 %v10421
    %10435 = vmatpush1.xpose.msra.mxu0 %v10420
    %10436 = vmatprep.subr.mxu0 %v10428
    %10437 = vmatpush1.xpose.msra.mxu0 %v10427
    %10438 = vmatprep.subr.mxu0 0.0
    %10439 = vmatpush1.xpose.msra.mxu0 0.0
    %10440 = vmatprep.subr.mxu0 0.0
    %10441 = vmatpush1.xpose.msra.mxu0 0.0
    %10442 = vmatprep.subr.mxu0 0.0
    %10443 = vmatpush1.xpose.msra.mxu0 0.0
    %10444 = vmatprep.subr.mxu0 0.0
    %10445 = vmatpush1.xpose.msra.mxu0 0.0
    %10446 = vmatprep.subr.mxu0 0.0
    %10447 = vmatpush1.xpose.msra.mxu0 0.0
    %10448 = vmatprep.subr.mxu0 0.0
    %10449 = vmatpush1.xpose.msra.mxu0 0.0
    %10450 = vmatprep.subr.mxu0 0.0
    %10451 = vmatpush1.xpose.msra.mxu0 0.0
    %10452 = vmatprep.subr.mxu0 0.0
    %10453 = vmatpush1.xpose.msra.mxu0 0.0
    %10454 = vmatprep.subr.mxu0 0.0
    %10455 = vmatpush1.xpose.msra.mxu0 0.0
    %10456 = vmatprep.subr.mxu0 0.0
    %10457 = vmatpush1.xpose.msra.mxu0 0.0
    %10458 = vmatprep.subr.mxu0 0.0
    %10459 = vmatpush1.xpose.msra.mxu0 0.0
    %10460 = vmatprep.subr.mxu0 0.0
    %10461 = vmatpush1.xpose.msra.mxu0 0.0
    %10462 = vmatprep.subr.mxu0 0.0
    %10463 = vmatpush1.xpose.msra.mxu0 0.0
    %10464 = vmatprep.subr.mxu0 0.0
    %10465 = vmatpush1.xpose.msra.mxu0 0.0
    %10466 = vmatprep.subr.mxu0 0.0
    %10467 = vmatpush1.xpose.msra.mxu0 0.0
    %10468 = vmatprep.subr.mxu0 0.0
    %10469 = vmatpush1.xpose.msra.mxu0 0.0
    %10470 = vmatprep.subr.mxu0 0.0
    %10471 = vmatpush1.xpose.msra.mxu0 0.0
    %10472 = vmatprep.subr.mxu0 0.0
    %10473 = vmatpush1.xpose.msra.mxu0 0.0
    %10474 = vmatprep.subr.mxu0 0.0
    %10475 = vmatpush1.xpose.msra.mxu0 0.0
    %10476 = vmatprep.subr.mxu0 0.0
    %10477 = vmatpush1.xpose.msra.mxu0 0.0
    %10478 = vmatprep.subr.mxu0 0.0
    %10479 = vmatpush1.xpose.msra.mxu0 0.0
    %10480 = vmatprep.subr.mxu0 0.0
    %10481 = vmatpush1.xpose.msra.mxu0 0.0
    %10482 = vmatprep.subr.mxu0 0.0
    %10483 = vmatpush1.xpose.msra.mxu0 0.0
    %10484 = vmatprep.subr.mxu0 0.0
    %10485 = vmatpush1.xpose.msra.mxu0 0.0
    %10486 = vmatprep.subr.mxu0 0.0
    %10487 = vmatpush1.xpose.msra.mxu0 0.0
    %10488 = vmatprep.subr.mxu0 0.0
    %10489 = vmatpush1.xpose.msra.mxu0 0.0
    %10490 = vmatprep.subr.mxu0 0.0
    %10491 = vmatpush1.xpose.msra.mxu0 0.0
    %10492 = vmatprep.subr.mxu0 0.0
    %10493 = vmatpush1.xpose.msra.mxu0 0.0
    %10494 = vmatprep.subr.mxu0 0.0
    %10495 = vmatpush1.xpose.msra.mxu0 0.0
    %10496 = vmatprep.subr.mxu0 0.0
    %10497 = vmatpush1.xpose.msra.mxu0 0.0
    %10498 = vmatprep.mubr.f32.mxu0 %v10414
    %10499 = vmatmul.mubr.f32.gmra.mrb[0].mxu0 %v10413
    %v10500 = vpop.f32.mrb[0].mxu0
    %v10501 = vadd.f32 0.0, %v10500
    %v10502 = vpop.f32.mrb[0].mxu0
    %10503 = vdwg.mxu0
    %10504 = vmatprep.subr.mxu0 %v10423
    %10505 = vmatpush1.xpose.msra.mxu0 %v10422
    %10506 = vmatprep.subr.mxu0 %v10430
    %10507 = vmatpush1.xpose.msra.mxu0 %v10429
    %10508 = vmatprep.subr.mxu0 0.0
    %10509 = vmatpush1.xpose.msra.mxu0 0.0
    %10510 = vmatprep.subr.mxu0 0.0
    %10511 = vmatpush1.xpose.msra.mxu0 0.0
    %10512 = vmatprep.subr.mxu0 0.0
    %10513 = vmatpush1.xpose.msra.mxu0 0.0
    %10514 = vmatprep.subr.mxu0 0.0
    %10515 = vmatpush1.xpose.msra.mxu0 0.0
    %10516 = vmatprep.subr.mxu0 0.0
    %10517 = vmatpush1.xpose.msra.mxu0 0.0
    %10518 = vmatprep.subr.mxu0 0.0
    %10519 = vmatpush1.xpose.msra.mxu0 0.0
    %10520 = vmatprep.subr.mxu0 0.0
    %10521 = vmatpush1.xpose.msra.mxu0 0.0
    %10522 = vmatprep.subr.mxu0 0.0
    %10523 = vmatpush1.xpose.msra.mxu0 0.0
    %10524 = vmatprep.subr.mxu0 0.0
    %10525 = vmatpush1.xpose.msra.mxu0 0.0
    %10526 = vmatprep.subr.mxu0 0.0
    %10527 = vmatpush1.xpose.msra.mxu0 0.0
    %10528 = vmatprep.subr.mxu0 0.0
    %10529 = vmatpush1.xpose.msra.mxu0 0.0
    %10530 = vmatprep.subr.mxu0 0.0
    %10531 = vmatpush1.xpose.msra.mxu0 0.0
    %10532 = vmatprep.subr.mxu0 0.0
    %10533 = vmatpush1.xpose.msra.mxu0 0.0
    %10534 = vmatprep.subr.mxu0 0.0
    %10535 = vmatpush1.xpose.msra.mxu0 0.0
    %10536 = vmatprep.subr.mxu0 0.0
    %10537 = vmatpush1.xpose.msra.mxu0 0.0
    %10538 = vmatprep.subr.mxu0 0.0
    %10539 = vmatpush1.xpose.msra.mxu0 0.0
    %10540 = vmatprep.subr.mxu0 0.0
    %10541 = vmatpush1.xpose.msra.mxu0 0.0
    %10542 = vmatprep.subr.mxu0 0.0
    %10543 = vmatpush1.xpose.msra.mxu0 0.0
    %10544 = vmatprep.subr.mxu0 0.0
    %10545 = vmatpush1.xpose.msra.mxu0 0.0
    %10546 = vmatprep.subr.mxu0 0.0
    %10547 = vmatpush1.xpose.msra.mxu0 0.0
    %10548 = vmatprep.subr.mxu0 0.0
    %10549 = vmatpush1.xpose.msra.mxu0 0.0
    %10550 = vmatprep.subr.mxu0 0.0
    %10551 = vmatpush1.xpose.msra.mxu0 0.0
    %10552 = vmatprep.subr.mxu0 0.0
    %10553 = vmatpush1.xpose.msra.mxu0 0.0
    %10554 = vmatprep.subr.mxu0 0.0
    %10555 = vmatpush1.xpose.msra.mxu0 0.0
    %10556 = vmatprep.subr.mxu0 0.0
    %10557 = vmatpush1.xpose.msra.mxu0 0.0
    %10558 = vmatprep.subr.mxu0 0.0
    %10559 = vmatpush1.xpose.msra.mxu0 0.0
    %10560 = vmatprep.subr.mxu0 0.0
    %10561 = vmatpush1.xpose.msra.mxu0 0.0
    %10562 = vmatprep.subr.mxu0 0.0
    %10563 = vmatpush1.xpose.msra.mxu0 0.0
    %10564 = vmatprep.subr.mxu0 0.0
    %10565 = vmatpush1.xpose.msra.mxu0 0.0
    %10566 = vmatprep.subr.mxu0 0.0
    %10567 = vmatpush1.xpose.msra.mxu0 0.0
    %10568 = vmatprep.mubr.f32.mxu0 %v10416
    %10569 = vmatmul.mubr.f32.gmra.mrb[0].mxu0 %v10415
    %v10570 = vpop.f32.mrb[0].mxu0
    %v10571 = vadd.f32 %v10501, %v10570
    %v10572 = vpop.f32.mrb[0].mxu0
    %10573 = vdwg.mxu0
    %10574 = vmatprep.subr.mxu0 %v10425
    %10575 = vmatpush1.xpose.msra.mxu0 %v10424
    %10576 = vmatprep.subr.mxu0 %v10432
    %10577 = vmatpush1.xpose.msra.mxu0 %v10431
    %10578 = vmatprep.subr.mxu0 0.0
    %10579 = vmatpush1.xpose.msra.mxu0 0.0
    %10580 = vmatprep.subr.mxu0 0.0
    %10581 = vmatpush1.xpose.msra.mxu0 0.0
    %10582 = vmatprep.subr.mxu0 0.0
    %10583 = vmatpush1.xpose.msra.mxu0 0.0
    %10584 = vmatprep.subr.mxu0 0.0
    %10585 = vmatpush1.xpose.msra.mxu0 0.0
    %10586 = vmatprep.subr.mxu0 0.0
    %10587 = vmatpush1.xpose.msra.mxu0 0.0
    %10588 = vmatprep.subr.mxu0 0.0
    %10589 = vmatpush1.xpose.msra.mxu0 0.0
    %10590 = vmatprep.subr.mxu0 0.0
    %10591 = vmatpush1.xpose.msra.mxu0 0.0
    %10592 = vmatprep.subr.mxu0 0.0
    %10593 = vmatpush1.xpose.msra.mxu0 0.0
    %10594 = vmatprep.subr.mxu0 0.0
    %10595 = vmatpush1.xpose.msra.mxu0 0.0
    %10596 = vmatprep.subr.mxu0 0.0
    %10597 = vmatpush1.xpose.msra.mxu0 0.0
    %10598 = vmatprep.subr.mxu0 0.0
    %10599 = vmatpush1.xpose.msra.mxu0 0.0
    %10600 = vmatprep.subr.mxu0 0.0
    %10601 = vmatpush1.xpose.msra.mxu0 0.0
    %10602 = vmatprep.subr.mxu0 0.0
    %10603 = vmatpush1.xpose.msra.mxu0 0.0
    %10604 = vmatprep.subr.mxu0 0.0
    %10605 = vmatpush1.xpose.msra.mxu0 0.0
    %10606 = vmatprep.subr.mxu0 0.0
    %10607 = vmatpush1.xpose.msra.mxu0 0.0
    %10608 = vmatprep.subr.mxu0 0.0
    %10609 = vmatpush1.xpose.msra.mxu0 0.0
    %10610 = vmatprep.subr.mxu0 0.0
    %10611 = vmatpush1.xpose.msra.mxu0 0.0
    %10612 = vmatprep.subr.mxu0 0.0
    %10613 = vmatpush1.xpose.msra.mxu0 0.0
    %10614 = vmatprep.subr.mxu0 0.0
    %10615 = vmatpush1.xpose.msra.mxu0 0.0
    %10616 = vmatprep.subr.mxu0 0.0
    %10617 = vmatpush1.xpose.msra.mxu0 0.0
    %10618 = vmatprep.subr.mxu0 0.0
    %10619 = vmatpush1.xpose.msra.mxu0 0.0
    %10620 = vmatprep.subr.mxu0 0.0
    %10621 = vmatpush1.xpose.msra.mxu0 0.0
    %10622 = vmatprep.subr.mxu0 0.0
    %10623 = vmatpush1.xpose.msra.mxu0 0.0
    %10624 = vmatprep.subr.mxu0 0.0
    %10625 = vmatpush1.xpose.msra.mxu0 0.0
    %10626 = vmatprep.subr.mxu0 0.0
    %10627 = vmatpush1.xpose.msra.mxu0 0.0
    %10628 = vmatprep.subr.mxu0 0.0
    %10629 = vmatpush1.xpose.msra.mxu0 0.0
    %10630 = vmatprep.subr.mxu0 0.0
    %10631 = vmatpush1.xpose.msra.mxu0 0.0
    %10632 = vmatprep.subr.mxu0 0.0
    %10633 = vmatpush1.xpose.msra.mxu0 0.0
    %10634 = vmatprep.subr.mxu0 0.0
    %10635 = vmatpush1.xpose.msra.mxu0 0.0
    %10636 = vmatprep.subr.mxu0 0.0
    %10637 = vmatpush1.xpose.msra.mxu0 0.0
    %10638 = vmatprep.mubr.f32.mxu0 %v10418
    %10639 = vmatmul.mubr.f32.gmra.mrb[0].mxu0 %v10417
    %v10640 = vpop.f32.mrb[0].mxu0
    %v10641 = vadd.f32 %v10571, %v10640
    %v10642 = vpop.f32.mrb[0].mxu0
    %10643 = vdwg.mxu0
    %10644 = vmatprep.subr.mxu0 0.0
    %10645 = vmatpush1.xpose.msra.mxu0 %v10426
    %10646 = vmatprep.subr.mxu0 0.0
    %10647 = vmatpush1.xpose.msra.mxu0 %v10433
    %10648 = vmatprep.subr.mxu0 0.0
    %10649 = vmatpush1.xpose.msra.mxu0 0.0
    %10650 = vmatprep.subr.mxu0 0.0
    %10651 = vmatpush1.xpose.msra.mxu0 0.0
    %10652 = vmatprep.subr.mxu0 0.0
    %10653 = vmatpush1.xpose.msra.mxu0 0.0
    %10654 = vmatprep.subr.mxu0 0.0
    %10655 = vmatpush1.xpose.msra.mxu0 0.0
    %10656 = vmatprep.subr.mxu0 0.0
    %10657 = vmatpush1.xpose.msra.mxu0 0.0
    %10658 = vmatprep.subr.mxu0 0.0
    %10659 = vmatpush1.xpose.msra.mxu0 0.0
    %10660 = vmatprep.subr.mxu0 0.0
    %10661 = vmatpush1.xpose.msra.mxu0 0.0
    %10662 = vmatprep.subr.mxu0 0.0
    %10663 = vmatpush1.xpose.msra.mxu0 0.0
    %10664 = vmatprep.subr.mxu0 0.0
    %10665 = vmatpush1.xpose.msra.mxu0 0.0
    %10666 = vmatprep.subr.mxu0 0.0
    %10667 = vmatpush1.xpose.msra.mxu0 0.0
    %10668 = vmatprep.subr.mxu0 0.0
    %10669 = vmatpush1.xpose.msra.mxu0 0.0
    %10670 = vmatprep.subr.mxu0 0.0
    %10671 = vmatpush1.xpose.msra.mxu0 0.0
    %10672 = vmatprep.subr.mxu0 0.0
    %10673 = vmatpush1.xpose.msra.mxu0 0.0
    %10674 = vmatprep.subr.mxu0 0.0
    %10675 = vmatpush1.xpose.msra.mxu0 0.0
    %10676 = vmatprep.subr.mxu0 0.0
    %10677 = vmatpush1.xpose.msra.mxu0 0.0
    %10678 = vmatprep.subr.mxu0 0.0
    %10679 = vmatpush1.xpose.msra.mxu0 0.0
    %10680 = vmatprep.subr.mxu0 0.0
    %10681 = vmatpush1.xpose.msra.mxu0 0.0
    %10682 = vmatprep.subr.mxu0 0.0
    %10683 = vmatpush1.xpose.msra.mxu0 0.0
    %10684 = vmatprep.subr.mxu0 0.0
    %10685 = vmatpush1.xpose.msra.mxu0 0.0
    %10686 = vmatprep.subr.mxu0 0.0
    %10687 = vmatpush1.xpose.msra.mxu0 0.0
    %10688 = vmatprep.subr.mxu0 0.0
    %10689 = vmatpush1.xpose.msra.mxu0 0.0
    %10690 = vmatprep.subr.mxu0 0.0
    %10691 = vmatpush1.xpose.msra.mxu0 0.0
    %10692 = vmatprep.subr.mxu0 0.0
    %10693 = vmatpush1.xpose.msra.mxu0 0.0
    %10694 = vmatprep.subr.mxu0 0.0
    %10695 = vmatpush1.xpose.msra.mxu0 0.0
    %10696 = vmatprep.subr.mxu0 0.0
    %10697 = vmatpush1.xpose.msra.mxu0 0.0
    %10698 = vmatprep.subr.mxu0 0.0
    %10699 = vmatpush1.xpose.msra.mxu0 0.0
    %10700 = vmatprep.subr.mxu0 0.0
    %10701 = vmatpush1.xpose.msra.mxu0 0.0
    %10702 = vmatprep.subr.mxu0 0.0
    %10703 = vmatpush1.xpose.msra.mxu0 0.0
    %10704 = vmatprep.subr.mxu0 0.0
    %10705 = vmatpush1.xpose.msra.mxu0 0.0
    %10706 = vmatprep.subr.mxu0 0.0
    %10707 = vmatpush1.xpose.msra.mxu0 0.0
    %10708 = vmatprep.mubr.f32.mxu0 0.0
    %10709 = vmatmul.mubr.f32.gmra.mrb[0].mxu0 %v10419
    %v10710 = vpop.f32.mrb[0].mxu0
    %v10711 = vadd.f32 %v10641, %v10710
    %v10712 = vpop.f32.mrb[0].mxu0
    %10713 = vdwg.mxu0
    %v10714 = vadd.f32 %v9954, %v10711
    %s10715 = sld [smem:[#allocation2 + $0x700]]
    %v10716 = vstv %s10715
    %v10717 = vmul.f32 %v61, %v10716
    %v10718 = vmul.f32 %v62, %v10716
    %v10719 = vmul.f32 %v63, %v10716
    %v10720 = vmul.f32 %v64, %v10716
    %v10721 = vmul.f32 %v65, %v10716
    %v10722 = vmul.f32 %v66, %v10716
    %v10723 = vmul.f32 %v67, %v10716
    %s10724 = sld [smem:[#allocation2 + $0x701]]
    %v10725 = vstv %s10724
    %v10726 = vmul.f32 %v61, %v10725
    %v10727 = vmul.f32 %v62, %v10725
    %v10728 = vmul.f32 %v63, %v10725
    %v10729 = vmul.f32 %v64, %v10725
    %v10730 = vmul.f32 %v65, %v10725
    %v10731 = vmul.f32 %v66, %v10725
    %v10732 = vmul.f32 %v67, %v10725
    %v10733 = vmul.f32 %v68, %v10725
    %10742 = vrot.lane.b32.xlu0 %v10726, 127
    %v10743 = vpop.permute.xlu0 %10742
    %10744 = vrot.lane.b32.xlu0 %v10727, 127
    %v10745 = vpop.permute.xlu0 %10744
    %10746 = vrot.lane.b32.xlu0 %v10728, 127
    %v10747 = vpop.permute.xlu0 %10746
    %10748 = vrot.lane.b32.xlu0 %v10729, 127
    %v10749 = vpop.permute.xlu0 %10748
    %10750 = vrot.lane.b32.xlu0 %v10730, 127
    %v10751 = vpop.permute.xlu0 %10750
    %10752 = vrot.lane.b32.xlu0 %v10731, 127
    %v10753 = vpop.permute.xlu0 %10752
    %10754 = vrot.lane.b32.xlu0 %v10732, 127
    %v10755 = vpop.permute.xlu0 %10754
    %10756 = vrot.lane.b32.xlu0 %v10733, 127
    %v10757 = vpop.permute.xlu0 %10756
    %v10758 = vsel %vm112, %v10743, %v10745
    %v10759 = vsel %vm112, %v10745, %v10747
    %v10760 = vsel %vm112, %v10747, %v10749
    %v10761 = vsel %vm112, %v10749, %v10751
    %v10762 = vsel %vm112, %v10751, %v10753
    %v10763 = vsel %vm112, %v10753, %v10755
    %v10764 = vsel %vm112, %v10755, %v10757
    %v10772 = vadd.f32 %v10717, %v10758
    %v10773 = vadd.f32 %v10718, %v10759
    %v10774 = vadd.f32 %v10719, %v10760
    %v10775 = vadd.f32 %v10720, %v10761
    %v10776 = vadd.f32 %v10721, %v10762
    %v10777 = vadd.f32 %v10722, %v10763
    %v10778 = vadd.f32 %v10723, %v10764
    %s10779 = sld [smem:[#allocation2 + $0x702]]
    %v10780 = vstv %s10779
    %v10781 = vmul.f32 %v61, %v10780
    %v10782 = vmul.f32 %v62, %v10780
    %v10783 = vmul.f32 %v63, %v10780
    %v10784 = vmul.f32 %v64, %v10780
    %v10785 = vmul.f32 %v65, %v10780
    %v10786 = vmul.f32 %v66, %v10780
    %v10787 = vmul.f32 %v67, %v10780
    %v10788 = vmul.f32 %v68, %v10780
    %10797 = vrot.lane.b32.xlu0 %v10781, 126
    %v10798 = vpop.permute.xlu0 %10797
    %10799 = vrot.lane.b32.xlu0 %v10782, 126
    %v10800 = vpop.permute.xlu0 %10799
    %10801 = vrot.lane.b32.xlu0 %v10783, 126
    %v10802 = vpop.permute.xlu0 %10801
    %10803 = vrot.lane.b32.xlu0 %v10784, 126
    %v10804 = vpop.permute.xlu0 %10803
    %10805 = vrot.lane.b32.xlu0 %v10785, 126
    %v10806 = vpop.permute.xlu0 %10805
    %10807 = vrot.lane.b32.xlu0 %v10786, 126
    %v10808 = vpop.permute.xlu0 %10807
    %10809 = vrot.lane.b32.xlu0 %v10787, 126
    %v10810 = vpop.permute.xlu0 %10809
    %10811 = vrot.lane.b32.xlu0 %v10788, 126
    %v10812 = vpop.permute.xlu0 %10811
    %v10813 = vsel %vm168, %v10798, %v10800
    %v10814 = vsel %vm168, %v10800, %v10802
    %v10815 = vsel %vm168, %v10802, %v10804
    %v10816 = vsel %vm168, %v10804, %v10806
    %v10817 = vsel %vm168, %v10806, %v10808
    %v10818 = vsel %vm168, %v10808, %v10810
    %v10819 = vsel %vm168, %v10810, %v10812
    %v10827 = vadd.f32 %v10772, %v10813
    %v10828 = vadd.f32 %v10773, %v10814
    %v10829 = vadd.f32 %v10774, %v10815
    %v10830 = vadd.f32 %v10775, %v10816
    %v10831 = vadd.f32 %v10776, %v10817
    %v10832 = vadd.f32 %v10777, %v10818
    %v10833 = vadd.f32 %v10778, %v10819
    %s10834 = sld [smem:[#allocation2 + $0x703]]
    %v10835 = vstv %s10834
    %v10836 = vmul.f32 %v61, %v10835
    %v10837 = vmul.f32 %v62, %v10835
    %v10838 = vmul.f32 %v63, %v10835
    %v10839 = vmul.f32 %v64, %v10835
    %v10840 = vmul.f32 %v65, %v10835
    %v10841 = vmul.f32 %v66, %v10835
    %v10842 = vmul.f32 %v67, %v10835
    %v10843 = vmul.f32 %v68, %v10835
    %10852 = vrot.lane.b32.xlu0 %v10836, 100
    %v10853 = vpop.permute.xlu0 %10852
    %10854 = vrot.lane.b32.xlu0 %v10837, 100
    %v10855 = vpop.permute.xlu0 %10854
    %10856 = vrot.lane.b32.xlu0 %v10838, 100
    %v10857 = vpop.permute.xlu0 %10856
    %10858 = vrot.lane.b32.xlu0 %v10839, 100
    %v10859 = vpop.permute.xlu0 %10858
    %10860 = vrot.lane.b32.xlu0 %v10840, 100
    %v10861 = vpop.permute.xlu0 %10860
    %10862 = vrot.lane.b32.xlu0 %v10841, 100
    %v10863 = vpop.permute.xlu0 %10862
    %10864 = vrot.lane.b32.xlu0 %v10842, 100
    %v10865 = vpop.permute.xlu0 %10864
    %10866 = vrot.lane.b32.xlu0 %v10843, 100
    %v10867 = vpop.permute.xlu0 %10866
    %v10868 = vsel %vm224, %v10853, %v10855
    %v10869 = vsel %vm224, %v10855, %v10857
    %v10870 = vsel %vm224, %v10857, %v10859
    %v10871 = vsel %vm224, %v10859, %v10861
    %v10872 = vsel %vm224, %v10861, %v10863
    %v10873 = vsel %vm224, %v10863, %v10865
    %v10874 = vsel %vm224, %v10865, %v10867
    %v10882 = vadd.f32 %v10827, %v10868
    %v10883 = vadd.f32 %v10828, %v10869
    %v10884 = vadd.f32 %v10829, %v10870
    %v10885 = vadd.f32 %v10830, %v10871
    %v10886 = vadd.f32 %v10831, %v10872
    %v10887 = vadd.f32 %v10832, %v10873
    %v10888 = vadd.f32 %v10833, %v10874
    %s10889 = sld [smem:[#allocation2 + $0x704]]
    %v10890 = vstv %s10889
    %v10891 = vmul.f32 %v61, %v10890
    %v10892 = vmul.f32 %v62, %v10890
    %v10893 = vmul.f32 %v63, %v10890
    %v10894 = vmul.f32 %v64, %v10890
    %v10895 = vmul.f32 %v65, %v10890
    %v10896 = vmul.f32 %v66, %v10890
    %v10897 = vmul.f32 %v67, %v10890
    %v10898 = vmul.f32 %v68, %v10890
    %10907 = vrot.lane.b32.xlu0 %v10891, 99
    %v10908 = vpop.permute.xlu0 %10907
    %10909 = vrot.lane.b32.xlu0 %v10892, 99
    %v10910 = vpop.permute.xlu0 %10909
    %10911 = vrot.lane.b32.xlu0 %v10893, 99
    %v10912 = vpop.permute.xlu0 %10911
    %10913 = vrot.lane.b32.xlu0 %v10894, 99
    %v10914 = vpop.permute.xlu0 %10913
    %10915 = vrot.lane.b32.xlu0 %v10895, 99
    %v10916 = vpop.permute.xlu0 %10915
    %10917 = vrot.lane.b32.xlu0 %v10896, 99
    %v10918 = vpop.permute.xlu0 %10917
    %10919 = vrot.lane.b32.xlu0 %v10897, 99
    %v10920 = vpop.permute.xlu0 %10919
    %10921 = vrot.lane.b32.xlu0 %v10898, 99
    %v10922 = vpop.permute.xlu0 %10921
    %v10923 = vsel %vm280, %v10908, %v10910
    %v10924 = vsel %vm280, %v10910, %v10912
    %v10925 = vsel %vm280, %v10912, %v10914
    %v10926 = vsel %vm280, %v10914, %v10916
    %v10927 = vsel %vm280, %v10916, %v10918
    %v10928 = vsel %vm280, %v10918, %v10920
    %v10929 = vsel %vm280, %v10920, %v10922
    %v10937 = vadd.f32 %v10882, %v10923
    %v10938 = vadd.f32 %v10883, %v10924
    %v10939 = vadd.f32 %v10884, %v10925
    %v10940 = vadd.f32 %v10885, %v10926
    %v10941 = vadd.f32 %v10886, %v10927
    %v10942 = vadd.f32 %v10887, %v10928
    %v10943 = vadd.f32 %v10888, %v10929
    %s10944 = sld [smem:[#allocation2 + $0x705]]
    %v10945 = vstv %s10944
    %v10946 = vmul.f32 %v61, %v10945
    %v10947 = vmul.f32 %v62, %v10945
    %v10948 = vmul.f32 %v63, %v10945
    %v10949 = vmul.f32 %v64, %v10945
    %v10950 = vmul.f32 %v65, %v10945
    %v10951 = vmul.f32 %v66, %v10945
    %v10952 = vmul.f32 %v67, %v10945
    %v10953 = vmul.f32 %v68, %v10945
    %10962 = vrot.lane.b32.xlu0 %v10946, 98
    %v10963 = vpop.permute.xlu0 %10962
    %10964 = vrot.lane.b32.xlu0 %v10947, 98
    %v10965 = vpop.permute.xlu0 %10964
    %10966 = vrot.lane.b32.xlu0 %v10948, 98
    %v10967 = vpop.permute.xlu0 %10966
    %10968 = vrot.lane.b32.xlu0 %v10949, 98
    %v10969 = vpop.permute.xlu0 %10968
    %10970 = vrot.lane.b32.xlu0 %v10950, 98
    %v10971 = vpop.permute.xlu0 %10970
    %10972 = vrot.lane.b32.xlu0 %v10951, 98
    %v10973 = vpop.permute.xlu0 %10972
    %10974 = vrot.lane.b32.xlu0 %v10952, 98
    %v10975 = vpop.permute.xlu0 %10974
    %10976 = vrot.lane.b32.xlu0 %v10953, 98
    %v10977 = vpop.permute.xlu0 %10976
    %v10978 = vsel %vm336, %v10963, %v10965
    %v10979 = vsel %vm336, %v10965, %v10967
    %v10980 = vsel %vm336, %v10967, %v10969
    %v10981 = vsel %vm336, %v10969, %v10971
    %v10982 = vsel %vm336, %v10971, %v10973
    %v10983 = vsel %vm336, %v10973, %v10975
    %v10984 = vsel %vm336, %v10975, %v10977
    %v10992 = vadd.f32 %v10937, %v10978
    %v10993 = vadd.f32 %v10938, %v10979
    %v10994 = vadd.f32 %v10939, %v10980
    %v10995 = vadd.f32 %v10940, %v10981
    %v10996 = vadd.f32 %v10941, %v10982
    %v10997 = vadd.f32 %v10942, %v10983
    %v10998 = vadd.f32 %v10943, %v10984
    %s10999 = sld [smem:[#allocation2 + $0x706]]
    %v11000 = vstv %s10999
    %v11001 = vmul.f32 %v61, %v11000
    %v11002 = vmul.f32 %v62, %v11000
    %v11003 = vmul.f32 %v63, %v11000
    %v11004 = vmul.f32 %v64, %v11000
    %v11005 = vmul.f32 %v65, %v11000
    %v11006 = vmul.f32 %v66, %v11000
    %v11007 = vmul.f32 %v67, %v11000
    %v11008 = vmul.f32 %v68, %v11000
    %11017 = vrot.lane.b32.xlu0 %v11001, 72
    %v11018 = vpop.permute.xlu0 %11017
    %11019 = vrot.lane.b32.xlu0 %v11002, 72
    %v11020 = vpop.permute.xlu0 %11019
    %11021 = vrot.lane.b32.xlu0 %v11003, 72
    %v11022 = vpop.permute.xlu0 %11021
    %11023 = vrot.lane.b32.xlu0 %v11004, 72
    %v11024 = vpop.permute.xlu0 %11023
    %11025 = vrot.lane.b32.xlu0 %v11005, 72
    %v11026 = vpop.permute.xlu0 %11025
    %11027 = vrot.lane.b32.xlu0 %v11006, 72
    %v11028 = vpop.permute.xlu0 %11027
    %11029 = vrot.lane.b32.xlu0 %v11007, 72
    %v11030 = vpop.permute.xlu0 %11029
    %11031 = vrot.lane.b32.xlu0 %v11008, 72
    %v11032 = vpop.permute.xlu0 %11031
    %v11033 = vsel %vm392, %v11018, %v11020
    %v11034 = vsel %vm392, %v11020, %v11022
    %v11035 = vsel %vm392, %v11022, %v11024
    %v11036 = vsel %vm392, %v11024, %v11026
    %v11037 = vsel %vm392, %v11026, %v11028
    %v11038 = vsel %vm392, %v11028, %v11030
    %v11039 = vsel %vm392, %v11030, %v11032
    %v11047 = vadd.f32 %v10992, %v11033
    %v11048 = vadd.f32 %v10993, %v11034
    %v11049 = vadd.f32 %v10994, %v11035
    %v11050 = vadd.f32 %v10995, %v11036
    %v11051 = vadd.f32 %v10996, %v11037
    %v11052 = vadd.f32 %v10997, %v11038
    %v11053 = vadd.f32 %v10998, %v11039
    %s11054 = sld [smem:[#allocation2 + $0x707]]
    %v11055 = vstv %s11054
    %v11056 = vmul.f32 %v61, %v11055
    %v11057 = vmul.f32 %v62, %v11055
    %v11058 = vmul.f32 %v63, %v11055
    %v11059 = vmul.f32 %v64, %v11055
    %v11060 = vmul.f32 %v65, %v11055
    %v11061 = vmul.f32 %v66, %v11055
    %v11062 = vmul.f32 %v67, %v11055
    %v11063 = vmul.f32 %v68, %v11055
    %11072 = vrot.lane.b32.xlu0 %v11056, 71
    %v11073 = vpop.permute.xlu0 %11072
    %11074 = vrot.lane.b32.xlu0 %v11057, 71
    %v11075 = vpop.permute.xlu0 %11074
    %11076 = vrot.lane.b32.xlu0 %v11058, 71
    %v11077 = vpop.permute.xlu0 %11076
    %11078 = vrot.lane.b32.xlu0 %v11059, 71
    %v11079 = vpop.permute.xlu0 %11078
    %11080 = vrot.lane.b32.xlu0 %v11060, 71
    %v11081 = vpop.permute.xlu0 %11080
    %11082 = vrot.lane.b32.xlu0 %v11061, 71
    %v11083 = vpop.permute.xlu0 %11082
    %11084 = vrot.lane.b32.xlu0 %v11062, 71
    %v11085 = vpop.permute.xlu0 %11084
    %11086 = vrot.lane.b32.xlu0 %v11063, 71
    %v11087 = vpop.permute.xlu0 %11086
    %v11088 = vsel %vm448, %v11073, %v11075
    %v11089 = vsel %vm448, %v11075, %v11077
    %v11090 = vsel %vm448, %v11077, %v11079
    %v11091 = vsel %vm448, %v11079, %v11081
    %v11092 = vsel %vm448, %v11081, %v11083
    %v11093 = vsel %vm448, %v11083, %v11085
    %v11094 = vsel %vm448, %v11085, %v11087
    %v11102 = vadd.f32 %v11047, %v11088
    %v11103 = vadd.f32 %v11048, %v11089
    %v11104 = vadd.f32 %v11049, %v11090
    %v11105 = vadd.f32 %v11050, %v11091
    %v11106 = vadd.f32 %v11051, %v11092
    %v11107 = vadd.f32 %v11052, %v11093
    %v11108 = vadd.f32 %v11053, %v11094
    %s11109 = sld [smem:[#allocation2 + $0x708]]
    %v11110 = vstv %s11109
    %v11111 = vmul.f32 %v61, %v11110
    %v11112 = vmul.f32 %v62, %v11110
    %v11113 = vmul.f32 %v63, %v11110
    %v11114 = vmul.f32 %v64, %v11110
    %v11115 = vmul.f32 %v65, %v11110
    %v11116 = vmul.f32 %v66, %v11110
    %v11117 = vmul.f32 %v67, %v11110
    %v11118 = vmul.f32 %v68, %v11110
    %11127 = vrot.lane.b32.xlu0 %v11111, 70
    %v11128 = vpop.permute.xlu0 %11127
    %11129 = vrot.lane.b32.xlu0 %v11112, 70
    %v11130 = vpop.permute.xlu0 %11129
    %11131 = vrot.lane.b32.xlu0 %v11113, 70
    %v11132 = vpop.permute.xlu0 %11131
    %11133 = vrot.lane.b32.xlu0 %v11114, 70
    %v11134 = vpop.permute.xlu0 %11133
    %11135 = vrot.lane.b32.xlu0 %v11115, 70
    %v11136 = vpop.permute.xlu0 %11135
    %11137 = vrot.lane.b32.xlu0 %v11116, 70
    %v11138 = vpop.permute.xlu0 %11137
    %11139 = vrot.lane.b32.xlu0 %v11117, 70
    %v11140 = vpop.permute.xlu0 %11139
    %11141 = vrot.lane.b32.xlu0 %v11118, 70
    %v11142 = vpop.permute.xlu0 %11141
    %v11143 = vsel %vm504, %v11128, %v11130
    %v11144 = vsel %vm504, %v11130, %v11132
    %v11145 = vsel %vm504, %v11132, %v11134
    %v11146 = vsel %vm504, %v11134, %v11136
    %v11147 = vsel %vm504, %v11136, %v11138
    %v11148 = vsel %vm504, %v11138, %v11140
    %v11149 = vsel %vm504, %v11140, %v11142
    %v11157 = vadd.f32 %v11102, %v11143
    %v11158 = vadd.f32 %v11103, %v11144
    %v11159 = vadd.f32 %v11104, %v11145
    %v11160 = vadd.f32 %v11105, %v11146
    %v11161 = vadd.f32 %v11106, %v11147
    %v11162 = vadd.f32 %v11107, %v11148
    %v11163 = vadd.f32 %v11108, %v11149
    %s11164 = sld [smem:[#allocation5 + $0xe]]
    %v11165 = vstv %s11164
    %v11166 = vadd.f32 %v11157, %v11165
    %v11167 = vadd.f32 %v11158, %v11165
    %v11168 = vadd.f32 %v11159, %v11165
    %v11169 = vadd.f32 %v11160, %v11165
    %v11170 = vadd.f32 %v11161, %v11165
    %v11171 = vadd.f32 %v11162, %v11165
    %v11172 = vadd.f32 %v11163, %v11165
    %v11173 = vmax.f32 %v11166, 0.0
    %v11174 = vmax.f32 %v11167, 0.0
    %v11175 = vmax.f32 %v11168, 0.0
    %v11176 = vmax.f32 %v11169, 0.0
    %v11177 = vmax.f32 %v11170, 0.0
    %v11178 = vmax.f32 %v11171, 0.0
    %v11179 = vmax.f32 %v11172, 0.0
    %v11180 = vld [vmem:[#allocation7 + $0x310] sm:$0xff]
    %v11181 = vld [vmem:[#allocation7 + $0x318] sm:$0xff]
    %v11182 = vld [vmem:[#allocation7 + $0x320] sm:$0xff]
    %v11183 = vld [vmem:[#allocation7 + $0x328] sm:$0xff]
    %v11184 = vld [vmem:[#allocation7 + $0x330] sm:$0xff]
    %v11185 = vld [vmem:[#allocation7 + $0x338] sm:$0xff]
    %v11186 = vld [vmem:[#allocation7 + $0x340] sm:$0xff]
    %v11187 = vld [vmem:[#allocation7 + $0x690] sm:$0x3]
    %v11188 = vld [vmem:[#allocation7 + $0x698] sm:$0x3]
    %v11189 = vld [vmem:[#allocation7 + $0x6a0] sm:$0x3]
    %v11190 = vld [vmem:[#allocation7 + $0x6a8] sm:$0x3]
    %v11191 = vld [vmem:[#allocation7 + $0x6b0] sm:$0x3]
    %v11192 = vld [vmem:[#allocation7 + $0x6b8] sm:$0x3]
    %v11193 = vld [vmem:[#allocation7 + $0x6c0] sm:$0x3]
    %11194 = vmatprep.subr.mxu0 %v11181
    %11195 = vmatpush1.xpose.msra.mxu0 %v11180
    %11196 = vmatprep.subr.mxu0 %v11188
    %11197 = vmatpush1.xpose.msra.mxu0 %v11187
    %11198 = vmatprep.subr.mxu0 0.0
    %11199 = vmatpush1.xpose.msra.mxu0 0.0
    %11200 = vmatprep.subr.mxu0 0.0
    %11201 = vmatpush1.xpose.msra.mxu0 0.0
    %11202 = vmatprep.subr.mxu0 0.0
    %11203 = vmatpush1.xpose.msra.mxu0 0.0
    %11204 = vmatprep.subr.mxu0 0.0
    %11205 = vmatpush1.xpose.msra.mxu0 0.0
    %11206 = vmatprep.subr.mxu0 0.0
    %11207 = vmatpush1.xpose.msra.mxu0 0.0
    %11208 = vmatprep.subr.mxu0 0.0
    %11209 = vmatpush1.xpose.msra.mxu0 0.0
    %11210 = vmatprep.subr.mxu0 0.0
    %11211 = vmatpush1.xpose.msra.mxu0 0.0
    %11212 = vmatprep.subr.mxu0 0.0
    %11213 = vmatpush1.xpose.msra.mxu0 0.0
    %11214 = vmatprep.subr.mxu0 0.0
    %11215 = vmatpush1.xpose.msra.mxu0 0.0
    %11216 = vmatprep.subr.mxu0 0.0
    %11217 = vmatpush1.xpose.msra.mxu0 0.0
    %11218 = vmatprep.subr.mxu0 0.0
    %11219 = vmatpush1.xpose.msra.mxu0 0.0
    %11220 = vmatprep.subr.mxu0 0.0
    %11221 = vmatpush1.xpose.msra.mxu0 0.0
    %11222 = vmatprep.subr.mxu0 0.0
    %11223 = vmatpush1.xpose.msra.mxu0 0.0
    %11224 = vmatprep.subr.mxu0 0.0
    %11225 = vmatpush1.xpose.msra.mxu0 0.0
    %11226 = vmatprep.subr.mxu0 0.0
    %11227 = vmatpush1.xpose.msra.mxu0 0.0
    %11228 = vmatprep.subr.mxu0 0.0
    %11229 = vmatpush1.xpose.msra.mxu0 0.0
    %11230 = vmatprep.subr.mxu0 0.0
    %11231 = vmatpush1.xpose.msra.mxu0 0.0
    %11232 = vmatprep.subr.mxu0 0.0
    %11233 = vmatpush1.xpose.msra.mxu0 0.0
    %11234 = vmatprep.subr.mxu0 0.0
    %11235 = vmatpush1.xpose.msra.mxu0 0.0
    %11236 = vmatprep.subr.mxu0 0.0
    %11237 = vmatpush1.xpose.msra.mxu0 0.0
    %11238 = vmatprep.subr.mxu0 0.0
    %11239 = vmatpush1.xpose.msra.mxu0 0.0
    %11240 = vmatprep.subr.mxu0 0.0
    %11241 = vmatpush1.xpose.msra.mxu0 0.0
    %11242 = vmatprep.subr.mxu0 0.0
    %11243 = vmatpush1.xpose.msra.mxu0 0.0
    %11244 = vmatprep.subr.mxu0 0.0
    %11245 = vmatpush1.xpose.msra.mxu0 0.0
    %11246 = vmatprep.subr.mxu0 0.0
    %11247 = vmatpush1.xpose.msra.mxu0 0.0
    %11248 = vmatprep.subr.mxu0 0.0
    %11249 = vmatpush1.xpose.msra.mxu0 0.0
    %11250 = vmatprep.subr.mxu0 0.0
    %11251 = vmatpush1.xpose.msra.mxu0 0.0
    %11252 = vmatprep.subr.mxu0 0.0
    %11253 = vmatpush1.xpose.msra.mxu0 0.0
    %11254 = vmatprep.subr.mxu0 0.0
    %11255 = vmatpush1.xpose.msra.mxu0 0.0
    %11256 = vmatprep.subr.mxu0 0.0
    %11257 = vmatpush1.xpose.msra.mxu0 0.0
    %11258 = vmatprep.mubr.f32.mxu0 %v11174
    %11259 = vmatmul.mubr.f32.gmra.mrb[0].mxu0 %v11173
    %v11260 = vpop.f32.mrb[0].mxu0
    %v11261 = vadd.f32 0.0, %v11260
    %v11262 = vpop.f32.mrb[0].mxu0
    %11263 = vdwg.mxu0
    %11264 = vmatprep.subr.mxu0 %v11183
    %11265 = vmatpush1.xpose.msra.mxu0 %v11182
    %11266 = vmatprep.subr.mxu0 %v11190
    %11267 = vmatpush1.xpose.msra.mxu0 %v11189
    %11268 = vmatprep.subr.mxu0 0.0
    %11269 = vmatpush1.xpose.msra.mxu0 0.0
    %11270 = vmatprep.subr.mxu0 0.0
    %11271 = vmatpush1.xpose.msra.mxu0 0.0
    %11272 = vmatprep.subr.mxu0 0.0
    %11273 = vmatpush1.xpose.msra.mxu0 0.0
    %11274 = vmatprep.subr.mxu0 0.0
    %11275 = vmatpush1.xpose.msra.mxu0 0.0
    %11276 = vmatprep.subr.mxu0 0.0
    %11277 = vmatpush1.xpose.msra.mxu0 0.0
    %11278 = vmatprep.subr.mxu0 0.0
    %11279 = vmatpush1.xpose.msra.mxu0 0.0
    %11280 = vmatprep.subr.mxu0 0.0
    %11281 = vmatpush1.xpose.msra.mxu0 0.0
    %11282 = vmatprep.subr.mxu0 0.0
    %11283 = vmatpush1.xpose.msra.mxu0 0.0
    %11284 = vmatprep.subr.mxu0 0.0
    %11285 = vmatpush1.xpose.msra.mxu0 0.0
    %11286 = vmatprep.subr.mxu0 0.0
    %11287 = vmatpush1.xpose.msra.mxu0 0.0
    %11288 = vmatprep.subr.mxu0 0.0
    %11289 = vmatpush1.xpose.msra.mxu0 0.0
    %11290 = vmatprep.subr.mxu0 0.0
    %11291 = vmatpush1.xpose.msra.mxu0 0.0
    %11292 = vmatprep.subr.mxu0 0.0
    %11293 = vmatpush1.xpose.msra.mxu0 0.0
    %11294 = vmatprep.subr.mxu0 0.0
    %11295 = vmatpush1.xpose.msra.mxu0 0.0
    %11296 = vmatprep.subr.mxu0 0.0
    %11297 = vmatpush1.xpose.msra.mxu0 0.0
    %11298 = vmatprep.subr.mxu0 0.0
    %11299 = vmatpush1.xpose.msra.mxu0 0.0
    %11300 = vmatprep.subr.mxu0 0.0
    %11301 = vmatpush1.xpose.msra.mxu0 0.0
    %11302 = vmatprep.subr.mxu0 0.0
    %11303 = vmatpush1.xpose.msra.mxu0 0.0
    %11304 = vmatprep.subr.mxu0 0.0
    %11305 = vmatpush1.xpose.msra.mxu0 0.0
    %11306 = vmatprep.subr.mxu0 0.0
    %11307 = vmatpush1.xpose.msra.mxu0 0.0
    %11308 = vmatprep.subr.mxu0 0.0
    %11309 = vmatpush1.xpose.msra.mxu0 0.0
    %11310 = vmatprep.subr.mxu0 0.0
    %11311 = vmatpush1.xpose.msra.mxu0 0.0
    %11312 = vmatprep.subr.mxu0 0.0
    %11313 = vmatpush1.xpose.msra.mxu0 0.0
    %11314 = vmatprep.subr.mxu0 0.0
    %11315 = vmatpush1.xpose.msra.mxu0 0.0
    %11316 = vmatprep.subr.mxu0 0.0
    %11317 = vmatpush1.xpose.msra.mxu0 0.0
    %11318 = vmatprep.subr.mxu0 0.0
    %11319 = vmatpush1.xpose.msra.mxu0 0.0
    %11320 = vmatprep.subr.mxu0 0.0
    %11321 = vmatpush1.xpose.msra.mxu0 0.0
    %11322 = vmatprep.subr.mxu0 0.0
    %11323 = vmatpush1.xpose.msra.mxu0 0.0
    %11324 = vmatprep.subr.mxu0 0.0
    %11325 = vmatpush1.xpose.msra.mxu0 0.0
    %11326 = vmatprep.subr.mxu0 0.0
    %11327 = vmatpush1.xpose.msra.mxu0 0.0
    %11328 = vmatprep.mubr.f32.mxu0 %v11176
    %11329 = vmatmul.mubr.f32.gmra.mrb[0].mxu0 %v11175
    %v11330 = vpop.f32.mrb[0].mxu0
    %v11331 = vadd.f32 %v11261, %v11330
    %v11332 = vpop.f32.mrb[0].mxu0
    %11333 = vdwg.mxu0
    %11334 = vmatprep.subr.mxu0 %v11185
    %11335 = vmatpush1.xpose.msra.mxu0 %v11184
    %11336 = vmatprep.subr.mxu0 %v11192
    %11337 = vmatpush1.xpose.msra.mxu0 %v11191
    %11338 = vmatprep.subr.mxu0 0.0
    %11339 = vmatpush1.xpose.msra.mxu0 0.0
    %11340 = vmatprep.subr.mxu0 0.0
    %11341 = vmatpush1.xpose.msra.mxu0 0.0
    %11342 = vmatprep.subr.mxu0 0.0
    %11343 = vmatpush1.xpose.msra.mxu0 0.0
    %11344 = vmatprep.subr.mxu0 0.0
    %11345 = vmatpush1.xpose.msra.mxu0 0.0
    %11346 = vmatprep.subr.mxu0 0.0
    %11347 = vmatpush1.xpose.msra.mxu0 0.0
    %11348 = vmatprep.subr.mxu0 0.0
    %11349 = vmatpush1.xpose.msra.mxu0 0.0
    %11350 = vmatprep.subr.mxu0 0.0
    %11351 = vmatpush1.xpose.msra.mxu0 0.0
    %11352 = vmatprep.subr.mxu0 0.0
    %11353 = vmatpush1.xpose.msra.mxu0 0.0
    %11354 = vmatprep.subr.mxu0 0.0
    %11355 = vmatpush1.xpose.msra.mxu0 0.0
    %11356 = vmatprep.subr.mxu0 0.0
    %11357 = vmatpush1.xpose.msra.mxu0 0.0
    %11358 = vmatprep.subr.mxu0 0.0
    %11359 = vmatpush1.xpose.msra.mxu0 0.0
    %11360 = vmatprep.subr.mxu0 0.0
    %11361 = vmatpush1.xpose.msra.mxu0 0.0
    %11362 = vmatprep.subr.mxu0 0.0
    %11363 = vmatpush1.xpose.msra.mxu0 0.0
    %11364 = vmatprep.subr.mxu0 0.0
    %11365 = vmatpush1.xpose.msra.mxu0 0.0
    %11366 = vmatprep.subr.mxu0 0.0
    %11367 = vmatpush1.xpose.msra.mxu0 0.0
    %11368 = vmatprep.subr.mxu0 0.0
    %11369 = vmatpush1.xpose.msra.mxu0 0.0
    %11370 = vmatprep.subr.mxu0 0.0
    %11371 = vmatpush1.xpose.msra.mxu0 0.0
    %11372 = vmatprep.subr.mxu0 0.0
    %11373 = vmatpush1.xpose.msra.mxu0 0.0
    %11374 = vmatprep.subr.mxu0 0.0
    %11375 = vmatpush1.xpose.msra.mxu0 0.0
    %11376 = vmatprep.subr.mxu0 0.0
    %11377 = vmatpush1.xpose.msra.mxu0 0.0
    %11378 = vmatprep.subr.mxu0 0.0
    %11379 = vmatpush1.xpose.msra.mxu0 0.0
    %11380 = vmatprep.subr.mxu0 0.0
    %11381 = vmatpush1.xpose.msra.mxu0 0.0
    %11382 = vmatprep.subr.mxu0 0.0
    %11383 = vmatpush1.xpose.msra.mxu0 0.0
    %11384 = vmatprep.subr.mxu0 0.0
    %11385 = vmatpush1.xpose.msra.mxu0 0.0
    %11386 = vmatprep.subr.mxu0 0.0
    %11387 = vmatpush1.xpose.msra.mxu0 0.0
    %11388 = vmatprep.subr.mxu0 0.0
    %11389 = vmatpush1.xpose.msra.mxu0 0.0
    %11390 = vmatprep.subr.mxu0 0.0
    %11391 = vmatpush1.xpose.msra.mxu0 0.0
    %11392 = vmatprep.subr.mxu0 0.0
    %11393 = vmatpush1.xpose.msra.mxu0 0.0
    %11394 = vmatprep.subr.mxu0 0.0
    %11395 = vmatpush1.xpose.msra.mxu0 0.0
    %11396 = vmatprep.subr.mxu0 0.0
    %11397 = vmatpush1.xpose.msra.mxu0 0.0
    %11398 = vmatprep.mubr.f32.mxu0 %v11178
    %11399 = vmatmul.mubr.f32.gmra.mrb[0].mxu0 %v11177
    %v11400 = vpop.f32.mrb[0].mxu0
    %v11401 = vadd.f32 %v11331, %v11400
    %v11402 = vpop.f32.mrb[0].mxu0
    %11403 = vdwg.mxu0
    %11404 = vmatprep.subr.mxu0 0.0
    %11405 = vmatpush1.xpose.msra.mxu0 %v11186
    %11406 = vmatprep.subr.mxu0 0.0
    %11407 = vmatpush1.xpose.msra.mxu0 %v11193
    %11408 = vmatprep.subr.mxu0 0.0
    %11409 = vmatpush1.xpose.msra.mxu0 0.0
    %11410 = vmatprep.subr.mxu0 0.0
    %11411 = vmatpush1.xpose.msra.mxu0 0.0
    %11412 = vmatprep.subr.mxu0 0.0
    %11413 = vmatpush1.xpose.msra.mxu0 0.0
    %11414 = vmatprep.subr.mxu0 0.0
    %11415 = vmatpush1.xpose.msra.mxu0 0.0
    %11416 = vmatprep.subr.mxu0 0.0
    %11417 = vmatpush1.xpose.msra.mxu0 0.0
    %11418 = vmatprep.subr.mxu0 0.0
    %11419 = vmatpush1.xpose.msra.mxu0 0.0
    %11420 = vmatprep.subr.mxu0 0.0
    %11421 = vmatpush1.xpose.msra.mxu0 0.0
    %11422 = vmatprep.subr.mxu0 0.0
    %11423 = vmatpush1.xpose.msra.mxu0 0.0
    %11424 = vmatprep.subr.mxu0 0.0
    %11425 = vmatpush1.xpose.msra.mxu0 0.0
    %11426 = vmatprep.subr.mxu0 0.0
    %11427 = vmatpush1.xpose.msra.mxu0 0.0
    %11428 = vmatprep.subr.mxu0 0.0
    %11429 = vmatpush1.xpose.msra.mxu0 0.0
    %11430 = vmatprep.subr.mxu0 0.0
    %11431 = vmatpush1.xpose.msra.mxu0 0.0
    %11432 = vmatprep.subr.mxu0 0.0
    %11433 = vmatpush1.xpose.msra.mxu0 0.0
    %11434 = vmatprep.subr.mxu0 0.0
    %11435 = vmatpush1.xpose.msra.mxu0 0.0
    %11436 = vmatprep.subr.mxu0 0.0
    %11437 = vmatpush1.xpose.msra.mxu0 0.0
    %11438 = vmatprep.subr.mxu0 0.0
    %11439 = vmatpush1.xpose.msra.mxu0 0.0
    %11440 = vmatprep.subr.mxu0 0.0
    %11441 = vmatpush1.xpose.msra.mxu0 0.0
    %11442 = vmatprep.subr.mxu0 0.0
    %11443 = vmatpush1.xpose.msra.mxu0 0.0
    %11444 = vmatprep.subr.mxu0 0.0
    %11445 = vmatpush1.xpose.msra.mxu0 0.0
    %11446 = vmatprep.subr.mxu0 0.0
    %11447 = vmatpush1.xpose.msra.mxu0 0.0
    %11448 = vmatprep.subr.mxu0 0.0
    %11449 = vmatpush1.xpose.msra.mxu0 0.0
    %11450 = vmatprep.subr.mxu0 0.0
    %11451 = vmatpush1.xpose.msra.mxu0 0.0
    %11452 = vmatprep.subr.mxu0 0.0
    %11453 = vmatpush1.xpose.msra.mxu0 0.0
    %11454 = vmatprep.subr.mxu0 0.0
    %11455 = vmatpush1.xpose.msra.mxu0 0.0
    %11456 = vmatprep.subr.mxu0 0.0
    %11457 = vmatpush1.xpose.msra.mxu0 0.0
    %11458 = vmatprep.subr.mxu0 0.0
    %11459 = vmatpush1.xpose.msra.mxu0 0.0
    %11460 = vmatprep.subr.mxu0 0.0
    %11461 = vmatpush1.xpose.msra.mxu0 0.0
    %11462 = vmatprep.subr.mxu0 0.0
    %11463 = vmatpush1.xpose.msra.mxu0 0.0
    %11464 = vmatprep.subr.mxu0 0.0
    %11465 = vmatpush1.xpose.msra.mxu0 0.0
    %11466 = vmatprep.subr.mxu0 0.0
    %11467 = vmatpush1.xpose.msra.mxu0 0.0
    %11468 = vmatprep.mubr.f32.mxu0 0.0
    %11469 = vmatmul.mubr.f32.gmra.mrb[0].mxu0 %v11179
    %v11470 = vpop.f32.mrb[0].mxu0
    %v11471 = vadd.f32 %v11401, %v11470
    %v11472 = vpop.f32.mrb[0].mxu0
    %11473 = vdwg.mxu0
    %v11474 = vadd.f32 %v10714, %v11471
    %s11475 = sld [smem:[#allocation2 + $0x780]]
    %v11476 = vstv %s11475
    %v11477 = vmul.f32 %v61, %v11476
    %v11478 = vmul.f32 %v62, %v11476
    %v11479 = vmul.f32 %v63, %v11476
    %v11480 = vmul.f32 %v64, %v11476
    %v11481 = vmul.f32 %v65, %v11476
    %v11482 = vmul.f32 %v66, %v11476
    %v11483 = vmul.f32 %v67, %v11476
    %s11484 = sld [smem:[#allocation2 + $0x781]]
    %v11485 = vstv %s11484
    %v11486 = vmul.f32 %v61, %v11485
    %v11487 = vmul.f32 %v62, %v11485
    %v11488 = vmul.f32 %v63, %v11485
    %v11489 = vmul.f32 %v64, %v11485
    %v11490 = vmul.f32 %v65, %v11485
    %v11491 = vmul.f32 %v66, %v11485
    %v11492 = vmul.f32 %v67, %v11485
    %v11493 = vmul.f32 %v68, %v11485
    %11502 = vrot.lane.b32.xlu0 %v11486, 127
    %v11503 = vpop.permute.xlu0 %11502
    %11504 = vrot.lane.b32.xlu0 %v11487, 127
    %v11505 = vpop.permute.xlu0 %11504
    %11506 = vrot.lane.b32.xlu0 %v11488, 127
    %v11507 = vpop.permute.xlu0 %11506
    %11508 = vrot.lane.b32.xlu0 %v11489, 127
    %v11509 = vpop.permute.xlu0 %11508
    %11510 = vrot.lane.b32.xlu0 %v11490, 127
    %v11511 = vpop.permute.xlu0 %11510
    %11512 = vrot.lane.b32.xlu0 %v11491, 127
    %v11513 = vpop.permute.xlu0 %11512
    %11514 = vrot.lane.b32.xlu0 %v11492, 127
    %v11515 = vpop.permute.xlu0 %11514
    %11516 = vrot.lane.b32.xlu0 %v11493, 127
    %v11517 = vpop.permute.xlu0 %11516
    %v11518 = vsel %vm112, %v11503, %v11505
    %v11519 = vsel %vm112, %v11505, %v11507
    %v11520 = vsel %vm112, %v11507, %v11509
    %v11521 = vsel %vm112, %v11509, %v11511
    %v11522 = vsel %vm112, %v11511, %v11513
    %v11523 = vsel %vm112, %v11513, %v11515
    %v11524 = vsel %vm112, %v11515, %v11517
    %v11532 = vadd.f32 %v11477, %v11518
    %v11533 = vadd.f32 %v11478, %v11519
    %v11534 = vadd.f32 %v11479, %v11520
    %v11535 = vadd.f32 %v11480, %v11521
    %v11536 = vadd.f32 %v11481, %v11522
    %v11537 = vadd.f32 %v11482, %v11523
    %v11538 = vadd.f32 %v11483, %v11524
    %s11539 = sld [smem:[#allocation2 + $0x782]]
    %v11540 = vstv %s11539
    %v11541 = vmul.f32 %v61, %v11540
    %v11542 = vmul.f32 %v62, %v11540
    %v11543 = vmul.f32 %v63, %v11540
    %v11544 = vmul.f32 %v64, %v11540
    %v11545 = vmul.f32 %v65, %v11540
    %v11546 = vmul.f32 %v66, %v11540
    %v11547 = vmul.f32 %v67, %v11540
    %v11548 = vmul.f32 %v68, %v11540
    %11557 = vrot.lane.b32.xlu0 %v11541, 126
    %v11558 = vpop.permute.xlu0 %11557
    %11559 = vrot.lane.b32.xlu0 %v11542, 126
    %v11560 = vpop.permute.xlu0 %11559
    %11561 = vrot.lane.b32.xlu0 %v11543, 126
    %v11562 = vpop.permute.xlu0 %11561
    %11563 = vrot.lane.b32.xlu0 %v11544, 126
    %v11564 = vpop.permute.xlu0 %11563
    %11565 = vrot.lane.b32.xlu0 %v11545, 126
    %v11566 = vpop.permute.xlu0 %11565
    %11567 = vrot.lane.b32.xlu0 %v11546, 126
    %v11568 = vpop.permute.xlu0 %11567
    %11569 = vrot.lane.b32.xlu0 %v11547, 126
    %v11570 = vpop.permute.xlu0 %11569
    %11571 = vrot.lane.b32.xlu0 %v11548, 126
    %v11572 = vpop.permute.xlu0 %11571
    %v11573 = vsel %vm168, %v11558, %v11560
    %v11574 = vsel %vm168, %v11560, %v11562
    %v11575 = vsel %vm168, %v11562, %v11564
    %v11576 = vsel %vm168, %v11564, %v11566
    %v11577 = vsel %vm168, %v11566, %v11568
    %v11578 = vsel %vm168, %v11568, %v11570
    %v11579 = vsel %vm168, %v11570, %v11572
    %v11587 = vadd.f32 %v11532, %v11573
    %v11588 = vadd.f32 %v11533, %v11574
    %v11589 = vadd.f32 %v11534, %v11575
    %v11590 = vadd.f32 %v11535, %v11576
    %v11591 = vadd.f32 %v11536, %v11577
    %v11592 = vadd.f32 %v11537, %v11578
    %v11593 = vadd.f32 %v11538, %v11579
    %s11594 = sld [smem:[#allocation2 + $0x783]]
    %v11595 = vstv %s11594
    %v11596 = vmul.f32 %v61, %v11595
    %v11597 = vmul.f32 %v62, %v11595
    %v11598 = vmul.f32 %v63, %v11595
    %v11599 = vmul.f32 %v64, %v11595
    %v11600 = vmul.f32 %v65, %v11595
    %v11601 = vmul.f32 %v66, %v11595
    %v11602 = vmul.f32 %v67, %v11595
    %v11603 = vmul.f32 %v68, %v11595
    %11612 = vrot.lane.b32.xlu0 %v11596, 100
    %v11613 = vpop.permute.xlu0 %11612
    %11614 = vrot.lane.b32.xlu0 %v11597, 100
    %v11615 = vpop.permute.xlu0 %11614
    %11616 = vrot.lane.b32.xlu0 %v11598, 100
    %v11617 = vpop.permute.xlu0 %11616
    %11618 = vrot.lane.b32.xlu0 %v11599, 100
    %v11619 = vpop.permute.xlu0 %11618
    %11620 = vrot.lane.b32.xlu0 %v11600, 100
    %v11621 = vpop.permute.xlu0 %11620
    %11622 = vrot.lane.b32.xlu0 %v11601, 100
    %v11623 = vpop.permute.xlu0 %11622
    %11624 = vrot.lane.b32.xlu0 %v11602, 100
    %v11625 = vpop.permute.xlu0 %11624
    %11626 = vrot.lane.b32.xlu0 %v11603, 100
    %v11627 = vpop.permute.xlu0 %11626
    %v11628 = vsel %vm224, %v11613, %v11615
    %v11629 = vsel %vm224, %v11615, %v11617
    %v11630 = vsel %vm224, %v11617, %v11619
    %v11631 = vsel %vm224, %v11619, %v11621
    %v11632 = vsel %vm224, %v11621, %v11623
    %v11633 = vsel %vm224, %v11623, %v11625
    %v11634 = vsel %vm224, %v11625, %v11627
    %v11642 = vadd.f32 %v11587, %v11628
    %v11643 = vadd.f32 %v11588, %v11629
    %v11644 = vadd.f32 %v11589, %v11630
    %v11645 = vadd.f32 %v11590, %v11631
    %v11646 = vadd.f32 %v11591, %v11632
    %v11647 = vadd.f32 %v11592, %v11633
    %v11648 = vadd.f32 %v11593, %v11634
    %s11649 = sld [smem:[#allocation2 + $0x784]]
    %v11650 = vstv %s11649
    %v11651 = vmul.f32 %v61, %v11650
    %v11652 = vmul.f32 %v62, %v11650
    %v11653 = vmul.f32 %v63, %v11650
    %v11654 = vmul.f32 %v64, %v11650
    %v11655 = vmul.f32 %v65, %v11650
    %v11656 = vmul.f32 %v66, %v11650
    %v11657 = vmul.f32 %v67, %v11650
    %v11658 = vmul.f32 %v68, %v11650
    %11667 = vrot.lane.b32.xlu0 %v11651, 99
    %v11668 = vpop.permute.xlu0 %11667
    %11669 = vrot.lane.b32.xlu0 %v11652, 99
    %v11670 = vpop.permute.xlu0 %11669
    %11671 = vrot.lane.b32.xlu0 %v11653, 99
    %v11672 = vpop.permute.xlu0 %11671
    %11673 = vrot.lane.b32.xlu0 %v11654, 99
    %v11674 = vpop.permute.xlu0 %11673
    %11675 = vrot.lane.b32.xlu0 %v11655, 99
    %v11676 = vpop.permute.xlu0 %11675
    %11677 = vrot.lane.b32.xlu0 %v11656, 99
    %v11678 = vpop.permute.xlu0 %11677
    %11679 = vrot.lane.b32.xlu0 %v11657, 99
    %v11680 = vpop.permute.xlu0 %11679
    %11681 = vrot.lane.b32.xlu0 %v11658, 99
    %v11682 = vpop.permute.xlu0 %11681
    %v11683 = vsel %vm280, %v11668, %v11670
    %v11684 = vsel %vm280, %v11670, %v11672
    %v11685 = vsel %vm280, %v11672, %v11674
    %v11686 = vsel %vm280, %v11674, %v11676
    %v11687 = vsel %vm280, %v11676, %v11678
    %v11688 = vsel %vm280, %v11678, %v11680
    %v11689 = vsel %vm280, %v11680, %v11682
    %v11697 = vadd.f32 %v11642, %v11683
    %v11698 = vadd.f32 %v11643, %v11684
    %v11699 = vadd.f32 %v11644, %v11685
    %v11700 = vadd.f32 %v11645, %v11686
    %v11701 = vadd.f32 %v11646, %v11687
    %v11702 = vadd.f32 %v11647, %v11688
    %v11703 = vadd.f32 %v11648, %v11689
    %s11704 = sld [smem:[#allocation2 + $0x785]]
    %v11705 = vstv %s11704
    %v11706 = vmul.f32 %v61, %v11705
    %v11707 = vmul.f32 %v62, %v11705
    %v11708 = vmul.f32 %v63, %v11705
    %v11709 = vmul.f32 %v64, %v11705
    %v11710 = vmul.f32 %v65, %v11705
    %v11711 = vmul.f32 %v66, %v11705
    %v11712 = vmul.f32 %v67, %v11705
    %v11713 = vmul.f32 %v68, %v11705
    %11722 = vrot.lane.b32.xlu0 %v11706, 98
    %v11723 = vpop.permute.xlu0 %11722
    %11724 = vrot.lane.b32.xlu0 %v11707, 98
    %v11725 = vpop.permute.xlu0 %11724
    %11726 = vrot.lane.b32.xlu0 %v11708, 98
    %v11727 = vpop.permute.xlu0 %11726
    %11728 = vrot.lane.b32.xlu0 %v11709, 98
    %v11729 = vpop.permute.xlu0 %11728
    %11730 = vrot.lane.b32.xlu0 %v11710, 98
    %v11731 = vpop.permute.xlu0 %11730
    %11732 = vrot.lane.b32.xlu0 %v11711, 98
    %v11733 = vpop.permute.xlu0 %11732
    %11734 = vrot.lane.b32.xlu0 %v11712, 98
    %v11735 = vpop.permute.xlu0 %11734
    %11736 = vrot.lane.b32.xlu0 %v11713, 98
    %v11737 = vpop.permute.xlu0 %11736
    %v11738 = vsel %vm336, %v11723, %v11725
    %v11739 = vsel %vm336, %v11725, %v11727
    %v11740 = vsel %vm336, %v11727, %v11729
    %v11741 = vsel %vm336, %v11729, %v11731
    %v11742 = vsel %vm336, %v11731, %v11733
    %v11743 = vsel %vm336, %v11733, %v11735
    %v11744 = vsel %vm336, %v11735, %v11737
    %v11752 = vadd.f32 %v11697, %v11738
    %v11753 = vadd.f32 %v11698, %v11739
    %v11754 = vadd.f32 %v11699, %v11740
    %v11755 = vadd.f32 %v11700, %v11741
    %v11756 = vadd.f32 %v11701, %v11742
    %v11757 = vadd.f32 %v11702, %v11743
    %v11758 = vadd.f32 %v11703, %v11744
    %s11759 = sld [smem:[#allocation2 + $0x786]]
    %v11760 = vstv %s11759
    %v11761 = vmul.f32 %v61, %v11760
    %v11762 = vmul.f32 %v62, %v11760
    %v11763 = vmul.f32 %v63, %v11760
    %v11764 = vmul.f32 %v64, %v11760
    %v11765 = vmul.f32 %v65, %v11760
    %v11766 = vmul.f32 %v66, %v11760
    %v11767 = vmul.f32 %v67, %v11760
    %v11768 = vmul.f32 %v68, %v11760
    %11777 = vrot.lane.b32.xlu0 %v11761, 72
    %v11778 = vpop.permute.xlu0 %11777
    %11779 = vrot.lane.b32.xlu0 %v11762, 72
    %v11780 = vpop.permute.xlu0 %11779
    %11781 = vrot.lane.b32.xlu0 %v11763, 72
    %v11782 = vpop.permute.xlu0 %11781
    %11783 = vrot.lane.b32.xlu0 %v11764, 72
    %v11784 = vpop.permute.xlu0 %11783
    %11785 = vrot.lane.b32.xlu0 %v11765, 72
    %v11786 = vpop.permute.xlu0 %11785
    %11787 = vrot.lane.b32.xlu0 %v11766, 72
    %v11788 = vpop.permute.xlu0 %11787
    %11789 = vrot.lane.b32.xlu0 %v11767, 72
    %v11790 = vpop.permute.xlu0 %11789
    %11791 = vrot.lane.b32.xlu0 %v11768, 72
    %v11792 = vpop.permute.xlu0 %11791
    %v11793 = vsel %vm392, %v11778, %v11780
    %v11794 = vsel %vm392, %v11780, %v11782
    %v11795 = vsel %vm392, %v11782, %v11784
    %v11796 = vsel %vm392, %v11784, %v11786
    %v11797 = vsel %vm392, %v11786, %v11788
    %v11798 = vsel %vm392, %v11788, %v11790
    %v11799 = vsel %vm392, %v11790, %v11792
    %v11807 = vadd.f32 %v11752, %v11793
    %v11808 = vadd.f32 %v11753, %v11794
    %v11809 = vadd.f32 %v11754, %v11795
    %v11810 = vadd.f32 %v11755, %v11796
    %v11811 = vadd.f32 %v11756, %v11797
    %v11812 = vadd.f32 %v11757, %v11798
    %v11813 = vadd.f32 %v11758, %v11799
    %s11814 = sld [smem:[#allocation2 + $0x787]]
    %v11815 = vstv %s11814
    %v11816 = vmul.f32 %v61, %v11815
    %v11817 = vmul.f32 %v62, %v11815
    %v11818 = vmul.f32 %v63, %v11815
    %v11819 = vmul.f32 %v64, %v11815
    %v11820 = vmul.f32 %v65, %v11815
    %v11821 = vmul.f32 %v66, %v11815
    %v11822 = vmul.f32 %v67, %v11815
    %v11823 = vmul.f32 %v68, %v11815
    %11832 = vrot.lane.b32.xlu0 %v11816, 71
    %v11833 = vpop.permute.xlu0 %11832
    %11834 = vrot.lane.b32.xlu0 %v11817, 71
    %v11835 = vpop.permute.xlu0 %11834
    %11836 = vrot.lane.b32.xlu0 %v11818, 71
    %v11837 = vpop.permute.xlu0 %11836
    %11838 = vrot.lane.b32.xlu0 %v11819, 71
    %v11839 = vpop.permute.xlu0 %11838
    %11840 = vrot.lane.b32.xlu0 %v11820, 71
    %v11841 = vpop.permute.xlu0 %11840
    %11842 = vrot.lane.b32.xlu0 %v11821, 71
    %v11843 = vpop.permute.xlu0 %11842
    %11844 = vrot.lane.b32.xlu0 %v11822, 71
    %v11845 = vpop.permute.xlu0 %11844
    %11846 = vrot.lane.b32.xlu0 %v11823, 71
    %v11847 = vpop.permute.xlu0 %11846
    %v11848 = vsel %vm448, %v11833, %v11835
    %v11849 = vsel %vm448, %v11835, %v11837
    %v11850 = vsel %vm448, %v11837, %v11839
    %v11851 = vsel %vm448, %v11839, %v11841
    %v11852 = vsel %vm448, %v11841, %v11843
    %v11853 = vsel %vm448, %v11843, %v11845
    %v11854 = vsel %vm448, %v11845, %v11847
    %v11862 = vadd.f32 %v11807, %v11848
    %v11863 = vadd.f32 %v11808, %v11849
    %v11864 = vadd.f32 %v11809, %v11850
    %v11865 = vadd.f32 %v11810, %v11851
    %v11866 = vadd.f32 %v11811, %v11852
    %v11867 = vadd.f32 %v11812, %v11853
    %v11868 = vadd.f32 %v11813, %v11854
    %s11869 = sld [smem:[#allocation2 + $0x788]]
    %v11870 = vstv %s11869
    %v11871 = vmul.f32 %v61, %v11870
    %v11872 = vmul.f32 %v62, %v11870
    %v11873 = vmul.f32 %v63, %v11870
    %v11874 = vmul.f32 %v64, %v11870
    %v11875 = vmul.f32 %v65, %v11870
    %v11876 = vmul.f32 %v66, %v11870
    %v11877 = vmul.f32 %v67, %v11870
    %v11878 = vmul.f32 %v68, %v11870
    %11887 = vrot.lane.b32.xlu0 %v11871, 70
    %v11888 = vpop.permute.xlu0 %11887
    %11889 = vrot.lane.b32.xlu0 %v11872, 70
    %v11890 = vpop.permute.xlu0 %11889
    %11891 = vrot.lane.b32.xlu0 %v11873, 70
    %v11892 = vpop.permute.xlu0 %11891
    %11893 = vrot.lane.b32.xlu0 %v11874, 70
    %v11894 = vpop.permute.xlu0 %11893
    %11895 = vrot.lane.b32.xlu0 %v11875, 70
    %v11896 = vpop.permute.xlu0 %11895
    %11897 = vrot.lane.b32.xlu0 %v11876, 70
    %v11898 = vpop.permute.xlu0 %11897
    %11899 = vrot.lane.b32.xlu0 %v11877, 70
    %v11900 = vpop.permute.xlu0 %11899
    %11901 = vrot.lane.b32.xlu0 %v11878, 70
    %v11902 = vpop.permute.xlu0 %11901
    %v11903 = vsel %vm504, %v11888, %v11890
    %v11904 = vsel %vm504, %v11890, %v11892
    %v11905 = vsel %vm504, %v11892, %v11894
    %v11906 = vsel %vm504, %v11894, %v11896
    %v11907 = vsel %vm504, %v11896, %v11898
    %v11908 = vsel %vm504, %v11898, %v11900
    %v11909 = vsel %vm504, %v11900, %v11902
    %v11917 = vadd.f32 %v11862, %v11903
    %v11918 = vadd.f32 %v11863, %v11904
    %v11919 = vadd.f32 %v11864, %v11905
    %v11920 = vadd.f32 %v11865, %v11906
    %v11921 = vadd.f32 %v11866, %v11907
    %v11922 = vadd.f32 %v11867, %v11908
    %v11923 = vadd.f32 %v11868, %v11909
    %s11924 = sld [smem:[#allocation5 + $0xf]]
    %v11925 = vstv %s11924
    %v11926 = vadd.f32 %v11917, %v11925
    %v11927 = vadd.f32 %v11918, %v11925
    %v11928 = vadd.f32 %v11919, %v11925
    %v11929 = vadd.f32 %v11920, %v11925
    %v11930 = vadd.f32 %v11921, %v11925
    %v11931 = vadd.f32 %v11922, %v11925
    %v11932 = vadd.f32 %v11923, %v11925
    %v11933 = vmax.f32 %v11926, 0.0
    %v11934 = vmax.f32 %v11927, 0.0
    %v11935 = vmax.f32 %v11928, 0.0
    %v11936 = vmax.f32 %v11929, 0.0
    %v11937 = vmax.f32 %v11930, 0.0
    %v11938 = vmax.f32 %v11931, 0.0
    %v11939 = vmax.f32 %v11932, 0.0
    %v11940 = vld [vmem:[#allocation7 + $0x348] sm:$0xff]
    %v11941 = vld [vmem:[#allocation7 + $0x350] sm:$0xff]
    %v11942 = vld [vmem:[#allocation7 + $0x358] sm:$0xff]
    %v11943 = vld [vmem:[#allocation7 + $0x360] sm:$0xff]
    %v11944 = vld [vmem:[#allocation7 + $0x368] sm:$0xff]
    %v11945 = vld [vmem:[#allocation7 + $0x370] sm:$0xff]
    %v11946 = vld [vmem:[#allocation7 + $0x378] sm:$0xff]
    %v11947 = vld [vmem:[#allocation7 + $0x6c8] sm:$0x3]
    %v11948 = vld [vmem:[#allocation7 + $0x6d0] sm:$0x3]
    %v11949 = vld [vmem:[#allocation7 + $0x6d8] sm:$0x3]
    %v11950 = vld [vmem:[#allocation7 + $0x6e0] sm:$0x3]
    %v11951 = vld [vmem:[#allocation7 + $0x6e8] sm:$0x3]
    %v11952 = vld [vmem:[#allocation7 + $0x6f0] sm:$0x3]
    %v11953 = vld [vmem:[#allocation7 + $0x6f8] sm:$0x3]
    %11954 = vmatprep.subr.mxu0 %v11941
    %11955 = vmatpush1.xpose.msra.mxu0 %v11940
    %11956 = vmatprep.subr.mxu0 %v11948
    %11957 = vmatpush1.xpose.msra.mxu0 %v11947
    %11958 = vmatprep.subr.mxu0 0.0
    %11959 = vmatpush1.xpose.msra.mxu0 0.0
    %11960 = vmatprep.subr.mxu0 0.0
    %11961 = vmatpush1.xpose.msra.mxu0 0.0
    %11962 = vmatprep.subr.mxu0 0.0
    %11963 = vmatpush1.xpose.msra.mxu0 0.0
    %11964 = vmatprep.subr.mxu0 0.0
    %11965 = vmatpush1.xpose.msra.mxu0 0.0
    %11966 = vmatprep.subr.mxu0 0.0
    %11967 = vmatpush1.xpose.msra.mxu0 0.0
    %11968 = vmatprep.subr.mxu0 0.0
    %11969 = vmatpush1.xpose.msra.mxu0 0.0
    %11970 = vmatprep.subr.mxu0 0.0
    %11971 = vmatpush1.xpose.msra.mxu0 0.0
    %11972 = vmatprep.subr.mxu0 0.0
    %11973 = vmatpush1.xpose.msra.mxu0 0.0
    %11974 = vmatprep.subr.mxu0 0.0
    %11975 = vmatpush1.xpose.msra.mxu0 0.0
    %11976 = vmatprep.subr.mxu0 0.0
    %11977 = vmatpush1.xpose.msra.mxu0 0.0
    %11978 = vmatprep.subr.mxu0 0.0
    %11979 = vmatpush1.xpose.msra.mxu0 0.0
    %11980 = vmatprep.subr.mxu0 0.0
    %11981 = vmatpush1.xpose.msra.mxu0 0.0
    %11982 = vmatprep.subr.mxu0 0.0
    %11983 = vmatpush1.xpose.msra.mxu0 0.0
    %11984 = vmatprep.subr.mxu0 0.0
    %11985 = vmatpush1.xpose.msra.mxu0 0.0
    %11986 = vmatprep.subr.mxu0 0.0
    %11987 = vmatpush1.xpose.msra.mxu0 0.0
    %11988 = vmatprep.subr.mxu0 0.0
    %11989 = vmatpush1.xpose.msra.mxu0 0.0
    %11990 = vmatprep.subr.mxu0 0.0
    %11991 = vmatpush1.xpose.msra.mxu0 0.0
    %11992 = vmatprep.subr.mxu0 0.0
    %11993 = vmatpush1.xpose.msra.mxu0 0.0
    %11994 = vmatprep.subr.mxu0 0.0
    %11995 = vmatpush1.xpose.msra.mxu0 0.0
    %11996 = vmatprep.subr.mxu0 0.0
    %11997 = vmatpush1.xpose.msra.mxu0 0.0
    %11998 = vmatprep.subr.mxu0 0.0
    %11999 = vmatpush1.xpose.msra.mxu0 0.0
    %12000 = vmatprep.subr.mxu0 0.0
    %12001 = vmatpush1.xpose.msra.mxu0 0.0
    %12002 = vmatprep.subr.mxu0 0.0
    %12003 = vmatpush1.xpose.msra.mxu0 0.0
    %12004 = vmatprep.subr.mxu0 0.0
    %12005 = vmatpush1.xpose.msra.mxu0 0.0
    %12006 = vmatprep.subr.mxu0 0.0
    %12007 = vmatpush1.xpose.msra.mxu0 0.0
    %12008 = vmatprep.subr.mxu0 0.0
    %12009 = vmatpush1.xpose.msra.mxu0 0.0
    %12010 = vmatprep.subr.mxu0 0.0
    %12011 = vmatpush1.xpose.msra.mxu0 0.0
    %12012 = vmatprep.subr.mxu0 0.0
    %12013 = vmatpush1.xpose.msra.mxu0 0.0
    %12014 = vmatprep.subr.mxu0 0.0
    %12015 = vmatpush1.xpose.msra.mxu0 0.0
    %12016 = vmatprep.subr.mxu0 0.0
    %12017 = vmatpush1.xpose.msra.mxu0 0.0
    %12018 = vmatprep.mubr.f32.mxu0 %v11934
    %12019 = vmatmul.mubr.f32.gmra.mrb[0].mxu0 %v11933
    %v12020 = vpop.f32.mrb[0].mxu0
    %v12021 = vadd.f32 0.0, %v12020
    %v12022 = vpop.f32.mrb[0].mxu0
    %12023 = vdwg.mxu0
    %12024 = vmatprep.subr.mxu0 %v11943
    %12025 = vmatpush1.xpose.msra.mxu0 %v11942
    %12026 = vmatprep.subr.mxu0 %v11950
    %12027 = vmatpush1.xpose.msra.mxu0 %v11949
    %12028 = vmatprep.subr.mxu0 0.0
    %12029 = vmatpush1.xpose.msra.mxu0 0.0
    %12030 = vmatprep.subr.mxu0 0.0
    %12031 = vmatpush1.xpose.msra.mxu0 0.0
    %12032 = vmatprep.subr.mxu0 0.0
    %12033 = vmatpush1.xpose.msra.mxu0 0.0
    %12034 = vmatprep.subr.mxu0 0.0
    %12035 = vmatpush1.xpose.msra.mxu0 0.0
    %12036 = vmatprep.subr.mxu0 0.0
    %12037 = vmatpush1.xpose.msra.mxu0 0.0
    %12038 = vmatprep.subr.mxu0 0.0
    %12039 = vmatpush1.xpose.msra.mxu0 0.0
    %12040 = vmatprep.subr.mxu0 0.0
    %12041 = vmatpush1.xpose.msra.mxu0 0.0
    %12042 = vmatprep.subr.mxu0 0.0
    %12043 = vmatpush1.xpose.msra.mxu0 0.0
    %12044 = vmatprep.subr.mxu0 0.0
    %12045 = vmatpush1.xpose.msra.mxu0 0.0
    %12046 = vmatprep.subr.mxu0 0.0
    %12047 = vmatpush1.xpose.msra.mxu0 0.0
    %12048 = vmatprep.subr.mxu0 0.0
    %12049 = vmatpush1.xpose.msra.mxu0 0.0
    %12050 = vmatprep.subr.mxu0 0.0
    %12051 = vmatpush1.xpose.msra.mxu0 0.0
    %12052 = vmatprep.subr.mxu0 0.0
    %12053 = vmatpush1.xpose.msra.mxu0 0.0
    %12054 = vmatprep.subr.mxu0 0.0
    %12055 = vmatpush1.xpose.msra.mxu0 0.0
    %12056 = vmatprep.subr.mxu0 0.0
    %12057 = vmatpush1.xpose.msra.mxu0 0.0
    %12058 = vmatprep.subr.mxu0 0.0
    %12059 = vmatpush1.xpose.msra.mxu0 0.0
    %12060 = vmatprep.subr.mxu0 0.0
    %12061 = vmatpush1.xpose.msra.mxu0 0.0
    %12062 = vmatprep.subr.mxu0 0.0
    %12063 = vmatpush1.xpose.msra.mxu0 0.0
    %12064 = vmatprep.subr.mxu0 0.0
    %12065 = vmatpush1.xpose.msra.mxu0 0.0
    %12066 = vmatprep.subr.mxu0 0.0
    %12067 = vmatpush1.xpose.msra.mxu0 0.0
    %12068 = vmatprep.subr.mxu0 0.0
    %12069 = vmatpush1.xpose.msra.mxu0 0.0
    %12070 = vmatprep.subr.mxu0 0.0
    %12071 = vmatpush1.xpose.msra.mxu0 0.0
    %12072 = vmatprep.subr.mxu0 0.0
    %12073 = vmatpush1.xpose.msra.mxu0 0.0
    %12074 = vmatprep.subr.mxu0 0.0
    %12075 = vmatpush1.xpose.msra.mxu0 0.0
    %12076 = vmatprep.subr.mxu0 0.0
    %12077 = vmatpush1.xpose.msra.mxu0 0.0
    %12078 = vmatprep.subr.mxu0 0.0
    %12079 = vmatpush1.xpose.msra.mxu0 0.0
    %12080 = vmatprep.subr.mxu0 0.0
    %12081 = vmatpush1.xpose.msra.mxu0 0.0
    %12082 = vmatprep.subr.mxu0 0.0
    %12083 = vmatpush1.xpose.msra.mxu0 0.0
    %12084 = vmatprep.subr.mxu0 0.0
    %12085 = vmatpush1.xpose.msra.mxu0 0.0
    %12086 = vmatprep.subr.mxu0 0.0
    %12087 = vmatpush1.xpose.msra.mxu0 0.0
    %12088 = vmatprep.mubr.f32.mxu0 %v11936
    %12089 = vmatmul.mubr.f32.gmra.mrb[0].mxu0 %v11935
    %v12090 = vpop.f32.mrb[0].mxu0
    %v12091 = vadd.f32 %v12021, %v12090
    %v12092 = vpop.f32.mrb[0].mxu0
    %12093 = vdwg.mxu0
    %12094 = vmatprep.subr.mxu0 %v11945
    %12095 = vmatpush1.xpose.msra.mxu0 %v11944
    %12096 = vmatprep.subr.mxu0 %v11952
    %12097 = vmatpush1.xpose.msra.mxu0 %v11951
    %12098 = vmatprep.subr.mxu0 0.0
    %12099 = vmatpush1.xpose.msra.mxu0 0.0
    %12100 = vmatprep.subr.mxu0 0.0
    %12101 = vmatpush1.xpose.msra.mxu0 0.0
    %12102 = vmatprep.subr.mxu0 0.0
    %12103 = vmatpush1.xpose.msra.mxu0 0.0
    %12104 = vmatprep.subr.mxu0 0.0
    %12105 = vmatpush1.xpose.msra.mxu0 0.0
    %12106 = vmatprep.subr.mxu0 0.0
    %12107 = vmatpush1.xpose.msra.mxu0 0.0
    %12108 = vmatprep.subr.mxu0 0.0
    %12109 = vmatpush1.xpose.msra.mxu0 0.0
    %12110 = vmatprep.subr.mxu0 0.0
    %12111 = vmatpush1.xpose.msra.mxu0 0.0
    %12112 = vmatprep.subr.mxu0 0.0
    %12113 = vmatpush1.xpose.msra.mxu0 0.0
    %12114 = vmatprep.subr.mxu0 0.0
    %12115 = vmatpush1.xpose.msra.mxu0 0.0
    %12116 = vmatprep.subr.mxu0 0.0
    %12117 = vmatpush1.xpose.msra.mxu0 0.0
    %12118 = vmatprep.subr.mxu0 0.0
    %12119 = vmatpush1.xpose.msra.mxu0 0.0
    %12120 = vmatprep.subr.mxu0 0.0
    %12121 = vmatpush1.xpose.msra.mxu0 0.0
    %12122 = vmatprep.subr.mxu0 0.0
    %12123 = vmatpush1.xpose.msra.mxu0 0.0
    %12124 = vmatprep.subr.mxu0 0.0
    %12125 = vmatpush1.xpose.msra.mxu0 0.0
    %12126 = vmatprep.subr.mxu0 0.0
    %12127 = vmatpush1.xpose.msra.mxu0 0.0
    %12128 = vmatprep.subr.mxu0 0.0
    %12129 = vmatpush1.xpose.msra.mxu0 0.0
    %12130 = vmatprep.subr.mxu0 0.0
    %12131 = vmatpush1.xpose.msra.mxu0 0.0
    %12132 = vmatprep.subr.mxu0 0.0
    %12133 = vmatpush1.xpose.msra.mxu0 0.0
    %12134 = vmatprep.subr.mxu0 0.0
    %12135 = vmatpush1.xpose.msra.mxu0 0.0
    %12136 = vmatprep.subr.mxu0 0.0
    %12137 = vmatpush1.xpose.msra.mxu0 0.0
    %12138 = vmatprep.subr.mxu0 0.0
    %12139 = vmatpush1.xpose.msra.mxu0 0.0
    %12140 = vmatprep.subr.mxu0 0.0
    %12141 = vmatpush1.xpose.msra.mxu0 0.0
    %12142 = vmatprep.subr.mxu0 0.0
    %12143 = vmatpush1.xpose.msra.mxu0 0.0
    %12144 = vmatprep.subr.mxu0 0.0
    %12145 = vmatpush1.xpose.msra.mxu0 0.0
    %12146 = vmatprep.subr.mxu0 0.0
    %12147 = vmatpush1.xpose.msra.mxu0 0.0
    %12148 = vmatprep.subr.mxu0 0.0
    %12149 = vmatpush1.xpose.msra.mxu0 0.0
    %12150 = vmatprep.subr.mxu0 0.0
    %12151 = vmatpush1.xpose.msra.mxu0 0.0
    %12152 = vmatprep.subr.mxu0 0.0
    %12153 = vmatpush1.xpose.msra.mxu0 0.0
    %12154 = vmatprep.subr.mxu0 0.0
    %12155 = vmatpush1.xpose.msra.mxu0 0.0
    %12156 = vmatprep.subr.mxu0 0.0
    %12157 = vmatpush1.xpose.msra.mxu0 0.0
    %12158 = vmatprep.mubr.f32.mxu0 %v11938
    %12159 = vmatmul.mubr.f32.gmra.mrb[0].mxu0 %v11937
    %v12160 = vpop.f32.mrb[0].mxu0
    %v12161 = vadd.f32 %v12091, %v12160
    %v12162 = vpop.f32.mrb[0].mxu0
    %12163 = vdwg.mxu0
    %12164 = vmatprep.subr.mxu0 0.0
    %12165 = vmatpush1.xpose.msra.mxu0 %v11946
    %12166 = vmatprep.subr.mxu0 0.0
    %12167 = vmatpush1.xpose.msra.mxu0 %v11953
    %12168 = vmatprep.subr.mxu0 0.0
    %12169 = vmatpush1.xpose.msra.mxu0 0.0
    %12170 = vmatprep.subr.mxu0 0.0
    %12171 = vmatpush1.xpose.msra.mxu0 0.0
    %12172 = vmatprep.subr.mxu0 0.0
    %12173 = vmatpush1.xpose.msra.mxu0 0.0
    %12174 = vmatprep.subr.mxu0 0.0
    %12175 = vmatpush1.xpose.msra.mxu0 0.0
    %12176 = vmatprep.subr.mxu0 0.0
    %12177 = vmatpush1.xpose.msra.mxu0 0.0
    %12178 = vmatprep.subr.mxu0 0.0
    %12179 = vmatpush1.xpose.msra.mxu0 0.0
    %12180 = vmatprep.subr.mxu0 0.0
    %12181 = vmatpush1.xpose.msra.mxu0 0.0
    %12182 = vmatprep.subr.mxu0 0.0
    %12183 = vmatpush1.xpose.msra.mxu0 0.0
    %12184 = vmatprep.subr.mxu0 0.0
    %12185 = vmatpush1.xpose.msra.mxu0 0.0
    %12186 = vmatprep.subr.mxu0 0.0
    %12187 = vmatpush1.xpose.msra.mxu0 0.0
    %12188 = vmatprep.subr.mxu0 0.0
    %12189 = vmatpush1.xpose.msra.mxu0 0.0
    %12190 = vmatprep.subr.mxu0 0.0
    %12191 = vmatpush1.xpose.msra.mxu0 0.0
    %12192 = vmatprep.subr.mxu0 0.0
    %12193 = vmatpush1.xpose.msra.mxu0 0.0
    %12194 = vmatprep.subr.mxu0 0.0
    %12195 = vmatpush1.xpose.msra.mxu0 0.0
    %12196 = vmatprep.subr.mxu0 0.0
    %12197 = vmatpush1.xpose.msra.mxu0 0.0
    %12198 = vmatprep.subr.mxu0 0.0
    %12199 = vmatpush1.xpose.msra.mxu0 0.0
    %12200 = vmatprep.subr.mxu0 0.0
    %12201 = vmatpush1.xpose.msra.mxu0 0.0
    %12202 = vmatprep.subr.mxu0 0.0
    %12203 = vmatpush1.xpose.msra.mxu0 0.0
    %12204 = vmatprep.subr.mxu0 0.0
    %12205 = vmatpush1.xpose.msra.mxu0 0.0
    %12206 = vmatprep.subr.mxu0 0.0
    %12207 = vmatpush1.xpose.msra.mxu0 0.0
    %12208 = vmatprep.subr.mxu0 0.0
    %12209 = vmatpush1.xpose.msra.mxu0 0.0
    %12210 = vmatprep.subr.mxu0 0.0
    %12211 = vmatpush1.xpose.msra.mxu0 0.0
    %12212 = vmatprep.subr.mxu0 0.0
    %12213 = vmatpush1.xpose.msra.mxu0 0.0
    %12214 = vmatprep.subr.mxu0 0.0
    %12215 = vmatpush1.xpose.msra.mxu0 0.0
    %12216 = vmatprep.subr.mxu0 0.0
    %12217 = vmatpush1.xpose.msra.mxu0 0.0
    %12218 = vmatprep.subr.mxu0 0.0
    %12219 = vmatpush1.xpose.msra.mxu0 0.0
    %12220 = vmatprep.subr.mxu0 0.0
    %12221 = vmatpush1.xpose.msra.mxu0 0.0
    %12222 = vmatprep.subr.mxu0 0.0
    %12223 = vmatpush1.xpose.msra.mxu0 0.0
    %12224 = vmatprep.subr.mxu0 0.0
    %12225 = vmatpush1.xpose.msra.mxu0 0.0
    %12226 = vmatprep.subr.mxu0 0.0
    %12227 = vmatpush1.xpose.msra.mxu0 0.0
    %12228 = vmatprep.mubr.f32.mxu0 0.0
    %12229 = vmatmul.mubr.f32.gmra.mrb[0].mxu0 %v11939
    %v12230 = vpop.f32.mrb[0].mxu0
    %v12231 = vadd.f32 %v12161, %v12230
    %v12232 = vpop.f32.mrb[0].mxu0
    %12233 = vdwg.mxu0
    %v12234 = vadd.f32 %v11474, %v12231
    %v12235 = vld [vmem:[%s4] sm:$0x1]
    %v12237 = vlaneseq
    %v12238 = vshrl.u32 %v12237, 7
    %v12239 = vsub.s32 0, %v12238
    %v12240 = vrot.slane %v12235, %v12239
    %v12242 = vadd.f32 %v12234, %v12240
    %vm12243 = vcmask 80896
    %12244 = vst.msk [vmem:[%s5] sm:$0xff] %vm12243, %v12242
    // Predicated region
    $region34: #{cnn_forward.1} parent=1 // pred_check
      _
    $region35: #{cnn_forward.1} parent=1 // pred_check_branch
      %12246 = sbr.rel (0) target = $region37
    $region36: #{cnn_forward.1} parent=1 // pred_region
      _
    $region37: #{cnn_forward.1} parent=1 // pred_fallthru
      _
    // Predicated region
    $region38: #{cnn_forward.1} parent=1 // pred_check
      _
    $region39: #{cnn_forward.1} parent=1 // pred_check_branch
      %12248 = sbr.rel (0) target = $region41
    $region40: #{cnn_forward.1} parent=1 // pred_region
      _
    $region41: #{cnn_forward.1} parent=1 // pred_fallthru
      _
    %12249 = vsyncpa [#allocation3], 1
    %12250 = vsyncpa [#allocation4], 1
    %12251 = vsyncpa [#allocation6], 1

</llo_original>
